<compile_context>
chip_gen: v7x
topology: tpu7x:2x2x1
jax: 0.10.0
libtpu: 0.0.40
codegen_flags: <defaults>
</compile_context>

<pallas_src>
import functools

import jax
import jax.numpy as jnp
from jax.experimental import pallas as pl
from jax.experimental.pallas import tpu as pltpu

_SLOPE = 0.1      # nn.LeakyReLU(0.1) everywhere in this module
_GN_EPS = 1e-5    # nn.GroupNorm default eps


def _lrelu(x):
    return jnp.where(x >= 0, x, _SLOPE * x)


# ----------------------------- Pallas kernels -----------------------------

def _resblock_kernel(xpad_ref, w1_ref, b1_ref, w2_ref, b2_ref, w3_ref, b3_ref,
                     wsk_ref, bsk_ref, o_ref, h2_scr, *, H, W, skip_conv):
    """Fused ResBlock for one batch image.

    xpad_ref : (1, H+2, W+2, Cin)  zero-padded input image (f32)
    w*_ref   : bf16 matmul weights, b*_ref: f32 (1, C) biases
    o_ref    : (1, H*W, Cout) f32 output (x_skip, flattened spatial)
    h2_scr   : (H+2, W+2, Cm) f32 VMEM scratch (padded hidden activation)
    """
    Cin = xpad_ref.shape[3]
    Cm = w1_ref.shape[1]
    Cout = w3_ref.shape[2]
    HW = H * W

    # Interior (unpadded) pixels, flattened: (H*W, Cin), f32.
    xin = xpad_ref[0, 1:H + 1, 1:W + 1, :].reshape(HW, Cin)

    # 1x1 conv -> LReLU -> 1x1 conv -> LReLU  (bf16 MXU, f32 accumulate/epilogue)
    h1 = jnp.dot(xin.astype(jnp.bfloat16), w1_ref[...],
                 preferred_element_type=jnp.float32) + b1_ref[...]
    h1 = _lrelu(h1)
    h2 = jnp.dot(h1.astype(jnp.bfloat16), w2_ref[...],
                 preferred_element_type=jnp.float32) + b2_ref[...]
    h2 = _lrelu(h2)

    # Zero-padded copy of h2 in VMEM for the in-kernel 3x3 "im2col".
    h2_scr[...] = jnp.zeros_like(h2_scr)
    h2_scr[1:H + 1, 1:W + 1, :] = h2.reshape(H, W, Cm)

    # 3x3 conv (padding=1) as 9 shifted MXU matmuls, f32 accumulation.
    acc = jnp.zeros((HW, Cout), jnp.float32)
    for dy in range(3):
        for dx in range(3):
            tap = h2_scr[dy:dy + H, dx:dx + W, :].reshape(HW, Cm)
            acc = acc + jnp.dot(tap.astype(jnp.bfloat16), w3_ref[dy * 3 + dx],
                                preferred_element_type=jnp.float32)
    residual = _lrelu(acc + b3_ref[...])

    # Skip path: 1x1 conv when channel counts differ, otherwise identity.
    if skip_conv:
        skip = jnp.dot(xin.astype(jnp.bfloat16), wsk_ref[...],
                       preferred_element_type=jnp.float32) + bsk_ref[...]
    else:
        skip = xin

    o_ref[0] = skip + residual


def _down_kernel(ph_ref, wd_ref, bd_ref, gamma_ref, beta_ref, gmask_ref, o_ref,
                 *, Ho, Wo):
    """Fused 4x4 stride-2 conv + GroupNorm(32) + LeakyReLU for one batch image.

    ph_ref    : (4, Hph, Wph, C) phase-decomposed zero-padded x_skip (f32)
                phase p = py*2+px holds xpad[py::2, px::2, :].
    wd_ref    : (16, C, C) bf16 conv weights (tap k = dy*4+dx)
    gmask_ref : (C, C) f32 group-averaging matrix (1/(group_size*Ho*Wo) in-group)
    o_ref     : (1, Ho*Wo, C) f32 output
    """
    C = wd_ref.shape[2]
    HWo = Ho * Wo

    acc = jnp.zeros((HWo, C), jnp.float32)
    for dy in range(4):
        for dx in range(4):
            p = (dy % 2) * 2 + (dx % 2)
            qy, qx = dy // 2, dx // 2
            tap = ph_ref[p, qy:qy + Ho, qx:qx + Wo, :].reshape(HWo, C)
            acc = acc + jnp.dot(tap.astype(jnp.bfloat16), wd_ref[dy * 4 + dx],
                                preferred_element_type=jnp.float32)
    acc = acc + bd_ref[...]

    # GroupNorm(32, C): per-sample stats over (spatial, channels-in-group).
    ch_sum = jnp.sum(acc, axis=0, keepdims=True)         # (1, C)
    ch_ssq = jnp.sum(acc * acc, axis=0, keepdims=True)   # (1, C)
    mean = jnp.dot(ch_sum, gmask_ref[...], preferred_element_type=jnp.float32)
    msq = jnp.dot(ch_ssq, gmask_ref[...], preferred_element_type=jnp.float32)
    var = jnp.maximum(msq - mean * mean, 0.0)
    inv = jax.lax.rsqrt(var + _GN_EPS)
    y = (acc - mean) * inv * gamma_ref[...] + beta_ref[...]
    o_ref[0] = _lrelu(y)


# ------------------------------ wrapper (JAX) ------------------------------

def down_forward(params, x_nchw, *, num_groups=32):
    """Pallas implementation of down.forward: returns (x_skip, x_down), NCHW."""
    N, Cin, H, W = x_nchw.shape
    Cm = params["w1"].shape[1]
    Cout = params["w3"].shape[2]
    assert Cout % num_groups == 0, "GroupNorm requires out_ch % 32 == 0"
    assert H % 2 == 0 and W % 2 == 0, "down block assumes even spatial dims"

    bf = jnp.bfloat16
    f32 = jnp.float32
    x = jnp.transpose(x_nchw, (0, 2, 3, 1)).astype(f32)          # NCHW -> NHWC

    # ------------------- fused ResBlock kernel (per image) -------------------
    xpad = jnp.pad(x, ((0, 0), (1, 1), (1, 1), (0, 0)))          # (N, H+2, W+2, Cin)
    Hp, Wp = H + 2, W + 2

    w1 = params["w1"].astype(bf)
    w2 = params["w2"].astype(bf)
    w3 = params["w3"].astype(bf)
    wsk = params["wsk"].astype(bf)
    b1 = params["b1"].reshape(1, Cm).astype(f32)
    b2 = params["b2"].reshape(1, Cm).astype(f32)
    b3 = params["b3"].reshape(1, Cout).astype(f32)
    bsk = params["bsk"].reshape(1, Cout).astype(f32)

    res_kernel = functools.partial(_resblock_kernel, H=H, W=W,
                                   skip_conv=(Cin != Cout))
    xskip_flat = pl.pallas_call(
        res_kernel,
        grid=(N,),
        in_specs=[
            pl.BlockSpec((1, Hp, Wp, Cin), lambda n: (n, 0, 0, 0)),
            pl.BlockSpec((Cin, Cm), lambda n: (0, 0)),
            pl.BlockSpec((1, Cm), lambda n: (0, 0)),
            pl.BlockSpec((Cm, Cm), lambda n: (0, 0)),
            pl.BlockSpec((1, Cm), lambda n: (0, 0)),
            pl.BlockSpec((9, Cm, Cout), lambda n: (0, 0, 0)),
            pl.BlockSpec((1, Cout), lambda n: (0, 0)),
            pl.BlockSpec((Cin, Cout), lambda n: (0, 0)),
            pl.BlockSpec((1, Cout), lambda n: (0, 0)),
        ],
        out_specs=pl.BlockSpec((1, H * W, Cout), lambda n: (n, 0, 0)),
        out_shape=jax.ShapeDtypeStruct((N, H * W, Cout), f32),
        scratch_shapes=[pltpu.VMEM((Hp, Wp, Cm), f32)],
        compiler_params=pltpu.CompilerParams(dimension_semantics=("parallel",)),
    )(xpad, w1, b1, w2, b2, w3, b3, wsk, bsk)

    xskip = xskip_flat.reshape(N, H, W, Cout)                    # NHWC

    # ------------- fused 4x4/s2 conv + GroupNorm + LReLU (per image) ----------
    Ho, Wo = H // 2, W // 2                                      # k=4, p=1, s=2
    xsp = jnp.pad(xskip, ((0, 0), (1, 1), (1, 1), (0, 0)))       # (N, H+2, W+2, C)
    Hph, Wph = (H + 2) // 2, (W + 2) // 2
    # Space-to-depth phase decomposition (pure layout plumbing, no inflation).
    phases = jnp.stack([xsp[:, py::2, px::2, :] for py in (0, 1) for px in (0, 1)],
                       axis=1)                                   # (N, 4, Hph, Wph, C)
    phases = phases.reshape(N * 4, Hph, Wph, Cout)

    gs = Cout // num_groups
    gidx = jnp.arange(Cout) // gs
    gmask = (gidx[:, None] == gidx[None, :]).astype(f32) / float(gs * Ho * Wo)

    wd = params["wd"].astype(bf)
    bd = params["bd"].reshape(1, Cout).astype(f32)
    gng = params["gn_g"].reshape(1, Cout).astype(f32)
    gnb = params["gn_b"].reshape(1, Cout).astype(f32)

    down_kernel = functools.partial(_down_kernel, Ho=Ho, Wo=Wo)
    xdown_flat = pl.pallas_call(
        down_kernel,
        grid=(N,),
        in_specs=[
            pl.BlockSpec((4, Hph, Wph, Cout), lambda n: (n, 0, 0, 0)),
            pl.BlockSpec((16, Cout, Cout), lambda n: (0, 0, 0)),
            pl.BlockSpec((1, Cout), lambda n: (0, 0)),
            pl.BlockSpec((1, Cout), lambda n: (0, 0)),
            pl.BlockSpec((1, Cout), lambda n: (0, 0)),
            pl.BlockSpec((Cout, Cout), lambda n: (0, 0)),
        ],
        out_specs=pl.BlockSpec((1, Ho * Wo, Cout), lambda n: (n, 0, 0)),
        out_shape=jax.ShapeDtypeStruct((N, Ho * Wo, Cout), f32),
        compiler_params=pltpu.CompilerParams(dimension_semantics=("parallel",)),
    )(phases, wd, bd, gng, gnb, gmask)

    xdown = xdown_flat.reshape(N, Ho, Wo, Cout)

    # Back to PyTorch NCHW layout.
    return (jnp.transpose(xskip, (0, 3, 1, 2)),
            jnp.transpose(xdown, (0, 3, 1, 2)))


# ------------------------------- parameters -------------------------------

def init_params(key, in_ch, m_ch, out_ch):
    """Random weights in matmul layout (k, Cin, Cout) / (Cin, Cout)."""
    ks = jax.random.split(key, 10)

    def w(k, shape, fan_in):
        return jax.random.normal(k, shape, jnp.float32) / jnp.sqrt(float(fan_in))

    return dict(
        w1=w(ks[0], (in_ch, m_ch), in_ch),
        b1=0.1 * jax.random.normal(ks[1], (m_ch,), jnp.float32),
        w2=w(ks[2], (m_ch, m_ch), m_ch),
        b2=0.1 * jax.random.normal(ks[3], (m_ch,), jnp.float32),
        w3=w(ks[4], (9, m_ch, out_ch), 9 * m_ch),
        b3=0.1 * jax.random.normal(ks[5], (out_ch,), jnp.float32),
        wsk=w(ks[6], (in_ch, out_ch), in_ch),
        bsk=0.1 * jax.random.normal(ks[7], (out_ch,), jnp.float32),
        wd=w(ks[8], (16, out_ch, out_ch), 16 * out_ch),
        bd=0.1 * jax.random.normal(ks[9], (out_ch,), jnp.float32),
        gn_g=jnp.ones((out_ch,), jnp.float32),
        gn_b=jnp.zeros((out_ch,), jnp.float32),
    )


if __name__ == "__main__":
    key = jax.random.PRNGKey(0)
    pkey, xkey = jax.random.split(key)

    IN_CH, M_CH, OUT_CH = 4, 32, 64          # GroupNorm(32, out_ch) needs out_ch % 32 == 0
    params = init_params(pkey, IN_CH, M_CH, OUT_CH)
    x = jax.random.normal(xkey, (2, IN_CH, 16, 16), dtype=jnp.float32)  # NCHW

    fwd = jax.jit(down_forward)
    x_skip, x_down = fwd(params, x)
    x_skip, x_down = jax.block_until_ready((x_skip, x_down))

    assert x_skip.shape == (2, OUT_CH, 16, 16), x_skip.shape
    assert x_down.shape == (2, OUT_CH, 8, 8), x_down.shape
    assert bool(jnp.all(jnp.isfinite(x_skip))) and bool(jnp.all(jnp.isfinite(x_down)))
    print("KERNEL_OK")
</pallas_src>

<mosaic_0001>
module attributes {stable_mosaic.version = 11 : i64} {
  func.func @_resblock_kernel(%arg0: i32, %arg1: memref<1x18x18x4xf32, #tpu.memory_space<vmem>>, %arg2: memref<4x32xbf16, #tpu.memory_space<vmem>>, %arg3: memref<1x32xf32, #tpu.memory_space<vmem>>, %arg4: memref<32x32xbf16, #tpu.memory_space<vmem>>, %arg5: memref<1x32xf32, #tpu.memory_space<vmem>>, %arg6: memref<9x32x64xbf16, #tpu.memory_space<vmem>>, %arg7: memref<1x64xf32, #tpu.memory_space<vmem>>, %arg8: memref<4x64xbf16, #tpu.memory_space<vmem>>, %arg9: memref<1x64xf32, #tpu.memory_space<vmem>>, %arg10: memref<1x256x64xf32, #tpu.memory_space<vmem>>, %arg11: memref<18x18x32xf32, #tpu.memory_space<vmem>>) attributes {dimension_semantics = [#tpu.dimension_semantics<parallel>], iteration_bounds = array<i64: 2>, scalar_prefetch = 0 : i64, scratch_operands = 1 : i64, tpu.core_type = #tpu.core_type<tc>, window_params = [{transform_indices = @transform_0, window_bounds = array<i64: 1, 18, 18, 4>}, {pipeline_mode = #tpu.pipeline_mode<synchronous>, transform_indices = @transform_1, window_bounds = array<i64: 4, 32>}, {pipeline_mode = #tpu.pipeline_mode<synchronous>, transform_indices = @transform_2, window_bounds = array<i64: 1, 32>}, {pipeline_mode = #tpu.pipeline_mode<synchronous>, transform_indices = @transform_3, window_bounds = array<i64: 32, 32>}, {pipeline_mode = #tpu.pipeline_mode<synchronous>, transform_indices = @transform_4, window_bounds = array<i64: 1, 32>}, {pipeline_mode = #tpu.pipeline_mode<synchronous>, transform_indices = @transform_5, window_bounds = array<i64: 9, 32, 64>}, {pipeline_mode = #tpu.pipeline_mode<synchronous>, transform_indices = @transform_6, window_bounds = array<i64: 1, 64>}, {pipeline_mode = #tpu.pipeline_mode<synchronous>, transform_indices = @transform_7, window_bounds = array<i64: 4, 64>}, {pipeline_mode = #tpu.pipeline_mode<synchronous>, transform_indices = @transform_8, window_bounds = array<i64: 1, 64>}, {transform_indices = @transform_9, window_bounds = array<i64: 1, 256, 64>}]} {
    %c0 = arith.constant 0 : index
    %c1 = arith.constant 1 : index
    %c1_0 = arith.constant 1 : index
    %c0_1 = arith.constant 0 : index
    %0 = vector.load %arg1[%c0, %c1, %c1_0, %c0_1] : memref<1x18x18x4xf32, #tpu.memory_space<vmem>>, vector<1x16x16x4xf32>
    %1 = vector.shape_cast %0 : vector<1x16x16x4xf32> to vector<16x16x4xf32>
    %2 = vector.shape_cast %1 : vector<16x16x4xf32> to vector<256x4xf32>
    %3 = arith.truncf %2 : vector<256x4xf32> to vector<256x4xbf16>
    %c0_2 = arith.constant 0 : index
    %c0_3 = arith.constant 0 : index
    %4 = vector.load %arg2[%c0_2, %c0_3] : memref<4x32xbf16, #tpu.memory_space<vmem>>, vector<4x32xbf16>
    %cst = arith.constant dense<0.000000e+00> : vector<256x32xf32>
    %5 = tpu.matmul %3, %4, %cst {dimension_numbers = #tpu.dot_dimension_numbers<[1], [0], [0], [1], [0, 0, 1, 1], [], []>} : vector<256x4xbf16>, vector<4x32xbf16>, vector<256x32xf32> -> vector<256x32xf32>
    %c0_4 = arith.constant 0 : index
    %c0_5 = arith.constant 0 : index
    %6 = vector.load %arg3[%c0_4, %c0_5] : memref<1x32xf32, #tpu.memory_space<vmem>>, vector<1x32xf32>
    %7 = vector.broadcast %6 : vector<1x32xf32> to vector<256x32xf32>
    %8 = arith.addf %5, %7 : vector<256x32xf32>
    %cst_6 = arith.constant 0.000000e+00 : f32
    %9 = vector.broadcast %cst_6 : f32 to vector<256x32xf32>
    %10 = arith.cmpf oge, %8, %9 : vector<256x32xf32>
    %cst_7 = arith.constant 1.000000e-01 : f32
    %11 = vector.broadcast %cst_7 : f32 to vector<256x32xf32>
    %12 = arith.mulf %11, %8 : vector<256x32xf32>
    %13 = arith.select %10, %8, %12 : vector<256x32xi1>, vector<256x32xf32>
    %14 = arith.truncf %13 : vector<256x32xf32> to vector<256x32xbf16>
    %c0_8 = arith.constant 0 : index
    %c0_9 = arith.constant 0 : index
    %15 = vector.load %arg4[%c0_8, %c0_9] : memref<32x32xbf16, #tpu.memory_space<vmem>>, vector<32x32xbf16>
    %cst_10 = arith.constant dense<0.000000e+00> : vector<256x32xf32>
    %16 = tpu.matmul %14, %15, %cst_10 {dimension_numbers = #tpu.dot_dimension_numbers<[1], [0], [0], [1], [0, 0, 1, 1], [], []>} : vector<256x32xbf16>, vector<32x32xbf16>, vector<256x32xf32> -> vector<256x32xf32>
    %c0_11 = arith.constant 0 : index
    %c0_12 = arith.constant 0 : index
    %17 = vector.load %arg5[%c0_11, %c0_12] : memref<1x32xf32, #tpu.memory_space<vmem>>, vector<1x32xf32>
    %18 = vector.broadcast %17 : vector<1x32xf32> to vector<256x32xf32>
    %19 = arith.addf %16, %18 : vector<256x32xf32>
    %cst_13 = arith.constant 0.000000e+00 : f32
    %20 = vector.broadcast %cst_13 : f32 to vector<256x32xf32>
    %21 = arith.cmpf oge, %19, %20 : vector<256x32xf32>
    %cst_14 = arith.constant 1.000000e-01 : f32
    %22 = vector.broadcast %cst_14 : f32 to vector<256x32xf32>
    %23 = arith.mulf %22, %19 : vector<256x32xf32>
    %24 = arith.select %21, %19, %23 : vector<256x32xi1>, vector<256x32xf32>
    %cst_15 = arith.constant 0.000000e+00 : f32
    %25 = vector.broadcast %cst_15 : f32 to vector<18x18x32xf32>
    %c0_16 = arith.constant 0 : index
    %c0_17 = arith.constant 0 : index
    %c0_18 = arith.constant 0 : index
    %26 = vector.load %arg11[%c0_16, %c0_17, %c0_18] : memref<18x18x32xf32, #tpu.memory_space<vmem>>, vector<18x18x32xf32>
    tpu.vector_store %arg11[%c0_16, %c0_17, %c0_18], %25 {strides = array<i32>} : memref<18x18x32xf32, #tpu.memory_space<vmem>>, vector<18x18x32xf32>,
    %27 = vector.shape_cast %24 : vector<256x32xf32> to vector<16x16x32xf32>
    %c1_19 = arith.constant 1 : index
    %c1_20 = arith.constant 1 : index
    %c0_21 = arith.constant 0 : index
    %28 = vector.load %arg11[%c1_19, %c1_20, %c0_21] : memref<18x18x32xf32, #tpu.memory_space<vmem>>, vector<16x16x32xf32>
    tpu.vector_store %arg11[%c1_19, %c1_20, %c0_21], %27 {strides = array<i32>} : memref<18x18x32xf32, #tpu.memory_space<vmem>>, vector<16x16x32xf32>,
    %cst_22 = arith.constant 0.000000e+00 : f32
    %29 = vector.broadcast %cst_22 : f32 to vector<256x64xf32>
    %c0_23 = arith.constant 0 : index
    %c0_24 = arith.constant 0 : index
    %c0_25 = arith.constant 0 : index
    %30 = vector.load %arg11[%c0_23, %c0_24, %c0_25] : memref<18x18x32xf32, #tpu.memory_space<vmem>>, vector<16x16x32xf32>
    %31 = vector.shape_cast %30 : vector<16x16x32xf32> to vector<256x32xf32>
    %32 = arith.truncf %31 : vector<256x32xf32> to vector<256x32xbf16>
    %c0_26 = arith.constant 0 : index
    %c0_27 = arith.constant 0 : index
    %c0_28 = arith.constant 0 : index
    %33 = vector.load %arg6[%c0_26, %c0_27, %c0_28] : memref<9x32x64xbf16, #tpu.memory_space<vmem>>, vector<1x32x64xbf16>
    %34 = vector.shape_cast %33 : vector<1x32x64xbf16> to vector<32x64xbf16>
    %cst_29 = arith.constant dense<0.000000e+00> : vector<256x64xf32>
    %35 = tpu.matmul %32, %34, %cst_29 {dimension_numbers = #tpu.dot_dimension_numbers<[1], [0], [0], [1], [0, 0, 1, 1], [], []>} : vector<256x32xbf16>, vector<32x64xbf16>, vector<256x64xf32> -> vector<256x64xf32>
    %36 = arith.addf %29, %35 : vector<256x64xf32>
    %c0_30 = arith.constant 0 : index
    %c1_31 = arith.constant 1 : index
    %c0_32 = arith.constant 0 : index
    %37 = vector.load %arg11[%c0_30, %c1_31, %c0_32] : memref<18x18x32xf32, #tpu.memory_space<vmem>>, vector<16x16x32xf32>
    %38 = vector.shape_cast %37 : vector<16x16x32xf32> to vector<256x32xf32>
    %39 = arith.truncf %38 : vector<256x32xf32> to vector<256x32xbf16>
    %c1_33 = arith.constant 1 : index
    %c0_34 = arith.constant 0 : index
    %c0_35 = arith.constant 0 : index
    %40 = vector.load %arg6[%c1_33, %c0_34, %c0_35] : memref<9x32x64xbf16, #tpu.memory_space<vmem>>, vector<1x32x64xbf16>
    %41 = vector.shape_cast %40 : vector<1x32x64xbf16> to vector<32x64xbf16>
    %cst_36 = arith.constant dense<0.000000e+00> : vector<256x64xf32>
    %42 = tpu.matmul %39, %41, %cst_36 {dimension_numbers = #tpu.dot_dimension_numbers<[1], [0], [0], [1], [0, 0, 1, 1], [], []>} : vector<256x32xbf16>, vector<32x64xbf16>, vector<256x64xf32> -> vector<256x64xf32>
    %43 = arith.addf %36, %42 : vector<256x64xf32>
    %c0_37 = arith.constant 0 : index
    %c2 = arith.constant 2 : index
    %c0_38 = arith.constant 0 : index
    %44 = vector.load %arg11[%c0_37, %c2, %c0_38] : memref<18x18x32xf32, #tpu.memory_space<vmem>>, vector<16x16x32xf32>
    %45 = vector.shape_cast %44 : vector<16x16x32xf32> to vector<256x32xf32>
    %46 = arith.truncf %45 : vector<256x32xf32> to vector<256x32xbf16>
    %c2_39 = arith.constant 2 : index
    %c0_40 = arith.constant 0 : index
    %c0_41 = arith.constant 0 : index
    %47 = vector.load %arg6[%c2_39, %c0_40, %c0_41] : memref<9x32x64xbf16, #tpu.memory_space<vmem>>, vector<1x32x64xbf16>
    %48 = vector.shape_cast %47 : vector<1x32x64xbf16> to vector<32x64xbf16>
    %cst_42 = arith.constant dense<0.000000e+00> : vector<256x64xf32>
    %49 = tpu.matmul %46, %48, %cst_42 {dimension_numbers = #tpu.dot_dimension_numbers<[1], [0], [0], [1], [0, 0, 1, 1], [], []>} : vector<256x32xbf16>, vector<32x64xbf16>, vector<256x64xf32> -> vector<256x64xf32>
    %50 = arith.addf %43, %49 : vector<256x64xf32>
    %c1_43 = arith.constant 1 : index
    %c0_44 = arith.constant 0 : index
    %c0_45 = arith.constant 0 : index
    %51 = vector.load %arg11[%c1_43, %c0_44, %c0_45] : memref<18x18x32xf32, #tpu.memory_space<vmem>>, vector<16x16x32xf32>
    %52 = vector.shape_cast %51 : vector<16x16x32xf32> to vector<256x32xf32>
    %53 = arith.truncf %52 : vector<256x32xf32> to vector<256x32xbf16>
    %c3 = arith.constant 3 : index
    %c0_46 = arith.constant 0 : index
    %c0_47 = arith.constant 0 : index
    %54 = vector.load %arg6[%c3, %c0_46, %c0_47] : memref<9x32x64xbf16, #tpu.memory_space<vmem>>, vector<1x32x64xbf16>
    %55 = vector.shape_cast %54 : vector<1x32x64xbf16> to vector<32x64xbf16>
    %cst_48 = arith.constant dense<0.000000e+00> : vector<256x64xf32>
    %56 = tpu.matmul %53, %55, %cst_48 {dimension_numbers = #tpu.dot_dimension_numbers<[1], [0], [0], [1], [0, 0, 1, 1], [], []>} : vector<256x32xbf16>, vector<32x64xbf16>, vector<256x64xf32> -> vector<256x64xf32>
    %57 = arith.addf %50, %56 : vector<256x64xf32>
    %c1_49 = arith.constant 1 : index
    %c1_50 = arith.constant 1 : index
    %c0_51 = arith.constant 0 : index
    %58 = vector.load %arg11[%c1_49, %c1_50, %c0_51] : memref<18x18x32xf32, #tpu.memory_space<vmem>>, vector<16x16x32xf32>
    %59 = vector.shape_cast %58 : vector<16x16x32xf32> to vector<256x32xf32>
    %60 = arith.truncf %59 : vector<256x32xf32> to vector<256x32xbf16>
    %c4 = arith.constant 4 : index
    %c0_52 = arith.constant 0 : index
    %c0_53 = arith.constant 0 : index
    %61 = vector.load %arg6[%c4, %c0_52, %c0_53] : memref<9x32x64xbf16, #tpu.memory_space<vmem>>, vector<1x32x64xbf16>
    %62 = vector.shape_cast %61 : vector<1x32x64xbf16> to vector<32x64xbf16>
    %cst_54 = arith.constant dense<0.000000e+00> : vector<256x64xf32>
    %63 = tpu.matmul %60, %62, %cst_54 {dimension_numbers = #tpu.dot_dimension_numbers<[1], [0], [0], [1], [0, 0, 1, 1], [], []>} : vector<256x32xbf16>, vector<32x64xbf16>, vector<256x64xf32> -> vector<256x64xf32>
    %64 = arith.addf %57, %63 : vector<256x64xf32>
    %c1_55 = arith.constant 1 : index
    %c2_56 = arith.constant 2 : index
    %c0_57 = arith.constant 0 : index
    %65 = vector.load %arg11[%c1_55, %c2_56, %c0_57] : memref<18x18x32xf32, #tpu.memory_space<vmem>>, vector<16x16x32xf32>
    %66 = vector.shape_cast %65 : vector<16x16x32xf32> to vector<256x32xf32>
    %67 = arith.truncf %66 : vector<256x32xf32> to vector<256x32xbf16>
    %c5 = arith.constant 5 : index
    %c0_58 = arith.constant 0 : index
    %c0_59 = arith.constant 0 : index
    %68 = vector.load %arg6[%c5, %c0_58, %c0_59] : memref<9x32x64xbf16, #tpu.memory_space<vmem>>, vector<1x32x64xbf16>
    %69 = vector.shape_cast %68 : vector<1x32x64xbf16> to vector<32x64xbf16>
    %cst_60 = arith.constant dense<0.000000e+00> : vector<256x64xf32>
    %70 = tpu.matmul %67, %69, %cst_60 {dimension_numbers = #tpu.dot_dimension_numbers<[1], [0], [0], [1], [0, 0, 1, 1], [], []>} : vector<256x32xbf16>, vector<32x64xbf16>, vector<256x64xf32> -> vector<256x64xf32>
    %71 = arith.addf %64, %70 : vector<256x64xf32>
    %c2_61 = arith.constant 2 : index
    %c0_62 = arith.constant 0 : index
    %c0_63 = arith.constant 0 : index
    %72 = vector.load %arg11[%c2_61, %c0_62, %c0_63] : memref<18x18x32xf32, #tpu.memory_space<vmem>>, vector<16x16x32xf32>
    %73 = vector.shape_cast %72 : vector<16x16x32xf32> to vector<256x32xf32>
    %74 = arith.truncf %73 : vector<256x32xf32> to vector<256x32xbf16>
    %c6 = arith.constant 6 : index
    %c0_64 = arith.constant 0 : index
    %c0_65 = arith.constant 0 : index
    %75 = vector.load %arg6[%c6, %c0_64, %c0_65] : memref<9x32x64xbf16, #tpu.memory_space<vmem>>, vector<1x32x64xbf16>
    %76 = vector.shape_cast %75 : vector<1x32x64xbf16> to vector<32x64xbf16>
    %cst_66 = arith.constant dense<0.000000e+00> : vector<256x64xf32>
    %77 = tpu.matmul %74, %76, %cst_66 {dimension_numbers = #tpu.dot_dimension_numbers<[1], [0], [0], [1], [0, 0, 1, 1], [], []>} : vector<256x32xbf16>, vector<32x64xbf16>, vector<256x64xf32> -> vector<256x64xf32>
    %78 = arith.addf %71, %77 : vector<256x64xf32>
    %c2_67 = arith.constant 2 : index
    %c1_68 = arith.constant 1 : index
    %c0_69 = arith.constant 0 : index
    %79 = vector.load %arg11[%c2_67, %c1_68, %c0_69] : memref<18x18x32xf32, #tpu.memory_space<vmem>>, vector<16x16x32xf32>
    %80 = vector.shape_cast %79 : vector<16x16x32xf32> to vector<256x32xf32>
    %81 = arith.truncf %80 : vector<256x32xf32> to vector<256x32xbf16>
    %c7 = arith.constant 7 : index
    %c0_70 = arith.constant 0 : index
    %c0_71 = arith.constant 0 : index
    %82 = vector.load %arg6[%c7, %c0_70, %c0_71] : memref<9x32x64xbf16, #tpu.memory_space<vmem>>, vector<1x32x64xbf16>
    %83 = vector.shape_cast %82 : vector<1x32x64xbf16> to vector<32x64xbf16>
    %cst_72 = arith.constant dense<0.000000e+00> : vector<256x64xf32>
    %84 = tpu.matmul %81, %83, %cst_72 {dimension_numbers = #tpu.dot_dimension_numbers<[1], [0], [0], [1], [0, 0, 1, 1], [], []>} : vector<256x32xbf16>, vector<32x64xbf16>, vector<256x64xf32> -> vector<256x64xf32>
    %85 = arith.addf %78, %84 : vector<256x64xf32>
    %c2_73 = arith.constant 2 : index
    %c2_74 = arith.constant 2 : index
    %c0_75 = arith.constant 0 : index
    %86 = vector.load %arg11[%c2_73, %c2_74, %c0_75] : memref<18x18x32xf32, #tpu.memory_space<vmem>>, vector<16x16x32xf32>
    %87 = vector.shape_cast %86 : vector<16x16x32xf32> to vector<256x32xf32>
    %88 = arith.truncf %87 : vector<256x32xf32> to vector<256x32xbf16>
    %c8 = arith.constant 8 : index
    %c0_76 = arith.constant 0 : index
    %c0_77 = arith.constant 0 : index
    %89 = vector.load %arg6[%c8, %c0_76, %c0_77] : memref<9x32x64xbf16, #tpu.memory_space<vmem>>, vector<1x32x64xbf16>
    %90 = vector.shape_cast %89 : vector<1x32x64xbf16> to vector<32x64xbf16>
    %cst_78 = arith.constant dense<0.000000e+00> : vector<256x64xf32>
    %91 = tpu.matmul %88, %90, %cst_78 {dimension_numbers = #tpu.dot_dimension_numbers<[1], [0], [0], [1], [0, 0, 1, 1], [], []>} : vector<256x32xbf16>, vector<32x64xbf16>, vector<256x64xf32> -> vector<256x64xf32>
    %92 = arith.addf %85, %91 : vector<256x64xf32>
    %c0_79 = arith.constant 0 : index
    %c0_80 = arith.constant 0 : index
    %93 = vector.load %arg7[%c0_79, %c0_80] : memref<1x64xf32, #tpu.memory_space<vmem>>, vector<1x64xf32>
    %94 = vector.broadcast %93 : vector<1x64xf32> to vector<256x64xf32>
    %95 = arith.addf %92, %94 : vector<256x64xf32>
    %cst_81 = arith.constant 0.000000e+00 : f32
    %96 = vector.broadcast %cst_81 : f32 to vector<256x64xf32>
    %97 = arith.cmpf oge, %95, %96 : vector<256x64xf32>
    %cst_82 = arith.constant 1.000000e-01 : f32
    %98 = vector.broadcast %cst_82 : f32 to vector<256x64xf32>
    %99 = arith.mulf %98, %95 : vector<256x64xf32>
    %100 = arith.select %97, %95, %99 : vector<256x64xi1>, vector<256x64xf32>
    %101 = arith.truncf %2 : vector<256x4xf32> to vector<256x4xbf16>
    %c0_83 = arith.constant 0 : index
    %c0_84 = arith.constant 0 : index
    %102 = vector.load %arg8[%c0_83, %c0_84] : memref<4x64xbf16, #tpu.memory_space<vmem>>, vector<4x64xbf16>
    %cst_85 = arith.constant dense<0.000000e+00> : vector<256x64xf32>
    %103 = tpu.matmul %101, %102, %cst_85 {dimension_numbers = #tpu.dot_dimension_numbers<[1], [0], [0], [1], [0, 0, 1, 1], [], []>} : vector<256x4xbf16>, vector<4x64xbf16>, vector<256x64xf32> -> vector<256x64xf32>
    %c0_86 = arith.constant 0 : index
    %c0_87 = arith.constant 0 : index
    %104 = vector.load %arg9[%c0_86, %c0_87] : memref<1x64xf32, #tpu.memory_space<vmem>>, vector<1x64xf32>
    %105 = vector.broadcast %104 : vector<1x64xf32> to vector<256x64xf32>
    %106 = arith.addf %103, %105 : vector<256x64xf32>
    %107 = arith.addf %106, %100 : vector<256x64xf32>
    %c0_88 = arith.constant 0 : index
    %c0_89 = arith.constant 0 : index
    %c0_90 = arith.constant 0 : index
    %108 = vector.load %arg10[%c0_88, %c0_89, %c0_90] : memref<1x256x64xf32, #tpu.memory_space<vmem>>, vector<1x256x64xf32>
    %109 = vector.shape_cast %108 : vector<1x256x64xf32> to vector<256x64xf32>
    %110 = vector.shape_cast %107 : vector<256x64xf32> to vector<1x256x64xf32>
    tpu.vector_store %arg10[%c0_88, %c0_89, %c0_90], %110 {strides = array<i32>} : memref<1x256x64xf32, #tpu.memory_space<vmem>>, vector<1x256x64xf32>,
    return
  }
  func.func @transform_0(%arg0: i32) -> (i32, i32, i32, i32) {
    %c0_i32 = arith.constant 0 : i32
    %c0_i32_0 = arith.constant 0 : i32
    %c0_i32_1 = arith.constant 0 : i32
    %c0_i32_2 = arith.constant 0 : i32
    return %arg0, %c0_i32, %c0_i32_0, %c0_i32_1 : i32, i32, i32, i32
  }
  func.func @transform_1(%arg0: i32) -> (i32, i32) {
    %c0_i32 = arith.constant 0 : i32
    %c0_i32_0 = arith.constant 0 : i32
    %c0_i32_1 = arith.constant 0 : i32
    return %c0_i32, %c0_i32_0 : i32, i32
  }
  func.func @transform_2(%arg0: i32) -> (i32, i32) {
    %c0_i32 = arith.constant 0 : i32
    %c0_i32_0 = arith.constant 0 : i32
    %c0_i32_1 = arith.constant 0 : i32
    return %c0_i32, %c0_i32_0 : i32, i32
  }
  func.func @transform_3(%arg0: i32) -> (i32, i32) {
    %c0_i32 = arith.constant 0 : i32
    %c0_i32_0 = arith.constant 0 : i32
    %c0_i32_1 = arith.constant 0 : i32
    return %c0_i32, %c0_i32_0 : i32, i32
  }
  func.func @transform_4(%arg0: i32) -> (i32, i32) {
    %c0_i32 = arith.constant 0 : i32
    %c0_i32_0 = arith.constant 0 : i32
    %c0_i32_1 = arith.constant 0 : i32
    return %c0_i32, %c0_i32_0 : i32, i32
  }
  func.func @transform_5(%arg0: i32) -> (i32, i32, i32) {
    %c0_i32 = arith.constant 0 : i32
    %c0_i32_0 = arith.constant 0 : i32
    %c0_i32_1 = arith.constant 0 : i32
    %c0_i32_2 = arith.constant 0 : i32
    return %c0_i32, %c0_i32_0, %c0_i32_1 : i32, i32, i32
  }
  func.func @transform_6(%arg0: i32) -> (i32, i32) {
    %c0_i32 = arith.constant 0 : i32
    %c0_i32_0 = arith.constant 0 : i32
    %c0_i32_1 = arith.constant 0 : i32
    return %c0_i32, %c0_i32_0 : i32, i32
  }
  func.func @transform_7(%arg0: i32) -> (i32, i32) {
    %c0_i32 = arith.constant 0 : i32
    %c0_i32_0 = arith.constant 0 : i32
    %c0_i32_1 = arith.constant 0 : i32
    return %c0_i32, %c0_i32_0 : i32, i32
  }
  func.func @transform_8(%arg0: i32) -> (i32, i32) {
    %c0_i32 = arith.constant 0 : i32
    %c0_i32_0 = arith.constant 0 : i32
    %c0_i32_1 = arith.constant 0 : i32
    return %c0_i32, %c0_i32_0 : i32, i32
  }
  func.func @transform_9(%arg0: i32) -> (i32, i32, i32) {
    %c0_i32 = arith.constant 0 : i32
    %c0_i32_0 = arith.constant 0 : i32
    %c0_i32_1 = arith.constant 0 : i32
    return %arg0, %c0_i32, %c0_i32_0 : i32, i32, i32
  }
}

module attributes {stable_mosaic.version = 11 : i64} {
  func.func @_down_kernel(%arg0: i32, %arg1: memref<4x9x9x64xf32, #tpu.memory_space<vmem>>, %arg2: memref<16x64x64xbf16, #tpu.memory_space<vmem>>, %arg3: memref<1x64xf32, #tpu.memory_space<vmem>>, %arg4: memref<1x64xf32, #tpu.memory_space<vmem>>, %arg5: memref<1x64xf32, #tpu.memory_space<vmem>>, %arg6: memref<64x64xf32, #tpu.memory_space<vmem>>, %arg7: memref<1x64x64xf32, #tpu.memory_space<vmem>>) attributes {dimension_semantics = [#tpu.dimension_semantics<parallel>], iteration_bounds = array<i64: 2>, scalar_prefetch = 0 : i64, scratch_operands = 0 : i64, tpu.core_type = #tpu.core_type<tc>, window_params = [{transform_indices = @transform_0, window_bounds = array<i64: 4, 9, 9, 64>}, {pipeline_mode = #tpu.pipeline_mode<synchronous>, transform_indices = @transform_1, window_bounds = array<i64: 16, 64, 64>}, {pipeline_mode = #tpu.pipeline_mode<synchronous>, transform_indices = @transform_2, window_bounds = array<i64: 1, 64>}, {pipeline_mode = #tpu.pipeline_mode<synchronous>, transform_indices = @transform_3, window_bounds = array<i64: 1, 64>}, {pipeline_mode = #tpu.pipeline_mode<synchronous>, transform_indices = @transform_4, window_bounds = array<i64: 1, 64>}, {pipeline_mode = #tpu.pipeline_mode<synchronous>, transform_indices = @transform_5, window_bounds = array<i64: 64, 64>}, {transform_indices = @transform_6, window_bounds = array<i64: 1, 64, 64>}]} {
    %cst = arith.constant 0.000000e+00 : f32
    %0 = vector.broadcast %cst : f32 to vector<64x64xf32>
    %c0 = arith.constant 0 : index
    %c0_0 = arith.constant 0 : index
    %c0_1 = arith.constant 0 : index
    %c0_2 = arith.constant 0 : index
    %1 = vector.load %arg1[%c0, %c0_0, %c0_1, %c0_2] : memref<4x9x9x64xf32, #tpu.memory_space<vmem>>, vector<1x8x8x64xf32>
    %2 = vector.shape_cast %1 : vector<1x8x8x64xf32> to vector<8x8x64xf32>
    %3 = vector.shape_cast %2 : vector<8x8x64xf32> to vector<64x64xf32>
    %4 = arith.truncf %3 : vector<64x64xf32> to vector<64x64xbf16>
    %c0_3 = arith.constant 0 : index
    %c0_4 = arith.constant 0 : index
    %c0_5 = arith.constant 0 : index
    %5 = vector.load %arg2[%c0_3, %c0_4, %c0_5] : memref<16x64x64xbf16, #tpu.memory_space<vmem>>, vector<1x64x64xbf16>
    %6 = vector.shape_cast %5 : vector<1x64x64xbf16> to vector<64x64xbf16>
    %cst_6 = arith.constant dense<0.000000e+00> : vector<64x64xf32>
    %7 = tpu.matmul %4, %6, %cst_6 {dimension_numbers = #tpu.dot_dimension_numbers<[1], [0], [0], [1], [0, 0, 1, 1], [], []>} : vector<64x64xbf16>, vector<64x64xbf16>, vector<64x64xf32> -> vector<64x64xf32>
    %8 = arith.addf %0, %7 : vector<64x64xf32>
    %c1 = arith.constant 1 : index
    %c0_7 = arith.constant 0 : index
    %c0_8 = arith.constant 0 : index
    %c0_9 = arith.constant 0 : index
    %9 = vector.load %arg1[%c1, %c0_7, %c0_8, %c0_9] : memref<4x9x9x64xf32, #tpu.memory_space<vmem>>, vector<1x8x8x64xf32>
    %10 = vector.shape_cast %9 : vector<1x8x8x64xf32> to vector<8x8x64xf32>
    %11 = vector.shape_cast %10 : vector<8x8x64xf32> to vector<64x64xf32>
    %12 = arith.truncf %11 : vector<64x64xf32> to vector<64x64xbf16>
    %c1_10 = arith.constant 1 : index
    %c0_11 = arith.constant 0 : index
    %c0_12 = arith.constant 0 : index
    %13 = vector.load %arg2[%c1_10, %c0_11, %c0_12] : memref<16x64x64xbf16, #tpu.memory_space<vmem>>, vector<1x64x64xbf16>
    %14 = vector.shape_cast %13 : vector<1x64x64xbf16> to vector<64x64xbf16>
    %cst_13 = arith.constant dense<0.000000e+00> : vector<64x64xf32>
    %15 = tpu.matmul %12, %14, %cst_13 {dimension_numbers = #tpu.dot_dimension_numbers<[1], [0], [0], [1], [0, 0, 1, 1], [], []>} : vector<64x64xbf16>, vector<64x64xbf16>, vector<64x64xf32> -> vector<64x64xf32>
    %16 = arith.addf %8, %15 : vector<64x64xf32>
    %c0_14 = arith.constant 0 : index
    %c0_15 = arith.constant 0 : index
    %c1_16 = arith.constant 1 : index
    %c0_17 = arith.constant 0 : index
    %17 = vector.load %arg1[%c0_14, %c0_15, %c1_16, %c0_17] : memref<4x9x9x64xf32, #tpu.memory_space<vmem>>, vector<1x8x8x64xf32>
    %18 = vector.shape_cast %17 : vector<1x8x8x64xf32> to vector<8x8x64xf32>
    %19 = vector.shape_cast %18 : vector<8x8x64xf32> to vector<64x64xf32>
    %20 = arith.truncf %19 : vector<64x64xf32> to vector<64x64xbf16>
    %c2 = arith.constant 2 : index
    %c0_18 = arith.constant 0 : index
    %c0_19 = arith.constant 0 : index
    %21 = vector.load %arg2[%c2, %c0_18, %c0_19] : memref<16x64x64xbf16, #tpu.memory_space<vmem>>, vector<1x64x64xbf16>
    %22 = vector.shape_cast %21 : vector<1x64x64xbf16> to vector<64x64xbf16>
    %cst_20 = arith.constant dense<0.000000e+00> : vector<64x64xf32>
    %23 = tpu.matmul %20, %22, %cst_20 {dimension_numbers = #tpu.dot_dimension_numbers<[1], [0], [0], [1], [0, 0, 1, 1], [], []>} : vector<64x64xbf16>, vector<64x64xbf16>, vector<64x64xf32> -> vector<64x64xf32>
    %24 = arith.addf %16, %23 : vector<64x64xf32>
    %c1_21 = arith.constant 1 : index
    %c0_22 = arith.constant 0 : index
    %c1_23 = arith.constant 1 : index
    %c0_24 = arith.constant 0 : index
    %25 = vector.load %arg1[%c1_21, %c0_22, %c1_23, %c0_24] : memref<4x9x9x64xf32, #tpu.memory_space<vmem>>, vector<1x8x8x64xf32>
    %26 = vector.shape_cast %25 : vector<1x8x8x64xf32> to vector<8x8x64xf32>
    %27 = vector.shape_cast %26 : vector<8x8x64xf32> to vector<64x64xf32>
    %28 = arith.truncf %27 : vector<64x64xf32> to vector<64x64xbf16>
    %c3 = arith.constant 3 : index
    %c0_25 = arith.constant 0 : index
    %c0_26 = arith.constant 0 : index
    %29 = vector.load %arg2[%c3, %c0_25, %c0_26] : memref<16x64x64xbf16, #tpu.memory_space<vmem>>, vector<1x64x64xbf16>
    %30 = vector.shape_cast %29 : vector<1x64x64xbf16> to vector<64x64xbf16>
    %cst_27 = arith.constant dense<0.000000e+00> : vector<64x64xf32>
    %31 = tpu.matmul %28, %30, %cst_27 {dimension_numbers = #tpu.dot_dimension_numbers<[1], [0], [0], [1], [0, 0, 1, 1], [], []>} : vector<64x64xbf16>, vector<64x64xbf16>, vector<64x64xf32> -> vector<64x64xf32>
    %32 = arith.addf %24, %31 : vector<64x64xf32>
    %c2_28 = arith.constant 2 : index
    %c0_29 = arith.constant 0 : index
    %c0_30 = arith.constant 0 : index
    %c0_31 = arith.constant 0 : index
    %33 = vector.load %arg1[%c2_28, %c0_29, %c0_30, %c0_31] : memref<4x9x9x64xf32, #tpu.memory_space<vmem>>, vector<1x8x8x64xf32>
    %34 = vector.shape_cast %33 : vector<1x8x8x64xf32> to vector<8x8x64xf32>
    %35 = vector.shape_cast %34 : vector<8x8x64xf32> to vector<64x64xf32>
    %36 = arith.truncf %35 : vector<64x64xf32> to vector<64x64xbf16>
    %c4 = arith.constant 4 : index
    %c0_32 = arith.constant 0 : index
    %c0_33 = arith.constant 0 : index
    %37 = vector.load %arg2[%c4, %c0_32, %c0_33] : memref<16x64x64xbf16, #tpu.memory_space<vmem>>, vector<1x64x64xbf16>
    %38 = vector.shape_cast %37 : vector<1x64x64xbf16> to vector<64x64xbf16>
    %cst_34 = arith.constant dense<0.000000e+00> : vector<64x64xf32>
    %39 = tpu.matmul %36, %38, %cst_34 {dimension_numbers = #tpu.dot_dimension_numbers<[1], [0], [0], [1], [0, 0, 1, 1], [], []>} : vector<64x64xbf16>, vector<64x64xbf16>, vector<64x64xf32> -> vector<64x64xf32>
    %40 = arith.addf %32, %39 : vector<64x64xf32>
    %c3_35 = arith.constant 3 : index
    %c0_36 = arith.constant 0 : index
    %c0_37 = arith.constant 0 : index
    %c0_38 = arith.constant 0 : index
    %41 = vector.load %arg1[%c3_35, %c0_36, %c0_37, %c0_38] : memref<4x9x9x64xf32, #tpu.memory_space<vmem>>, vector<1x8x8x64xf32>
    %42 = vector.shape_cast %41 : vector<1x8x8x64xf32> to vector<8x8x64xf32>
    %43 = vector.shape_cast %42 : vector<8x8x64xf32> to vector<64x64xf32>
    %44 = arith.truncf %43 : vector<64x64xf32> to vector<64x64xbf16>
    %c5 = arith.constant 5 : index
    %c0_39 = arith.constant 0 : index
    %c0_40 = arith.constant 0 : index
    %45 = vector.load %arg2[%c5, %c0_39, %c0_40] : memref<16x64x64xbf16, #tpu.memory_space<vmem>>, vector<1x64x64xbf16>
    %46 = vector.shape_cast %45 : vector<1x64x64xbf16> to vector<64x64xbf16>
    %cst_41 = arith.constant dense<0.000000e+00> : vector<64x64xf32>
    %47 = tpu.matmul %44, %46, %cst_41 {dimension_numbers = #tpu.dot_dimension_numbers<[1], [0], [0], [1], [0, 0, 1, 1], [], []>} : vector<64x64xbf16>, vector<64x64xbf16>, vector<64x64xf32> -> vector<64x64xf32>
    %48 = arith.addf %40, %47 : vector<64x64xf32>
    %c2_42 = arith.constant 2 : index
    %c0_43 = arith.constant 0 : index
    %c1_44 = arith.constant 1 : index
    %c0_45 = arith.constant 0 : index
    %49 = vector.load %arg1[%c2_42, %c0_43, %c1_44, %c0_45] : memref<4x9x9x64xf32, #tpu.memory_space<vmem>>, vector<1x8x8x64xf32>
    %50 = vector.shape_cast %49 : vector<1x8x8x64xf32> to vector<8x8x64xf32>
    %51 = vector.shape_cast %50 : vector<8x8x64xf32> to vector<64x64xf32>
    %52 = arith.truncf %51 : vector<64x64xf32> to vector<64x64xbf16>
    %c6 = arith.constant 6 : index
    %c0_46 = arith.constant 0 : index
    %c0_47 = arith.constant 0 : index
    %53 = vector.load %arg2[%c6, %c0_46, %c0_47] : memref<16x64x64xbf16, #tpu.memory_space<vmem>>, vector<1x64x64xbf16>
    %54 = vector.shape_cast %53 : vector<1x64x64xbf16> to vector<64x64xbf16>
    %cst_48 = arith.constant dense<0.000000e+00> : vector<64x64xf32>
    %55 = tpu.matmul %52, %54, %cst_48 {dimension_numbers = #tpu.dot_dimension_numbers<[1], [0], [0], [1], [0, 0, 1, 1], [], []>} : vector<64x64xbf16>, vector<64x64xbf16>, vector<64x64xf32> -> vector<64x64xf32>
    %56 = arith.addf %48, %55 : vector<64x64xf32>
    %c3_49 = arith.constant 3 : index
    %c0_50 = arith.constant 0 : index
    %c1_51 = arith.constant 1 : index
    %c0_52 = arith.constant 0 : index
    %57 = vector.load %arg1[%c3_49, %c0_50, %c1_51, %c0_52] : memref<4x9x9x64xf32, #tpu.memory_space<vmem>>, vector<1x8x8x64xf32>
    %58 = vector.shape_cast %57 : vector<1x8x8x64xf32> to vector<8x8x64xf32>
    %59 = vector.shape_cast %58 : vector<8x8x64xf32> to vector<64x64xf32>
    %60 = arith.truncf %59 : vector<64x64xf32> to vector<64x64xbf16>
    %c7 = arith.constant 7 : index
    %c0_53 = arith.constant 0 : index
    %c0_54 = arith.constant 0 : index
    %61 = vector.load %arg2[%c7, %c0_53, %c0_54] : memref<16x64x64xbf16, #tpu.memory_space<vmem>>, vector<1x64x64xbf16>
    %62 = vector.shape_cast %61 : vector<1x64x64xbf16> to vector<64x64xbf16>
    %cst_55 = arith.constant dense<0.000000e+00> : vector<64x64xf32>
    %63 = tpu.matmul %60, %62, %cst_55 {dimension_numbers = #tpu.dot_dimension_numbers<[1], [0], [0], [1], [0, 0, 1, 1], [], []>} : vector<64x64xbf16>, vector<64x64xbf16>, vector<64x64xf32> -> vector<64x64xf32>
    %64 = arith.addf %56, %63 : vector<64x64xf32>
    %c0_56 = arith.constant 0 : index
    %c1_57 = arith.constant 1 : index
    %c0_58 = arith.constant 0 : index
    %c0_59 = arith.constant 0 : index
    %65 = vector.load %arg1[%c0_56, %c1_57, %c0_58, %c0_59] : memref<4x9x9x64xf32, #tpu.memory_space<vmem>>, vector<1x8x8x64xf32>
    %66 = vector.shape_cast %65 : vector<1x8x8x64xf32> to vector<8x8x64xf32>
    %67 = vector.shape_cast %66 : vector<8x8x64xf32> to vector<64x64xf32>
    %68 = arith.truncf %67 : vector<64x64xf32> to vector<64x64xbf16>
    %c8 = arith.constant 8 : index
    %c0_60 = arith.constant 0 : index
    %c0_61 = arith.constant 0 : index
    %69 = vector.load %arg2[%c8, %c0_60, %c0_61] : memref<16x64x64xbf16, #tpu.memory_space<vmem>>, vector<1x64x64xbf16>
    %70 = vector.shape_cast %69 : vector<1x64x64xbf16> to vector<64x64xbf16>
    %cst_62 = arith.constant dense<0.000000e+00> : vector<64x64xf32>
    %71 = tpu.matmul %68, %70, %cst_62 {dimension_numbers = #tpu.dot_dimension_numbers<[1], [0], [0], [1], [0, 0, 1, 1], [], []>} : vector<64x64xbf16>, vector<64x64xbf16>, vector<64x64xf32> -> vector<64x64xf32>
    %72 = arith.addf %64, %71 : vector<64x64xf32>
    %c1_63 = arith.constant 1 : index
    %c1_64 = arith.constant 1 : index
    %c0_65 = arith.constant 0 : index
    %c0_66 = arith.constant 0 : index
    %73 = vector.load %arg1[%c1_63, %c1_64, %c0_65, %c0_66] : memref<4x9x9x64xf32, #tpu.memory_space<vmem>>, vector<1x8x8x64xf32>
    %74 = vector.shape_cast %73 : vector<1x8x8x64xf32> to vector<8x8x64xf32>
    %75 = vector.shape_cast %74 : vector<8x8x64xf32> to vector<64x64xf32>
    %76 = arith.truncf %75 : vector<64x64xf32> to vector<64x64xbf16>
    %c9 = arith.constant 9 : index
    %c0_67 = arith.constant 0 : index
    %c0_68 = arith.constant 0 : index
    %77 = vector.load %arg2[%c9, %c0_67, %c0_68] : memref<16x64x64xbf16, #tpu.memory_space<vmem>>, vector<1x64x64xbf16>
    %78 = vector.shape_cast %77 : vector<1x64x64xbf16> to vector<64x64xbf16>
    %cst_69 = arith.constant dense<0.000000e+00> : vector<64x64xf32>
    %79 = tpu.matmul %76, %78, %cst_69 {dimension_numbers = #tpu.dot_dimension_numbers<[1], [0], [0], [1], [0, 0, 1, 1], [], []>} : vector<64x64xbf16>, vector<64x64xbf16>, vector<64x64xf32> -> vector<64x64xf32>
    %80 = arith.addf %72, %79 : vector<64x64xf32>
    %c0_70 = arith.constant 0 : index
    %c1_71 = arith.constant 1 : index
    %c1_72 = arith.constant 1 : index
    %c0_73 = arith.constant 0 : index
    %81 = vector.load %arg1[%c0_70, %c1_71, %c1_72, %c0_73] : memref<4x9x9x64xf32, #tpu.memory_space<vmem>>, vector<1x8x8x64xf32>
    %82 = vector.shape_cast %81 : vector<1x8x8x64xf32> to vector<8x8x64xf32>
    %83 = vector.shape_cast %82 : vector<8x8x64xf32> to vector<64x64xf32>
    %84 = arith.truncf %83 : vector<64x64xf32> to vector<64x64xbf16>
    %c10 = arith.constant 10 : index
    %c0_74 = arith.constant 0 : index
    %c0_75 = arith.constant 0 : index
    %85 = vector.load %arg2[%c10, %c0_74, %c0_75] : memref<16x64x64xbf16, #tpu.memory_space<vmem>>, vector<1x64x64xbf16>
    %86 = vector.shape_cast %85 : vector<1x64x64xbf16> to vector<64x64xbf16>
    %cst_76 = arith.constant dense<0.000000e+00> : vector<64x64xf32>
    %87 = tpu.matmul %84, %86, %cst_76 {dimension_numbers = #tpu.dot_dimension_numbers<[1], [0], [0], [1], [0, 0, 1, 1], [], []>} : vector<64x64xbf16>, vector<64x64xbf16>, vector<64x64xf32> -> vector<64x64xf32>
    %88 = arith.addf %80, %87 : vector<64x64xf32>
    %c1_77 = arith.constant 1 : index
    %c1_78 = arith.constant 1 : index
    %c1_79 = arith.constant 1 : index
    %c0_80 = arith.constant 0 : index
    %89 = vector.load %arg1[%c1_77, %c1_78, %c1_79, %c0_80] : memref<4x9x9x64xf32, #tpu.memory_space<vmem>>, vector<1x8x8x64xf32>
    %90 = vector.shape_cast %89 : vector<1x8x8x64xf32> to vector<8x8x64xf32>
    %91 = vector.shape_cast %90 : vector<8x8x64xf32> to vector<64x64xf32>
    %92 = arith.truncf %91 : vector<64x64xf32> to vector<64x64xbf16>
    %c11 = arith.constant 11 : index
    %c0_81 = arith.constant 0 : index
    %c0_82 = arith.constant 0 : index
    %93 = vector.load %arg2[%c11, %c0_81, %c0_82] : memref<16x64x64xbf16, #tpu.memory_space<vmem>>, vector<1x64x64xbf16>
    %94 = vector.shape_cast %93 : vector<1x64x64xbf16> to vector<64x64xbf16>
    %cst_83 = arith.constant dense<0.000000e+00> : vector<64x64xf32>
    %95 = tpu.matmul %92, %94, %cst_83 {dimension_numbers = #tpu.dot_dimension_numbers<[1], [0], [0], [1], [0, 0, 1, 1], [], []>} : vector<64x64xbf16>, vector<64x64xbf16>, vector<64x64xf32> -> vector<64x64xf32>
    %96 = arith.addf %88, %95 : vector<64x64xf32>
    %c2_84 = arith.constant 2 : index
    %c1_85 = arith.constant 1 : index
    %c0_86 = arith.constant 0 : index
    %c0_87 = arith.constant 0 : index
    %97 = vector.load %arg1[%c2_84, %c1_85, %c0_86, %c0_87] : memref<4x9x9x64xf32, #tpu.memory_space<vmem>>, vector<1x8x8x64xf32>
    %98 = vector.shape_cast %97 : vector<1x8x8x64xf32> to vector<8x8x64xf32>
    %99 = vector.shape_cast %98 : vector<8x8x64xf32> to vector<64x64xf32>
    %100 = arith.truncf %99 : vector<64x64xf32> to vector<64x64xbf16>
    %c12 = arith.constant 12 : index
    %c0_88 = arith.constant 0 : index
    %c0_89 = arith.constant 0 : index
    %101 = vector.load %arg2[%c12, %c0_88, %c0_89] : memref<16x64x64xbf16, #tpu.memory_space<vmem>>, vector<1x64x64xbf16>
    %102 = vector.shape_cast %101 : vector<1x64x64xbf16> to vector<64x64xbf16>
    %cst_90 = arith.constant dense<0.000000e+00> : vector<64x64xf32>
    %103 = tpu.matmul %100, %102, %cst_90 {dimension_numbers = #tpu.dot_dimension_numbers<[1], [0], [0], [1], [0, 0, 1, 1], [], []>} : vector<64x64xbf16>, vector<64x64xbf16>, vector<64x64xf32> -> vector<64x64xf32>
    %104 = arith.addf %96, %103 : vector<64x64xf32>
    %c3_91 = arith.constant 3 : index
    %c1_92 = arith.constant 1 : index
    %c0_93 = arith.constant 0 : index
    %c0_94 = arith.constant 0 : index
    %105 = vector.load %arg1[%c3_91, %c1_92, %c0_93, %c0_94] : memref<4x9x9x64xf32, #tpu.memory_space<vmem>>, vector<1x8x8x64xf32>
    %106 = vector.shape_cast %105 : vector<1x8x8x64xf32> to vector<8x8x64xf32>
    %107 = vector.shape_cast %106 : vector<8x8x64xf32> to vector<64x64xf32>
    %108 = arith.truncf %107 : vector<64x64xf32> to vector<64x64xbf16>
    %c13 = arith.constant 13 : index
    %c0_95 = arith.constant 0 : index
    %c0_96 = arith.constant 0 : index
    %109 = vector.load %arg2[%c13, %c0_95, %c0_96] : memref<16x64x64xbf16, #tpu.memory_space<vmem>>, vector<1x64x64xbf16>
    %110 = vector.shape_cast %109 : vector<1x64x64xbf16> to vector<64x64xbf16>
    %cst_97 = arith.constant dense<0.000000e+00> : vector<64x64xf32>
    %111 = tpu.matmul %108, %110, %cst_97 {dimension_numbers = #tpu.dot_dimension_numbers<[1], [0], [0], [1], [0, 0, 1, 1], [], []>} : vector<64x64xbf16>, vector<64x64xbf16>, vector<64x64xf32> -> vector<64x64xf32>
    %112 = arith.addf %104, %111 : vector<64x64xf32>
    %c2_98 = arith.constant 2 : index
    %c1_99 = arith.constant 1 : index
    %c1_100 = arith.constant 1 : index
    %c0_101 = arith.constant 0 : index
    %113 = vector.load %arg1[%c2_98, %c1_99, %c1_100, %c0_101] : memref<4x9x9x64xf32, #tpu.memory_space<vmem>>, vector<1x8x8x64xf32>
    %114 = vector.shape_cast %113 : vector<1x8x8x64xf32> to vector<8x8x64xf32>
    %115 = vector.shape_cast %114 : vector<8x8x64xf32> to vector<64x64xf32>
    %116 = arith.truncf %115 : vector<64x64xf32> to vector<64x64xbf16>
    %c14 = arith.constant 14 : index
    %c0_102 = arith.constant 0 : index
    %c0_103 = arith.constant 0 : index
    %117 = vector.load %arg2[%c14, %c0_102, %c0_103] : memref<16x64x64xbf16, #tpu.memory_space<vmem>>, vector<1x64x64xbf16>
    %118 = vector.shape_cast %117 : vector<1x64x64xbf16> to vector<64x64xbf16>
    %cst_104 = arith.constant dense<0.000000e+00> : vector<64x64xf32>
    %119 = tpu.matmul %116, %118, %cst_104 {dimension_numbers = #tpu.dot_dimension_numbers<[1], [0], [0], [1], [0, 0, 1, 1], [], []>} : vector<64x64xbf16>, vector<64x64xbf16>, vector<64x64xf32> -> vector<64x64xf32>
    %120 = arith.addf %112, %119 : vector<64x64xf32>
    %c3_105 = arith.constant 3 : index
    %c1_106 = arith.constant 1 : index
    %c1_107 = arith.constant 1 : index
    %c0_108 = arith.constant 0 : index
    %121 = vector.load %arg1[%c3_105, %c1_106, %c1_107, %c0_108] : memref<4x9x9x64xf32, #tpu.memory_space<vmem>>, vector<1x8x8x64xf32>
    %122 = vector.shape_cast %121 : vector<1x8x8x64xf32> to vector<8x8x64xf32>
    %123 = vector.shape_cast %122 : vector<8x8x64xf32> to vector<64x64xf32>
    %124 = arith.truncf %123 : vector<64x64xf32> to vector<64x64xbf16>
    %c15 = arith.constant 15 : index
    %c0_109 = arith.constant 0 : index
    %c0_110 = arith.constant 0 : index
    %125 = vector.load %arg2[%c15, %c0_109, %c0_110] : memref<16x64x64xbf16, #tpu.memory_space<vmem>>, vector<1x64x64xbf16>
    %126 = vector.shape_cast %125 : vector<1x64x64xbf16> to vector<64x64xbf16>
    %cst_111 = arith.constant dense<0.000000e+00> : vector<64x64xf32>
    %127 = tpu.matmul %124, %126, %cst_111 {dimension_numbers = #tpu.dot_dimension_numbers<[1], [0], [0], [1], [0, 0, 1, 1], [], []>} : vector<64x64xbf16>, vector<64x64xbf16>, vector<64x64xf32> -> vector<64x64xf32>
    %128 = arith.addf %120, %127 : vector<64x64xf32>
    %c0_112 = arith.constant 0 : index
    %c0_113 = arith.constant 0 : index
    %129 = vector.load %arg3[%c0_112, %c0_113] : memref<1x64xf32, #tpu.memory_space<vmem>>, vector<1x64xf32>
    %130 = vector.broadcast %129 : vector<1x64xf32> to vector<64x64xf32>
    %131 = arith.addf %128, %130 : vector<64x64xf32>
    %cst_114 = arith.constant dense<0.000000e+00> : vector<64xf32>
    %132 = vector.multi_reduction <add>, %131, %cst_114 [0] : vector<64x64xf32> to vector<64xf32>
    %133 = vector.shape_cast %132 : vector<64xf32> to vector<1x64xf32>
    %134 = arith.mulf %131, %131 : vector<64x64xf32>
    %cst_115 = arith.constant dense<0.000000e+00> : vector<64xf32>
    %135 = vector.multi_reduction <add>, %134, %cst_115 [0] : vector<64x64xf32> to vector<64xf32>
    %136 = vector.shape_cast %135 : vector<64xf32> to vector<1x64xf32>
    %c0_116 = arith.constant 0 : index
    %c0_117 = arith.constant 0 : index
    %137 = vector.load %arg6[%c0_116, %c0_117] : memref<64x64xf32, #tpu.memory_space<vmem>>, vector<64x64xf32>
    %cst_118 = arith.constant dense<0.000000e+00> : vector<1x64xf32>
    %138 = tpu.matmul %133, %137, %cst_118 {dimension_numbers = #tpu.dot_dimension_numbers<[1], [0], [0], [1], [0, 0, 1, 1], [], []>} : vector<1x64xf32>, vector<64x64xf32>, vector<1x64xf32> -> vector<1x64xf32>
    %c0_119 = arith.constant 0 : index
    %c0_120 = arith.constant 0 : index
    %139 = vector.load %arg6[%c0_119, %c0_120] : memref<64x64xf32, #tpu.memory_space<vmem>>, vector<64x64xf32>
    %cst_121 = arith.constant dense<0.000000e+00> : vector<1x64xf32>
    %140 = tpu.matmul %136, %139, %cst_121 {dimension_numbers = #tpu.dot_dimension_numbers<[1], [0], [0], [1], [0, 0, 1, 1], [], []>} : vector<1x64xf32>, vector<64x64xf32>, vector<1x64xf32> -> vector<1x64xf32>
    %141 = arith.mulf %138, %138 : vector<1x64xf32>
    %142 = arith.subf %140, %141 : vector<1x64xf32>
    %cst_122 = arith.constant 0.000000e+00 : f32
    %143 = vector.broadcast %cst_122 : f32 to vector<1x64xf32>
    %144 = arith.maximumf %142, %143 : vector<1x64xf32>
    %cst_123 = arith.constant 9.99999974E-6 : f32
    %145 = vector.broadcast %cst_123 : f32 to vector<1x64xf32>
    %146 = arith.addf %144, %145 : vector<1x64xf32>
    %147 = math.rsqrt %146 : vector<1x64xf32>
    %148 = vector.broadcast %138 : vector<1x64xf32> to vector<64x64xf32>
    %149 = arith.subf %131, %148 : vector<64x64xf32>
    %150 = vector.broadcast %147 : vector<1x64xf32> to vector<64x64xf32>
    %151 = arith.mulf %149, %150 : vector<64x64xf32>
    %c0_124 = arith.constant 0 : index
    %c0_125 = arith.constant 0 : index
    %152 = vector.load %arg4[%c0_124, %c0_125] : memref<1x64xf32, #tpu.memory_space<vmem>>, vector<1x64xf32>
    %153 = vector.broadcast %152 : vector<1x64xf32> to vector<64x64xf32>
    %154 = arith.mulf %151, %153 : vector<64x64xf32>
    %c0_126 = arith.constant 0 : index
    %c0_127 = arith.constant 0 : index
    %155 = vector.load %arg5[%c0_126, %c0_127] : memref<1x64xf32, #tpu.memory_space<vmem>>, vector<1x64xf32>
    %156 = vector.broadcast %155 : vector<1x64xf32> to vector<64x64xf32>
    %157 = arith.addf %154, %156 : vector<64x64xf32>
    %cst_128 = arith.constant 0.000000e+00 : f32
    %158 = vector.broadcast %cst_128 : f32 to vector<64x64xf32>
    %159 = arith.cmpf oge, %157, %158 : vector<64x64xf32>
    %cst_129 = arith.constant 1.000000e-01 : f32
    %160 = vector.broadcast %cst_129 : f32 to vector<64x64xf32>
    %161 = arith.mulf %160, %157 : vector<64x64xf32>
    %162 = arith.select %159, %157, %161 : vector<64x64xi1>, vector<64x64xf32>
    %c0_130 = arith.constant 0 : index
    %c0_131 = arith.constant 0 : index
    %c0_132 = arith.constant 0 : index
    %163 = vector.load %arg7[%c0_130, %c0_131, %c0_132] : memref<1x64x64xf32, #tpu.memory_space<vmem>>, vector<1x64x64xf32>
    %164 = vector.shape_cast %163 : vector<1x64x64xf32> to vector<64x64xf32>
    %165 = vector.shape_cast %162 : vector<64x64xf32> to vector<1x64x64xf32>
    tpu.vector_store %arg7[%c0_130, %c0_131, %c0_132], %165 {strides = array<i32>} : memref<1x64x64xf32, #tpu.memory_space<vmem>>, vector<1x64x64xf32>,
    return
  }
  func.func @transform_0(%arg0: i32) -> (i32, i32, i32, i32) {
    %c0_i32 = arith.constant 0 : i32
    %c0_i32_0 = arith.constant 0 : i32
    %c0_i32_1 = arith.constant 0 : i32
    %c0_i32_2 = arith.constant 0 : i32
    return %arg0, %c0_i32, %c0_i32_0, %c0_i32_1 : i32, i32, i32, i32
  }
  func.func @transform_1(%arg0: i32) -> (i32, i32, i32) {
    %c0_i32 = arith.constant 0 : i32
    %c0_i32_0 = arith.constant 0 : i32
    %c0_i32_1 = arith.constant 0 : i32
    %c0_i32_2 = arith.constant 0 : i32
    return %c0_i32, %c0_i32_0, %c0_i32_1 : i32, i32, i32
  }
  func.func @transform_2(%arg0: i32) -> (i32, i32) {
    %c0_i32 = arith.constant 0 : i32
    %c0_i32_0 = arith.constant 0 : i32
    %c0_i32_1 = arith.constant 0 : i32
    return %c0_i32, %c0_i32_0 : i32, i32
  }
  func.func @transform_3(%arg0: i32) -> (i32, i32) {
    %c0_i32 = arith.constant 0 : i32
    %c0_i32_0 = arith.constant 0 : i32
    %c0_i32_1 = arith.constant 0 : i32
    return %c0_i32, %c0_i32_0 : i32, i32
  }
  func.func @transform_4(%arg0: i32) -> (i32, i32) {
    %c0_i32 = arith.constant 0 : i32
    %c0_i32_0 = arith.constant 0 : i32
    %c0_i32_1 = arith.constant 0 : i32
    return %c0_i32, %c0_i32_0 : i32, i32
  }
  func.func @transform_5(%arg0: i32) -> (i32, i32) {
    %c0_i32 = arith.constant 0 : i32
    %c0_i32_0 = arith.constant 0 : i32
    %c0_i32_1 = arith.constant 0 : i32
    return %c0_i32, %c0_i32_0 : i32, i32
  }
  func.func @transform_6(%arg0: i32) -> (i32, i32, i32) {
    %c0_i32 = arith.constant 0 : i32
    %c0_i32_0 = arith.constant 0 : i32
    %c0_i32_1 = arith.constant 0 : i32
    return %arg0, %c0_i32, %c0_i32_0 : i32, i32, i32
  }
}

</mosaic_0001>

<llo_original>
// kernel: down_forward.3
$region0: #{down_forward.3}
  #allocation0 [shape = 'u32[]', space=smem, size = 0x4, offset = 0x4, fixed_abs, tag = 'smem constant byte address 0x4 - core index']
  #allocation1 [shape = 'u32[144,128]{1,0:T(1,128)}', space=vmem, size = 0x12000, scoped, tag = 'internal scratch']
  %s0 = inlined_call_operand.vmem [shape: f32[8,9,9,64], index: 0, kind: input, shape index: {}]
  %s1 = inlined_call_operand.vmem [shape: bf16[16,64,64], index: 1, kind: input, shape index: {}]
  %s2 = inlined_call_operand.vmem [shape: f32[1,64], index: 2, kind: input, shape index: {}]
  %s3 = inlined_call_operand.vmem [shape: f32[1,64], index: 3, kind: input, shape index: {}]
  %s4 = inlined_call_operand.vmem [shape: f32[1,64], index: 4, kind: input, shape index: {}]
  %s5 = inlined_call_operand.vmem [shape: f32[64,64], index: 5, kind: input, shape index: {}]
  %s6 = inlined_call_operand.hbm [shape: f32[2,64,64], index: 6, kind: output, shape index: {}]
  %s7 = sld [smem:[#allocation0]]
  $region57: #{down_forward.3} parent=0
    _
  %s9 = ssub.s32 1, %s7
  %s10 = scalar_select 0, %s9, %s7
  $region1: #{down_forward.3} parent=0
    #allocation2 [shape = 'u8[65536]{0}', space=vmem, size = 0x10000, scoped, tag = 'output window, operand 0']
    #allocation3 [shape = 's32[2]{0}', space=sflag, size = 0x8, scoped, tag = 'scoped memory for down_forward.3']
    %11 = vsyncpa [#allocation3], 0
    %s12 = scalar_lea.sflag [#allocation3], 1
    %13 = vsyncpa %s12, 0
    loop: start=0, step=1, limit=4
    $region2: #{down_forward.3} parent=1 // loop_pre_header
      _
    $region3: #{down_forward.3} parent=1 // loop_header
      %s15 = sphi 0, %s19
      %p16 = scmp.ge.s32.totalorder %s15, 4
      %s25 = sphi 0, %s27
      %s28 = sphi 0, %s25
      %s29 = sphi 0, %s28
      %s45 = sphi 0, %s29
      %s49 = sphi 0, %s49
      %s51 = sphi 0, %s49
      %s52 = sphi 0, %s51
      %s66 = sphi 0, %s52
      %s70 = sphi 0, %s70
      %s72 = sphi 0, %s70
      %s73 = sphi 0, %s72
      %s87 = sphi 0, %s73
      %s91 = sphi 0, %s91
      %s93 = sphi 0, %s91
      %s94 = sphi 0, %s93
      %s108 = sphi 0, %s94
      %s112 = sphi 0, %s112
      %s114 = sphi 0, %s112
      %s115 = sphi 0, %s114
      %s129 = sphi 0, %s115
      %s133 = sphi 0, %s133
      %s135 = sphi 0, %s133
      %s136 = sphi 0, %s135
      %s150 = sphi 0, %s136
      %s156 = sphi 0, %s158
      %s159 = sphi 0, %s156
      %s160 = sphi 0, %s159
      %s176 = sphi 0, %s160
    $region4: #{down_forward.3} parent=1 // loop_header_branch
      %18 = sbr.rel (%p16) target = $region8
    $region5: #{down_forward.3} parent=1 // loop_body
      %s20 = ssub.s32 %s15, 1
      %s21 = ssub.s32 %s15, 2
      %s22 = sadd.s32 %s15, 1
      %s23 = ssub.s32 %s15, %s22
      %p24 = scmp.eq.s32.totalorder %s23, 0
      %s26 = sadd.s32 %s25, 1
      %s27 = scalar_select %p24, %s25, %s26
      %p30 = pneg %p24
      %p31 = scmp.eq.s32.totalorder %s15, 1
      %p32 = por %p30, %p31
      %p33 = scmp.ne.s32.totalorder %s25, %s28
      %p34 = scmp.eq.s32.totalorder %s15, 0
      %p35 = por %p33, %p34
      %p36 = scmp.ne.s32.totalorder %s25, %s28
      %p37 = scmp.eq.s32.totalorder %s20, 1
      %p38 = por %p36, %p37
      %p39 = scmp.ne.s32.totalorder %s28, %s29
      %p40 = scmp.eq.s32.totalorder %s20, 0
      %p41 = por %p39, %p40
      %p42 = scmp.ne.s32.totalorder %s28, %s29
      %p43 = scmp.eq.s32.totalorder %s21, 1
      %p44 = por %p42, %p43
      %p46 = scmp.ne.s32.totalorder %s29, %s45
      %p47 = scmp.eq.s32.totalorder %s21, 0
      %p48 = por %p46, %p47
      %s50 = sadd.s32 %s49, 1
      %p53 = scmp.eq.s32.totalorder %s15, 1
      %p54 = scmp.ne.s32.totalorder %s49, %s51
      %p55 = scmp.eq.s32.totalorder %s15, 0
      %p56 = por %p54, %p55
      %p57 = scmp.ne.s32.totalorder %s49, %s51
      %p58 = scmp.eq.s32.totalorder %s20, 1
      %p59 = por %p57, %p58
      %p60 = scmp.ne.s32.totalorder %s51, %s52
      %p61 = scmp.eq.s32.totalorder %s20, 0
      %p62 = por %p60, %p61
      %p63 = scmp.ne.s32.totalorder %s51, %s52
      %p64 = scmp.eq.s32.totalorder %s21, 1
      %p65 = por %p63, %p64
      %p67 = scmp.ne.s32.totalorder %s52, %s66
      %p68 = scmp.eq.s32.totalorder %s21, 0
      %p69 = por %p67, %p68
      %s71 = sadd.s32 %s70, 1
      %p74 = scmp.eq.s32.totalorder %s15, 1
      %p75 = scmp.ne.s32.totalorder %s70, %s72
      %p76 = scmp.eq.s32.totalorder %s15, 0
      %p77 = por %p75, %p76
      %p78 = scmp.ne.s32.totalorder %s70, %s72
      %p79 = scmp.eq.s32.totalorder %s20, 1
      %p80 = por %p78, %p79
      %p81 = scmp.ne.s32.totalorder %s72, %s73
      %p82 = scmp.eq.s32.totalorder %s20, 0
      %p83 = por %p81, %p82
      %p84 = scmp.ne.s32.totalorder %s72, %s73
      %p85 = scmp.eq.s32.totalorder %s21, 1
      %p86 = por %p84, %p85
      %p88 = scmp.ne.s32.totalorder %s73, %s87
      %p89 = scmp.eq.s32.totalorder %s21, 0
      %p90 = por %p88, %p89
      %s92 = sadd.s32 %s91, 1
      %p95 = scmp.eq.s32.totalorder %s15, 1
      %p96 = scmp.ne.s32.totalorder %s91, %s93
      %p97 = scmp.eq.s32.totalorder %s15, 0
      %p98 = por %p96, %p97
      %p99 = scmp.ne.s32.totalorder %s91, %s93
      %p100 = scmp.eq.s32.totalorder %s20, 1
      %p101 = por %p99, %p100
      %p102 = scmp.ne.s32.totalorder %s93, %s94
      %p103 = scmp.eq.s32.totalorder %s20, 0
      %p104 = por %p102, %p103
      %p105 = scmp.ne.s32.totalorder %s93, %s94
      %p106 = scmp.eq.s32.totalorder %s21, 1
      %p107 = por %p105, %p106
      %p109 = scmp.ne.s32.totalorder %s94, %s108
      %p110 = scmp.eq.s32.totalorder %s21, 0
      %p111 = por %p109, %p110
      %s113 = sadd.s32 %s112, 1
      %p116 = scmp.eq.s32.totalorder %s15, 1
      %p117 = scmp.ne.s32.totalorder %s112, %s114
      %p118 = scmp.eq.s32.totalorder %s15, 0
      %p119 = por %p117, %p118
      %p120 = scmp.ne.s32.totalorder %s112, %s114
      %p121 = scmp.eq.s32.totalorder %s20, 1
      %p122 = por %p120, %p121
      %p123 = scmp.ne.s32.totalorder %s114, %s115
      %p124 = scmp.eq.s32.totalorder %s20, 0
      %p125 = por %p123, %p124
      %p126 = scmp.ne.s32.totalorder %s114, %s115
      %p127 = scmp.eq.s32.totalorder %s21, 1
      %p128 = por %p126, %p127
      %p130 = scmp.ne.s32.totalorder %s115, %s129
      %p131 = scmp.eq.s32.totalorder %s21, 0
      %p132 = por %p130, %p131
      %s134 = sadd.s32 %s133, 1
      %p137 = scmp.eq.s32.totalorder %s15, 1
      %p138 = scmp.ne.s32.totalorder %s133, %s135
      %p139 = scmp.eq.s32.totalorder %s15, 0
      %p140 = por %p138, %p139
      %p141 = scmp.ne.s32.totalorder %s133, %s135
      %p142 = scmp.eq.s32.totalorder %s20, 1
      %p143 = por %p141, %p142
      %p144 = scmp.ne.s32.totalorder %s135, %s136
      %p145 = scmp.eq.s32.totalorder %s20, 0
      %p146 = por %p144, %p145
      %p147 = scmp.ne.s32.totalorder %s135, %s136
      %p148 = scmp.eq.s32.totalorder %s21, 1
      %p149 = por %p147, %p148
      %p151 = scmp.ne.s32.totalorder %s136, %s150
      %p152 = scmp.eq.s32.totalorder %s21, 0
      %p153 = por %p151, %p152
      %s154 = ssub.s32 %s15, %s22
      %p155 = scmp.eq.s32.totalorder %s154, 0
      %s157 = sadd.s32 %s156, 1
      %s158 = scalar_select %p155, %s156, %s157
      %p161 = pneg %p155
      %p162 = scmp.eq.s32.totalorder %s15, 1
      %p163 = por %p161, %p162
      %p164 = scmp.ne.s32.totalorder %s156, %s159
      %p165 = scmp.eq.s32.totalorder %s15, 0
      %p166 = por %p164, %p165
      %p167 = scmp.ne.s32.totalorder %s156, %s159
      %p168 = scmp.eq.s32.totalorder %s20, 1
      %p169 = por %p167, %p168
      %p170 = scmp.ne.s32.totalorder %s159, %s160
      %p171 = scmp.eq.s32.totalorder %s20, 0
      %p172 = por %p170, %p171
      %p173 = scmp.ne.s32.totalorder %s159, %s160
      %p174 = scmp.eq.s32.totalorder %s21, 1
      %p175 = por %p173, %p174
      %p177 = scmp.ne.s32.totalorder %s160, %s176
      %p178 = scmp.eq.s32.totalorder %s21, 0
      %p179 = por %p177, %p178
      %p180 = scmp.le.s32.totalorder 1, %s15
      %p181 = scmp.lt.s32.totalorder %s15, 3
      %p182 = pnand %p180, %p181
      %p183 = pneg %p182
      // Predicated region
      $region9: #{down_forward.3} parent=5 // pred_check
        _
      $region10: #{down_forward.3} parent=5 // pred_check_branch
        %185 = sbr.rel (%p182) target = $region12
      $region11: #{down_forward.3} parent=5 // pred_region
        %s186 = ssub.s32 %s15, 1
        // Predicated region
        $region13: #{down_forward.3} parent=11 // pred_check
          %p187 = pneg %p62
        $region14: #{down_forward.3} parent=11 // pred_check_branch
          %189 = sbr.rel (%p187) target = $region16
        $region15: #{down_forward.3} parent=11 // pred_region
          _
        $region16: #{down_forward.3} parent=11 // pred_fallthru
          _
        // Predicated region
        $region17: #{down_forward.3} parent=11 // pred_check
          %p190 = pneg %p83
        $region18: #{down_forward.3} parent=11 // pred_check_branch
          %192 = sbr.rel (%p190) target = $region20
        $region19: #{down_forward.3} parent=11 // pred_region
          _
        $region20: #{down_forward.3} parent=11 // pred_fallthru
          _
        // Predicated region
        $region21: #{down_forward.3} parent=11 // pred_check
          %p193 = pneg %p104
        $region22: #{down_forward.3} parent=11 // pred_check_branch
          %195 = sbr.rel (%p193) target = $region24
        $region23: #{down_forward.3} parent=11 // pred_region
          _
        $region24: #{down_forward.3} parent=11 // pred_fallthru
          _
        // Predicated region
        $region25: #{down_forward.3} parent=11 // pred_check
          %p196 = pneg %p125
        $region26: #{down_forward.3} parent=11 // pred_check_branch
          %198 = sbr.rel (%p196) target = $region28
        $region27: #{down_forward.3} parent=11 // pred_region
          _
        $region28: #{down_forward.3} parent=11 // pred_fallthru
          _
        // Predicated region
        $region29: #{down_forward.3} parent=11 // pred_check
          %p199 = pneg %p146
        $region30: #{down_forward.3} parent=11 // pred_check_branch
          %201 = sbr.rel (%p199) target = $region32
        $region31: #{down_forward.3} parent=11 // pred_region
          _
        $region32: #{down_forward.3} parent=11 // pred_fallthru
          _
      $region12: #{down_forward.3} parent=5 // pred_fallthru
        _
      %p202 = scmp.lt.s32.totalorder %s15, 2
      // Predicated region
      $region33: #{down_forward.3} parent=5 // pred_check
        %p203 = pneg %p202
      $region34: #{down_forward.3} parent=5 // pred_check_branch
        %205 = sbr.rel (%p203) target = $region36
      $region35: #{down_forward.3} parent=5 // pred_region
        // Predicated region
        $region37: #{down_forward.3} parent=35 // pred_check
          %p206 = pneg %p35
        $region38: #{down_forward.3} parent=35 // pred_check_branch
          %208 = sbr.rel (%p206) target = $region40
        $region39: #{down_forward.3} parent=35 // pred_region
          %s209 = smul.u32 4, %s15
          %p210 = scmp.lt.s32.totalorder %s209, 7
          %s211 = scalar_select %p210, %s209, 7
          %s212 = smul.addr %s211, 18
          %s213 = smul.addr %s212, 8
          %s214 = scalar_lea.vmem %s0, %s213
          %s215 = smul.u32 4, %s15
        $region40: #{down_forward.3} parent=35 // pred_fallthru
          _
      $region36: #{down_forward.3} parent=5 // pred_fallthru
        _
      %p216 = scmp.le.s32.totalorder 1, %s15
      %p217 = scmp.lt.s32.totalorder %s15, 3
      %p218 = pnand %p216, %p217
      %p219 = pneg %p218
      // Predicated region
      $region41: #{down_forward.3} parent=5 // pred_check
        _
      $region42: #{down_forward.3} parent=5 // pred_check_branch
        %221 = sbr.rel (%p218) target = $region44
      $region43: #{down_forward.3} parent=5 // pred_region
        %s222 = ssub.s32 %s15, 1
        %s223 = smul.u32 4, %s20
        %p224 = scmp.lt.s32.totalorder %s223, 7
        %s225 = scalar_select %p224, %s223, 7
        %s226 = smul.addr %s225, 18
        %s227 = smul.addr %s226, 8
        %s228 = scalar_lea.vmem %s0, %s227
        %p229 = pneg %p41
        %p230 = pneg %p38
        %p231 = pneg %p62
        %p232 = pneg %p59
        %p233 = pneg %p83
        %p234 = pneg %p80
        %p235 = pneg %p104
        %p236 = pneg %p101
        %p237 = pneg %p125
        %p238 = pneg %p122
        %p239 = pneg %p146
        %p240 = pneg %p143
        %p241 = pneg %p172
        %p242 = pneg %p169
        %s243 = sand.u32 %s159, 1
        %s244 = scalar_lea.sflag [#allocation3], %s243
        %s245 = sand.u32 %s159, 1
        %s246 = smul.addr %s245, 64
        %s247 = scalar_lea.vmem [#allocation2], %s246
        %s248 = smul.u32 4, %s20
        %p249 = scmp.lt.s32.totalorder %s248, 7
        %s250 = scalar_select %p249, %s248, 7
        %s251 = smul.addr %s250, 18
        %s252 = smul.addr %s251, 8
        %s253 = scalar_lea.vmem %s0, %s252
        %s254 = smul.u32 4, %s20
        %v256 = vld [vmem:[%s253] sm:$0xff]
        %v257 = vld [vmem:[%s253 + $0x10] sm:$0xff]
        %v258 = vld [vmem:[%s253 + $0x20] sm:$0xff]
        %v259 = vld [vmem:[%s253 + $0x30] sm:$0xff]
        %v260 = vld [vmem:[%s253 + $0x40] sm:$0xff]
        %v261 = vld [vmem:[%s253 + $0x50] sm:$0xff]
        %v262 = vld [vmem:[%s253 + $0x60] sm:$0xff]
        %v263 = vld [vmem:[%s253 + $0x70] sm:$0xff]
        %v264 = vpack.c.bf16 %v257, %v256
        %v265 = vpack.c.bf16 %v259, %v258
        %v266 = vpack.c.bf16 %v261, %v260
        %v267 = vpack.c.bf16 %v263, %v262
        %v268 = vld [vmem:[%s1] sm:$0xf]
        %v269 = vld [vmem:[%s1 + $0x4] sm:$0xf]
        %v270 = vld [vmem:[%s1 + $0x8] sm:$0xf]
        %v271 = vld [vmem:[%s1 + $0xc] sm:$0xf]
        %v272 = vld [vmem:[%s1 + $0x10] sm:$0xf]
        %v273 = vld [vmem:[%s1 + $0x14] sm:$0xf]
        %v274 = vld [vmem:[%s1 + $0x18] sm:$0xf]
        %v275 = vld [vmem:[%s1 + $0x1c] sm:$0xf]
        %s276 = scalar_lea.vmem %s253, 144
        %v277 = vld [vmem:[%s276] sm:$0xff]
        %v278 = vld [vmem:[%s276 + $0x10] sm:$0xff]
        %v279 = vld [vmem:[%s276 + $0x20] sm:$0xff]
        %v280 = vld [vmem:[%s276 + $0x30] sm:$0xff]
        %v281 = vld [vmem:[%s276 + $0x40] sm:$0xff]
        %v282 = vld [vmem:[%s276 + $0x50] sm:$0xff]
        %v283 = vld [vmem:[%s276 + $0x60] sm:$0xff]
        %v284 = vld [vmem:[%s276 + $0x70] sm:$0xff]
        %v285 = vpack.c.bf16 %v278, %v277
        %v286 = vpack.c.bf16 %v280, %v279
        %v287 = vpack.c.bf16 %v282, %v281
        %v288 = vpack.c.bf16 %v284, %v283
        %s289 = scalar_lea.vmem %s1, 32
        %v290 = vld [vmem:[%s289] sm:$0xf]
        %v291 = vld [vmem:[%s289 + $0x4] sm:$0xf]
        %v292 = vld [vmem:[%s289 + $0x8] sm:$0xf]
        %v293 = vld [vmem:[%s289 + $0xc] sm:$0xf]
        %v294 = vld [vmem:[%s289 + $0x10] sm:$0xf]
        %v295 = vld [vmem:[%s289 + $0x14] sm:$0xf]
        %v296 = vld [vmem:[%s289 + $0x18] sm:$0xf]
        %v297 = vld [vmem:[%s289 + $0x1c] sm:$0xf]
        %v306 = vunpack.c.l.b16 %v290
        %v307 = vunpack.c.l.b16 %v291
        %v308 = vunpack.c.l.b16 %v292
        %v309 = vunpack.c.l.b16 %v293
        %v310 = vunpack.c.l.b16 %v294
        %v311 = vunpack.c.l.b16 %v295
        %v312 = vunpack.c.l.b16 %v296
        %v313 = vunpack.c.l.b16 %v297
        %v314 = vpack.c.b16 %v307, %v306
        %v315 = vpack.c.b16 %v309, %v308
        %v316 = vpack.c.b16 %v311, %v310
        %v317 = vpack.c.b16 %v313, %v312
        %vm322 = vcmask 523264
        %v324 = vsel %vm322, %v285, 0
        %v327 = vsel %vm322, %v286, 0
        %v330 = vsel %vm322, %v287, 0
        %v333 = vsel %vm322, %v288, 0
        %335 = vmatprep.subr.bf16.mxu0 0
        %336 = vmatpush1.bf16.msra.mxu0 %v314
        %337 = vmatprep.subr.bf16.mxu0 0
        %338 = vmatpush1.bf16.msra.mxu0 %v315
        %339 = vmatprep.subr.bf16.mxu0 0
        %340 = vmatpush1.bf16.msra.mxu0 %v316
        %341 = vmatprep.subr.bf16.mxu0 0
        %342 = vmatpush1.bf16.msra.mxu0 %v317
        %343 = vmatprep.subr.bf16.mxu0 0
        %344 = vmatpush1.bf16.msra.mxu0 0
        %345 = vmatprep.subr.bf16.mxu0 0
        %346 = vmatpush1.bf16.msra.mxu0 0
        %347 = vmatprep.subr.bf16.mxu0 0
        %348 = vmatpush1.bf16.msra.mxu0 0
        %349 = vmatprep.subr.bf16.mxu0 0
        %350 = vmatpush1.bf16.msra.mxu0 0
        %351 = vmatprep.subr.bf16.mxu0 0
        %352 = vmatpush1.bf16.msra.mxu0 0
        %353 = vmatprep.subr.bf16.mxu0 0
        %354 = vmatpush1.bf16.msra.mxu0 0
        %355 = vmatprep.subr.bf16.mxu0 0
        %356 = vmatpush1.bf16.msra.mxu0 0
        %357 = vmatprep.subr.bf16.mxu0 0
        %358 = vmatpush1.bf16.msra.mxu0 0
        %359 = vmatprep.subr.bf16.mxu0 0
        %360 = vmatpush1.bf16.msra.mxu0 0
        %361 = vmatprep.subr.bf16.mxu0 0
        %362 = vmatpush1.bf16.msra.mxu0 0
        %363 = vmatprep.subr.bf16.mxu0 0
        %364 = vmatpush1.bf16.msra.mxu0 0
        %365 = vmatprep.subr.bf16.mxu0 0
        %366 = vmatpush1.bf16.msra.mxu0 0
        %367 = vmatprep.mubr.bf16.mxu0 0
        %368 = vmatmul.mubr.bf16.gmra.mrb[0].mxu0 %v324
        %v369 = vpop.f32.mrb[0].mxu0
        %v370 = vadd.f32 0.0, %v369
        %v371 = vpop.f32.mrb[0].mxu0
        %v372 = vpop.f32.mrb[0].mxu0
        %v373 = vadd.f32 0.0, %v372
        %v374 = vpop.f32.mrb[0].mxu0
        %375 = vmatprep.mubr.bf16.mxu0 0
        %376 = vmatmul.mubr.bf16.gmra.mrb[0].mxu0 %v327
        %v377 = vpop.f32.mrb[0].mxu0
        %v378 = vadd.f32 0.0, %v377
        %v379 = vpop.f32.mrb[0].mxu0
        %v380 = vpop.f32.mrb[0].mxu0
        %v381 = vadd.f32 0.0, %v380
        %v382 = vpop.f32.mrb[0].mxu0
        %383 = vmatprep.mubr.bf16.mxu0 0
        %384 = vmatmul.mubr.bf16.gmra.mrb[0].mxu0 %v330
        %v385 = vpop.f32.mrb[0].mxu0
        %v386 = vadd.f32 0.0, %v385
        %v387 = vpop.f32.mrb[0].mxu0
        %v388 = vpop.f32.mrb[0].mxu0
        %v389 = vadd.f32 0.0, %v388
        %v390 = vpop.f32.mrb[0].mxu0
        %391 = vmatprep.mubr.bf16.mxu0 0
        %392 = vmatmul.mubr.bf16.gmra.mrb[0].mxu0 %v333
        %v393 = vpop.f32.mrb[0].mxu0
        %v394 = vadd.f32 0.0, %v393
        %v395 = vpop.f32.mrb[0].mxu0
        %v396 = vpop.f32.mrb[0].mxu0
        %v397 = vadd.f32 0.0, %v396
        %v398 = vpop.f32.mrb[0].mxu0
        %399 = vdwg.mxu0
        %v408 = vunpack.c.l.b16 %v268
        %v409 = vunpack.c.l.b16 %v269
        %v410 = vunpack.c.l.b16 %v270
        %v411 = vunpack.c.l.b16 %v271
        %v412 = vunpack.c.l.b16 %v272
        %v413 = vunpack.c.l.b16 %v273
        %v414 = vunpack.c.l.b16 %v274
        %v415 = vunpack.c.l.b16 %v275
        %v416 = vpack.c.b16 %v409, %v408
        %v417 = vpack.c.b16 %v411, %v410
        %v418 = vpack.c.b16 %v413, %v412
        %v419 = vpack.c.b16 %v415, %v414
        %v425 = vsel %vm322, %v264, 0
        %v428 = vsel %vm322, %v265, 0
        %v431 = vsel %vm322, %v266, 0
        %v434 = vsel %vm322, %v267, 0
        %436 = vmatprep.subr.bf16.mxu0 0
        %437 = vmatpush1.bf16.msra.mxu0 %v416
        %438 = vmatprep.subr.bf16.mxu0 0
        %439 = vmatpush1.bf16.msra.mxu0 %v417
        %440 = vmatprep.subr.bf16.mxu0 0
        %441 = vmatpush1.bf16.msra.mxu0 %v418
        %442 = vmatprep.subr.bf16.mxu0 0
        %443 = vmatpush1.bf16.msra.mxu0 %v419
        %444 = vmatprep.subr.bf16.mxu0 0
        %445 = vmatpush1.bf16.msra.mxu0 0
        %446 = vmatprep.subr.bf16.mxu0 0
        %447 = vmatpush1.bf16.msra.mxu0 0
        %448 = vmatprep.subr.bf16.mxu0 0
        %449 = vmatpush1.bf16.msra.mxu0 0
        %450 = vmatprep.subr.bf16.mxu0 0
        %451 = vmatpush1.bf16.msra.mxu0 0
        %452 = vmatprep.subr.bf16.mxu0 0
        %453 = vmatpush1.bf16.msra.mxu0 0
        %454 = vmatprep.subr.bf16.mxu0 0
        %455 = vmatpush1.bf16.msra.mxu0 0
        %456 = vmatprep.subr.bf16.mxu0 0
        %457 = vmatpush1.bf16.msra.mxu0 0
        %458 = vmatprep.subr.bf16.mxu0 0
        %459 = vmatpush1.bf16.msra.mxu0 0
        %460 = vmatprep.subr.bf16.mxu0 0
        %461 = vmatpush1.bf16.msra.mxu0 0
        %462 = vmatprep.subr.bf16.mxu0 0
        %463 = vmatpush1.bf16.msra.mxu0 0
        %464 = vmatprep.subr.bf16.mxu0 0
        %465 = vmatpush1.bf16.msra.mxu0 0
        %466 = vmatprep.subr.bf16.mxu0 0
        %467 = vmatpush1.bf16.msra.mxu0 0
        %468 = vmatprep.mubr.bf16.mxu0 0
        %469 = vmatmul.mubr.bf16.gmra.mrb[0].mxu0 %v425
        %v470 = vpop.f32.mrb[0].mxu0
        %v471 = vadd.f32 %v370, %v470
        %v472 = vpop.f32.mrb[0].mxu0
        %v473 = vpop.f32.mrb[0].mxu0
        %v474 = vadd.f32 %v373, %v473
        %v475 = vpop.f32.mrb[0].mxu0
        %476 = vmatprep.mubr.bf16.mxu0 0
        %477 = vmatmul.mubr.bf16.gmra.mrb[0].mxu0 %v428
        %v478 = vpop.f32.mrb[0].mxu0
        %v479 = vadd.f32 %v378, %v478
        %v480 = vpop.f32.mrb[0].mxu0
        %v481 = vpop.f32.mrb[0].mxu0
        %v482 = vadd.f32 %v381, %v481
        %v483 = vpop.f32.mrb[0].mxu0
        %484 = vmatprep.mubr.bf16.mxu0 0
        %485 = vmatmul.mubr.bf16.gmra.mrb[0].mxu0 %v431
        %v486 = vpop.f32.mrb[0].mxu0
        %v487 = vadd.f32 %v386, %v486
        %v488 = vpop.f32.mrb[0].mxu0
        %v489 = vpop.f32.mrb[0].mxu0
        %v490 = vadd.f32 %v389, %v489
        %v491 = vpop.f32.mrb[0].mxu0
        %492 = vmatprep.mubr.bf16.mxu0 0
        %493 = vmatmul.mubr.bf16.gmra.mrb[0].mxu0 %v434
        %v494 = vpop.f32.mrb[0].mxu0
        %v495 = vadd.f32 %v394, %v494
        %v496 = vpop.f32.mrb[0].mxu0
        %v497 = vpop.f32.mrb[0].mxu0
        %v498 = vadd.f32 %v397, %v497
        %v499 = vpop.f32.mrb[0].mxu0
        %500 = vdwg.mxu0
        %v501 = vld [vmem:[%s253 + $0x1] sm:$0xff]
        %v502 = vld [vmem:[%s253 + $0x11] sm:$0xff]
        %v503 = vld [vmem:[%s253 + $0x21] sm:$0xff]
        %v504 = vld [vmem:[%s253 + $0x31] sm:$0xff]
        %v505 = vld [vmem:[%s253 + $0x41] sm:$0xff]
        %v506 = vld [vmem:[%s253 + $0x51] sm:$0xff]
        %v507 = vld [vmem:[%s253 + $0x61] sm:$0xff]
        %v508 = vld [vmem:[%s253 + $0x71] sm:$0xff]
        %v509 = vpack.c.bf16 %v502, %v501
        %v510 = vpack.c.bf16 %v504, %v503
        %v511 = vpack.c.bf16 %v506, %v505
        %v512 = vpack.c.bf16 %v508, %v507
        %s513 = scalar_lea.vmem %s1, 64
        %v514 = vld [vmem:[%s513] sm:$0xf]
        %v515 = vld [vmem:[%s513 + $0x4] sm:$0xf]
        %v516 = vld [vmem:[%s513 + $0x8] sm:$0xf]
        %v517 = vld [vmem:[%s513 + $0xc] sm:$0xf]
        %v518 = vld [vmem:[%s513 + $0x10] sm:$0xf]
        %v519 = vld [vmem:[%s513 + $0x14] sm:$0xf]
        %v520 = vld [vmem:[%s513 + $0x18] sm:$0xf]
        %v521 = vld [vmem:[%s513 + $0x1c] sm:$0xf]
        %v530 = vunpack.c.l.b16 %v514
        %v531 = vunpack.c.l.b16 %v515
        %v532 = vunpack.c.l.b16 %v516
        %v533 = vunpack.c.l.b16 %v517
        %v534 = vunpack.c.l.b16 %v518
        %v535 = vunpack.c.l.b16 %v519
        %v536 = vunpack.c.l.b16 %v520
        %v537 = vunpack.c.l.b16 %v521
        %v538 = vpack.c.b16 %v531, %v530
        %v539 = vpack.c.b16 %v533, %v532
        %v540 = vpack.c.b16 %v535, %v534
        %v541 = vpack.c.b16 %v537, %v536
        %v547 = vsel %vm322, %v509, 0
        %v550 = vsel %vm322, %v510, 0
        %v553 = vsel %vm322, %v511, 0
        %v556 = vsel %vm322, %v512, 0
        %558 = vmatprep.subr.bf16.mxu0 0
        %559 = vmatpush1.bf16.msra.mxu0 %v538
        %560 = vmatprep.subr.bf16.mxu0 0
        %561 = vmatpush1.bf16.msra.mxu0 %v539
        %562 = vmatprep.subr.bf16.mxu0 0
        %563 = vmatpush1.bf16.msra.mxu0 %v540
        %564 = vmatprep.subr.bf16.mxu0 0
        %565 = vmatpush1.bf16.msra.mxu0 %v541
        %566 = vmatprep.subr.bf16.mxu0 0
        %567 = vmatpush1.bf16.msra.mxu0 0
        %568 = vmatprep.subr.bf16.mxu0 0
        %569 = vmatpush1.bf16.msra.mxu0 0
        %570 = vmatprep.subr.bf16.mxu0 0
        %571 = vmatpush1.bf16.msra.mxu0 0
        %572 = vmatprep.subr.bf16.mxu0 0
        %573 = vmatpush1.bf16.msra.mxu0 0
        %574 = vmatprep.subr.bf16.mxu0 0
        %575 = vmatpush1.bf16.msra.mxu0 0
        %576 = vmatprep.subr.bf16.mxu0 0
        %577 = vmatpush1.bf16.msra.mxu0 0
        %578 = vmatprep.subr.bf16.mxu0 0
        %579 = vmatpush1.bf16.msra.mxu0 0
        %580 = vmatprep.subr.bf16.mxu0 0
        %581 = vmatpush1.bf16.msra.mxu0 0
        %582 = vmatprep.subr.bf16.mxu0 0
        %583 = vmatpush1.bf16.msra.mxu0 0
        %584 = vmatprep.subr.bf16.mxu0 0
        %585 = vmatpush1.bf16.msra.mxu0 0
        %586 = vmatprep.subr.bf16.mxu0 0
        %587 = vmatpush1.bf16.msra.mxu0 0
        %588 = vmatprep.subr.bf16.mxu0 0
        %589 = vmatpush1.bf16.msra.mxu0 0
        %590 = vmatprep.mubr.bf16.mxu0 0
        %591 = vmatmul.mubr.bf16.gmra.mrb[0].mxu0 %v547
        %v592 = vpop.f32.mrb[0].mxu0
        %v593 = vadd.f32 0.0, %v592
        %v594 = vpop.f32.mrb[0].mxu0
        %v595 = vpop.f32.mrb[0].mxu0
        %v596 = vadd.f32 0.0, %v595
        %v597 = vpop.f32.mrb[0].mxu0
        %598 = vmatprep.mubr.bf16.mxu0 0
        %599 = vmatmul.mubr.bf16.gmra.mrb[0].mxu0 %v550
        %v600 = vpop.f32.mrb[0].mxu0
        %v601 = vadd.f32 0.0, %v600
        %v602 = vpop.f32.mrb[0].mxu0
        %v603 = vpop.f32.mrb[0].mxu0
        %v604 = vadd.f32 0.0, %v603
        %v605 = vpop.f32.mrb[0].mxu0
        %606 = vmatprep.mubr.bf16.mxu0 0
        %607 = vmatmul.mubr.bf16.gmra.mrb[0].mxu0 %v553
        %v608 = vpop.f32.mrb[0].mxu0
        %v609 = vadd.f32 0.0, %v608
        %v610 = vpop.f32.mrb[0].mxu0
        %v611 = vpop.f32.mrb[0].mxu0
        %v612 = vadd.f32 0.0, %v611
        %v613 = vpop.f32.mrb[0].mxu0
        %614 = vmatprep.mubr.bf16.mxu0 0
        %615 = vmatmul.mubr.bf16.gmra.mrb[0].mxu0 %v556
        %v616 = vpop.f32.mrb[0].mxu0
        %v617 = vadd.f32 0.0, %v616
        %v618 = vpop.f32.mrb[0].mxu0
        %v619 = vpop.f32.mrb[0].mxu0
        %v620 = vadd.f32 0.0, %v619
        %v621 = vpop.f32.mrb[0].mxu0
        %622 = vdwg.mxu0
        %v623 = vadd.f32 %v471, %v593
        %v624 = vadd.f32 %v474, %v596
        %v625 = vadd.f32 %v479, %v601
        %v626 = vadd.f32 %v482, %v604
        %v627 = vadd.f32 %v487, %v609
        %v628 = vadd.f32 %v490, %v612
        %v629 = vadd.f32 %v495, %v617
        %v630 = vadd.f32 %v498, %v620
        %v631 = vld [vmem:[%s276 + $0x1] sm:$0xff]
        %v632 = vld [vmem:[%s276 + $0x11] sm:$0xff]
        %v633 = vld [vmem:[%s276 + $0x21] sm:$0xff]
        %v634 = vld [vmem:[%s276 + $0x31] sm:$0xff]
        %v635 = vld [vmem:[%s276 + $0x41] sm:$0xff]
        %v636 = vld [vmem:[%s276 + $0x51] sm:$0xff]
        %v637 = vld [vmem:[%s276 + $0x61] sm:$0xff]
        %v638 = vld [vmem:[%s276 + $0x71] sm:$0xff]
        %v639 = vpack.c.bf16 %v632, %v631
        %v640 = vpack.c.bf16 %v634, %v633
        %v641 = vpack.c.bf16 %v636, %v635
        %v642 = vpack.c.bf16 %v638, %v637
        %s643 = scalar_lea.vmem %s1, 96
        %v644 = vld [vmem:[%s643] sm:$0xf]
        %v645 = vld [vmem:[%s643 + $0x4] sm:$0xf]
        %v646 = vld [vmem:[%s643 + $0x8] sm:$0xf]
        %v647 = vld [vmem:[%s643 + $0xc] sm:$0xf]
        %v648 = vld [vmem:[%s643 + $0x10] sm:$0xf]
        %v649 = vld [vmem:[%s643 + $0x14] sm:$0xf]
        %v650 = vld [vmem:[%s643 + $0x18] sm:$0xf]
        %v651 = vld [vmem:[%s643 + $0x1c] sm:$0xf]
        %v660 = vunpack.c.l.b16 %v644
        %v661 = vunpack.c.l.b16 %v645
        %v662 = vunpack.c.l.b16 %v646
        %v663 = vunpack.c.l.b16 %v647
        %v664 = vunpack.c.l.b16 %v648
        %v665 = vunpack.c.l.b16 %v649
        %v666 = vunpack.c.l.b16 %v650
        %v667 = vunpack.c.l.b16 %v651
        %v668 = vpack.c.b16 %v661, %v660
        %v669 = vpack.c.b16 %v663, %v662
        %v670 = vpack.c.b16 %v665, %v664
        %v671 = vpack.c.b16 %v667, %v666
        %v677 = vsel %vm322, %v639, 0
        %v680 = vsel %vm322, %v640, 0
        %v683 = vsel %vm322, %v641, 0
        %v686 = vsel %vm322, %v642, 0
        %688 = vmatprep.subr.bf16.mxu0 0
        %689 = vmatpush1.bf16.msra.mxu0 %v668
        %690 = vmatprep.subr.bf16.mxu0 0
        %691 = vmatpush1.bf16.msra.mxu0 %v669
        %692 = vmatprep.subr.bf16.mxu0 0
        %693 = vmatpush1.bf16.msra.mxu0 %v670
        %694 = vmatprep.subr.bf16.mxu0 0
        %695 = vmatpush1.bf16.msra.mxu0 %v671
        %696 = vmatprep.subr.bf16.mxu0 0
        %697 = vmatpush1.bf16.msra.mxu0 0
        %698 = vmatprep.subr.bf16.mxu0 0
        %699 = vmatpush1.bf16.msra.mxu0 0
        %700 = vmatprep.subr.bf16.mxu0 0
        %701 = vmatpush1.bf16.msra.mxu0 0
        %702 = vmatprep.subr.bf16.mxu0 0
        %703 = vmatpush1.bf16.msra.mxu0 0
        %704 = vmatprep.subr.bf16.mxu0 0
        %705 = vmatpush1.bf16.msra.mxu0 0
        %706 = vmatprep.subr.bf16.mxu0 0
        %707 = vmatpush1.bf16.msra.mxu0 0
        %708 = vmatprep.subr.bf16.mxu0 0
        %709 = vmatpush1.bf16.msra.mxu0 0
        %710 = vmatprep.subr.bf16.mxu0 0
        %711 = vmatpush1.bf16.msra.mxu0 0
        %712 = vmatprep.subr.bf16.mxu0 0
        %713 = vmatpush1.bf16.msra.mxu0 0
        %714 = vmatprep.subr.bf16.mxu0 0
        %715 = vmatpush1.bf16.msra.mxu0 0
        %716 = vmatprep.subr.bf16.mxu0 0
        %717 = vmatpush1.bf16.msra.mxu0 0
        %718 = vmatprep.subr.bf16.mxu0 0
        %719 = vmatpush1.bf16.msra.mxu0 0
        %720 = vmatprep.mubr.bf16.mxu0 0
        %721 = vmatmul.mubr.bf16.gmra.mrb[0].mxu0 %v677
        %v722 = vpop.f32.mrb[0].mxu0
        %v723 = vadd.f32 0.0, %v722
        %v724 = vpop.f32.mrb[0].mxu0
        %v725 = vpop.f32.mrb[0].mxu0
        %v726 = vadd.f32 0.0, %v725
        %v727 = vpop.f32.mrb[0].mxu0
        %728 = vmatprep.mubr.bf16.mxu0 0
        %729 = vmatmul.mubr.bf16.gmra.mrb[0].mxu0 %v680
        %v730 = vpop.f32.mrb[0].mxu0
        %v731 = vadd.f32 0.0, %v730
        %v732 = vpop.f32.mrb[0].mxu0
        %v733 = vpop.f32.mrb[0].mxu0
        %v734 = vadd.f32 0.0, %v733
        %v735 = vpop.f32.mrb[0].mxu0
        %736 = vmatprep.mubr.bf16.mxu0 0
        %737 = vmatmul.mubr.bf16.gmra.mrb[0].mxu0 %v683
        %v738 = vpop.f32.mrb[0].mxu0
        %v739 = vadd.f32 0.0, %v738
        %v740 = vpop.f32.mrb[0].mxu0
        %v741 = vpop.f32.mrb[0].mxu0
        %v742 = vadd.f32 0.0, %v741
        %v743 = vpop.f32.mrb[0].mxu0
        %744 = vmatprep.mubr.bf16.mxu0 0
        %745 = vmatmul.mubr.bf16.gmra.mrb[0].mxu0 %v686
        %v746 = vpop.f32.mrb[0].mxu0
        %v747 = vadd.f32 0.0, %v746
        %v748 = vpop.f32.mrb[0].mxu0
        %v749 = vpop.f32.mrb[0].mxu0
        %v750 = vadd.f32 0.0, %v749
        %v751 = vpop.f32.mrb[0].mxu0
        %752 = vdwg.mxu0
        %v753 = vadd.f32 %v623, %v723
        %v754 = vadd.f32 %v624, %v726
        %v755 = vadd.f32 %v625, %v731
        %v756 = vadd.f32 %v626, %v734
        %v757 = vadd.f32 %v627, %v739
        %v758 = vadd.f32 %v628, %v742
        %v759 = vadd.f32 %v629, %v747
        %v760 = vadd.f32 %v630, %v750
        %s761 = scalar_lea.vmem %s253, 288
        %v762 = vld [vmem:[%s761] sm:$0xff]
        %v763 = vld [vmem:[%s761 + $0x10] sm:$0xff]
        %v764 = vld [vmem:[%s761 + $0x20] sm:$0xff]
        %v765 = vld [vmem:[%s761 + $0x30] sm:$0xff]
        %v766 = vld [vmem:[%s761 + $0x40] sm:$0xff]
        %v767 = vld [vmem:[%s761 + $0x50] sm:$0xff]
        %v768 = vld [vmem:[%s761 + $0x60] sm:$0xff]
        %v769 = vld [vmem:[%s761 + $0x70] sm:$0xff]
        %v770 = vpack.c.bf16 %v763, %v762
        %v771 = vpack.c.bf16 %v765, %v764
        %v772 = vpack.c.bf16 %v767, %v766
        %v773 = vpack.c.bf16 %v769, %v768
        %s774 = scalar_lea.vmem %s1, 128
        %v775 = vld [vmem:[%s774] sm:$0xf]
        %v776 = vld [vmem:[%s774 + $0x4] sm:$0xf]
        %v777 = vld [vmem:[%s774 + $0x8] sm:$0xf]
        %v778 = vld [vmem:[%s774 + $0xc] sm:$0xf]
        %v779 = vld [vmem:[%s774 + $0x10] sm:$0xf]
        %v780 = vld [vmem:[%s774 + $0x14] sm:$0xf]
        %v781 = vld [vmem:[%s774 + $0x18] sm:$0xf]
        %v782 = vld [vmem:[%s774 + $0x1c] sm:$0xf]
        %v791 = vunpack.c.l.b16 %v775
        %v792 = vunpack.c.l.b16 %v776
        %v793 = vunpack.c.l.b16 %v777
        %v794 = vunpack.c.l.b16 %v778
        %v795 = vunpack.c.l.b16 %v779
        %v796 = vunpack.c.l.b16 %v780
        %v797 = vunpack.c.l.b16 %v781
        %v798 = vunpack.c.l.b16 %v782
        %v799 = vpack.c.b16 %v792, %v791
        %v800 = vpack.c.b16 %v794, %v793
        %v801 = vpack.c.b16 %v796, %v795
        %v802 = vpack.c.b16 %v798, %v797
        %v808 = vsel %vm322, %v770, 0
        %v811 = vsel %vm322, %v771, 0
        %v814 = vsel %vm322, %v772, 0
        %v817 = vsel %vm322, %v773, 0
        %819 = vmatprep.subr.bf16.mxu0 0
        %820 = vmatpush1.bf16.msra.mxu0 %v799
        %821 = vmatprep.subr.bf16.mxu0 0
        %822 = vmatpush1.bf16.msra.mxu0 %v800
        %823 = vmatprep.subr.bf16.mxu0 0
        %824 = vmatpush1.bf16.msra.mxu0 %v801
        %825 = vmatprep.subr.bf16.mxu0 0
        %826 = vmatpush1.bf16.msra.mxu0 %v802
        %827 = vmatprep.subr.bf16.mxu0 0
        %828 = vmatpush1.bf16.msra.mxu0 0
        %829 = vmatprep.subr.bf16.mxu0 0
        %830 = vmatpush1.bf16.msra.mxu0 0
        %831 = vmatprep.subr.bf16.mxu0 0
        %832 = vmatpush1.bf16.msra.mxu0 0
        %833 = vmatprep.subr.bf16.mxu0 0
        %834 = vmatpush1.bf16.msra.mxu0 0
        %835 = vmatprep.subr.bf16.mxu0 0
        %836 = vmatpush1.bf16.msra.mxu0 0
        %837 = vmatprep.subr.bf16.mxu0 0
        %838 = vmatpush1.bf16.msra.mxu0 0
        %839 = vmatprep.subr.bf16.mxu0 0
        %840 = vmatpush1.bf16.msra.mxu0 0
        %841 = vmatprep.subr.bf16.mxu0 0
        %842 = vmatpush1.bf16.msra.mxu0 0
        %843 = vmatprep.subr.bf16.mxu0 0
        %844 = vmatpush1.bf16.msra.mxu0 0
        %845 = vmatprep.subr.bf16.mxu0 0
        %846 = vmatpush1.bf16.msra.mxu0 0
        %847 = vmatprep.subr.bf16.mxu0 0
        %848 = vmatpush1.bf16.msra.mxu0 0
        %849 = vmatprep.subr.bf16.mxu0 0
        %850 = vmatpush1.bf16.msra.mxu0 0
        %851 = vmatprep.mubr.bf16.mxu0 0
        %852 = vmatmul.mubr.bf16.gmra.mrb[0].mxu0 %v808
        %v853 = vpop.f32.mrb[0].mxu0
        %v854 = vadd.f32 0.0, %v853
        %v855 = vpop.f32.mrb[0].mxu0
        %v856 = vpop.f32.mrb[0].mxu0
        %v857 = vadd.f32 0.0, %v856
        %v858 = vpop.f32.mrb[0].mxu0
        %859 = vmatprep.mubr.bf16.mxu0 0
        %860 = vmatmul.mubr.bf16.gmra.mrb[0].mxu0 %v811
        %v861 = vpop.f32.mrb[0].mxu0
        %v862 = vadd.f32 0.0, %v861
        %v863 = vpop.f32.mrb[0].mxu0
        %v864 = vpop.f32.mrb[0].mxu0
        %v865 = vadd.f32 0.0, %v864
        %v866 = vpop.f32.mrb[0].mxu0
        %867 = vmatprep.mubr.bf16.mxu0 0
        %868 = vmatmul.mubr.bf16.gmra.mrb[0].mxu0 %v814
        %v869 = vpop.f32.mrb[0].mxu0
        %v870 = vadd.f32 0.0, %v869
        %v871 = vpop.f32.mrb[0].mxu0
        %v872 = vpop.f32.mrb[0].mxu0
        %v873 = vadd.f32 0.0, %v872
        %v874 = vpop.f32.mrb[0].mxu0
        %875 = vmatprep.mubr.bf16.mxu0 0
        %876 = vmatmul.mubr.bf16.gmra.mrb[0].mxu0 %v817
        %v877 = vpop.f32.mrb[0].mxu0
        %v878 = vadd.f32 0.0, %v877
        %v879 = vpop.f32.mrb[0].mxu0
        %v880 = vpop.f32.mrb[0].mxu0
        %v881 = vadd.f32 0.0, %v880
        %v882 = vpop.f32.mrb[0].mxu0
        %883 = vdwg.mxu0
        %v884 = vadd.f32 %v753, %v854
        %v885 = vadd.f32 %v754, %v857
        %v886 = vadd.f32 %v755, %v862
        %v887 = vadd.f32 %v756, %v865
        %v888 = vadd.f32 %v757, %v870
        %v889 = vadd.f32 %v758, %v873
        %v890 = vadd.f32 %v759, %v878
        %v891 = vadd.f32 %v760, %v881
        %s892 = scalar_lea.vmem %s253, 432
        %v893 = vld [vmem:[%s892] sm:$0xff]
        %v894 = vld [vmem:[%s892 + $0x10] sm:$0xff]
        %v895 = vld [vmem:[%s892 + $0x20] sm:$0xff]
        %v896 = vld [vmem:[%s892 + $0x30] sm:$0xff]
        %v897 = vld [vmem:[%s892 + $0x40] sm:$0xff]
        %v898 = vld [vmem:[%s892 + $0x50] sm:$0xff]
        %v899 = vld [vmem:[%s892 + $0x60] sm:$0xff]
        %v900 = vld [vmem:[%s892 + $0x70] sm:$0xff]
        %v901 = vpack.c.bf16 %v894, %v893
        %v902 = vpack.c.bf16 %v896, %v895
        %v903 = vpack.c.bf16 %v898, %v897
        %v904 = vpack.c.bf16 %v900, %v899
        %s905 = scalar_lea.vmem %s1, 160
        %v906 = vld [vmem:[%s905] sm:$0xf]
        %v907 = vld [vmem:[%s905 + $0x4] sm:$0xf]
        %v908 = vld [vmem:[%s905 + $0x8] sm:$0xf]
        %v909 = vld [vmem:[%s905 + $0xc] sm:$0xf]
        %v910 = vld [vmem:[%s905 + $0x10] sm:$0xf]
        %v911 = vld [vmem:[%s905 + $0x14] sm:$0xf]
        %v912 = vld [vmem:[%s905 + $0x18] sm:$0xf]
        %v913 = vld [vmem:[%s905 + $0x1c] sm:$0xf]
        %v922 = vunpack.c.l.b16 %v906
        %v923 = vunpack.c.l.b16 %v907
        %v924 = vunpack.c.l.b16 %v908
        %v925 = vunpack.c.l.b16 %v909
        %v926 = vunpack.c.l.b16 %v910
        %v927 = vunpack.c.l.b16 %v911
        %v928 = vunpack.c.l.b16 %v912
        %v929 = vunpack.c.l.b16 %v913
        %v930 = vpack.c.b16 %v923, %v922
        %v931 = vpack.c.b16 %v925, %v924
        %v932 = vpack.c.b16 %v927, %v926
        %v933 = vpack.c.b16 %v929, %v928
        %v939 = vsel %vm322, %v901, 0
        %v942 = vsel %vm322, %v902, 0
        %v945 = vsel %vm322, %v903, 0
        %v948 = vsel %vm322, %v904, 0
        %950 = vmatprep.subr.bf16.mxu0 0
        %951 = vmatpush1.bf16.msra.mxu0 %v930
        %952 = vmatprep.subr.bf16.mxu0 0
        %953 = vmatpush1.bf16.msra.mxu0 %v931
        %954 = vmatprep.subr.bf16.mxu0 0
        %955 = vmatpush1.bf16.msra.mxu0 %v932
        %956 = vmatprep.subr.bf16.mxu0 0
        %957 = vmatpush1.bf16.msra.mxu0 %v933
        %958 = vmatprep.subr.bf16.mxu0 0
        %959 = vmatpush1.bf16.msra.mxu0 0
        %960 = vmatprep.subr.bf16.mxu0 0
        %961 = vmatpush1.bf16.msra.mxu0 0
        %962 = vmatprep.subr.bf16.mxu0 0
        %963 = vmatpush1.bf16.msra.mxu0 0
        %964 = vmatprep.subr.bf16.mxu0 0
        %965 = vmatpush1.bf16.msra.mxu0 0
        %966 = vmatprep.subr.bf16.mxu0 0
        %967 = vmatpush1.bf16.msra.mxu0 0
        %968 = vmatprep.subr.bf16.mxu0 0
        %969 = vmatpush1.bf16.msra.mxu0 0
        %970 = vmatprep.subr.bf16.mxu0 0
        %971 = vmatpush1.bf16.msra.mxu0 0
        %972 = vmatprep.subr.bf16.mxu0 0
        %973 = vmatpush1.bf16.msra.mxu0 0
        %974 = vmatprep.subr.bf16.mxu0 0
        %975 = vmatpush1.bf16.msra.mxu0 0
        %976 = vmatprep.subr.bf16.mxu0 0
        %977 = vmatpush1.bf16.msra.mxu0 0
        %978 = vmatprep.subr.bf16.mxu0 0
        %979 = vmatpush1.bf16.msra.mxu0 0
        %980 = vmatprep.subr.bf16.mxu0 0
        %981 = vmatpush1.bf16.msra.mxu0 0
        %982 = vmatprep.mubr.bf16.mxu0 0
        %983 = vmatmul.mubr.bf16.gmra.mrb[0].mxu0 %v939
        %v984 = vpop.f32.mrb[0].mxu0
        %v985 = vadd.f32 0.0, %v984
        %v986 = vpop.f32.mrb[0].mxu0
        %v987 = vpop.f32.mrb[0].mxu0
        %v988 = vadd.f32 0.0, %v987
        %v989 = vpop.f32.mrb[0].mxu0
        %990 = vmatprep.mubr.bf16.mxu0 0
        %991 = vmatmul.mubr.bf16.gmra.mrb[0].mxu0 %v942
        %v992 = vpop.f32.mrb[0].mxu0
        %v993 = vadd.f32 0.0, %v992
        %v994 = vpop.f32.mrb[0].mxu0
        %v995 = vpop.f32.mrb[0].mxu0
        %v996 = vadd.f32 0.0, %v995
        %v997 = vpop.f32.mrb[0].mxu0
        %998 = vmatprep.mubr.bf16.mxu0 0
        %999 = vmatmul.mubr.bf16.gmra.mrb[0].mxu0 %v945
        %v1000 = vpop.f32.mrb[0].mxu0
        %v1001 = vadd.f32 0.0, %v1000
        %v1002 = vpop.f32.mrb[0].mxu0
        %v1003 = vpop.f32.mrb[0].mxu0
        %v1004 = vadd.f32 0.0, %v1003
        %v1005 = vpop.f32.mrb[0].mxu0
        %1006 = vmatprep.mubr.bf16.mxu0 0
        %1007 = vmatmul.mubr.bf16.gmra.mrb[0].mxu0 %v948
        %v1008 = vpop.f32.mrb[0].mxu0
        %v1009 = vadd.f32 0.0, %v1008
        %v1010 = vpop.f32.mrb[0].mxu0
        %v1011 = vpop.f32.mrb[0].mxu0
        %v1012 = vadd.f32 0.0, %v1011
        %v1013 = vpop.f32.mrb[0].mxu0
        %1014 = vdwg.mxu0
        %v1015 = vadd.f32 %v884, %v985
        %v1016 = vadd.f32 %v885, %v988
        %v1017 = vadd.f32 %v886, %v993
        %v1018 = vadd.f32 %v887, %v996
        %v1019 = vadd.f32 %v888, %v1001
        %v1020 = vadd.f32 %v889, %v1004
        %v1021 = vadd.f32 %v890, %v1009
        %v1022 = vadd.f32 %v891, %v1012
        %v1023 = vld [vmem:[%s761 + $0x1] sm:$0xff]
        %v1024 = vld [vmem:[%s761 + $0x11] sm:$0xff]
        %v1025 = vld [vmem:[%s761 + $0x21] sm:$0xff]
        %v1026 = vld [vmem:[%s761 + $0x31] sm:$0xff]
        %v1027 = vld [vmem:[%s761 + $0x41] sm:$0xff]
        %v1028 = vld [vmem:[%s761 + $0x51] sm:$0xff]
        %v1029 = vld [vmem:[%s761 + $0x61] sm:$0xff]
        %v1030 = vld [vmem:[%s761 + $0x71] sm:$0xff]
        %v1031 = vpack.c.bf16 %v1024, %v1023
        %v1032 = vpack.c.bf16 %v1026, %v1025
        %v1033 = vpack.c.bf16 %v1028, %v1027
        %v1034 = vpack.c.bf16 %v1030, %v1029
        %s1035 = scalar_lea.vmem %s1, 192
        %v1036 = vld [vmem:[%s1035] sm:$0xf]
        %v1037 = vld [vmem:[%s1035 + $0x4] sm:$0xf]
        %v1038 = vld [vmem:[%s1035 + $0x8] sm:$0xf]
        %v1039 = vld [vmem:[%s1035 + $0xc] sm:$0xf]
        %v1040 = vld [vmem:[%s1035 + $0x10] sm:$0xf]
        %v1041 = vld [vmem:[%s1035 + $0x14] sm:$0xf]
        %v1042 = vld [vmem:[%s1035 + $0x18] sm:$0xf]
        %v1043 = vld [vmem:[%s1035 + $0x1c] sm:$0xf]
        %v1052 = vunpack.c.l.b16 %v1036
        %v1053 = vunpack.c.l.b16 %v1037
        %v1054 = vunpack.c.l.b16 %v1038
        %v1055 = vunpack.c.l.b16 %v1039
        %v1056 = vunpack.c.l.b16 %v1040
        %v1057 = vunpack.c.l.b16 %v1041
        %v1058 = vunpack.c.l.b16 %v1042
        %v1059 = vunpack.c.l.b16 %v1043
        %v1060 = vpack.c.b16 %v1053, %v1052
        %v1061 = vpack.c.b16 %v1055, %v1054
        %v1062 = vpack.c.b16 %v1057, %v1056
        %v1063 = vpack.c.b16 %v1059, %v1058
        %v1069 = vsel %vm322, %v1031, 0
        %v1072 = vsel %vm322, %v1032, 0
        %v1075 = vsel %vm322, %v1033, 0
        %v1078 = vsel %vm322, %v1034, 0
        %1080 = vmatprep.subr.bf16.mxu0 0
        %1081 = vmatpush1.bf16.msra.mxu0 %v1060
        %1082 = vmatprep.subr.bf16.mxu0 0
        %1083 = vmatpush1.bf16.msra.mxu0 %v1061
        %1084 = vmatprep.subr.bf16.mxu0 0
        %1085 = vmatpush1.bf16.msra.mxu0 %v1062
        %1086 = vmatprep.subr.bf16.mxu0 0
        %1087 = vmatpush1.bf16.msra.mxu0 %v1063
        %1088 = vmatprep.subr.bf16.mxu0 0
        %1089 = vmatpush1.bf16.msra.mxu0 0
        %1090 = vmatprep.subr.bf16.mxu0 0
        %1091 = vmatpush1.bf16.msra.mxu0 0
        %1092 = vmatprep.subr.bf16.mxu0 0
        %1093 = vmatpush1.bf16.msra.mxu0 0
        %1094 = vmatprep.subr.bf16.mxu0 0
        %1095 = vmatpush1.bf16.msra.mxu0 0
        %1096 = vmatprep.subr.bf16.mxu0 0
        %1097 = vmatpush1.bf16.msra.mxu0 0
        %1098 = vmatprep.subr.bf16.mxu0 0
        %1099 = vmatpush1.bf16.msra.mxu0 0
        %1100 = vmatprep.subr.bf16.mxu0 0
        %1101 = vmatpush1.bf16.msra.mxu0 0
        %1102 = vmatprep.subr.bf16.mxu0 0
        %1103 = vmatpush1.bf16.msra.mxu0 0
        %1104 = vmatprep.subr.bf16.mxu0 0
        %1105 = vmatpush1.bf16.msra.mxu0 0
        %1106 = vmatprep.subr.bf16.mxu0 0
        %1107 = vmatpush1.bf16.msra.mxu0 0
        %1108 = vmatprep.subr.bf16.mxu0 0
        %1109 = vmatpush1.bf16.msra.mxu0 0
        %1110 = vmatprep.subr.bf16.mxu0 0
        %1111 = vmatpush1.bf16.msra.mxu0 0
        %1112 = vmatprep.mubr.bf16.mxu0 0
        %1113 = vmatmul.mubr.bf16.gmra.mrb[0].mxu0 %v1069
        %v1114 = vpop.f32.mrb[0].mxu0
        %v1115 = vadd.f32 0.0, %v1114
        %v1116 = vpop.f32.mrb[0].mxu0
        %v1117 = vpop.f32.mrb[0].mxu0
        %v1118 = vadd.f32 0.0, %v1117
        %v1119 = vpop.f32.mrb[0].mxu0
        %1120 = vmatprep.mubr.bf16.mxu0 0
        %1121 = vmatmul.mubr.bf16.gmra.mrb[0].mxu0 %v1072
        %v1122 = vpop.f32.mrb[0].mxu0
        %v1123 = vadd.f32 0.0, %v1122
        %v1124 = vpop.f32.mrb[0].mxu0
        %v1125 = vpop.f32.mrb[0].mxu0
        %v1126 = vadd.f32 0.0, %v1125
        %v1127 = vpop.f32.mrb[0].mxu0
        %1128 = vmatprep.mubr.bf16.mxu0 0
        %1129 = vmatmul.mubr.bf16.gmra.mrb[0].mxu0 %v1075
        %v1130 = vpop.f32.mrb[0].mxu0
        %v1131 = vadd.f32 0.0, %v1130
        %v1132 = vpop.f32.mrb[0].mxu0
        %v1133 = vpop.f32.mrb[0].mxu0
        %v1134 = vadd.f32 0.0, %v1133
        %v1135 = vpop.f32.mrb[0].mxu0
        %1136 = vmatprep.mubr.bf16.mxu0 0
        %1137 = vmatmul.mubr.bf16.gmra.mrb[0].mxu0 %v1078
        %v1138 = vpop.f32.mrb[0].mxu0
        %v1139 = vadd.f32 0.0, %v1138
        %v1140 = vpop.f32.mrb[0].mxu0
        %v1141 = vpop.f32.mrb[0].mxu0
        %v1142 = vadd.f32 0.0, %v1141
        %v1143 = vpop.f32.mrb[0].mxu0
        %1144 = vdwg.mxu0
        %v1145 = vadd.f32 %v1015, %v1115
        %v1146 = vadd.f32 %v1016, %v1118
        %v1147 = vadd.f32 %v1017, %v1123
        %v1148 = vadd.f32 %v1018, %v1126
        %v1149 = vadd.f32 %v1019, %v1131
        %v1150 = vadd.f32 %v1020, %v1134
        %v1151 = vadd.f32 %v1021, %v1139
        %v1152 = vadd.f32 %v1022, %v1142
        %v1153 = vld [vmem:[%s892 + $0x1] sm:$0xff]
        %v1154 = vld [vmem:[%s892 + $0x11] sm:$0xff]
        %v1155 = vld [vmem:[%s892 + $0x21] sm:$0xff]
        %v1156 = vld [vmem:[%s892 + $0x31] sm:$0xff]
        %v1157 = vld [vmem:[%s892 + $0x41] sm:$0xff]
        %v1158 = vld [vmem:[%s892 + $0x51] sm:$0xff]
        %v1159 = vld [vmem:[%s892 + $0x61] sm:$0xff]
        %v1160 = vld [vmem:[%s892 + $0x71] sm:$0xff]
        %v1161 = vpack.c.bf16 %v1154, %v1153
        %v1162 = vpack.c.bf16 %v1156, %v1155
        %v1163 = vpack.c.bf16 %v1158, %v1157
        %v1164 = vpack.c.bf16 %v1160, %v1159
        %s1165 = scalar_lea.vmem %s1, 224
        %v1166 = vld [vmem:[%s1165] sm:$0xf]
        %v1167 = vld [vmem:[%s1165 + $0x4] sm:$0xf]
        %v1168 = vld [vmem:[%s1165 + $0x8] sm:$0xf]
        %v1169 = vld [vmem:[%s1165 + $0xc] sm:$0xf]
        %v1170 = vld [vmem:[%s1165 + $0x10] sm:$0xf]
        %v1171 = vld [vmem:[%s1165 + $0x14] sm:$0xf]
        %v1172 = vld [vmem:[%s1165 + $0x18] sm:$0xf]
        %v1173 = vld [vmem:[%s1165 + $0x1c] sm:$0xf]
        %v1182 = vunpack.c.l.b16 %v1166
        %v1183 = vunpack.c.l.b16 %v1167
        %v1184 = vunpack.c.l.b16 %v1168
        %v1185 = vunpack.c.l.b16 %v1169
        %v1186 = vunpack.c.l.b16 %v1170
        %v1187 = vunpack.c.l.b16 %v1171
        %v1188 = vunpack.c.l.b16 %v1172
        %v1189 = vunpack.c.l.b16 %v1173
        %v1190 = vpack.c.b16 %v1183, %v1182
        %v1191 = vpack.c.b16 %v1185, %v1184
        %v1192 = vpack.c.b16 %v1187, %v1186
        %v1193 = vpack.c.b16 %v1189, %v1188
        %v1199 = vsel %vm322, %v1161, 0
        %v1202 = vsel %vm322, %v1162, 0
        %v1205 = vsel %vm322, %v1163, 0
        %v1208 = vsel %vm322, %v1164, 0
        %1210 = vmatprep.subr.bf16.mxu0 0
        %1211 = vmatpush1.bf16.msra.mxu0 %v1190
        %1212 = vmatprep.subr.bf16.mxu0 0
        %1213 = vmatpush1.bf16.msra.mxu0 %v1191
        %1214 = vmatprep.subr.bf16.mxu0 0
        %1215 = vmatpush1.bf16.msra.mxu0 %v1192
        %1216 = vmatprep.subr.bf16.mxu0 0
        %1217 = vmatpush1.bf16.msra.mxu0 %v1193
        %1218 = vmatprep.subr.bf16.mxu0 0
        %1219 = vmatpush1.bf16.msra.mxu0 0
        %1220 = vmatprep.subr.bf16.mxu0 0
        %1221 = vmatpush1.bf16.msra.mxu0 0
        %1222 = vmatprep.subr.bf16.mxu0 0
        %1223 = vmatpush1.bf16.msra.mxu0 0
        %1224 = vmatprep.subr.bf16.mxu0 0
        %1225 = vmatpush1.bf16.msra.mxu0 0
        %1226 = vmatprep.subr.bf16.mxu0 0
        %1227 = vmatpush1.bf16.msra.mxu0 0
        %1228 = vmatprep.subr.bf16.mxu0 0
        %1229 = vmatpush1.bf16.msra.mxu0 0
        %1230 = vmatprep.subr.bf16.mxu0 0
        %1231 = vmatpush1.bf16.msra.mxu0 0
        %1232 = vmatprep.subr.bf16.mxu0 0
        %1233 = vmatpush1.bf16.msra.mxu0 0
        %1234 = vmatprep.subr.bf16.mxu0 0
        %1235 = vmatpush1.bf16.msra.mxu0 0
        %1236 = vmatprep.subr.bf16.mxu0 0
        %1237 = vmatpush1.bf16.msra.mxu0 0
        %1238 = vmatprep.subr.bf16.mxu0 0
        %1239 = vmatpush1.bf16.msra.mxu0 0
        %1240 = vmatprep.subr.bf16.mxu0 0
        %1241 = vmatpush1.bf16.msra.mxu0 0
        %1242 = vmatprep.mubr.bf16.mxu0 0
        %1243 = vmatmul.mubr.bf16.gmra.mrb[0].mxu0 %v1199
        %v1244 = vpop.f32.mrb[0].mxu0
        %v1245 = vadd.f32 0.0, %v1244
        %v1246 = vpop.f32.mrb[0].mxu0
        %v1247 = vpop.f32.mrb[0].mxu0
        %v1248 = vadd.f32 0.0, %v1247
        %v1249 = vpop.f32.mrb[0].mxu0
        %1250 = vmatprep.mubr.bf16.mxu0 0
        %1251 = vmatmul.mubr.bf16.gmra.mrb[0].mxu0 %v1202
        %v1252 = vpop.f32.mrb[0].mxu0
        %v1253 = vadd.f32 0.0, %v1252
        %v1254 = vpop.f32.mrb[0].mxu0
        %v1255 = vpop.f32.mrb[0].mxu0
        %v1256 = vadd.f32 0.0, %v1255
        %v1257 = vpop.f32.mrb[0].mxu0
        %1258 = vmatprep.mubr.bf16.mxu0 0
        %1259 = vmatmul.mubr.bf16.gmra.mrb[0].mxu0 %v1205
        %v1260 = vpop.f32.mrb[0].mxu0
        %v1261 = vadd.f32 0.0, %v1260
        %v1262 = vpop.f32.mrb[0].mxu0
        %v1263 = vpop.f32.mrb[0].mxu0
        %v1264 = vadd.f32 0.0, %v1263
        %v1265 = vpop.f32.mrb[0].mxu0
        %1266 = vmatprep.mubr.bf16.mxu0 0
        %1267 = vmatmul.mubr.bf16.gmra.mrb[0].mxu0 %v1208
        %v1268 = vpop.f32.mrb[0].mxu0
        %v1269 = vadd.f32 0.0, %v1268
        %v1270 = vpop.f32.mrb[0].mxu0
        %v1271 = vpop.f32.mrb[0].mxu0
        %v1272 = vadd.f32 0.0, %v1271
        %v1273 = vpop.f32.mrb[0].mxu0
        %1274 = vdwg.mxu0
        %v1275 = vadd.f32 %v1145, %v1245
        %v1276 = vadd.f32 %v1146, %v1248
        %v1277 = vadd.f32 %v1147, %v1253
        %v1278 = vadd.f32 %v1148, %v1256
        %v1279 = vadd.f32 %v1149, %v1261
        %v1280 = vadd.f32 %v1150, %v1264
        %v1281 = vadd.f32 %v1151, %v1269
        %v1282 = vadd.f32 %v1152, %v1272
        %s1283 = scalar_lea.vmem %s253, 16
        %v1284 = vld [vmem:[%s1283] sm:$0xff]
        %v1285 = vld [vmem:[%s1283 + $0x10] sm:$0xff]
        %v1286 = vld [vmem:[%s1283 + $0x20] sm:$0xff]
        %v1287 = vld [vmem:[%s1283 + $0x30] sm:$0xff]
        %v1288 = vld [vmem:[%s1283 + $0x40] sm:$0xff]
        %v1289 = vld [vmem:[%s1283 + $0x50] sm:$0xff]
        %v1290 = vld [vmem:[%s1283 + $0x60] sm:$0xff]
        %v1291 = vld [vmem:[%s1283 + $0x70] sm:$0xff]
        %v1292 = vpack.c.bf16 %v1285, %v1284
        %v1293 = vpack.c.bf16 %v1287, %v1286
        %v1294 = vpack.c.bf16 %v1289, %v1288
        %v1295 = vpack.c.bf16 %v1291, %v1290
        %s1296 = scalar_lea.vmem %s1, 256
        %v1297 = vld [vmem:[%s1296] sm:$0xf]
        %v1298 = vld [vmem:[%s1296 + $0x4] sm:$0xf]
        %v1299 = vld [vmem:[%s1296 + $0x8] sm:$0xf]
        %v1300 = vld [vmem:[%s1296 + $0xc] sm:$0xf]
        %v1301 = vld [vmem:[%s1296 + $0x10] sm:$0xf]
        %v1302 = vld [vmem:[%s1296 + $0x14] sm:$0xf]
        %v1303 = vld [vmem:[%s1296 + $0x18] sm:$0xf]
        %v1304 = vld [vmem:[%s1296 + $0x1c] sm:$0xf]
        %v1313 = vunpack.c.l.b16 %v1297
        %v1314 = vunpack.c.l.b16 %v1298
        %v1315 = vunpack.c.l.b16 %v1299
        %v1316 = vunpack.c.l.b16 %v1300
        %v1317 = vunpack.c.l.b16 %v1301
        %v1318 = vunpack.c.l.b16 %v1302
        %v1319 = vunpack.c.l.b16 %v1303
        %v1320 = vunpack.c.l.b16 %v1304
        %v1321 = vpack.c.b16 %v1314, %v1313
        %v1322 = vpack.c.b16 %v1316, %v1315
        %v1323 = vpack.c.b16 %v1318, %v1317
        %v1324 = vpack.c.b16 %v1320, %v1319
        %v1330 = vsel %vm322, %v1292, 0
        %v1333 = vsel %vm322, %v1293, 0
        %v1336 = vsel %vm322, %v1294, 0
        %v1339 = vsel %vm322, %v1295, 0
        %1341 = vmatprep.subr.bf16.mxu0 0
        %1342 = vmatpush1.bf16.msra.mxu0 %v1321
        %1343 = vmatprep.subr.bf16.mxu0 0
        %1344 = vmatpush1.bf16.msra.mxu0 %v1322
        %1345 = vmatprep.subr.bf16.mxu0 0
        %1346 = vmatpush1.bf16.msra.mxu0 %v1323
        %1347 = vmatprep.subr.bf16.mxu0 0
        %1348 = vmatpush1.bf16.msra.mxu0 %v1324
        %1349 = vmatprep.subr.bf16.mxu0 0
        %1350 = vmatpush1.bf16.msra.mxu0 0
        %1351 = vmatprep.subr.bf16.mxu0 0
        %1352 = vmatpush1.bf16.msra.mxu0 0
        %1353 = vmatprep.subr.bf16.mxu0 0
        %1354 = vmatpush1.bf16.msra.mxu0 0
        %1355 = vmatprep.subr.bf16.mxu0 0
        %1356 = vmatpush1.bf16.msra.mxu0 0
        %1357 = vmatprep.subr.bf16.mxu0 0
        %1358 = vmatpush1.bf16.msra.mxu0 0
        %1359 = vmatprep.subr.bf16.mxu0 0
        %1360 = vmatpush1.bf16.msra.mxu0 0
        %1361 = vmatprep.subr.bf16.mxu0 0
        %1362 = vmatpush1.bf16.msra.mxu0 0
        %1363 = vmatprep.subr.bf16.mxu0 0
        %1364 = vmatpush1.bf16.msra.mxu0 0
        %1365 = vmatprep.subr.bf16.mxu0 0
        %1366 = vmatpush1.bf16.msra.mxu0 0
        %1367 = vmatprep.subr.bf16.mxu0 0
        %1368 = vmatpush1.bf16.msra.mxu0 0
        %1369 = vmatprep.subr.bf16.mxu0 0
        %1370 = vmatpush1.bf16.msra.mxu0 0
        %1371 = vmatprep.subr.bf16.mxu0 0
        %1372 = vmatpush1.bf16.msra.mxu0 0
        %1373 = vmatprep.mubr.bf16.mxu0 0
        %1374 = vmatmul.mubr.bf16.gmra.mrb[0].mxu0 %v1330
        %v1375 = vpop.f32.mrb[0].mxu0
        %v1376 = vadd.f32 0.0, %v1375
        %v1377 = vpop.f32.mrb[0].mxu0
        %v1378 = vpop.f32.mrb[0].mxu0
        %v1379 = vadd.f32 0.0, %v1378
        %v1380 = vpop.f32.mrb[0].mxu0
        %1381 = vmatprep.mubr.bf16.mxu0 0
        %1382 = vmatmul.mubr.bf16.gmra.mrb[0].mxu0 %v1333
        %v1383 = vpop.f32.mrb[0].mxu0
        %v1384 = vadd.f32 0.0, %v1383
        %v1385 = vpop.f32.mrb[0].mxu0
        %v1386 = vpop.f32.mrb[0].mxu0
        %v1387 = vadd.f32 0.0, %v1386
        %v1388 = vpop.f32.mrb[0].mxu0
        %1389 = vmatprep.mubr.bf16.mxu0 0
        %1390 = vmatmul.mubr.bf16.gmra.mrb[0].mxu0 %v1336
        %v1391 = vpop.f32.mrb[0].mxu0
        %v1392 = vadd.f32 0.0, %v1391
        %v1393 = vpop.f32.mrb[0].mxu0
        %v1394 = vpop.f32.mrb[0].mxu0
        %v1395 = vadd.f32 0.0, %v1394
        %v1396 = vpop.f32.mrb[0].mxu0
        %1397 = vmatprep.mubr.bf16.mxu0 0
        %1398 = vmatmul.mubr.bf16.gmra.mrb[0].mxu0 %v1339
        %v1399 = vpop.f32.mrb[0].mxu0
        %v1400 = vadd.f32 0.0, %v1399
        %v1401 = vpop.f32.mrb[0].mxu0
        %v1402 = vpop.f32.mrb[0].mxu0
        %v1403 = vadd.f32 0.0, %v1402
        %v1404 = vpop.f32.mrb[0].mxu0
        %1405 = vdwg.mxu0
        %v1406 = vadd.f32 %v1275, %v1376
        %v1407 = vadd.f32 %v1276, %v1379
        %v1408 = vadd.f32 %v1277, %v1384
        %v1409 = vadd.f32 %v1278, %v1387
        %v1410 = vadd.f32 %v1279, %v1392
        %v1411 = vadd.f32 %v1280, %v1395
        %v1412 = vadd.f32 %v1281, %v1400
        %v1413 = vadd.f32 %v1282, %v1403
        %s1414 = scalar_lea.vmem %s253, 160
        %v1415 = vld [vmem:[%s1414] sm:$0xff]
        %v1416 = vld [vmem:[%s1414 + $0x10] sm:$0xff]
        %v1417 = vld [vmem:[%s1414 + $0x20] sm:$0xff]
        %v1418 = vld [vmem:[%s1414 + $0x30] sm:$0xff]
        %v1419 = vld [vmem:[%s1414 + $0x40] sm:$0xff]
        %v1420 = vld [vmem:[%s1414 + $0x50] sm:$0xff]
        %v1421 = vld [vmem:[%s1414 + $0x60] sm:$0xff]
        %v1422 = vld [vmem:[%s1414 + $0x70] sm:$0xff]
        %v1423 = vpack.c.bf16 %v1416, %v1415
        %v1424 = vpack.c.bf16 %v1418, %v1417
        %v1425 = vpack.c.bf16 %v1420, %v1419
        %v1426 = vpack.c.bf16 %v1422, %v1421
        %s1427 = scalar_lea.vmem %s1, 288
        %v1428 = vld [vmem:[%s1427] sm:$0xf]
        %v1429 = vld [vmem:[%s1427 + $0x4] sm:$0xf]
        %v1430 = vld [vmem:[%s1427 + $0x8] sm:$0xf]
        %v1431 = vld [vmem:[%s1427 + $0xc] sm:$0xf]
        %v1432 = vld [vmem:[%s1427 + $0x10] sm:$0xf]
        %v1433 = vld [vmem:[%s1427 + $0x14] sm:$0xf]
        %v1434 = vld [vmem:[%s1427 + $0x18] sm:$0xf]
        %v1435 = vld [vmem:[%s1427 + $0x1c] sm:$0xf]
        %v1444 = vunpack.c.l.b16 %v1428
        %v1445 = vunpack.c.l.b16 %v1429
        %v1446 = vunpack.c.l.b16 %v1430
        %v1447 = vunpack.c.l.b16 %v1431
        %v1448 = vunpack.c.l.b16 %v1432
        %v1449 = vunpack.c.l.b16 %v1433
        %v1450 = vunpack.c.l.b16 %v1434
        %v1451 = vunpack.c.l.b16 %v1435
        %v1452 = vpack.c.b16 %v1445, %v1444
        %v1453 = vpack.c.b16 %v1447, %v1446
        %v1454 = vpack.c.b16 %v1449, %v1448
        %v1455 = vpack.c.b16 %v1451, %v1450
        %v1461 = vsel %vm322, %v1423, 0
        %v1464 = vsel %vm322, %v1424, 0
        %v1467 = vsel %vm322, %v1425, 0
        %v1470 = vsel %vm322, %v1426, 0
        %1472 = vmatprep.subr.bf16.mxu0 0
        %1473 = vmatpush1.bf16.msra.mxu0 %v1452
        %1474 = vmatprep.subr.bf16.mxu0 0
        %1475 = vmatpush1.bf16.msra.mxu0 %v1453
        %1476 = vmatprep.subr.bf16.mxu0 0
        %1477 = vmatpush1.bf16.msra.mxu0 %v1454
        %1478 = vmatprep.subr.bf16.mxu0 0
        %1479 = vmatpush1.bf16.msra.mxu0 %v1455
        %1480 = vmatprep.subr.bf16.mxu0 0
        %1481 = vmatpush1.bf16.msra.mxu0 0
        %1482 = vmatprep.subr.bf16.mxu0 0
        %1483 = vmatpush1.bf16.msra.mxu0 0
        %1484 = vmatprep.subr.bf16.mxu0 0
        %1485 = vmatpush1.bf16.msra.mxu0 0
        %1486 = vmatprep.subr.bf16.mxu0 0
        %1487 = vmatpush1.bf16.msra.mxu0 0
        %1488 = vmatprep.subr.bf16.mxu0 0
        %1489 = vmatpush1.bf16.msra.mxu0 0
        %1490 = vmatprep.subr.bf16.mxu0 0
        %1491 = vmatpush1.bf16.msra.mxu0 0
        %1492 = vmatprep.subr.bf16.mxu0 0
        %1493 = vmatpush1.bf16.msra.mxu0 0
        %1494 = vmatprep.subr.bf16.mxu0 0
        %1495 = vmatpush1.bf16.msra.mxu0 0
        %1496 = vmatprep.subr.bf16.mxu0 0
        %1497 = vmatpush1.bf16.msra.mxu0 0
        %1498 = vmatprep.subr.bf16.mxu0 0
        %1499 = vmatpush1.bf16.msra.mxu0 0
        %1500 = vmatprep.subr.bf16.mxu0 0
        %1501 = vmatpush1.bf16.msra.mxu0 0
        %1502 = vmatprep.subr.bf16.mxu0 0
        %1503 = vmatpush1.bf16.msra.mxu0 0
        %1504 = vmatprep.mubr.bf16.mxu0 0
        %1505 = vmatmul.mubr.bf16.gmra.mrb[0].mxu0 %v1461
        %v1506 = vpop.f32.mrb[0].mxu0
        %v1507 = vadd.f32 0.0, %v1506
        %v1508 = vpop.f32.mrb[0].mxu0
        %v1509 = vpop.f32.mrb[0].mxu0
        %v1510 = vadd.f32 0.0, %v1509
        %v1511 = vpop.f32.mrb[0].mxu0
        %1512 = vmatprep.mubr.bf16.mxu0 0
        %1513 = vmatmul.mubr.bf16.gmra.mrb[0].mxu0 %v1464
        %v1514 = vpop.f32.mrb[0].mxu0
        %v1515 = vadd.f32 0.0, %v1514
        %v1516 = vpop.f32.mrb[0].mxu0
        %v1517 = vpop.f32.mrb[0].mxu0
        %v1518 = vadd.f32 0.0, %v1517
        %v1519 = vpop.f32.mrb[0].mxu0
        %1520 = vmatprep.mubr.bf16.mxu0 0
        %1521 = vmatmul.mubr.bf16.gmra.mrb[0].mxu0 %v1467
        %v1522 = vpop.f32.mrb[0].mxu0
        %v1523 = vadd.f32 0.0, %v1522
        %v1524 = vpop.f32.mrb[0].mxu0
        %v1525 = vpop.f32.mrb[0].mxu0
        %v1526 = vadd.f32 0.0, %v1525
        %v1527 = vpop.f32.mrb[0].mxu0
        %1528 = vmatprep.mubr.bf16.mxu0 0
        %1529 = vmatmul.mubr.bf16.gmra.mrb[0].mxu0 %v1470
        %v1530 = vpop.f32.mrb[0].mxu0
        %v1531 = vadd.f32 0.0, %v1530
        %v1532 = vpop.f32.mrb[0].mxu0
        %v1533 = vpop.f32.mrb[0].mxu0
        %v1534 = vadd.f32 0.0, %v1533
        %v1535 = vpop.f32.mrb[0].mxu0
        %1536 = vdwg.mxu0
        %v1537 = vadd.f32 %v1406, %v1507
        %v1538 = vadd.f32 %v1407, %v1510
        %v1539 = vadd.f32 %v1408, %v1515
        %v1540 = vadd.f32 %v1409, %v1518
        %v1541 = vadd.f32 %v1410, %v1523
        %v1542 = vadd.f32 %v1411, %v1526
        %v1543 = vadd.f32 %v1412, %v1531
        %v1544 = vadd.f32 %v1413, %v1534
        %v1545 = vld [vmem:[%s1283 + $0x1] sm:$0xff]
        %v1546 = vld [vmem:[%s1283 + $0x11] sm:$0xff]
        %v1547 = vld [vmem:[%s1283 + $0x21] sm:$0xff]
        %v1548 = vld [vmem:[%s1283 + $0x31] sm:$0xff]
        %v1549 = vld [vmem:[%s1283 + $0x41] sm:$0xff]
        %v1550 = vld [vmem:[%s1283 + $0x51] sm:$0xff]
        %v1551 = vld [vmem:[%s1283 + $0x61] sm:$0xff]
        %v1552 = vld [vmem:[%s1283 + $0x71] sm:$0xff]
        %v1553 = vpack.c.bf16 %v1546, %v1545
        %v1554 = vpack.c.bf16 %v1548, %v1547
        %v1555 = vpack.c.bf16 %v1550, %v1549
        %v1556 = vpack.c.bf16 %v1552, %v1551
        %s1557 = scalar_lea.vmem %s1, 320
        %v1558 = vld [vmem:[%s1557] sm:$0xf]
        %v1559 = vld [vmem:[%s1557 + $0x4] sm:$0xf]
        %v1560 = vld [vmem:[%s1557 + $0x8] sm:$0xf]
        %v1561 = vld [vmem:[%s1557 + $0xc] sm:$0xf]
        %v1562 = vld [vmem:[%s1557 + $0x10] sm:$0xf]
        %v1563 = vld [vmem:[%s1557 + $0x14] sm:$0xf]
        %v1564 = vld [vmem:[%s1557 + $0x18] sm:$0xf]
        %v1565 = vld [vmem:[%s1557 + $0x1c] sm:$0xf]
        %v1574 = vunpack.c.l.b16 %v1558
        %v1575 = vunpack.c.l.b16 %v1559
        %v1576 = vunpack.c.l.b16 %v1560
        %v1577 = vunpack.c.l.b16 %v1561
        %v1578 = vunpack.c.l.b16 %v1562
        %v1579 = vunpack.c.l.b16 %v1563
        %v1580 = vunpack.c.l.b16 %v1564
        %v1581 = vunpack.c.l.b16 %v1565
        %v1582 = vpack.c.b16 %v1575, %v1574
        %v1583 = vpack.c.b16 %v1577, %v1576
        %v1584 = vpack.c.b16 %v1579, %v1578
        %v1585 = vpack.c.b16 %v1581, %v1580
        %v1591 = vsel %vm322, %v1553, 0
        %v1594 = vsel %vm322, %v1554, 0
        %v1597 = vsel %vm322, %v1555, 0
        %v1600 = vsel %vm322, %v1556, 0
        %1602 = vmatprep.subr.bf16.mxu0 0
        %1603 = vmatpush1.bf16.msra.mxu0 %v1582
        %1604 = vmatprep.subr.bf16.mxu0 0
        %1605 = vmatpush1.bf16.msra.mxu0 %v1583
        %1606 = vmatprep.subr.bf16.mxu0 0
        %1607 = vmatpush1.bf16.msra.mxu0 %v1584
        %1608 = vmatprep.subr.bf16.mxu0 0
        %1609 = vmatpush1.bf16.msra.mxu0 %v1585
        %1610 = vmatprep.subr.bf16.mxu0 0
        %1611 = vmatpush1.bf16.msra.mxu0 0
        %1612 = vmatprep.subr.bf16.mxu0 0
        %1613 = vmatpush1.bf16.msra.mxu0 0
        %1614 = vmatprep.subr.bf16.mxu0 0
        %1615 = vmatpush1.bf16.msra.mxu0 0
        %1616 = vmatprep.subr.bf16.mxu0 0
        %1617 = vmatpush1.bf16.msra.mxu0 0
        %1618 = vmatprep.subr.bf16.mxu0 0
        %1619 = vmatpush1.bf16.msra.mxu0 0
        %1620 = vmatprep.subr.bf16.mxu0 0
        %1621 = vmatpush1.bf16.msra.mxu0 0
        %1622 = vmatprep.subr.bf16.mxu0 0
        %1623 = vmatpush1.bf16.msra.mxu0 0
        %1624 = vmatprep.subr.bf16.mxu0 0
        %1625 = vmatpush1.bf16.msra.mxu0 0
        %1626 = vmatprep.subr.bf16.mxu0 0
        %1627 = vmatpush1.bf16.msra.mxu0 0
        %1628 = vmatprep.subr.bf16.mxu0 0
        %1629 = vmatpush1.bf16.msra.mxu0 0
        %1630 = vmatprep.subr.bf16.mxu0 0
        %1631 = vmatpush1.bf16.msra.mxu0 0
        %1632 = vmatprep.subr.bf16.mxu0 0
        %1633 = vmatpush1.bf16.msra.mxu0 0
        %1634 = vmatprep.mubr.bf16.mxu0 0
        %1635 = vmatmul.mubr.bf16.gmra.mrb[0].mxu0 %v1591
        %v1636 = vpop.f32.mrb[0].mxu0
        %v1637 = vadd.f32 0.0, %v1636
        %v1638 = vpop.f32.mrb[0].mxu0
        %v1639 = vpop.f32.mrb[0].mxu0
        %v1640 = vadd.f32 0.0, %v1639
        %v1641 = vpop.f32.mrb[0].mxu0
        %1642 = vmatprep.mubr.bf16.mxu0 0
        %1643 = vmatmul.mubr.bf16.gmra.mrb[0].mxu0 %v1594
        %v1644 = vpop.f32.mrb[0].mxu0
        %v1645 = vadd.f32 0.0, %v1644
        %v1646 = vpop.f32.mrb[0].mxu0
        %v1647 = vpop.f32.mrb[0].mxu0
        %v1648 = vadd.f32 0.0, %v1647
        %v1649 = vpop.f32.mrb[0].mxu0
        %1650 = vmatprep.mubr.bf16.mxu0 0
        %1651 = vmatmul.mubr.bf16.gmra.mrb[0].mxu0 %v1597
        %v1652 = vpop.f32.mrb[0].mxu0
        %v1653 = vadd.f32 0.0, %v1652
        %v1654 = vpop.f32.mrb[0].mxu0
        %v1655 = vpop.f32.mrb[0].mxu0
        %v1656 = vadd.f32 0.0, %v1655
        %v1657 = vpop.f32.mrb[0].mxu0
        %1658 = vmatprep.mubr.bf16.mxu0 0
        %1659 = vmatmul.mubr.bf16.gmra.mrb[0].mxu0 %v1600
        %v1660 = vpop.f32.mrb[0].mxu0
        %v1661 = vadd.f32 0.0, %v1660
        %v1662 = vpop.f32.mrb[0].mxu0
        %v1663 = vpop.f32.mrb[0].mxu0
        %v1664 = vadd.f32 0.0, %v1663
        %v1665 = vpop.f32.mrb[0].mxu0
        %1666 = vdwg.mxu0
        %v1667 = vadd.f32 %v1537, %v1637
        %v1668 = vadd.f32 %v1538, %v1640
        %v1669 = vadd.f32 %v1539, %v1645
        %v1670 = vadd.f32 %v1540, %v1648
        %v1671 = vadd.f32 %v1541, %v1653
        %v1672 = vadd.f32 %v1542, %v1656
        %v1673 = vadd.f32 %v1543, %v1661
        %v1674 = vadd.f32 %v1544, %v1664
        %v1675 = vld [vmem:[%s1414 + $0x1] sm:$0xff]
        %v1676 = vld [vmem:[%s1414 + $0x11] sm:$0xff]
        %v1677 = vld [vmem:[%s1414 + $0x21] sm:$0xff]
        %v1678 = vld [vmem:[%s1414 + $0x31] sm:$0xff]
        %v1679 = vld [vmem:[%s1414 + $0x41] sm:$0xff]
        %v1680 = vld [vmem:[%s1414 + $0x51] sm:$0xff]
        %v1681 = vld [vmem:[%s1414 + $0x61] sm:$0xff]
        %v1682 = vld [vmem:[%s1414 + $0x71] sm:$0xff]
        %v1683 = vpack.c.bf16 %v1676, %v1675
        %v1684 = vpack.c.bf16 %v1678, %v1677
        %v1685 = vpack.c.bf16 %v1680, %v1679
        %v1686 = vpack.c.bf16 %v1682, %v1681
        %s1687 = scalar_lea.vmem %s1, 352
        %v1688 = vld [vmem:[%s1687] sm:$0xf]
        %v1689 = vld [vmem:[%s1687 + $0x4] sm:$0xf]
        %v1690 = vld [vmem:[%s1687 + $0x8] sm:$0xf]
        %v1691 = vld [vmem:[%s1687 + $0xc] sm:$0xf]
        %v1692 = vld [vmem:[%s1687 + $0x10] sm:$0xf]
        %v1693 = vld [vmem:[%s1687 + $0x14] sm:$0xf]
        %v1694 = vld [vmem:[%s1687 + $0x18] sm:$0xf]
        %v1695 = vld [vmem:[%s1687 + $0x1c] sm:$0xf]
        %v1704 = vunpack.c.l.b16 %v1688
        %v1705 = vunpack.c.l.b16 %v1689
        %v1706 = vunpack.c.l.b16 %v1690
        %v1707 = vunpack.c.l.b16 %v1691
        %v1708 = vunpack.c.l.b16 %v1692
        %v1709 = vunpack.c.l.b16 %v1693
        %v1710 = vunpack.c.l.b16 %v1694
        %v1711 = vunpack.c.l.b16 %v1695
        %v1712 = vpack.c.b16 %v1705, %v1704
        %v1713 = vpack.c.b16 %v1707, %v1706
        %v1714 = vpack.c.b16 %v1709, %v1708
        %v1715 = vpack.c.b16 %v1711, %v1710
        %v1721 = vsel %vm322, %v1683, 0
        %v1724 = vsel %vm322, %v1684, 0
        %v1727 = vsel %vm322, %v1685, 0
        %v1730 = vsel %vm322, %v1686, 0
        %1732 = vmatprep.subr.bf16.mxu0 0
        %1733 = vmatpush1.bf16.msra.mxu0 %v1712
        %1734 = vmatprep.subr.bf16.mxu0 0
        %1735 = vmatpush1.bf16.msra.mxu0 %v1713
        %1736 = vmatprep.subr.bf16.mxu0 0
        %1737 = vmatpush1.bf16.msra.mxu0 %v1714
        %1738 = vmatprep.subr.bf16.mxu0 0
        %1739 = vmatpush1.bf16.msra.mxu0 %v1715
        %1740 = vmatprep.subr.bf16.mxu0 0
        %1741 = vmatpush1.bf16.msra.mxu0 0
        %1742 = vmatprep.subr.bf16.mxu0 0
        %1743 = vmatpush1.bf16.msra.mxu0 0
        %1744 = vmatprep.subr.bf16.mxu0 0
        %1745 = vmatpush1.bf16.msra.mxu0 0
        %1746 = vmatprep.subr.bf16.mxu0 0
        %1747 = vmatpush1.bf16.msra.mxu0 0
        %1748 = vmatprep.subr.bf16.mxu0 0
        %1749 = vmatpush1.bf16.msra.mxu0 0
        %1750 = vmatprep.subr.bf16.mxu0 0
        %1751 = vmatpush1.bf16.msra.mxu0 0
        %1752 = vmatprep.subr.bf16.mxu0 0
        %1753 = vmatpush1.bf16.msra.mxu0 0
        %1754 = vmatprep.subr.bf16.mxu0 0
        %1755 = vmatpush1.bf16.msra.mxu0 0
        %1756 = vmatprep.subr.bf16.mxu0 0
        %1757 = vmatpush1.bf16.msra.mxu0 0
        %1758 = vmatprep.subr.bf16.mxu0 0
        %1759 = vmatpush1.bf16.msra.mxu0 0
        %1760 = vmatprep.subr.bf16.mxu0 0
        %1761 = vmatpush1.bf16.msra.mxu0 0
        %1762 = vmatprep.subr.bf16.mxu0 0
        %1763 = vmatpush1.bf16.msra.mxu0 0
        %1764 = vmatprep.mubr.bf16.mxu0 0
        %1765 = vmatmul.mubr.bf16.gmra.mrb[0].mxu0 %v1721
        %v1766 = vpop.f32.mrb[0].mxu0
        %v1767 = vadd.f32 0.0, %v1766
        %v1768 = vpop.f32.mrb[0].mxu0
        %v1769 = vpop.f32.mrb[0].mxu0
        %v1770 = vadd.f32 0.0, %v1769
        %v1771 = vpop.f32.mrb[0].mxu0
        %1772 = vmatprep.mubr.bf16.mxu0 0
        %1773 = vmatmul.mubr.bf16.gmra.mrb[0].mxu0 %v1724
        %v1774 = vpop.f32.mrb[0].mxu0
        %v1775 = vadd.f32 0.0, %v1774
        %v1776 = vpop.f32.mrb[0].mxu0
        %v1777 = vpop.f32.mrb[0].mxu0
        %v1778 = vadd.f32 0.0, %v1777
        %v1779 = vpop.f32.mrb[0].mxu0
        %1780 = vmatprep.mubr.bf16.mxu0 0
        %1781 = vmatmul.mubr.bf16.gmra.mrb[0].mxu0 %v1727
        %v1782 = vpop.f32.mrb[0].mxu0
        %v1783 = vadd.f32 0.0, %v1782
        %v1784 = vpop.f32.mrb[0].mxu0
        %v1785 = vpop.f32.mrb[0].mxu0
        %v1786 = vadd.f32 0.0, %v1785
        %v1787 = vpop.f32.mrb[0].mxu0
        %1788 = vmatprep.mubr.bf16.mxu0 0
        %1789 = vmatmul.mubr.bf16.gmra.mrb[0].mxu0 %v1730
        %v1790 = vpop.f32.mrb[0].mxu0
        %v1791 = vadd.f32 0.0, %v1790
        %v1792 = vpop.f32.mrb[0].mxu0
        %v1793 = vpop.f32.mrb[0].mxu0
        %v1794 = vadd.f32 0.0, %v1793
        %v1795 = vpop.f32.mrb[0].mxu0
        %1796 = vdwg.mxu0
        %v1797 = vadd.f32 %v1667, %v1767
        %v1798 = vadd.f32 %v1668, %v1770
        %v1799 = vadd.f32 %v1669, %v1775
        %v1800 = vadd.f32 %v1670, %v1778
        %v1801 = vadd.f32 %v1671, %v1783
        %v1802 = vadd.f32 %v1672, %v1786
        %v1803 = vadd.f32 %v1673, %v1791
        %v1804 = vadd.f32 %v1674, %v1794
        %s1805 = scalar_lea.vmem %s253, 304
        %v1806 = vld [vmem:[%s1805] sm:$0xff]
        %v1807 = vld [vmem:[%s1805 + $0x10] sm:$0xff]
        %v1808 = vld [vmem:[%s1805 + $0x20] sm:$0xff]
        %v1809 = vld [vmem:[%s1805 + $0x30] sm:$0xff]
        %v1810 = vld [vmem:[%s1805 + $0x40] sm:$0xff]
        %v1811 = vld [vmem:[%s1805 + $0x50] sm:$0xff]
        %v1812 = vld [vmem:[%s1805 + $0x60] sm:$0xff]
        %v1813 = vld [vmem:[%s1805 + $0x70] sm:$0xff]
        %v1814 = vpack.c.bf16 %v1807, %v1806
        %v1815 = vpack.c.bf16 %v1809, %v1808
        %v1816 = vpack.c.bf16 %v1811, %v1810
        %v1817 = vpack.c.bf16 %v1813, %v1812
        %s1818 = scalar_lea.vmem %s1, 384
        %v1819 = vld [vmem:[%s1818] sm:$0xf]
        %v1820 = vld [vmem:[%s1818 + $0x4] sm:$0xf]
        %v1821 = vld [vmem:[%s1818 + $0x8] sm:$0xf]
        %v1822 = vld [vmem:[%s1818 + $0xc] sm:$0xf]
        %v1823 = vld [vmem:[%s1818 + $0x10] sm:$0xf]
        %v1824 = vld [vmem:[%s1818 + $0x14] sm:$0xf]
        %v1825 = vld [vmem:[%s1818 + $0x18] sm:$0xf]
        %v1826 = vld [vmem:[%s1818 + $0x1c] sm:$0xf]
        %v1835 = vunpack.c.l.b16 %v1819
        %v1836 = vunpack.c.l.b16 %v1820
        %v1837 = vunpack.c.l.b16 %v1821
        %v1838 = vunpack.c.l.b16 %v1822
        %v1839 = vunpack.c.l.b16 %v1823
        %v1840 = vunpack.c.l.b16 %v1824
        %v1841 = vunpack.c.l.b16 %v1825
        %v1842 = vunpack.c.l.b16 %v1826
        %v1843 = vpack.c.b16 %v1836, %v1835
        %v1844 = vpack.c.b16 %v1838, %v1837
        %v1845 = vpack.c.b16 %v1840, %v1839
        %v1846 = vpack.c.b16 %v1842, %v1841
        %v1852 = vsel %vm322, %v1814, 0
        %v1855 = vsel %vm322, %v1815, 0
        %v1858 = vsel %vm322, %v1816, 0
        %v1861 = vsel %vm322, %v1817, 0
        %1863 = vmatprep.subr.bf16.mxu0 0
        %1864 = vmatpush1.bf16.msra.mxu0 %v1843
        %1865 = vmatprep.subr.bf16.mxu0 0
        %1866 = vmatpush1.bf16.msra.mxu0 %v1844
        %1867 = vmatprep.subr.bf16.mxu0 0
        %1868 = vmatpush1.bf16.msra.mxu0 %v1845
        %1869 = vmatprep.subr.bf16.mxu0 0
        %1870 = vmatpush1.bf16.msra.mxu0 %v1846
        %1871 = vmatprep.subr.bf16.mxu0 0
        %1872 = vmatpush1.bf16.msra.mxu0 0
        %1873 = vmatprep.subr.bf16.mxu0 0
        %1874 = vmatpush1.bf16.msra.mxu0 0
        %1875 = vmatprep.subr.bf16.mxu0 0
        %1876 = vmatpush1.bf16.msra.mxu0 0
        %1877 = vmatprep.subr.bf16.mxu0 0
        %1878 = vmatpush1.bf16.msra.mxu0 0
        %1879 = vmatprep.subr.bf16.mxu0 0
        %1880 = vmatpush1.bf16.msra.mxu0 0
        %1881 = vmatprep.subr.bf16.mxu0 0
        %1882 = vmatpush1.bf16.msra.mxu0 0
        %1883 = vmatprep.subr.bf16.mxu0 0
        %1884 = vmatpush1.bf16.msra.mxu0 0
        %1885 = vmatprep.subr.bf16.mxu0 0
        %1886 = vmatpush1.bf16.msra.mxu0 0
        %1887 = vmatprep.subr.bf16.mxu0 0
        %1888 = vmatpush1.bf16.msra.mxu0 0
        %1889 = vmatprep.subr.bf16.mxu0 0
        %1890 = vmatpush1.bf16.msra.mxu0 0
        %1891 = vmatprep.subr.bf16.mxu0 0
        %1892 = vmatpush1.bf16.msra.mxu0 0
        %1893 = vmatprep.subr.bf16.mxu0 0
        %1894 = vmatpush1.bf16.msra.mxu0 0
        %1895 = vmatprep.mubr.bf16.mxu0 0
        %1896 = vmatmul.mubr.bf16.gmra.mrb[0].mxu0 %v1852
        %v1897 = vpop.f32.mrb[0].mxu0
        %v1898 = vadd.f32 0.0, %v1897
        %v1899 = vpop.f32.mrb[0].mxu0
        %v1900 = vpop.f32.mrb[0].mxu0
        %v1901 = vadd.f32 0.0, %v1900
        %v1902 = vpop.f32.mrb[0].mxu0
        %1903 = vmatprep.mubr.bf16.mxu0 0
        %1904 = vmatmul.mubr.bf16.gmra.mrb[0].mxu0 %v1855
        %v1905 = vpop.f32.mrb[0].mxu0
        %v1906 = vadd.f32 0.0, %v1905
        %v1907 = vpop.f32.mrb[0].mxu0
        %v1908 = vpop.f32.mrb[0].mxu0
        %v1909 = vadd.f32 0.0, %v1908
        %v1910 = vpop.f32.mrb[0].mxu0
        %1911 = vmatprep.mubr.bf16.mxu0 0
        %1912 = vmatmul.mubr.bf16.gmra.mrb[0].mxu0 %v1858
        %v1913 = vpop.f32.mrb[0].mxu0
        %v1914 = vadd.f32 0.0, %v1913
        %v1915 = vpop.f32.mrb[0].mxu0
        %v1916 = vpop.f32.mrb[0].mxu0
        %v1917 = vadd.f32 0.0, %v1916
        %v1918 = vpop.f32.mrb[0].mxu0
        %1919 = vmatprep.mubr.bf16.mxu0 0
        %1920 = vmatmul.mubr.bf16.gmra.mrb[0].mxu0 %v1861
        %v1921 = vpop.f32.mrb[0].mxu0
        %v1922 = vadd.f32 0.0, %v1921
        %v1923 = vpop.f32.mrb[0].mxu0
        %v1924 = vpop.f32.mrb[0].mxu0
        %v1925 = vadd.f32 0.0, %v1924
        %v1926 = vpop.f32.mrb[0].mxu0
        %1927 = vdwg.mxu0
        %v1928 = vadd.f32 %v1797, %v1898
        %v1929 = vadd.f32 %v1798, %v1901
        %v1930 = vadd.f32 %v1799, %v1906
        %v1931 = vadd.f32 %v1800, %v1909
        %v1932 = vadd.f32 %v1801, %v1914
        %v1933 = vadd.f32 %v1802, %v1917
        %v1934 = vadd.f32 %v1803, %v1922
        %v1935 = vadd.f32 %v1804, %v1925
        %s1936 = scalar_lea.vmem %s253, 448
        %v1937 = vld [vmem:[%s1936] sm:$0xff]
        %v1938 = vld [vmem:[%s1936 + $0x10] sm:$0xff]
        %v1939 = vld [vmem:[%s1936 + $0x20] sm:$0xff]
        %v1940 = vld [vmem:[%s1936 + $0x30] sm:$0xff]
        %v1941 = vld [vmem:[%s1936 + $0x40] sm:$0xff]
        %v1942 = vld [vmem:[%s1936 + $0x50] sm:$0xff]
        %v1943 = vld [vmem:[%s1936 + $0x60] sm:$0xff]
        %v1944 = vld [vmem:[%s1936 + $0x70] sm:$0xff]
        %v1945 = vpack.c.bf16 %v1938, %v1937
        %v1946 = vpack.c.bf16 %v1940, %v1939
        %v1947 = vpack.c.bf16 %v1942, %v1941
        %v1948 = vpack.c.bf16 %v1944, %v1943
        %s1949 = scalar_lea.vmem %s1, 416
        %v1950 = vld [vmem:[%s1949] sm:$0xf]
        %v1951 = vld [vmem:[%s1949 + $0x4] sm:$0xf]
        %v1952 = vld [vmem:[%s1949 + $0x8] sm:$0xf]
        %v1953 = vld [vmem:[%s1949 + $0xc] sm:$0xf]
        %v1954 = vld [vmem:[%s1949 + $0x10] sm:$0xf]
        %v1955 = vld [vmem:[%s1949 + $0x14] sm:$0xf]
        %v1956 = vld [vmem:[%s1949 + $0x18] sm:$0xf]
        %v1957 = vld [vmem:[%s1949 + $0x1c] sm:$0xf]
        %v1966 = vunpack.c.l.b16 %v1950
        %v1967 = vunpack.c.l.b16 %v1951
        %v1968 = vunpack.c.l.b16 %v1952
        %v1969 = vunpack.c.l.b16 %v1953
        %v1970 = vunpack.c.l.b16 %v1954
        %v1971 = vunpack.c.l.b16 %v1955
        %v1972 = vunpack.c.l.b16 %v1956
        %v1973 = vunpack.c.l.b16 %v1957
        %v1974 = vpack.c.b16 %v1967, %v1966
        %v1975 = vpack.c.b16 %v1969, %v1968
        %v1976 = vpack.c.b16 %v1971, %v1970
        %v1977 = vpack.c.b16 %v1973, %v1972
        %v1983 = vsel %vm322, %v1945, 0
        %v1986 = vsel %vm322, %v1946, 0
        %v1989 = vsel %vm322, %v1947, 0
        %v1992 = vsel %vm322, %v1948, 0
        %1994 = vmatprep.subr.bf16.mxu0 0
        %1995 = vmatpush1.bf16.msra.mxu0 %v1974
        %1996 = vmatprep.subr.bf16.mxu0 0
        %1997 = vmatpush1.bf16.msra.mxu0 %v1975
        %1998 = vmatprep.subr.bf16.mxu0 0
        %1999 = vmatpush1.bf16.msra.mxu0 %v1976
        %2000 = vmatprep.subr.bf16.mxu0 0
        %2001 = vmatpush1.bf16.msra.mxu0 %v1977
        %2002 = vmatprep.subr.bf16.mxu0 0
        %2003 = vmatpush1.bf16.msra.mxu0 0
        %2004 = vmatprep.subr.bf16.mxu0 0
        %2005 = vmatpush1.bf16.msra.mxu0 0
        %2006 = vmatprep.subr.bf16.mxu0 0
        %2007 = vmatpush1.bf16.msra.mxu0 0
        %2008 = vmatprep.subr.bf16.mxu0 0
        %2009 = vmatpush1.bf16.msra.mxu0 0
        %2010 = vmatprep.subr.bf16.mxu0 0
        %2011 = vmatpush1.bf16.msra.mxu0 0
        %2012 = vmatprep.subr.bf16.mxu0 0
        %2013 = vmatpush1.bf16.msra.mxu0 0
        %2014 = vmatprep.subr.bf16.mxu0 0
        %2015 = vmatpush1.bf16.msra.mxu0 0
        %2016 = vmatprep.subr.bf16.mxu0 0
        %2017 = vmatpush1.bf16.msra.mxu0 0
        %2018 = vmatprep.subr.bf16.mxu0 0
        %2019 = vmatpush1.bf16.msra.mxu0 0
        %2020 = vmatprep.subr.bf16.mxu0 0
        %2021 = vmatpush1.bf16.msra.mxu0 0
        %2022 = vmatprep.subr.bf16.mxu0 0
        %2023 = vmatpush1.bf16.msra.mxu0 0
        %2024 = vmatprep.subr.bf16.mxu0 0
        %2025 = vmatpush1.bf16.msra.mxu0 0
        %2026 = vmatprep.mubr.bf16.mxu0 0
        %2027 = vmatmul.mubr.bf16.gmra.mrb[0].mxu0 %v1983
        %v2028 = vpop.f32.mrb[0].mxu0
        %v2029 = vadd.f32 0.0, %v2028
        %v2030 = vpop.f32.mrb[0].mxu0
        %v2031 = vpop.f32.mrb[0].mxu0
        %v2032 = vadd.f32 0.0, %v2031
        %v2033 = vpop.f32.mrb[0].mxu0
        %2034 = vmatprep.mubr.bf16.mxu0 0
        %2035 = vmatmul.mubr.bf16.gmra.mrb[0].mxu0 %v1986
        %v2036 = vpop.f32.mrb[0].mxu0
        %v2037 = vadd.f32 0.0, %v2036
        %v2038 = vpop.f32.mrb[0].mxu0
        %v2039 = vpop.f32.mrb[0].mxu0
        %v2040 = vadd.f32 0.0, %v2039
        %v2041 = vpop.f32.mrb[0].mxu0
        %2042 = vmatprep.mubr.bf16.mxu0 0
        %2043 = vmatmul.mubr.bf16.gmra.mrb[0].mxu0 %v1989
        %v2044 = vpop.f32.mrb[0].mxu0
        %v2045 = vadd.f32 0.0, %v2044
        %v2046 = vpop.f32.mrb[0].mxu0
        %v2047 = vpop.f32.mrb[0].mxu0
        %v2048 = vadd.f32 0.0, %v2047
        %v2049 = vpop.f32.mrb[0].mxu0
        %2050 = vmatprep.mubr.bf16.mxu0 0
        %2051 = vmatmul.mubr.bf16.gmra.mrb[0].mxu0 %v1992
        %v2052 = vpop.f32.mrb[0].mxu0
        %v2053 = vadd.f32 0.0, %v2052
        %v2054 = vpop.f32.mrb[0].mxu0
        %v2055 = vpop.f32.mrb[0].mxu0
        %v2056 = vadd.f32 0.0, %v2055
        %v2057 = vpop.f32.mrb[0].mxu0
        %2058 = vdwg.mxu0
        %v2059 = vadd.f32 %v1928, %v2029
        %v2060 = vadd.f32 %v1929, %v2032
        %v2061 = vadd.f32 %v1930, %v2037
        %v2062 = vadd.f32 %v1931, %v2040
        %v2063 = vadd.f32 %v1932, %v2045
        %v2064 = vadd.f32 %v1933, %v2048
        %v2065 = vadd.f32 %v1934, %v2053
        %v2066 = vadd.f32 %v1935, %v2056
        %v2067 = vld [vmem:[%s1805 + $0x1] sm:$0xff]
        %v2068 = vld [vmem:[%s1805 + $0x11] sm:$0xff]
        %v2069 = vld [vmem:[%s1805 + $0x21] sm:$0xff]
        %v2070 = vld [vmem:[%s1805 + $0x31] sm:$0xff]
        %v2071 = vld [vmem:[%s1805 + $0x41] sm:$0xff]
        %v2072 = vld [vmem:[%s1805 + $0x51] sm:$0xff]
        %v2073 = vld [vmem:[%s1805 + $0x61] sm:$0xff]
        %v2074 = vld [vmem:[%s1805 + $0x71] sm:$0xff]
        %v2075 = vpack.c.bf16 %v2068, %v2067
        %v2076 = vpack.c.bf16 %v2070, %v2069
        %v2077 = vpack.c.bf16 %v2072, %v2071
        %v2078 = vpack.c.bf16 %v2074, %v2073
        %s2079 = scalar_lea.vmem %s1, 448
        %v2080 = vld [vmem:[%s2079] sm:$0xf]
        %v2081 = vld [vmem:[%s2079 + $0x4] sm:$0xf]
        %v2082 = vld [vmem:[%s2079 + $0x8] sm:$0xf]
        %v2083 = vld [vmem:[%s2079 + $0xc] sm:$0xf]
        %v2084 = vld [vmem:[%s2079 + $0x10] sm:$0xf]
        %v2085 = vld [vmem:[%s2079 + $0x14] sm:$0xf]
        %v2086 = vld [vmem:[%s2079 + $0x18] sm:$0xf]
        %v2087 = vld [vmem:[%s2079 + $0x1c] sm:$0xf]
        %v2096 = vunpack.c.l.b16 %v2080
        %v2097 = vunpack.c.l.b16 %v2081
        %v2098 = vunpack.c.l.b16 %v2082
        %v2099 = vunpack.c.l.b16 %v2083
        %v2100 = vunpack.c.l.b16 %v2084
        %v2101 = vunpack.c.l.b16 %v2085
        %v2102 = vunpack.c.l.b16 %v2086
        %v2103 = vunpack.c.l.b16 %v2087
        %v2104 = vpack.c.b16 %v2097, %v2096
        %v2105 = vpack.c.b16 %v2099, %v2098
        %v2106 = vpack.c.b16 %v2101, %v2100
        %v2107 = vpack.c.b16 %v2103, %v2102
        %v2113 = vsel %vm322, %v2075, 0
        %v2116 = vsel %vm322, %v2076, 0
        %v2119 = vsel %vm322, %v2077, 0
        %v2122 = vsel %vm322, %v2078, 0
        %2124 = vmatprep.subr.bf16.mxu0 0
        %2125 = vmatpush1.bf16.msra.mxu0 %v2104
        %2126 = vmatprep.subr.bf16.mxu0 0
        %2127 = vmatpush1.bf16.msra.mxu0 %v2105
        %2128 = vmatprep.subr.bf16.mxu0 0
        %2129 = vmatpush1.bf16.msra.mxu0 %v2106
        %2130 = vmatprep.subr.bf16.mxu0 0
        %2131 = vmatpush1.bf16.msra.mxu0 %v2107
        %2132 = vmatprep.subr.bf16.mxu0 0
        %2133 = vmatpush1.bf16.msra.mxu0 0
        %2134 = vmatprep.subr.bf16.mxu0 0
        %2135 = vmatpush1.bf16.msra.mxu0 0
        %2136 = vmatprep.subr.bf16.mxu0 0
        %2137 = vmatpush1.bf16.msra.mxu0 0
        %2138 = vmatprep.subr.bf16.mxu0 0
        %2139 = vmatpush1.bf16.msra.mxu0 0
        %2140 = vmatprep.subr.bf16.mxu0 0
        %2141 = vmatpush1.bf16.msra.mxu0 0
        %2142 = vmatprep.subr.bf16.mxu0 0
        %2143 = vmatpush1.bf16.msra.mxu0 0
        %2144 = vmatprep.subr.bf16.mxu0 0
        %2145 = vmatpush1.bf16.msra.mxu0 0
        %2146 = vmatprep.subr.bf16.mxu0 0
        %2147 = vmatpush1.bf16.msra.mxu0 0
        %2148 = vmatprep.subr.bf16.mxu0 0
        %2149 = vmatpush1.bf16.msra.mxu0 0
        %2150 = vmatprep.subr.bf16.mxu0 0
        %2151 = vmatpush1.bf16.msra.mxu0 0
        %2152 = vmatprep.subr.bf16.mxu0 0
        %2153 = vmatpush1.bf16.msra.mxu0 0
        %2154 = vmatprep.subr.bf16.mxu0 0
        %2155 = vmatpush1.bf16.msra.mxu0 0
        %2156 = vmatprep.mubr.bf16.mxu0 0
        %2157 = vmatmul.mubr.bf16.gmra.mrb[0].mxu0 %v2113
        %v2158 = vpop.f32.mrb[0].mxu0
        %v2159 = vadd.f32 0.0, %v2158
        %v2160 = vpop.f32.mrb[0].mxu0
        %v2161 = vpop.f32.mrb[0].mxu0
        %v2162 = vadd.f32 0.0, %v2161
        %v2163 = vpop.f32.mrb[0].mxu0
        %2164 = vmatprep.mubr.bf16.mxu0 0
        %2165 = vmatmul.mubr.bf16.gmra.mrb[0].mxu0 %v2116
        %v2166 = vpop.f32.mrb[0].mxu0
        %v2167 = vadd.f32 0.0, %v2166
        %v2168 = vpop.f32.mrb[0].mxu0
        %v2169 = vpop.f32.mrb[0].mxu0
        %v2170 = vadd.f32 0.0, %v2169
        %v2171 = vpop.f32.mrb[0].mxu0
        %2172 = vmatprep.mubr.bf16.mxu0 0
        %2173 = vmatmul.mubr.bf16.gmra.mrb[0].mxu0 %v2119
        %v2174 = vpop.f32.mrb[0].mxu0
        %v2175 = vadd.f32 0.0, %v2174
        %v2176 = vpop.f32.mrb[0].mxu0
        %v2177 = vpop.f32.mrb[0].mxu0
        %v2178 = vadd.f32 0.0, %v2177
        %v2179 = vpop.f32.mrb[0].mxu0
        %2180 = vmatprep.mubr.bf16.mxu0 0
        %2181 = vmatmul.mubr.bf16.gmra.mrb[0].mxu0 %v2122
        %v2182 = vpop.f32.mrb[0].mxu0
        %v2183 = vadd.f32 0.0, %v2182
        %v2184 = vpop.f32.mrb[0].mxu0
        %v2185 = vpop.f32.mrb[0].mxu0
        %v2186 = vadd.f32 0.0, %v2185
        %v2187 = vpop.f32.mrb[0].mxu0
        %2188 = vdwg.mxu0
        %v2189 = vadd.f32 %v2059, %v2159
        %v2190 = vadd.f32 %v2060, %v2162
        %v2191 = vadd.f32 %v2061, %v2167
        %v2192 = vadd.f32 %v2062, %v2170
        %v2193 = vadd.f32 %v2063, %v2175
        %v2194 = vadd.f32 %v2064, %v2178
        %v2195 = vadd.f32 %v2065, %v2183
        %v2196 = vadd.f32 %v2066, %v2186
        %v2197 = vld [vmem:[%s1936 + $0x1] sm:$0xff]
        %v2198 = vld [vmem:[%s1936 + $0x11] sm:$0xff]
        %v2199 = vld [vmem:[%s1936 + $0x21] sm:$0xff]
        %v2200 = vld [vmem:[%s1936 + $0x31] sm:$0xff]
        %v2201 = vld [vmem:[%s1936 + $0x41] sm:$0xff]
        %v2202 = vld [vmem:[%s1936 + $0x51] sm:$0xff]
        %v2203 = vld [vmem:[%s1936 + $0x61] sm:$0xff]
        %v2204 = vld [vmem:[%s1936 + $0x71] sm:$0xff]
        %v2205 = vpack.c.bf16 %v2198, %v2197
        %v2206 = vpack.c.bf16 %v2200, %v2199
        %v2207 = vpack.c.bf16 %v2202, %v2201
        %v2208 = vpack.c.bf16 %v2204, %v2203
        %s2209 = scalar_lea.vmem %s1, 480
        %v2210 = vld [vmem:[%s2209] sm:$0xf]
        %v2211 = vld [vmem:[%s2209 + $0x4] sm:$0xf]
        %v2212 = vld [vmem:[%s2209 + $0x8] sm:$0xf]
        %v2213 = vld [vmem:[%s2209 + $0xc] sm:$0xf]
        %v2214 = vld [vmem:[%s2209 + $0x10] sm:$0xf]
        %v2215 = vld [vmem:[%s2209 + $0x14] sm:$0xf]
        %v2216 = vld [vmem:[%s2209 + $0x18] sm:$0xf]
        %v2217 = vld [vmem:[%s2209 + $0x1c] sm:$0xf]
        %v2226 = vunpack.c.l.b16 %v2210
        %v2227 = vunpack.c.l.b16 %v2211
        %v2228 = vunpack.c.l.b16 %v2212
        %v2229 = vunpack.c.l.b16 %v2213
        %v2230 = vunpack.c.l.b16 %v2214
        %v2231 = vunpack.c.l.b16 %v2215
        %v2232 = vunpack.c.l.b16 %v2216
        %v2233 = vunpack.c.l.b16 %v2217
        %v2234 = vpack.c.b16 %v2227, %v2226
        %v2235 = vpack.c.b16 %v2229, %v2228
        %v2236 = vpack.c.b16 %v2231, %v2230
        %v2237 = vpack.c.b16 %v2233, %v2232
        %v2243 = vsel %vm322, %v2205, 0
        %v2246 = vsel %vm322, %v2206, 0
        %v2249 = vsel %vm322, %v2207, 0
        %v2252 = vsel %vm322, %v2208, 0
        %2254 = vmatprep.subr.bf16.mxu0 0
        %2255 = vmatpush1.bf16.msra.mxu0 %v2234
        %2256 = vmatprep.subr.bf16.mxu0 0
        %2257 = vmatpush1.bf16.msra.mxu0 %v2235
        %2258 = vmatprep.subr.bf16.mxu0 0
        %2259 = vmatpush1.bf16.msra.mxu0 %v2236
        %2260 = vmatprep.subr.bf16.mxu0 0
        %2261 = vmatpush1.bf16.msra.mxu0 %v2237
        %2262 = vmatprep.subr.bf16.mxu0 0
        %2263 = vmatpush1.bf16.msra.mxu0 0
        %2264 = vmatprep.subr.bf16.mxu0 0
        %2265 = vmatpush1.bf16.msra.mxu0 0
        %2266 = vmatprep.subr.bf16.mxu0 0
        %2267 = vmatpush1.bf16.msra.mxu0 0
        %2268 = vmatprep.subr.bf16.mxu0 0
        %2269 = vmatpush1.bf16.msra.mxu0 0
        %2270 = vmatprep.subr.bf16.mxu0 0
        %2271 = vmatpush1.bf16.msra.mxu0 0
        %2272 = vmatprep.subr.bf16.mxu0 0
        %2273 = vmatpush1.bf16.msra.mxu0 0
        %2274 = vmatprep.subr.bf16.mxu0 0
        %2275 = vmatpush1.bf16.msra.mxu0 0
        %2276 = vmatprep.subr.bf16.mxu0 0
        %2277 = vmatpush1.bf16.msra.mxu0 0
        %2278 = vmatprep.subr.bf16.mxu0 0
        %2279 = vmatpush1.bf16.msra.mxu0 0
        %2280 = vmatprep.subr.bf16.mxu0 0
        %2281 = vmatpush1.bf16.msra.mxu0 0
        %2282 = vmatprep.subr.bf16.mxu0 0
        %2283 = vmatpush1.bf16.msra.mxu0 0
        %2284 = vmatprep.subr.bf16.mxu0 0
        %2285 = vmatpush1.bf16.msra.mxu0 0
        %2286 = vmatprep.mubr.bf16.mxu0 0
        %2287 = vmatmul.mubr.bf16.gmra.mrb[0].mxu0 %v2243
        %v2288 = vpop.f32.mrb[0].mxu0
        %v2289 = vadd.f32 0.0, %v2288
        %v2290 = vpop.f32.mrb[0].mxu0
        %v2291 = vpop.f32.mrb[0].mxu0
        %v2292 = vadd.f32 0.0, %v2291
        %v2293 = vpop.f32.mrb[0].mxu0
        %2294 = vmatprep.mubr.bf16.mxu0 0
        %2295 = vmatmul.mubr.bf16.gmra.mrb[0].mxu0 %v2246
        %v2296 = vpop.f32.mrb[0].mxu0
        %v2297 = vadd.f32 0.0, %v2296
        %v2298 = vpop.f32.mrb[0].mxu0
        %v2299 = vpop.f32.mrb[0].mxu0
        %v2300 = vadd.f32 0.0, %v2299
        %v2301 = vpop.f32.mrb[0].mxu0
        %2302 = vmatprep.mubr.bf16.mxu0 0
        %2303 = vmatmul.mubr.bf16.gmra.mrb[0].mxu0 %v2249
        %v2304 = vpop.f32.mrb[0].mxu0
        %v2305 = vadd.f32 0.0, %v2304
        %v2306 = vpop.f32.mrb[0].mxu0
        %v2307 = vpop.f32.mrb[0].mxu0
        %v2308 = vadd.f32 0.0, %v2307
        %v2309 = vpop.f32.mrb[0].mxu0
        %2310 = vmatprep.mubr.bf16.mxu0 0
        %2311 = vmatmul.mubr.bf16.gmra.mrb[0].mxu0 %v2252
        %v2312 = vpop.f32.mrb[0].mxu0
        %v2313 = vadd.f32 0.0, %v2312
        %v2314 = vpop.f32.mrb[0].mxu0
        %v2315 = vpop.f32.mrb[0].mxu0
        %v2316 = vadd.f32 0.0, %v2315
        %v2317 = vpop.f32.mrb[0].mxu0
        %2318 = vdwg.mxu0
        %v2319 = vadd.f32 %v2189, %v2289
        %v2320 = vadd.f32 %v2190, %v2292
        %v2321 = vadd.f32 %v2191, %v2297
        %v2322 = vadd.f32 %v2192, %v2300
        %v2323 = vadd.f32 %v2193, %v2305
        %v2324 = vadd.f32 %v2194, %v2308
        %v2325 = vadd.f32 %v2195, %v2313
        %v2326 = vadd.f32 %v2196, %v2316
        %v2327 = vld [vmem:[%s2] sm:$0x1]
        %v2329 = vlaneseq
        %v2330 = vshrl.u32 %v2329, 7
        %v2331 = vsub.s32 0, %v2330
        %v2332 = vrot.slane %v2327, %v2331
        %v2334 = vadd.f32 %v2319, %v2332
        %v2335 = vadd.f32 %v2320, %v2332
        %v2336 = vadd.f32 %v2321, %v2332
        %v2337 = vadd.f32 %v2322, %v2332
        %v2338 = vadd.f32 %v2323, %v2332
        %v2339 = vadd.f32 %v2324, %v2332
        %v2340 = vadd.f32 %v2325, %v2332
        %v2341 = vadd.f32 %v2326, %v2332
        %v2342 = vsel %vm322, %v2334, 0.0
        %v2343 = vsel %vm322, %v2335, 0.0
        %v2344 = vadd.f32 %v2342, %v2343
        %v2345 = vsel %vm322, %v2336, 0.0
        %v2346 = vadd.f32 %v2344, %v2345
        %v2347 = vsel %vm322, %v2337, 0.0
        %v2348 = vadd.f32 %v2346, %v2347
        %v2349 = vsel %vm322, %v2338, 0.0
        %v2350 = vadd.f32 %v2348, %v2349
        %v2351 = vsel %vm322, %v2339, 0.0
        %v2352 = vadd.f32 %v2350, %v2351
        %v2353 = vsel %vm322, %v2340, 0.0
        %v2354 = vadd.f32 %v2352, %v2353
        %v2355 = vsel %vm322, %v2341, 0.0
        %v2356 = vadd.f32 %v2354, %v2355
        %v2357 = vrot.slane %v2356, 4
        %v2358 = vadd.f32 %v2356, %v2357
        %v2359 = vrot.slane %v2358, 2
        %v2360 = vadd.f32 %v2358, %v2359
        %v2361 = vrot.slane %v2360, 1
        %v2362 = vadd.f32 %v2360, %v2361
        %v2363 = vmul.f32 %v2334, %v2334
        %v2364 = vmul.f32 %v2335, %v2335
        %v2365 = vmul.f32 %v2336, %v2336
        %v2366 = vmul.f32 %v2337, %v2337
        %v2367 = vmul.f32 %v2338, %v2338
        %v2368 = vmul.f32 %v2339, %v2339
        %v2369 = vmul.f32 %v2340, %v2340
        %v2370 = vmul.f32 %v2341, %v2341
        %v2371 = vsel %vm322, %v2363, 0.0
        %v2372 = vsel %vm322, %v2364, 0.0
        %v2373 = vadd.f32 %v2371, %v2372
        %v2374 = vsel %vm322, %v2365, 0.0
        %v2375 = vadd.f32 %v2373, %v2374
        %v2376 = vsel %vm322, %v2366, 0.0
        %v2377 = vadd.f32 %v2375, %v2376
        %v2378 = vsel %vm322, %v2367, 0.0
        %v2379 = vadd.f32 %v2377, %v2378
        %v2380 = vsel %vm322, %v2368, 0.0
        %v2381 = vadd.f32 %v2379, %v2380
        %v2382 = vsel %vm322, %v2369, 0.0
        %v2383 = vadd.f32 %v2381, %v2382
        %v2384 = vsel %vm322, %v2370, 0.0
        %v2385 = vadd.f32 %v2383, %v2384
        %v2386 = vrot.slane %v2385, 4
        %v2387 = vadd.f32 %v2385, %v2386
        %v2388 = vrot.slane %v2387, 2
        %v2389 = vadd.f32 %v2387, %v2388
        %v2390 = vrot.slane %v2389, 1
        %v2391 = vadd.f32 %v2389, %v2390
        %v2392 = vld [vmem:[%s5] sm:$0xff]
        %v2393 = vld [vmem:[%s5 + $0x8] sm:$0xff]
        %v2394 = vld [vmem:[%s5 + $0x10] sm:$0xff]
        %v2395 = vld [vmem:[%s5 + $0x18] sm:$0xff]
        %v2396 = vld [vmem:[%s5 + $0x20] sm:$0xff]
        %v2397 = vld [vmem:[%s5 + $0x28] sm:$0xff]
        %v2398 = vld [vmem:[%s5 + $0x30] sm:$0xff]
        %v2399 = vld [vmem:[%s5 + $0x38] sm:$0xff]
        %v2401 = vsel %vm322, %v2362, 0
        %2403 = vmatprep.subr.mxu0 0.0
        %2404 = vmatpush1.msra.mxu0 %v2392
        %2405 = vmatprep.subr.mxu0 0.0
        %2406 = vmatpush1.msra.mxu0 %v2393
        %2407 = vmatprep.subr.mxu0 0.0
        %2408 = vmatpush1.msra.mxu0 %v2394
        %2409 = vmatprep.subr.mxu0 0.0
        %2410 = vmatpush1.msra.mxu0 %v2395
        %2411 = vmatprep.subr.mxu0 0.0
        %2412 = vmatpush1.msra.mxu0 %v2396
        %2413 = vmatprep.subr.mxu0 0.0
        %2414 = vmatpush1.msra.mxu0 %v2397
        %2415 = vmatprep.subr.mxu0 0.0
        %2416 = vmatpush1.msra.mxu0 %v2398
        %2417 = vmatprep.subr.mxu0 0.0
        %2418 = vmatpush1.msra.mxu0 %v2399
        %2419 = vmatprep.subr.mxu0 0.0
        %2420 = vmatpush1.msra.mxu0 0.0
        %2421 = vmatprep.subr.mxu0 0.0
        %2422 = vmatpush1.msra.mxu0 0.0
        %2423 = vmatprep.subr.mxu0 0.0
        %2424 = vmatpush1.msra.mxu0 0.0
        %2425 = vmatprep.subr.mxu0 0.0
        %2426 = vmatpush1.msra.mxu0 0.0
        %2427 = vmatprep.subr.mxu0 0.0
        %2428 = vmatpush1.msra.mxu0 0.0
        %2429 = vmatprep.subr.mxu0 0.0
        %2430 = vmatpush1.msra.mxu0 0.0
        %2431 = vmatprep.subr.mxu0 0.0
        %2432 = vmatpush1.msra.mxu0 0.0
        %2433 = vmatprep.subr.mxu0 0.0
        %2434 = vmatpush1.msra.mxu0 0.0
        %2435 = vmatprep.subr.mxu0 0.0
        %2436 = vmatpush1.msra.mxu0 0.0
        %2437 = vmatprep.subr.mxu0 0.0
        %2438 = vmatpush1.msra.mxu0 0.0
        %2439 = vmatprep.subr.mxu0 0.0
        %2440 = vmatpush1.msra.mxu0 0.0
        %2441 = vmatprep.subr.mxu0 0.0
        %2442 = vmatpush1.msra.mxu0 0.0
        %2443 = vmatprep.subr.mxu0 0.0
        %2444 = vmatpush1.msra.mxu0 0.0
        %2445 = vmatprep.subr.mxu0 0.0
        %2446 = vmatpush1.msra.mxu0 0.0
        %2447 = vmatprep.subr.mxu0 0.0
        %2448 = vmatpush1.msra.mxu0 0.0
        %2449 = vmatprep.subr.mxu0 0.0
        %2450 = vmatpush1.msra.mxu0 0.0
        %2451 = vmatprep.subr.mxu0 0.0
        %2452 = vmatpush1.msra.mxu0 0.0
        %2453 = vmatprep.subr.mxu0 0.0
        %2454 = vmatpush1.msra.mxu0 0.0
        %2455 = vmatprep.subr.mxu0 0.0
        %2456 = vmatpush1.msra.mxu0 0.0
        %2457 = vmatprep.subr.mxu0 0.0
        %2458 = vmatpush1.msra.mxu0 0.0
        %2459 = vmatprep.subr.mxu0 0.0
        %2460 = vmatpush1.msra.mxu0 0.0
        %2461 = vmatprep.subr.mxu0 0.0
        %2462 = vmatpush1.msra.mxu0 0.0
        %2463 = vmatprep.subr.mxu0 0.0
        %2464 = vmatpush1.msra.mxu0 0.0
        %2465 = vmatprep.subr.mxu0 0.0
        %2466 = vmatpush1.msra.mxu0 0.0
        %2467 = vmatprep.mubr.f32.mxu0 0.0
        %2468 = vmatmul.mubr.f32.gmra.mrb[0].mxu0 %v2401
        %v2469 = vpop.f32.mrb[0].mxu0
        %v2470 = vadd.f32 0.0, %v2469
        %v2471 = vpop.f32.mrb[0].mxu0
        %2472 = vdwg.mxu0
        %v2474 = vsel %vm322, %v2391, 0
        %2476 = vmatprep.subr.mxu0 0.0
        %2477 = vmatpush1.msra.mxu0 %v2392
        %2478 = vmatprep.subr.mxu0 0.0
        %2479 = vmatpush1.msra.mxu0 %v2393
        %2480 = vmatprep.subr.mxu0 0.0
        %2481 = vmatpush1.msra.mxu0 %v2394
        %2482 = vmatprep.subr.mxu0 0.0
        %2483 = vmatpush1.msra.mxu0 %v2395
        %2484 = vmatprep.subr.mxu0 0.0
        %2485 = vmatpush1.msra.mxu0 %v2396
        %2486 = vmatprep.subr.mxu0 0.0
        %2487 = vmatpush1.msra.mxu0 %v2397
        %2488 = vmatprep.subr.mxu0 0.0
        %2489 = vmatpush1.msra.mxu0 %v2398
        %2490 = vmatprep.subr.mxu0 0.0
        %2491 = vmatpush1.msra.mxu0 %v2399
        %2492 = vmatprep.subr.mxu0 0.0
        %2493 = vmatpush1.msra.mxu0 0.0
        %2494 = vmatprep.subr.mxu0 0.0
        %2495 = vmatpush1.msra.mxu0 0.0
        %2496 = vmatprep.subr.mxu0 0.0
        %2497 = vmatpush1.msra.mxu0 0.0
        %2498 = vmatprep.subr.mxu0 0.0
        %2499 = vmatpush1.msra.mxu0 0.0
        %2500 = vmatprep.subr.mxu0 0.0
        %2501 = vmatpush1.msra.mxu0 0.0
        %2502 = vmatprep.subr.mxu0 0.0
        %2503 = vmatpush1.msra.mxu0 0.0
        %2504 = vmatprep.subr.mxu0 0.0
        %2505 = vmatpush1.msra.mxu0 0.0
        %2506 = vmatprep.subr.mxu0 0.0
        %2507 = vmatpush1.msra.mxu0 0.0
        %2508 = vmatprep.subr.mxu0 0.0
        %2509 = vmatpush1.msra.mxu0 0.0
        %2510 = vmatprep.subr.mxu0 0.0
        %2511 = vmatpush1.msra.mxu0 0.0
        %2512 = vmatprep.subr.mxu0 0.0
        %2513 = vmatpush1.msra.mxu0 0.0
        %2514 = vmatprep.subr.mxu0 0.0
        %2515 = vmatpush1.msra.mxu0 0.0
        %2516 = vmatprep.subr.mxu0 0.0
        %2517 = vmatpush1.msra.mxu0 0.0
        %2518 = vmatprep.subr.mxu0 0.0
        %2519 = vmatpush1.msra.mxu0 0.0
        %2520 = vmatprep.subr.mxu0 0.0
        %2521 = vmatpush1.msra.mxu0 0.0
        %2522 = vmatprep.subr.mxu0 0.0
        %2523 = vmatpush1.msra.mxu0 0.0
        %2524 = vmatprep.subr.mxu0 0.0
        %2525 = vmatpush1.msra.mxu0 0.0
        %2526 = vmatprep.subr.mxu0 0.0
        %2527 = vmatpush1.msra.mxu0 0.0
        %2528 = vmatprep.subr.mxu0 0.0
        %2529 = vmatpush1.msra.mxu0 0.0
        %2530 = vmatprep.subr.mxu0 0.0
        %2531 = vmatpush1.msra.mxu0 0.0
        %2532 = vmatprep.subr.mxu0 0.0
        %2533 = vmatpush1.msra.mxu0 0.0
        %2534 = vmatprep.subr.mxu0 0.0
        %2535 = vmatpush1.msra.mxu0 0.0
        %2536 = vmatprep.subr.mxu0 0.0
        %2537 = vmatpush1.msra.mxu0 0.0
        %2538 = vmatprep.subr.mxu0 0.0
        %2539 = vmatpush1.msra.mxu0 0.0
        %2540 = vmatprep.mubr.f32.mxu0 0.0
        %2541 = vmatmul.mubr.f32.gmra.mrb[0].mxu0 %v2474
        %v2542 = vpop.f32.mrb[0].mxu0
        %v2543 = vadd.f32 0.0, %v2542
        %v2544 = vpop.f32.mrb[0].mxu0
        %2545 = vdwg.mxu0
        %v2546 = vmul.f32 %v2470, %v2470
        %v2547 = vsub.f32 %v2543, %v2546
        %v2548 = vmax.f32 %v2547, 0.0
        %v2549 = vadd.f32 %v2548, 1e-05
        %v2550 = vrsqrt.pop %v2549
        %v2551 = vlaneseq
        %v2552 = vshrl.u32 %v2551, 7
        %v2553 = vsub.s32 0, %v2552
        %v2554 = vrot.slane %v2470, %v2553
        %v2555 = vsub.f32 %v2334, %v2554
        %v2556 = vsub.f32 %v2335, %v2554
        %v2557 = vsub.f32 %v2336, %v2554
        %v2558 = vsub.f32 %v2337, %v2554
        %v2559 = vsub.f32 %v2338, %v2554
        %v2560 = vsub.f32 %v2339, %v2554
        %v2561 = vsub.f32 %v2340, %v2554
        %v2562 = vsub.f32 %v2341, %v2554
        %v2563 = vlaneseq
        %v2564 = vshrl.u32 %v2563, 7
        %v2565 = vsub.s32 0, %v2564
        %v2566 = vrot.slane %v2550, %v2565
        %v2567 = vmul.f32 %v2555, %v2566
        %v2568 = vmul.f32 %v2556, %v2566
        %v2569 = vmul.f32 %v2557, %v2566
        %v2570 = vmul.f32 %v2558, %v2566
        %v2571 = vmul.f32 %v2559, %v2566
        %v2572 = vmul.f32 %v2560, %v2566
        %v2573 = vmul.f32 %v2561, %v2566
        %v2574 = vmul.f32 %v2562, %v2566
        %v2575 = vld [vmem:[%s3] sm:$0x1]
        %v2577 = vlaneseq
        %v2578 = vshrl.u32 %v2577, 7
        %v2579 = vsub.s32 0, %v2578
        %v2580 = vrot.slane %v2575, %v2579
        %v2582 = vmul.f32 %v2567, %v2580
        %v2583 = vmul.f32 %v2568, %v2580
        %v2584 = vmul.f32 %v2569, %v2580
        %v2585 = vmul.f32 %v2570, %v2580
        %v2586 = vmul.f32 %v2571, %v2580
        %v2587 = vmul.f32 %v2572, %v2580
        %v2588 = vmul.f32 %v2573, %v2580
        %v2589 = vmul.f32 %v2574, %v2580
        %v2590 = vld [vmem:[%s4] sm:$0x1]
        %v2592 = vlaneseq
        %v2593 = vshrl.u32 %v2592, 7
        %v2594 = vsub.s32 0, %v2593
        %v2595 = vrot.slane %v2590, %v2594
        %v2597 = vadd.f32 %v2582, %v2595
        %v2598 = vadd.f32 %v2583, %v2595
        %v2599 = vadd.f32 %v2584, %v2595
        %v2600 = vadd.f32 %v2585, %v2595
        %v2601 = vadd.f32 %v2586, %v2595
        %v2602 = vadd.f32 %v2587, %v2595
        %v2603 = vadd.f32 %v2588, %v2595
        %v2604 = vadd.f32 %v2589, %v2595
        %vm2605 = vcmp.ge.f32.partialorder %v2597, 0.0
        %vm2606 = vcmp.ge.f32.partialorder %v2598, 0.0
        %vm2607 = vcmp.ge.f32.partialorder %v2599, 0.0
        %vm2608 = vcmp.ge.f32.partialorder %v2600, 0.0
        %vm2609 = vcmp.ge.f32.partialorder %v2601, 0.0
        %vm2610 = vcmp.ge.f32.partialorder %v2602, 0.0
        %vm2611 = vcmp.ge.f32.partialorder %v2603, 0.0
        %vm2612 = vcmp.ge.f32.partialorder %v2604, 0.0
        %v2613 = vmul.f32 %v2597, 0.1
        %v2614 = vmul.f32 %v2598, 0.1
        %v2615 = vmul.f32 %v2599, 0.1
        %v2616 = vmul.f32 %v2600, 0.1
        %v2617 = vmul.f32 %v2601, 0.1
        %v2618 = vmul.f32 %v2602, 0.1
        %v2619 = vmul.f32 %v2603, 0.1
        %v2620 = vmul.f32 %v2604, 0.1
        %v2621 = vsel %vm2605, %v2597, %v2613
        %v2622 = vsel %vm2606, %v2598, %v2614
        %v2623 = vsel %vm2607, %v2599, %v2615
        %v2624 = vsel %vm2608, %v2600, %v2616
        %v2625 = vsel %vm2609, %v2601, %v2617
        %v2626 = vsel %vm2610, %v2602, %v2618
        %v2627 = vsel %vm2611, %v2603, %v2619
        %v2628 = vsel %vm2612, %v2604, %v2620
        %2629 = vst.msk [vmem:[%s247] sm:$0xff] %vm322, %v2621
        %2630 = vst.msk [vmem:[%s247 + $0x8] sm:$0xff] %vm322, %v2622
        %2631 = vst.msk [vmem:[%s247 + $0x10] sm:$0xff] %vm322, %v2623
        %2632 = vst.msk [vmem:[%s247 + $0x18] sm:$0xff] %vm322, %v2624
        %2633 = vst.msk [vmem:[%s247 + $0x20] sm:$0xff] %vm322, %v2625
        %2634 = vst.msk [vmem:[%s247 + $0x28] sm:$0xff] %vm322, %v2626
        %2635 = vst.msk [vmem:[%s247 + $0x30] sm:$0xff] %vm322, %v2627
        %2636 = vst.msk [vmem:[%s247 + $0x38] sm:$0xff] %vm322, %v2628
        %s2637 = sand.u32 %s159, 1
        %s2638 = scalar_lea.sflag [#allocation3], %s2637
        %s2639 = sand.u32 %s159, 1
        %s2640 = smul.addr %s2639, 64
        %s2641 = scalar_lea.vmem [#allocation2], %s2640
        // Predicated region
        $region45: #{down_forward.3} parent=43 // pred_check
          %p2642 = pneg %p169
        $region46: #{down_forward.3} parent=43 // pred_check_branch
          %2644 = sbr.rel (%p2642) target = $region48
        $region47: #{down_forward.3} parent=43 // pred_region
          %s2646 = ssub.s32 1024, 1024
          %2647 = vsyncadd %s2638, %s2646
          %s2648 = smul.addr %s20, 8
          %s2649 = smul.addr %s2648, 128
          %s2650 = scalar_lea.hbm %s6, %s2649
          %s2651 = sshll.u32 %s2641, 4
          %s2652 = int_to_ptr.vmem [resolvable:$true] %s2651
          %2657 = dma.vmem_to_hbm [thread:$0]  %s2652, 1024, %s2650, %s2638, 128, 128, 8
        $region48: #{down_forward.3} parent=43 // pred_fallthru
          _
      $region44: #{down_forward.3} parent=5 // pred_fallthru
        _
      %p2658 = scmp.le.s32.totalorder 2, %s15
      // Predicated region
      $region49: #{down_forward.3} parent=5 // pred_check
        %p2659 = pneg %p2658
      $region50: #{down_forward.3} parent=5 // pred_check_branch
        %2661 = sbr.rel (%p2659) target = $region52
      $region51: #{down_forward.3} parent=5 // pred_region
        %s2662 = ssub.s32 %s15, 2
        // Predicated region
        $region53: #{down_forward.3} parent=51 // pred_check
          %p2663 = pneg %p175
        $region54: #{down_forward.3} parent=51 // pred_check_branch
          %2665 = sbr.rel (%p2663) target = $region56
        $region55: #{down_forward.3} parent=51 // pred_region
          %s2666 = sand.u32 %s160, 1
          %s2667 = scalar_lea.sflag [#allocation3], %s2666
          %s2668 = sand.u32 %s160, 1
          %s2669 = smul.addr %s2668, 64
          %s2670 = scalar_lea.vmem [#allocation2], %s2669
          %2671 = dma.done %s2667, 1024
        $region56: #{down_forward.3} parent=51 // pred_fallthru
          _
      $region52: #{down_forward.3} parent=5 // pred_fallthru
        _
    $region6: #{down_forward.3} parent=1 // loop_footer
      %s19 = sadd.s32 1, %s15
    $region7: #{down_forward.3} parent=1 // loop_footer_branch
      %14 = sbr.rel target = $region3
    $region8: #{down_forward.3} parent=1 // loop_exit
      _
    %2672 = vsyncpa [#allocation3], 1
    %s2673 = scalar_lea.sflag [#allocation3], 1
    %2674 = vsyncpa %s2673, 1

// kernel: down_forward.2
$region0: #{down_forward.2}
  #allocation0 [shape = 'u32[]', space=smem, size = 0x4, offset = 0x4, fixed_abs, tag = 'smem constant byte address 0x4 - core index']
  #allocation1 [shape = 'u32[144,128]{1,0:T(1,128)}', space=vmem, size = 0x12000, scoped, tag = 'internal scratch']
  #allocation2 [shape = 'f32[18,18,32]{2,1,0:T(8,128)}', space=vmem, size = 0x36000, scoped, tag = 'scratch operand']
  %s0 = inlined_call_operand.vmem [shape: f32[2,18,18,4], index: 0, kind: input, shape index: {}]
  %s1 = inlined_call_operand.vmem [shape: bf16[4,32], index: 1, kind: input, shape index: {}]
  %s2 = inlined_call_operand.vmem [shape: f32[1,32], index: 2, kind: input, shape index: {}]
  %s3 = inlined_call_operand.vmem [shape: bf16[32,32], index: 3, kind: input, shape index: {}]
  %s4 = inlined_call_operand.vmem [shape: f32[1,32], index: 4, kind: input, shape index: {}]
  %s5 = inlined_call_operand.vmem [shape: bf16[9,32,64], index: 5, kind: input, shape index: {}]
  %s6 = inlined_call_operand.vmem [shape: f32[1,64], index: 6, kind: input, shape index: {}]
  %s7 = inlined_call_operand.vmem [shape: bf16[4,64], index: 7, kind: input, shape index: {}]
  %s8 = inlined_call_operand.vmem [shape: f32[1,64], index: 8, kind: input, shape index: {}]
  %s9 = inlined_call_operand.vmem [shape: f32[2,256,64], index: 9, kind: output, shape index: {}]
  %s10 = sld [smem:[#allocation0]]
  $region69: #{down_forward.2} parent=0
    _
  %s12 = ssub.s32 1, %s10
  %s13 = scalar_select 0, %s12, %s10
  loop: start=0, step=1, limit=4
  $region2: #{down_forward.2} parent=0 // loop_pre_header
    _
  $region3: #{down_forward.2} parent=0 // loop_header
    %s15 = sphi 0, %s19
    %p16 = scmp.ge.s32.totalorder %s15, 4
    %s25 = sphi 0, %s27
    %s28 = sphi 0, %s25
    %s29 = sphi 0, %s28
    %s45 = sphi 0, %s29
    %s49 = sphi 0, %s49
    %s51 = sphi 0, %s49
    %s52 = sphi 0, %s51
    %s66 = sphi 0, %s52
    %s70 = sphi 0, %s70
    %s72 = sphi 0, %s70
    %s73 = sphi 0, %s72
    %s87 = sphi 0, %s73
    %s91 = sphi 0, %s91
    %s93 = sphi 0, %s91
    %s94 = sphi 0, %s93
    %s108 = sphi 0, %s94
    %s112 = sphi 0, %s112
    %s114 = sphi 0, %s112
    %s115 = sphi 0, %s114
    %s129 = sphi 0, %s115
    %s133 = sphi 0, %s133
    %s135 = sphi 0, %s133
    %s136 = sphi 0, %s135
    %s150 = sphi 0, %s136
    %s154 = sphi 0, %s154
    %s156 = sphi 0, %s154
    %s157 = sphi 0, %s156
    %s171 = sphi 0, %s157
    %s175 = sphi 0, %s175
    %s177 = sphi 0, %s175
    %s178 = sphi 0, %s177
    %s192 = sphi 0, %s178
    %s196 = sphi 0, %s196
    %s198 = sphi 0, %s196
    %s199 = sphi 0, %s198
    %s213 = sphi 0, %s199
    %s219 = sphi 0, %s221
    %s222 = sphi 0, %s219
    %s223 = sphi 0, %s222
    %s239 = sphi 0, %s223
  $region4: #{down_forward.2} parent=0 // loop_header_branch
    %18 = sbr.rel (%p16) target = $region8
  $region5: #{down_forward.2} parent=0 // loop_body
    %s20 = ssub.s32 %s15, 1
    %s21 = ssub.s32 %s15, 2
    %s22 = sadd.s32 %s15, 1
    %s23 = ssub.s32 %s15, %s22
    %p24 = scmp.eq.s32.totalorder %s23, 0
    %s26 = sadd.s32 %s25, 1
    %s27 = scalar_select %p24, %s25, %s26
    %p30 = pneg %p24
    %p31 = scmp.eq.s32.totalorder %s15, 1
    %p32 = por %p30, %p31
    %p33 = scmp.ne.s32.totalorder %s25, %s28
    %p34 = scmp.eq.s32.totalorder %s15, 0
    %p35 = por %p33, %p34
    %p36 = scmp.ne.s32.totalorder %s25, %s28
    %p37 = scmp.eq.s32.totalorder %s20, 1
    %p38 = por %p36, %p37
    %p39 = scmp.ne.s32.totalorder %s28, %s29
    %p40 = scmp.eq.s32.totalorder %s20, 0
    %p41 = por %p39, %p40
    %p42 = scmp.ne.s32.totalorder %s28, %s29
    %p43 = scmp.eq.s32.totalorder %s21, 1
    %p44 = por %p42, %p43
    %p46 = scmp.ne.s32.totalorder %s29, %s45
    %p47 = scmp.eq.s32.totalorder %s21, 0
    %p48 = por %p46, %p47
    %s50 = sadd.s32 %s49, 1
    %p53 = scmp.eq.s32.totalorder %s15, 1
    %p54 = scmp.ne.s32.totalorder %s49, %s51
    %p55 = scmp.eq.s32.totalorder %s15, 0
    %p56 = por %p54, %p55
    %p57 = scmp.ne.s32.totalorder %s49, %s51
    %p58 = scmp.eq.s32.totalorder %s20, 1
    %p59 = por %p57, %p58
    %p60 = scmp.ne.s32.totalorder %s51, %s52
    %p61 = scmp.eq.s32.totalorder %s20, 0
    %p62 = por %p60, %p61
    %p63 = scmp.ne.s32.totalorder %s51, %s52
    %p64 = scmp.eq.s32.totalorder %s21, 1
    %p65 = por %p63, %p64
    %p67 = scmp.ne.s32.totalorder %s52, %s66
    %p68 = scmp.eq.s32.totalorder %s21, 0
    %p69 = por %p67, %p68
    %s71 = sadd.s32 %s70, 1
    %p74 = scmp.eq.s32.totalorder %s15, 1
    %p75 = scmp.ne.s32.totalorder %s70, %s72
    %p76 = scmp.eq.s32.totalorder %s15, 0
    %p77 = por %p75, %p76
    %p78 = scmp.ne.s32.totalorder %s70, %s72
    %p79 = scmp.eq.s32.totalorder %s20, 1
    %p80 = por %p78, %p79
    %p81 = scmp.ne.s32.totalorder %s72, %s73
    %p82 = scmp.eq.s32.totalorder %s20, 0
    %p83 = por %p81, %p82
    %p84 = scmp.ne.s32.totalorder %s72, %s73
    %p85 = scmp.eq.s32.totalorder %s21, 1
    %p86 = por %p84, %p85
    %p88 = scmp.ne.s32.totalorder %s73, %s87
    %p89 = scmp.eq.s32.totalorder %s21, 0
    %p90 = por %p88, %p89
    %s92 = sadd.s32 %s91, 1
    %p95 = scmp.eq.s32.totalorder %s15, 1
    %p96 = scmp.ne.s32.totalorder %s91, %s93
    %p97 = scmp.eq.s32.totalorder %s15, 0
    %p98 = por %p96, %p97
    %p99 = scmp.ne.s32.totalorder %s91, %s93
    %p100 = scmp.eq.s32.totalorder %s20, 1
    %p101 = por %p99, %p100
    %p102 = scmp.ne.s32.totalorder %s93, %s94
    %p103 = scmp.eq.s32.totalorder %s20, 0
    %p104 = por %p102, %p103
    %p105 = scmp.ne.s32.totalorder %s93, %s94
    %p106 = scmp.eq.s32.totalorder %s21, 1
    %p107 = por %p105, %p106
    %p109 = scmp.ne.s32.totalorder %s94, %s108
    %p110 = scmp.eq.s32.totalorder %s21, 0
    %p111 = por %p109, %p110
    %s113 = sadd.s32 %s112, 1
    %p116 = scmp.eq.s32.totalorder %s15, 1
    %p117 = scmp.ne.s32.totalorder %s112, %s114
    %p118 = scmp.eq.s32.totalorder %s15, 0
    %p119 = por %p117, %p118
    %p120 = scmp.ne.s32.totalorder %s112, %s114
    %p121 = scmp.eq.s32.totalorder %s20, 1
    %p122 = por %p120, %p121
    %p123 = scmp.ne.s32.totalorder %s114, %s115
    %p124 = scmp.eq.s32.totalorder %s20, 0
    %p125 = por %p123, %p124
    %p126 = scmp.ne.s32.totalorder %s114, %s115
    %p127 = scmp.eq.s32.totalorder %s21, 1
    %p128 = por %p126, %p127
    %p130 = scmp.ne.s32.totalorder %s115, %s129
    %p131 = scmp.eq.s32.totalorder %s21, 0
    %p132 = por %p130, %p131
    %s134 = sadd.s32 %s133, 1
    %p137 = scmp.eq.s32.totalorder %s15, 1
    %p138 = scmp.ne.s32.totalorder %s133, %s135
    %p139 = scmp.eq.s32.totalorder %s15, 0
    %p140 = por %p138, %p139
    %p141 = scmp.ne.s32.totalorder %s133, %s135
    %p142 = scmp.eq.s32.totalorder %s20, 1
    %p143 = por %p141, %p142
    %p144 = scmp.ne.s32.totalorder %s135, %s136
    %p145 = scmp.eq.s32.totalorder %s20, 0
    %p146 = por %p144, %p145
    %p147 = scmp.ne.s32.totalorder %s135, %s136
    %p148 = scmp.eq.s32.totalorder %s21, 1
    %p149 = por %p147, %p148
    %p151 = scmp.ne.s32.totalorder %s136, %s150
    %p152 = scmp.eq.s32.totalorder %s21, 0
    %p153 = por %p151, %p152
    %s155 = sadd.s32 %s154, 1
    %p158 = scmp.eq.s32.totalorder %s15, 1
    %p159 = scmp.ne.s32.totalorder %s154, %s156
    %p160 = scmp.eq.s32.totalorder %s15, 0
    %p161 = por %p159, %p160
    %p162 = scmp.ne.s32.totalorder %s154, %s156
    %p163 = scmp.eq.s32.totalorder %s20, 1
    %p164 = por %p162, %p163
    %p165 = scmp.ne.s32.totalorder %s156, %s157
    %p166 = scmp.eq.s32.totalorder %s20, 0
    %p167 = por %p165, %p166
    %p168 = scmp.ne.s32.totalorder %s156, %s157
    %p169 = scmp.eq.s32.totalorder %s21, 1
    %p170 = por %p168, %p169
    %p172 = scmp.ne.s32.totalorder %s157, %s171
    %p173 = scmp.eq.s32.totalorder %s21, 0
    %p174 = por %p172, %p173
    %s176 = sadd.s32 %s175, 1
    %p179 = scmp.eq.s32.totalorder %s15, 1
    %p180 = scmp.ne.s32.totalorder %s175, %s177
    %p181 = scmp.eq.s32.totalorder %s15, 0
    %p182 = por %p180, %p181
    %p183 = scmp.ne.s32.totalorder %s175, %s177
    %p184 = scmp.eq.s32.totalorder %s20, 1
    %p185 = por %p183, %p184
    %p186 = scmp.ne.s32.totalorder %s177, %s178
    %p187 = scmp.eq.s32.totalorder %s20, 0
    %p188 = por %p186, %p187
    %p189 = scmp.ne.s32.totalorder %s177, %s178
    %p190 = scmp.eq.s32.totalorder %s21, 1
    %p191 = por %p189, %p190
    %p193 = scmp.ne.s32.totalorder %s178, %s192
    %p194 = scmp.eq.s32.totalorder %s21, 0
    %p195 = por %p193, %p194
    %s197 = sadd.s32 %s196, 1
    %p200 = scmp.eq.s32.totalorder %s15, 1
    %p201 = scmp.ne.s32.totalorder %s196, %s198
    %p202 = scmp.eq.s32.totalorder %s15, 0
    %p203 = por %p201, %p202
    %p204 = scmp.ne.s32.totalorder %s196, %s198
    %p205 = scmp.eq.s32.totalorder %s20, 1
    %p206 = por %p204, %p205
    %p207 = scmp.ne.s32.totalorder %s198, %s199
    %p208 = scmp.eq.s32.totalorder %s20, 0
    %p209 = por %p207, %p208
    %p210 = scmp.ne.s32.totalorder %s198, %s199
    %p211 = scmp.eq.s32.totalorder %s21, 1
    %p212 = por %p210, %p211
    %p214 = scmp.ne.s32.totalorder %s199, %s213
    %p215 = scmp.eq.s32.totalorder %s21, 0
    %p216 = por %p214, %p215
    %s217 = ssub.s32 %s15, %s22
    %p218 = scmp.eq.s32.totalorder %s217, 0
    %s220 = sadd.s32 %s219, 1
    %s221 = scalar_select %p218, %s219, %s220
    %p224 = pneg %p218
    %p225 = scmp.eq.s32.totalorder %s15, 1
    %p226 = por %p224, %p225
    %p227 = scmp.ne.s32.totalorder %s219, %s222
    %p228 = scmp.eq.s32.totalorder %s15, 0
    %p229 = por %p227, %p228
    %p230 = scmp.ne.s32.totalorder %s219, %s222
    %p231 = scmp.eq.s32.totalorder %s20, 1
    %p232 = por %p230, %p231
    %p233 = scmp.ne.s32.totalorder %s222, %s223
    %p234 = scmp.eq.s32.totalorder %s20, 0
    %p235 = por %p233, %p234
    %p236 = scmp.ne.s32.totalorder %s222, %s223
    %p237 = scmp.eq.s32.totalorder %s21, 1
    %p238 = por %p236, %p237
    %p240 = scmp.ne.s32.totalorder %s223, %s239
    %p241 = scmp.eq.s32.totalorder %s21, 0
    %p242 = por %p240, %p241
    %p243 = scmp.le.s32.totalorder 1, %s15
    %p244 = scmp.lt.s32.totalorder %s15, 3
    %p245 = pnand %p243, %p244
    %p246 = pneg %p245
    // Predicated region
    $region9: #{down_forward.2} parent=5 // pred_check
      _
    $region10: #{down_forward.2} parent=5 // pred_check_branch
      %248 = sbr.rel (%p245) target = $region12
    $region11: #{down_forward.2} parent=5 // pred_region
      %s249 = ssub.s32 %s15, 1
      // Predicated region
      $region13: #{down_forward.2} parent=11 // pred_check
        %p250 = pneg %p62
      $region14: #{down_forward.2} parent=11 // pred_check_branch
        %252 = sbr.rel (%p250) target = $region16
      $region15: #{down_forward.2} parent=11 // pred_region
        _
      $region16: #{down_forward.2} parent=11 // pred_fallthru
        _
      // Predicated region
      $region17: #{down_forward.2} parent=11 // pred_check
        %p253 = pneg %p83
      $region18: #{down_forward.2} parent=11 // pred_check_branch
        %255 = sbr.rel (%p253) target = $region20
      $region19: #{down_forward.2} parent=11 // pred_region
        _
      $region20: #{down_forward.2} parent=11 // pred_fallthru
        _
      // Predicated region
      $region21: #{down_forward.2} parent=11 // pred_check
        %p256 = pneg %p104
      $region22: #{down_forward.2} parent=11 // pred_check_branch
        %258 = sbr.rel (%p256) target = $region24
      $region23: #{down_forward.2} parent=11 // pred_region
        _
      $region24: #{down_forward.2} parent=11 // pred_fallthru
        _
      // Predicated region
      $region25: #{down_forward.2} parent=11 // pred_check
        %p259 = pneg %p125
      $region26: #{down_forward.2} parent=11 // pred_check_branch
        %261 = sbr.rel (%p259) target = $region28
      $region27: #{down_forward.2} parent=11 // pred_region
        _
      $region28: #{down_forward.2} parent=11 // pred_fallthru
        _
      // Predicated region
      $region29: #{down_forward.2} parent=11 // pred_check
        %p262 = pneg %p146
      $region30: #{down_forward.2} parent=11 // pred_check_branch
        %264 = sbr.rel (%p262) target = $region32
      $region31: #{down_forward.2} parent=11 // pred_region
        _
      $region32: #{down_forward.2} parent=11 // pred_fallthru
        _
      // Predicated region
      $region33: #{down_forward.2} parent=11 // pred_check
        %p265 = pneg %p167
      $region34: #{down_forward.2} parent=11 // pred_check_branch
        %267 = sbr.rel (%p265) target = $region36
      $region35: #{down_forward.2} parent=11 // pred_region
        _
      $region36: #{down_forward.2} parent=11 // pred_fallthru
        _
      // Predicated region
      $region37: #{down_forward.2} parent=11 // pred_check
        %p268 = pneg %p188
      $region38: #{down_forward.2} parent=11 // pred_check_branch
        %270 = sbr.rel (%p268) target = $region40
      $region39: #{down_forward.2} parent=11 // pred_region
        _
      $region40: #{down_forward.2} parent=11 // pred_fallthru
        _
      // Predicated region
      $region41: #{down_forward.2} parent=11 // pred_check
        %p271 = pneg %p209
      $region42: #{down_forward.2} parent=11 // pred_check_branch
        %273 = sbr.rel (%p271) target = $region44
      $region43: #{down_forward.2} parent=11 // pred_region
        _
      $region44: #{down_forward.2} parent=11 // pred_fallthru
        _
    $region12: #{down_forward.2} parent=5 // pred_fallthru
      _
    %p274 = scmp.lt.s32.totalorder %s15, 2
    // Predicated region
    $region45: #{down_forward.2} parent=5 // pred_check
      %p275 = pneg %p274
    $region46: #{down_forward.2} parent=5 // pred_check_branch
      %277 = sbr.rel (%p275) target = $region48
    $region47: #{down_forward.2} parent=5 // pred_region
      // Predicated region
      $region49: #{down_forward.2} parent=47 // pred_check
        %p278 = pneg %p35
      $region50: #{down_forward.2} parent=47 // pred_check_branch
        %280 = sbr.rel (%p278) target = $region52
      $region51: #{down_forward.2} parent=47 // pred_region
        %p281 = scmp.lt.s32.totalorder %s15, 1
        %s282 = scalar_select %p281, %s15, 1
        %s283 = smul.addr %s282, 54
        %s284 = smul.addr %s283, 8
        %s285 = scalar_lea.vmem %s0, %s284
      $region52: #{down_forward.2} parent=47 // pred_fallthru
        _
    $region48: #{down_forward.2} parent=5 // pred_fallthru
      _
    %p286 = scmp.le.s32.totalorder 1, %s15
    %p287 = scmp.lt.s32.totalorder %s15, 3
    %p288 = pnand %p286, %p287
    %p289 = pneg %p288
    // Predicated region
    $region53: #{down_forward.2} parent=5 // pred_check
      _
    $region54: #{down_forward.2} parent=5 // pred_check_branch
      %291 = sbr.rel (%p288) target = $region56
    $region55: #{down_forward.2} parent=5 // pred_region
      %s292 = ssub.s32 %s15, 1
      %p293 = scmp.lt.s32.totalorder %s20, 1
      %s294 = scalar_select %p293, %s20, 1
      %s295 = smul.addr %s294, 54
      %s296 = smul.addr %s295, 8
      %s297 = scalar_lea.vmem %s0, %s296
      %p298 = pneg %p41
      %p299 = pneg %p38
      %p300 = pneg %p62
      %p301 = pneg %p59
      %p302 = pneg %p83
      %p303 = pneg %p80
      %p304 = pneg %p104
      %p305 = pneg %p101
      %p306 = pneg %p125
      %p307 = pneg %p122
      %p308 = pneg %p146
      %p309 = pneg %p143
      %p310 = pneg %p167
      %p311 = pneg %p164
      %p312 = pneg %p188
      %p313 = pneg %p185
      %p314 = pneg %p209
      %p315 = pneg %p206
      %p316 = pneg %p235
      %p317 = pneg %p232
      %p318 = scmp.lt.s32.totalorder %s20, 1
      %s319 = scalar_select %p318, %s20, 1
      %s320 = smul.addr %s319, 32
      %s321 = smul.addr %s320, 8
      %s322 = scalar_lea.vmem %s9, %s321
      %p323 = scmp.lt.s32.totalorder %s20, 1
      %s324 = scalar_select %p323, %s20, 1
      %s325 = smul.addr %s324, 54
      %s326 = smul.addr %s325, 8
      %s327 = scalar_lea.vmem %s0, %s326
      %p328 = scmp.lt.s32.totalorder %s20, 1
      %s329 = scalar_select %p328, %s20, 1
      %s330 = smul.addr %s329, 32
      %s331 = smul.addr %s330, 8
      %s332 = scalar_lea.vmem %s9, %s331
      %s334 = scalar_lea.vmem %s327, 24
      %v335 = vld [vmem:[%s334 + $0x1] sm:$0xff]
      %v336 = vld [vmem:[%s334 + $0x9] sm:$0xff]
      %v337 = vld [vmem:[%s334 + $0x19] sm:$0xff]
      %v338 = vld [vmem:[%s334 + $0x21] sm:$0xff]
      %v339 = vld [vmem:[%s334 + $0x31] sm:$0xff]
      %v340 = vld [vmem:[%s334 + $0x39] sm:$0xff]
      %v341 = vld [vmem:[%s334 + $0x49] sm:$0xff]
      %v342 = vld [vmem:[%s334 + $0x51] sm:$0xff]
      %v343 = vld [vmem:[%s334 + $0x61] sm:$0xff]
      %v344 = vld [vmem:[%s334 + $0x69] sm:$0xff]
      %v345 = vld [vmem:[%s334 + $0x79] sm:$0xff]
      %v346 = vld [vmem:[%s334 + $0x81] sm:$0xff]
      %v347 = vld [vmem:[%s334 + $0x91] sm:$0xff]
      %v348 = vld [vmem:[%s334 + $0x99] sm:$0xff]
      %v349 = vld [vmem:[%s334 + $0xa9] sm:$0xff]
      %v350 = vld [vmem:[%s334 + $0xb1] sm:$0xff]
      %v351 = vld [vmem:[%s334 + $0xc1] sm:$0xff]
      %v352 = vld [vmem:[%s334 + $0xc9] sm:$0xff]
      %v353 = vld [vmem:[%s334 + $0xd9] sm:$0xff]
      %v354 = vld [vmem:[%s334 + $0xe1] sm:$0xff]
      %v355 = vld [vmem:[%s334 + $0xf1] sm:$0xff]
      %v356 = vld [vmem:[%s334 + $0xf9] sm:$0xff]
      %v357 = vld [vmem:[%s334 + $0x109] sm:$0xff]
      %v358 = vld [vmem:[%s334 + $0x111] sm:$0xff]
      %v359 = vld [vmem:[%s334 + $0x121] sm:$0xff]
      %v360 = vld [vmem:[%s334 + $0x129] sm:$0xff]
      %v361 = vld [vmem:[%s334 + $0x139] sm:$0xff]
      %v362 = vld [vmem:[%s334 + $0x141] sm:$0xff]
      %v363 = vld [vmem:[%s334 + $0x151] sm:$0xff]
      %v364 = vld [vmem:[%s334 + $0x159] sm:$0xff]
      %v365 = vld [vmem:[%s334 + $0x169] sm:$0xff]
      %v366 = vld [vmem:[%s334 + $0x171] sm:$0xff]
      %v367 = vpack.c.bf16 %v336, %v335
      %v368 = vpack.c.bf16 %v338, %v337
      %v369 = vpack.c.bf16 %v340, %v339
      %v370 = vpack.c.bf16 %v342, %v341
      %v371 = vpack.c.bf16 %v344, %v343
      %v372 = vpack.c.bf16 %v346, %v345
      %v373 = vpack.c.bf16 %v348, %v347
      %v374 = vpack.c.bf16 %v350, %v349
      %v375 = vpack.c.bf16 %v352, %v351
      %v376 = vpack.c.bf16 %v354, %v353
      %v377 = vpack.c.bf16 %v356, %v355
      %v378 = vpack.c.bf16 %v358, %v357
      %v379 = vpack.c.bf16 %v360, %v359
      %v380 = vpack.c.bf16 %v362, %v361
      %v381 = vpack.c.bf16 %v364, %v363
      %v382 = vpack.c.bf16 %v366, %v365
      %v383 = vld [vmem:[%s1] sm:$0x3]
      %v384 = vld [vmem:[%s2] sm:$0x1]
      %v386 = vlaneseq
      %v387 = vshrl.u32 %v386, 7
      %v388 = vsub.s32 0, %v387
      %v389 = vrot.slane %v384, %v388
      %vm391 = vcmask 31744
      %v393 = vsel %vm391, %v367, 0
      %v396 = vsel %vm391, %v368, 0
      %v399 = vsel %vm391, %v369, 0
      %v402 = vsel %vm391, %v370, 0
      %v405 = vsel %vm391, %v371, 0
      %v408 = vsel %vm391, %v372, 0
      %v411 = vsel %vm391, %v373, 0
      %v414 = vsel %vm391, %v374, 0
      %v417 = vsel %vm391, %v375, 0
      %v420 = vsel %vm391, %v376, 0
      %v423 = vsel %vm391, %v377, 0
      %v426 = vsel %vm391, %v378, 0
      %v429 = vsel %vm391, %v379, 0
      %v432 = vsel %vm391, %v380, 0
      %v435 = vsel %vm391, %v381, 0
      %v438 = vsel %vm391, %v382, 0
      %vm440 = vcmask 1041408
      %v442 = vsel %vm440, %v383, 0
      %444 = vmatprep.subr.bf16.mxu0 0
      %445 = vmatpush1.bf16.msra.mxu0 %v442
      %446 = vmatprep.subr.bf16.mxu0 0
      %447 = vmatpush1.bf16.msra.mxu0 0
      %448 = vmatprep.subr.bf16.mxu0 0
      %449 = vmatpush1.bf16.msra.mxu0 0
      %450 = vmatprep.subr.bf16.mxu0 0
      %451 = vmatpush1.bf16.msra.mxu0 0
      %452 = vmatprep.subr.bf16.mxu0 0
      %453 = vmatpush1.bf16.msra.mxu0 0
      %454 = vmatprep.subr.bf16.mxu0 0
      %455 = vmatpush1.bf16.msra.mxu0 0
      %456 = vmatprep.subr.bf16.mxu0 0
      %457 = vmatpush1.bf16.msra.mxu0 0
      %458 = vmatprep.subr.bf16.mxu0 0
      %459 = vmatpush1.bf16.msra.mxu0 0
      %460 = vmatprep.subr.bf16.mxu0 0
      %461 = vmatpush1.bf16.msra.mxu0 0
      %462 = vmatprep.subr.bf16.mxu0 0
      %463 = vmatpush1.bf16.msra.mxu0 0
      %464 = vmatprep.subr.bf16.mxu0 0
      %465 = vmatpush1.bf16.msra.mxu0 0
      %466 = vmatprep.subr.bf16.mxu0 0
      %467 = vmatpush1.bf16.msra.mxu0 0
      %468 = vmatprep.subr.bf16.mxu0 0
      %469 = vmatpush1.bf16.msra.mxu0 0
      %470 = vmatprep.subr.bf16.mxu0 0
      %471 = vmatpush1.bf16.msra.mxu0 0
      %472 = vmatprep.subr.bf16.mxu0 0
      %473 = vmatpush1.bf16.msra.mxu0 0
      %474 = vmatprep.subr.bf16.mxu0 0
      %475 = vmatpush1.bf16.msra.mxu0 0
      %476 = vmatprep.mubr.bf16.mxu0 0
      %477 = vmatmul.mubr.bf16.gmra.mrb[0].mxu0 %v393
      %v478 = vpop.f32.mrb[0].mxu0
      %v479 = vadd.f32 %v389, %v478
      %v480 = vpop.f32.mrb[0].mxu0
      %v481 = vpop.f32.mrb[0].mxu0
      %v482 = vadd.f32 %v389, %v481
      %v483 = vpop.f32.mrb[0].mxu0
      %484 = vmatprep.mubr.bf16.mxu0 0
      %485 = vmatmul.mubr.bf16.gmra.mrb[0].mxu0 %v396
      %v486 = vpop.f32.mrb[0].mxu0
      %v487 = vadd.f32 %v389, %v486
      %v488 = vpop.f32.mrb[0].mxu0
      %v489 = vpop.f32.mrb[0].mxu0
      %v490 = vadd.f32 %v389, %v489
      %v491 = vpop.f32.mrb[0].mxu0
      %492 = vmatprep.mubr.bf16.mxu0 0
      %493 = vmatmul.mubr.bf16.gmra.mrb[0].mxu0 %v399
      %v494 = vpop.f32.mrb[0].mxu0
      %v495 = vadd.f32 %v389, %v494
      %v496 = vpop.f32.mrb[0].mxu0
      %v497 = vpop.f32.mrb[0].mxu0
      %v498 = vadd.f32 %v389, %v497
      %v499 = vpop.f32.mrb[0].mxu0
      %500 = vmatprep.mubr.bf16.mxu0 0
      %501 = vmatmul.mubr.bf16.gmra.mrb[0].mxu0 %v402
      %v502 = vpop.f32.mrb[0].mxu0
      %v503 = vadd.f32 %v389, %v502
      %v504 = vpop.f32.mrb[0].mxu0
      %v505 = vpop.f32.mrb[0].mxu0
      %v506 = vadd.f32 %v389, %v505
      %v507 = vpop.f32.mrb[0].mxu0
      %508 = vmatprep.mubr.bf16.mxu0 0
      %509 = vmatmul.mubr.bf16.gmra.mrb[0].mxu0 %v405
      %v510 = vpop.f32.mrb[0].mxu0
      %v511 = vadd.f32 %v389, %v510
      %v512 = vpop.f32.mrb[0].mxu0
      %v513 = vpop.f32.mrb[0].mxu0
      %v514 = vadd.f32 %v389, %v513
      %v515 = vpop.f32.mrb[0].mxu0
      %516 = vmatprep.mubr.bf16.mxu0 0
      %517 = vmatmul.mubr.bf16.gmra.mrb[0].mxu0 %v408
      %v518 = vpop.f32.mrb[0].mxu0
      %v519 = vadd.f32 %v389, %v518
      %v520 = vpop.f32.mrb[0].mxu0
      %v521 = vpop.f32.mrb[0].mxu0
      %v522 = vadd.f32 %v389, %v521
      %v523 = vpop.f32.mrb[0].mxu0
      %524 = vmatprep.mubr.bf16.mxu0 0
      %525 = vmatmul.mubr.bf16.gmra.mrb[0].mxu0 %v411
      %v526 = vpop.f32.mrb[0].mxu0
      %v527 = vadd.f32 %v389, %v526
      %v528 = vpop.f32.mrb[0].mxu0
      %v529 = vpop.f32.mrb[0].mxu0
      %v530 = vadd.f32 %v389, %v529
      %v531 = vpop.f32.mrb[0].mxu0
      %532 = vmatprep.mubr.bf16.mxu0 0
      %533 = vmatmul.mubr.bf16.gmra.mrb[0].mxu0 %v414
      %v534 = vpop.f32.mrb[0].mxu0
      %v535 = vadd.f32 %v389, %v534
      %v536 = vpop.f32.mrb[0].mxu0
      %v537 = vpop.f32.mrb[0].mxu0
      %v538 = vadd.f32 %v389, %v537
      %v539 = vpop.f32.mrb[0].mxu0
      %540 = vmatprep.mubr.bf16.mxu0 0
      %541 = vmatmul.mubr.bf16.gmra.mrb[0].mxu0 %v417
      %v542 = vpop.f32.mrb[0].mxu0
      %v543 = vadd.f32 %v389, %v542
      %v544 = vpop.f32.mrb[0].mxu0
      %v545 = vpop.f32.mrb[0].mxu0
      %v546 = vadd.f32 %v389, %v545
      %v547 = vpop.f32.mrb[0].mxu0
      %548 = vmatprep.mubr.bf16.mxu0 0
      %549 = vmatmul.mubr.bf16.gmra.mrb[0].mxu0 %v420
      %v550 = vpop.f32.mrb[0].mxu0
      %v551 = vadd.f32 %v389, %v550
      %v552 = vpop.f32.mrb[0].mxu0
      %v553 = vpop.f32.mrb[0].mxu0
      %v554 = vadd.f32 %v389, %v553
      %v555 = vpop.f32.mrb[0].mxu0
      %556 = vmatprep.mubr.bf16.mxu0 0
      %557 = vmatmul.mubr.bf16.gmra.mrb[0].mxu0 %v423
      %v558 = vpop.f32.mrb[0].mxu0
      %v559 = vadd.f32 %v389, %v558
      %v560 = vpop.f32.mrb[0].mxu0
      %v561 = vpop.f32.mrb[0].mxu0
      %v562 = vadd.f32 %v389, %v561
      %v563 = vpop.f32.mrb[0].mxu0
      %564 = vmatprep.mubr.bf16.mxu0 0
      %565 = vmatmul.mubr.bf16.gmra.mrb[0].mxu0 %v426
      %v566 = vpop.f32.mrb[0].mxu0
      %v567 = vadd.f32 %v389, %v566
      %v568 = vpop.f32.mrb[0].mxu0
      %v569 = vpop.f32.mrb[0].mxu0
      %v570 = vadd.f32 %v389, %v569
      %v571 = vpop.f32.mrb[0].mxu0
      %572 = vmatprep.mubr.bf16.mxu0 0
      %573 = vmatmul.mubr.bf16.gmra.mrb[0].mxu0 %v429
      %v574 = vpop.f32.mrb[0].mxu0
      %v575 = vadd.f32 %v389, %v574
      %v576 = vpop.f32.mrb[0].mxu0
      %v577 = vpop.f32.mrb[0].mxu0
      %v578 = vadd.f32 %v389, %v577
      %v579 = vpop.f32.mrb[0].mxu0
      %580 = vmatprep.mubr.bf16.mxu0 0
      %581 = vmatmul.mubr.bf16.gmra.mrb[0].mxu0 %v432
      %v582 = vpop.f32.mrb[0].mxu0
      %v583 = vadd.f32 %v389, %v582
      %v584 = vpop.f32.mrb[0].mxu0
      %v585 = vpop.f32.mrb[0].mxu0
      %v586 = vadd.f32 %v389, %v585
      %v587 = vpop.f32.mrb[0].mxu0
      %588 = vmatprep.mubr.bf16.mxu0 0
      %589 = vmatmul.mubr.bf16.gmra.mrb[0].mxu0 %v435
      %v590 = vpop.f32.mrb[0].mxu0
      %v591 = vadd.f32 %v389, %v590
      %v592 = vpop.f32.mrb[0].mxu0
      %v593 = vpop.f32.mrb[0].mxu0
      %v594 = vadd.f32 %v389, %v593
      %v595 = vpop.f32.mrb[0].mxu0
      %596 = vmatprep.mubr.bf16.mxu0 0
      %597 = vmatmul.mubr.bf16.gmra.mrb[0].mxu0 %v438
      %v598 = vpop.f32.mrb[0].mxu0
      %v599 = vadd.f32 %v389, %v598
      %v600 = vpop.f32.mrb[0].mxu0
      %v601 = vpop.f32.mrb[0].mxu0
      %v602 = vadd.f32 %v389, %v601
      %v603 = vpop.f32.mrb[0].mxu0
      %604 = vdwg.mxu0
      %vm605 = vcmp.ge.f32.partialorder %v479, 0.0
      %vm606 = vcmp.ge.f32.partialorder %v482, 0.0
      %vm607 = vcmp.ge.f32.partialorder %v487, 0.0
      %vm608 = vcmp.ge.f32.partialorder %v490, 0.0
      %vm609 = vcmp.ge.f32.partialorder %v495, 0.0
      %vm610 = vcmp.ge.f32.partialorder %v498, 0.0
      %vm611 = vcmp.ge.f32.partialorder %v503, 0.0
      %vm612 = vcmp.ge.f32.partialorder %v506, 0.0
      %vm613 = vcmp.ge.f32.partialorder %v511, 0.0
      %vm614 = vcmp.ge.f32.partialorder %v514, 0.0
      %vm615 = vcmp.ge.f32.partialorder %v519, 0.0
      %vm616 = vcmp.ge.f32.partialorder %v522, 0.0
      %vm617 = vcmp.ge.f32.partialorder %v527, 0.0
      %vm618 = vcmp.ge.f32.partialorder %v530, 0.0
      %vm619 = vcmp.ge.f32.partialorder %v535, 0.0
      %vm620 = vcmp.ge.f32.partialorder %v538, 0.0
      %vm621 = vcmp.ge.f32.partialorder %v543, 0.0
      %vm622 = vcmp.ge.f32.partialorder %v546, 0.0
      %vm623 = vcmp.ge.f32.partialorder %v551, 0.0
      %vm624 = vcmp.ge.f32.partialorder %v554, 0.0
      %vm625 = vcmp.ge.f32.partialorder %v559, 0.0
      %vm626 = vcmp.ge.f32.partialorder %v562, 0.0
      %vm627 = vcmp.ge.f32.partialorder %v567, 0.0
      %vm628 = vcmp.ge.f32.partialorder %v570, 0.0
      %vm629 = vcmp.ge.f32.partialorder %v575, 0.0
      %vm630 = vcmp.ge.f32.partialorder %v578, 0.0
      %vm631 = vcmp.ge.f32.partialorder %v583, 0.0
      %vm632 = vcmp.ge.f32.partialorder %v586, 0.0
      %vm633 = vcmp.ge.f32.partialorder %v591, 0.0
      %vm634 = vcmp.ge.f32.partialorder %v594, 0.0
      %vm635 = vcmp.ge.f32.partialorder %v599, 0.0
      %vm636 = vcmp.ge.f32.partialorder %v602, 0.0
      %v637 = vmul.f32 %v479, 0.1
      %v638 = vmul.f32 %v482, 0.1
      %v639 = vmul.f32 %v487, 0.1
      %v640 = vmul.f32 %v490, 0.1
      %v641 = vmul.f32 %v495, 0.1
      %v642 = vmul.f32 %v498, 0.1
      %v643 = vmul.f32 %v503, 0.1
      %v644 = vmul.f32 %v506, 0.1
      %v645 = vmul.f32 %v511, 0.1
      %v646 = vmul.f32 %v514, 0.1
      %v647 = vmul.f32 %v519, 0.1
      %v648 = vmul.f32 %v522, 0.1
      %v649 = vmul.f32 %v527, 0.1
      %v650 = vmul.f32 %v530, 0.1
      %v651 = vmul.f32 %v535, 0.1
      %v652 = vmul.f32 %v538, 0.1
      %v653 = vmul.f32 %v543, 0.1
      %v654 = vmul.f32 %v546, 0.1
      %v655 = vmul.f32 %v551, 0.1
      %v656 = vmul.f32 %v554, 0.1
      %v657 = vmul.f32 %v559, 0.1
      %v658 = vmul.f32 %v562, 0.1
      %v659 = vmul.f32 %v567, 0.1
      %v660 = vmul.f32 %v570, 0.1
      %v661 = vmul.f32 %v575, 0.1
      %v662 = vmul.f32 %v578, 0.1
      %v663 = vmul.f32 %v583, 0.1
      %v664 = vmul.f32 %v586, 0.1
      %v665 = vmul.f32 %v591, 0.1
      %v666 = vmul.f32 %v594, 0.1
      %v667 = vmul.f32 %v599, 0.1
      %v668 = vmul.f32 %v602, 0.1
      %v669 = vsel %vm605, %v479, %v637
      %v670 = vsel %vm606, %v482, %v638
      %v671 = vsel %vm607, %v487, %v639
      %v672 = vsel %vm608, %v490, %v640
      %v673 = vsel %vm609, %v495, %v641
      %v674 = vsel %vm610, %v498, %v642
      %v675 = vsel %vm611, %v503, %v643
      %v676 = vsel %vm612, %v506, %v644
      %v677 = vsel %vm613, %v511, %v645
      %v678 = vsel %vm614, %v514, %v646
      %v679 = vsel %vm615, %v519, %v647
      %v680 = vsel %vm616, %v522, %v648
      %v681 = vsel %vm617, %v527, %v649
      %v682 = vsel %vm618, %v530, %v650
      %v683 = vsel %vm619, %v535, %v651
      %v684 = vsel %vm620, %v538, %v652
      %v685 = vsel %vm621, %v543, %v653
      %v686 = vsel %vm622, %v546, %v654
      %v687 = vsel %vm623, %v551, %v655
      %v688 = vsel %vm624, %v554, %v656
      %v689 = vsel %vm625, %v559, %v657
      %v690 = vsel %vm626, %v562, %v658
      %v691 = vsel %vm627, %v567, %v659
      %v692 = vsel %vm628, %v570, %v660
      %v693 = vsel %vm629, %v575, %v661
      %v694 = vsel %vm630, %v578, %v662
      %v695 = vsel %vm631, %v583, %v663
      %v696 = vsel %vm632, %v586, %v664
      %v697 = vsel %vm633, %v591, %v665
      %v698 = vsel %vm634, %v594, %v666
      %v699 = vsel %vm635, %v599, %v667
      %v700 = vsel %vm636, %v602, %v668
      %v701 = vpack.c.bf16 %v670, %v669
      %v702 = vpack.c.bf16 %v672, %v671
      %v703 = vpack.c.bf16 %v674, %v673
      %v704 = vpack.c.bf16 %v676, %v675
      %v705 = vpack.c.bf16 %v678, %v677
      %v706 = vpack.c.bf16 %v680, %v679
      %v707 = vpack.c.bf16 %v682, %v681
      %v708 = vpack.c.bf16 %v684, %v683
      %v709 = vpack.c.bf16 %v686, %v685
      %v710 = vpack.c.bf16 %v688, %v687
      %v711 = vpack.c.bf16 %v690, %v689
      %v712 = vpack.c.bf16 %v692, %v691
      %v713 = vpack.c.bf16 %v694, %v693
      %v714 = vpack.c.bf16 %v696, %v695
      %v715 = vpack.c.bf16 %v698, %v697
      %v716 = vpack.c.bf16 %v700, %v699
      %v717 = vld [vmem:[%s3] sm:$0xf]
      %v718 = vld [vmem:[%s3 + $0x4] sm:$0xf]
      %v719 = vld [vmem:[%s3 + $0x8] sm:$0xf]
      %v720 = vld [vmem:[%s3 + $0xc] sm:$0xf]
      %v721 = vld [vmem:[%s4] sm:$0x1]
      %v723 = vlaneseq
      %v724 = vshrl.u32 %v723, 7
      %v725 = vsub.s32 0, %v724
      %v726 = vrot.slane %v721, %v725
      %v732 = vunpack.c.l.b16 %v717
      %v733 = vunpack.c.l.b16 %v718
      %v734 = vunpack.c.l.b16 %v719
      %v735 = vunpack.c.l.b16 %v720
      %v736 = vpack.c.b16 %v733, %v732
      %v737 = vpack.c.b16 %v735, %v734
      %vm740 = vcmask 261120
      %v742 = vsel %vm740, %v701, 0
      %v745 = vsel %vm740, %v702, 0
      %v748 = vsel %vm740, %v703, 0
      %v751 = vsel %vm740, %v704, 0
      %v754 = vsel %vm740, %v705, 0
      %v757 = vsel %vm740, %v706, 0
      %v760 = vsel %vm740, %v707, 0
      %v763 = vsel %vm740, %v708, 0
      %v766 = vsel %vm740, %v709, 0
      %v769 = vsel %vm740, %v710, 0
      %v772 = vsel %vm740, %v711, 0
      %v775 = vsel %vm740, %v712, 0
      %v778 = vsel %vm740, %v713, 0
      %v781 = vsel %vm740, %v714, 0
      %v784 = vsel %vm740, %v715, 0
      %v787 = vsel %vm740, %v716, 0
      %789 = vmatprep.subr.bf16.mxu0 0
      %790 = vmatpush1.bf16.msra.mxu0 %v736
      %791 = vmatprep.subr.bf16.mxu0 0
      %792 = vmatpush1.bf16.msra.mxu0 %v737
      %793 = vmatprep.subr.bf16.mxu0 0
      %794 = vmatpush1.bf16.msra.mxu0 0
      %795 = vmatprep.subr.bf16.mxu0 0
      %796 = vmatpush1.bf16.msra.mxu0 0
      %797 = vmatprep.subr.bf16.mxu0 0
      %798 = vmatpush1.bf16.msra.mxu0 0
      %799 = vmatprep.subr.bf16.mxu0 0
      %800 = vmatpush1.bf16.msra.mxu0 0
      %801 = vmatprep.subr.bf16.mxu0 0
      %802 = vmatpush1.bf16.msra.mxu0 0
      %803 = vmatprep.subr.bf16.mxu0 0
      %804 = vmatpush1.bf16.msra.mxu0 0
      %805 = vmatprep.subr.bf16.mxu0 0
      %806 = vmatpush1.bf16.msra.mxu0 0
      %807 = vmatprep.subr.bf16.mxu0 0
      %808 = vmatpush1.bf16.msra.mxu0 0
      %809 = vmatprep.subr.bf16.mxu0 0
      %810 = vmatpush1.bf16.msra.mxu0 0
      %811 = vmatprep.subr.bf16.mxu0 0
      %812 = vmatpush1.bf16.msra.mxu0 0
      %813 = vmatprep.subr.bf16.mxu0 0
      %814 = vmatpush1.bf16.msra.mxu0 0
      %815 = vmatprep.subr.bf16.mxu0 0
      %816 = vmatpush1.bf16.msra.mxu0 0
      %817 = vmatprep.subr.bf16.mxu0 0
      %818 = vmatpush1.bf16.msra.mxu0 0
      %819 = vmatprep.subr.bf16.mxu0 0
      %820 = vmatpush1.bf16.msra.mxu0 0
      %821 = vmatprep.mubr.bf16.mxu0 0
      %822 = vmatmul.mubr.bf16.gmra.mrb[0].mxu0 %v742
      %v823 = vpop.f32.mrb[0].mxu0
      %v824 = vadd.f32 %v726, %v823
      %v825 = vpop.f32.mrb[0].mxu0
      %v826 = vpop.f32.mrb[0].mxu0
      %v827 = vadd.f32 %v726, %v826
      %v828 = vpop.f32.mrb[0].mxu0
      %829 = vmatprep.mubr.bf16.mxu0 0
      %830 = vmatmul.mubr.bf16.gmra.mrb[0].mxu0 %v745
      %v831 = vpop.f32.mrb[0].mxu0
      %v832 = vadd.f32 %v726, %v831
      %v833 = vpop.f32.mrb[0].mxu0
      %v834 = vpop.f32.mrb[0].mxu0
      %v835 = vadd.f32 %v726, %v834
      %v836 = vpop.f32.mrb[0].mxu0
      %837 = vmatprep.mubr.bf16.mxu0 0
      %838 = vmatmul.mubr.bf16.gmra.mrb[0].mxu0 %v748
      %v839 = vpop.f32.mrb[0].mxu0
      %v840 = vadd.f32 %v726, %v839
      %v841 = vpop.f32.mrb[0].mxu0
      %v842 = vpop.f32.mrb[0].mxu0
      %v843 = vadd.f32 %v726, %v842
      %v844 = vpop.f32.mrb[0].mxu0
      %845 = vmatprep.mubr.bf16.mxu0 0
      %846 = vmatmul.mubr.bf16.gmra.mrb[0].mxu0 %v751
      %v847 = vpop.f32.mrb[0].mxu0
      %v848 = vadd.f32 %v726, %v847
      %v849 = vpop.f32.mrb[0].mxu0
      %v850 = vpop.f32.mrb[0].mxu0
      %v851 = vadd.f32 %v726, %v850
      %v852 = vpop.f32.mrb[0].mxu0
      %853 = vmatprep.mubr.bf16.mxu0 0
      %854 = vmatmul.mubr.bf16.gmra.mrb[0].mxu0 %v754
      %v855 = vpop.f32.mrb[0].mxu0
      %v856 = vadd.f32 %v726, %v855
      %v857 = vpop.f32.mrb[0].mxu0
      %v858 = vpop.f32.mrb[0].mxu0
      %v859 = vadd.f32 %v726, %v858
      %v860 = vpop.f32.mrb[0].mxu0
      %861 = vmatprep.mubr.bf16.mxu0 0
      %862 = vmatmul.mubr.bf16.gmra.mrb[0].mxu0 %v757
      %v863 = vpop.f32.mrb[0].mxu0
      %v864 = vadd.f32 %v726, %v863
      %v865 = vpop.f32.mrb[0].mxu0
      %v866 = vpop.f32.mrb[0].mxu0
      %v867 = vadd.f32 %v726, %v866
      %v868 = vpop.f32.mrb[0].mxu0
      %869 = vmatprep.mubr.bf16.mxu0 0
      %870 = vmatmul.mubr.bf16.gmra.mrb[0].mxu0 %v760
      %v871 = vpop.f32.mrb[0].mxu0
      %v872 = vadd.f32 %v726, %v871
      %v873 = vpop.f32.mrb[0].mxu0
      %v874 = vpop.f32.mrb[0].mxu0
      %v875 = vadd.f32 %v726, %v874
      %v876 = vpop.f32.mrb[0].mxu0
      %877 = vmatprep.mubr.bf16.mxu0 0
      %878 = vmatmul.mubr.bf16.gmra.mrb[0].mxu0 %v763
      %v879 = vpop.f32.mrb[0].mxu0
      %v880 = vadd.f32 %v726, %v879
      %v881 = vpop.f32.mrb[0].mxu0
      %v882 = vpop.f32.mrb[0].mxu0
      %v883 = vadd.f32 %v726, %v882
      %v884 = vpop.f32.mrb[0].mxu0
      %885 = vmatprep.mubr.bf16.mxu0 0
      %886 = vmatmul.mubr.bf16.gmra.mrb[0].mxu0 %v766
      %v887 = vpop.f32.mrb[0].mxu0
      %v888 = vadd.f32 %v726, %v887
      %v889 = vpop.f32.mrb[0].mxu0
      %v890 = vpop.f32.mrb[0].mxu0
      %v891 = vadd.f32 %v726, %v890
      %v892 = vpop.f32.mrb[0].mxu0
      %893 = vmatprep.mubr.bf16.mxu0 0
      %894 = vmatmul.mubr.bf16.gmra.mrb[0].mxu0 %v769
      %v895 = vpop.f32.mrb[0].mxu0
      %v896 = vadd.f32 %v726, %v895
      %v897 = vpop.f32.mrb[0].mxu0
      %v898 = vpop.f32.mrb[0].mxu0
      %v899 = vadd.f32 %v726, %v898
      %v900 = vpop.f32.mrb[0].mxu0
      %901 = vmatprep.mubr.bf16.mxu0 0
      %902 = vmatmul.mubr.bf16.gmra.mrb[0].mxu0 %v772
      %v903 = vpop.f32.mrb[0].mxu0
      %v904 = vadd.f32 %v726, %v903
      %v905 = vpop.f32.mrb[0].mxu0
      %v906 = vpop.f32.mrb[0].mxu0
      %v907 = vadd.f32 %v726, %v906
      %v908 = vpop.f32.mrb[0].mxu0
      %909 = vmatprep.mubr.bf16.mxu0 0
      %910 = vmatmul.mubr.bf16.gmra.mrb[0].mxu0 %v775
      %v911 = vpop.f32.mrb[0].mxu0
      %v912 = vadd.f32 %v726, %v911
      %v913 = vpop.f32.mrb[0].mxu0
      %v914 = vpop.f32.mrb[0].mxu0
      %v915 = vadd.f32 %v726, %v914
      %v916 = vpop.f32.mrb[0].mxu0
      %917 = vmatprep.mubr.bf16.mxu0 0
      %918 = vmatmul.mubr.bf16.gmra.mrb[0].mxu0 %v778
      %v919 = vpop.f32.mrb[0].mxu0
      %v920 = vadd.f32 %v726, %v919
      %v921 = vpop.f32.mrb[0].mxu0
      %v922 = vpop.f32.mrb[0].mxu0
      %v923 = vadd.f32 %v726, %v922
      %v924 = vpop.f32.mrb[0].mxu0
      %925 = vmatprep.mubr.bf16.mxu0 0
      %926 = vmatmul.mubr.bf16.gmra.mrb[0].mxu0 %v781
      %v927 = vpop.f32.mrb[0].mxu0
      %v928 = vadd.f32 %v726, %v927
      %v929 = vpop.f32.mrb[0].mxu0
      %v930 = vpop.f32.mrb[0].mxu0
      %v931 = vadd.f32 %v726, %v930
      %v932 = vpop.f32.mrb[0].mxu0
      %933 = vmatprep.mubr.bf16.mxu0 0
      %934 = vmatmul.mubr.bf16.gmra.mrb[0].mxu0 %v784
      %v935 = vpop.f32.mrb[0].mxu0
      %v936 = vadd.f32 %v726, %v935
      %v937 = vpop.f32.mrb[0].mxu0
      %v938 = vpop.f32.mrb[0].mxu0
      %v939 = vadd.f32 %v726, %v938
      %v940 = vpop.f32.mrb[0].mxu0
      %941 = vmatprep.mubr.bf16.mxu0 0
      %942 = vmatmul.mubr.bf16.gmra.mrb[0].mxu0 %v787
      %v943 = vpop.f32.mrb[0].mxu0
      %v944 = vadd.f32 %v726, %v943
      %v945 = vpop.f32.mrb[0].mxu0
      %v946 = vpop.f32.mrb[0].mxu0
      %v947 = vadd.f32 %v726, %v946
      %v948 = vpop.f32.mrb[0].mxu0
      %949 = vdwg.mxu0
      %vm950 = vcmp.ge.f32.partialorder %v824, 0.0
      %vm951 = vcmp.ge.f32.partialorder %v827, 0.0
      %vm952 = vcmp.ge.f32.partialorder %v832, 0.0
      %vm953 = vcmp.ge.f32.partialorder %v835, 0.0
      %vm954 = vcmp.ge.f32.partialorder %v840, 0.0
      %vm955 = vcmp.ge.f32.partialorder %v843, 0.0
      %vm956 = vcmp.ge.f32.partialorder %v848, 0.0
      %vm957 = vcmp.ge.f32.partialorder %v851, 0.0
      %vm958 = vcmp.ge.f32.partialorder %v856, 0.0
      %vm959 = vcmp.ge.f32.partialorder %v859, 0.0
      %vm960 = vcmp.ge.f32.partialorder %v864, 0.0
      %vm961 = vcmp.ge.f32.partialorder %v867, 0.0
      %vm962 = vcmp.ge.f32.partialorder %v872, 0.0
      %vm963 = vcmp.ge.f32.partialorder %v875, 0.0
      %vm964 = vcmp.ge.f32.partialorder %v880, 0.0
      %vm965 = vcmp.ge.f32.partialorder %v883, 0.0
      %vm966 = vcmp.ge.f32.partialorder %v888, 0.0
      %vm967 = vcmp.ge.f32.partialorder %v891, 0.0
      %vm968 = vcmp.ge.f32.partialorder %v896, 0.0
      %vm969 = vcmp.ge.f32.partialorder %v899, 0.0
      %vm970 = vcmp.ge.f32.partialorder %v904, 0.0
      %vm971 = vcmp.ge.f32.partialorder %v907, 0.0
      %vm972 = vcmp.ge.f32.partialorder %v912, 0.0
      %vm973 = vcmp.ge.f32.partialorder %v915, 0.0
      %vm974 = vcmp.ge.f32.partialorder %v920, 0.0
      %vm975 = vcmp.ge.f32.partialorder %v923, 0.0
      %vm976 = vcmp.ge.f32.partialorder %v928, 0.0
      %vm977 = vcmp.ge.f32.partialorder %v931, 0.0
      %vm978 = vcmp.ge.f32.partialorder %v936, 0.0
      %vm979 = vcmp.ge.f32.partialorder %v939, 0.0
      %vm980 = vcmp.ge.f32.partialorder %v944, 0.0
      %vm981 = vcmp.ge.f32.partialorder %v947, 0.0
      %v982 = vmul.f32 %v824, 0.1
      %v983 = vmul.f32 %v827, 0.1
      %v984 = vmul.f32 %v832, 0.1
      %v985 = vmul.f32 %v835, 0.1
      %v986 = vmul.f32 %v840, 0.1
      %v987 = vmul.f32 %v843, 0.1
      %v988 = vmul.f32 %v848, 0.1
      %v989 = vmul.f32 %v851, 0.1
      %v990 = vmul.f32 %v856, 0.1
      %v991 = vmul.f32 %v859, 0.1
      %v992 = vmul.f32 %v864, 0.1
      %v993 = vmul.f32 %v867, 0.1
      %v994 = vmul.f32 %v872, 0.1
      %v995 = vmul.f32 %v875, 0.1
      %v996 = vmul.f32 %v880, 0.1
      %v997 = vmul.f32 %v883, 0.1
      %v998 = vmul.f32 %v888, 0.1
      %v999 = vmul.f32 %v891, 0.1
      %v1000 = vmul.f32 %v896, 0.1
      %v1001 = vmul.f32 %v899, 0.1
      %v1002 = vmul.f32 %v904, 0.1
      %v1003 = vmul.f32 %v907, 0.1
      %v1004 = vmul.f32 %v912, 0.1
      %v1005 = vmul.f32 %v915, 0.1
      %v1006 = vmul.f32 %v920, 0.1
      %v1007 = vmul.f32 %v923, 0.1
      %v1008 = vmul.f32 %v928, 0.1
      %v1009 = vmul.f32 %v931, 0.1
      %v1010 = vmul.f32 %v936, 0.1
      %v1011 = vmul.f32 %v939, 0.1
      %v1012 = vmul.f32 %v944, 0.1
      %v1013 = vmul.f32 %v947, 0.1
      %v1014 = vsel %vm950, %v824, %v982
      %v1015 = vsel %vm951, %v827, %v983
      %v1016 = vsel %vm952, %v832, %v984
      %v1017 = vsel %vm953, %v835, %v985
      %v1018 = vsel %vm954, %v840, %v986
      %v1019 = vsel %vm955, %v843, %v987
      %v1020 = vsel %vm956, %v848, %v988
      %v1021 = vsel %vm957, %v851, %v989
      %v1022 = vsel %vm958, %v856, %v990
      %v1023 = vsel %vm959, %v859, %v991
      %v1024 = vsel %vm960, %v864, %v992
      %v1025 = vsel %vm961, %v867, %v993
      %v1026 = vsel %vm962, %v872, %v994
      %v1027 = vsel %vm963, %v875, %v995
      %v1028 = vsel %vm964, %v880, %v996
      %v1029 = vsel %vm965, %v883, %v997
      %v1030 = vsel %vm966, %v888, %v998
      %v1031 = vsel %vm967, %v891, %v999
      %v1032 = vsel %vm968, %v896, %v1000
      %v1033 = vsel %vm969, %v899, %v1001
      %v1034 = vsel %vm970, %v904, %v1002
      %v1035 = vsel %vm971, %v907, %v1003
      %v1036 = vsel %vm972, %v912, %v1004
      %v1037 = vsel %vm973, %v915, %v1005
      %v1038 = vsel %vm974, %v920, %v1006
      %v1039 = vsel %vm975, %v923, %v1007
      %v1040 = vsel %vm976, %v928, %v1008
      %v1041 = vsel %vm977, %v931, %v1009
      %v1042 = vsel %vm978, %v936, %v1010
      %v1043 = vsel %vm979, %v939, %v1011
      %v1044 = vsel %vm980, %v944, %v1012
      %v1045 = vsel %vm981, %v947, %v1013
      %1046 = vst.msk [vmem:[#allocation2] sm:$0xff] %vm740, 0.0
      %1047 = vst.msk [vmem:[#allocation2 + $0x8] sm:$0xff] %vm740, 0.0
      %vm1048 = vcmask 254976
      %1049 = vst.msk [vmem:[#allocation2 + $0x10] sm:$0x3] %vm1048, 0.0
      %1050 = vst.msk [vmem:[#allocation2 + $0x18] sm:$0xff] %vm740, 0.0
      %1051 = vst.msk [vmem:[#allocation2 + $0x20] sm:$0xff] %vm740, 0.0
      %1052 = vst.msk [vmem:[#allocation2 + $0x28] sm:$0x3] %vm1048, 0.0
      %1053 = vst.msk [vmem:[#allocation2 + $0x30] sm:$0xff] %vm740, 0.0
      %1054 = vst.msk [vmem:[#allocation2 + $0x38] sm:$0xff] %vm740, 0.0
      %1055 = vst.msk [vmem:[#allocation2 + $0x40] sm:$0x3] %vm1048, 0.0
      %1056 = vst.msk [vmem:[#allocation2 + $0x48] sm:$0xff] %vm740, 0.0
      %1057 = vst.msk [vmem:[#allocation2 + $0x50] sm:$0xff] %vm740, 0.0
      %1058 = vst.msk [vmem:[#allocation2 + $0x58] sm:$0x3] %vm1048, 0.0
      %1059 = vst.msk [vmem:[#allocation2 + $0x60] sm:$0xff] %vm740, 0.0
      %1060 = vst.msk [vmem:[#allocation2 + $0x68] sm:$0xff] %vm740, 0.0
      %1061 = vst.msk [vmem:[#allocation2 + $0x70] sm:$0x3] %vm1048, 0.0
      %1062 = vst.msk [vmem:[#allocation2 + $0x78] sm:$0xff] %vm740, 0.0
      %1063 = vst.msk [vmem:[#allocation2 + $0x80] sm:$0xff] %vm740, 0.0
      %1064 = vst.msk [vmem:[#allocation2 + $0x88] sm:$0x3] %vm1048, 0.0
      %1065 = vst.msk [vmem:[#allocation2 + $0x90] sm:$0xff] %vm740, 0.0
      %1066 = vst.msk [vmem:[#allocation2 + $0x98] sm:$0xff] %vm740, 0.0
      %1067 = vst.msk [vmem:[#allocation2 + $0xa0] sm:$0x3] %vm1048, 0.0
      %1068 = vst.msk [vmem:[#allocation2 + $0xa8] sm:$0xff] %vm740, 0.0
      %1069 = vst.msk [vmem:[#allocation2 + $0xb0] sm:$0xff] %vm740, 0.0
      %1070 = vst.msk [vmem:[#allocation2 + $0xb8] sm:$0x3] %vm1048, 0.0
      %1071 = vst.msk [vmem:[#allocation2 + $0xc0] sm:$0xff] %vm740, 0.0
      %1072 = vst.msk [vmem:[#allocation2 + $0xc8] sm:$0xff] %vm740, 0.0
      %1073 = vst.msk [vmem:[#allocation2 + $0xd0] sm:$0x3] %vm1048, 0.0
      %1074 = vst.msk [vmem:[#allocation2 + $0xd8] sm:$0xff] %vm740, 0.0
      %1075 = vst.msk [vmem:[#allocation2 + $0xe0] sm:$0xff] %vm740, 0.0
      %1076 = vst.msk [vmem:[#allocation2 + $0xe8] sm:$0x3] %vm1048, 0.0
      %1077 = vst.msk [vmem:[#allocation2 + $0xf0] sm:$0xff] %vm740, 0.0
      %1078 = vst.msk [vmem:[#allocation2 + $0xf8] sm:$0xff] %vm740, 0.0
      %1079 = vst.msk [vmem:[#allocation2 + $0x100] sm:$0x3] %vm1048, 0.0
      %1080 = vst.msk [vmem:[#allocation2 + $0x108] sm:$0xff] %vm740, 0.0
      %1081 = vst.msk [vmem:[#allocation2 + $0x110] sm:$0xff] %vm740, 0.0
      %1082 = vst.msk [vmem:[#allocation2 + $0x118] sm:$0x3] %vm1048, 0.0
      %1083 = vst.msk [vmem:[#allocation2 + $0x120] sm:$0xff] %vm740, 0.0
      %1084 = vst.msk [vmem:[#allocation2 + $0x128] sm:$0xff] %vm740, 0.0
      %1085 = vst.msk [vmem:[#allocation2 + $0x130] sm:$0x3] %vm1048, 0.0
      %1086 = vst.msk [vmem:[#allocation2 + $0x138] sm:$0xff] %vm740, 0.0
      %1087 = vst.msk [vmem:[#allocation2 + $0x140] sm:$0xff] %vm740, 0.0
      %1088 = vst.msk [vmem:[#allocation2 + $0x148] sm:$0x3] %vm1048, 0.0
      %1089 = vst.msk [vmem:[#allocation2 + $0x150] sm:$0xff] %vm740, 0.0
      %1090 = vst.msk [vmem:[#allocation2 + $0x158] sm:$0xff] %vm740, 0.0
      %1091 = vst.msk [vmem:[#allocation2 + $0x160] sm:$0x3] %vm1048, 0.0
      %1092 = vst.msk [vmem:[#allocation2 + $0x168] sm:$0xff] %vm740, 0.0
      %1093 = vst.msk [vmem:[#allocation2 + $0x170] sm:$0xff] %vm740, 0.0
      %1094 = vst.msk [vmem:[#allocation2 + $0x178] sm:$0x3] %vm1048, 0.0
      %1095 = vst.msk [vmem:[#allocation2 + $0x180] sm:$0xff] %vm740, 0.0
      %1096 = vst.msk [vmem:[#allocation2 + $0x188] sm:$0xff] %vm740, 0.0
      %1097 = vst.msk [vmem:[#allocation2 + $0x190] sm:$0x3] %vm1048, 0.0
      %1098 = vst.msk [vmem:[#allocation2 + $0x198] sm:$0xff] %vm740, 0.0
      %1099 = vst.msk [vmem:[#allocation2 + $0x1a0] sm:$0xff] %vm740, 0.0
      %1100 = vst.msk [vmem:[#allocation2 + $0x1a8] sm:$0x3] %vm1048, 0.0
      %s1101 = scalar_lea.vmem [#allocation2], 24
      %1102 = vst.msk [vmem:[%s1101 + $0x1] sm:$0xff] %vm740, %v1014
      %1103 = vst.msk [vmem:[%s1101 + $0x9] sm:$0xff] %vm740, %v1015
      %1104 = vst.msk [vmem:[%s1101 + $0x19] sm:$0xff] %vm740, %v1016
      %1105 = vst.msk [vmem:[%s1101 + $0x21] sm:$0xff] %vm740, %v1017
      %1106 = vst.msk [vmem:[%s1101 + $0x31] sm:$0xff] %vm740, %v1018
      %1107 = vst.msk [vmem:[%s1101 + $0x39] sm:$0xff] %vm740, %v1019
      %1108 = vst.msk [vmem:[%s1101 + $0x49] sm:$0xff] %vm740, %v1020
      %1109 = vst.msk [vmem:[%s1101 + $0x51] sm:$0xff] %vm740, %v1021
      %1110 = vst.msk [vmem:[%s1101 + $0x61] sm:$0xff] %vm740, %v1022
      %1111 = vst.msk [vmem:[%s1101 + $0x69] sm:$0xff] %vm740, %v1023
      %1112 = vst.msk [vmem:[%s1101 + $0x79] sm:$0xff] %vm740, %v1024
      %1113 = vst.msk [vmem:[%s1101 + $0x81] sm:$0xff] %vm740, %v1025
      %1114 = vst.msk [vmem:[%s1101 + $0x91] sm:$0xff] %vm740, %v1026
      %1115 = vst.msk [vmem:[%s1101 + $0x99] sm:$0xff] %vm740, %v1027
      %1116 = vst.msk [vmem:[%s1101 + $0xa9] sm:$0xff] %vm740, %v1028
      %1117 = vst.msk [vmem:[%s1101 + $0xb1] sm:$0xff] %vm740, %v1029
      %1118 = vst.msk [vmem:[%s1101 + $0xc1] sm:$0xff] %vm740, %v1030
      %1119 = vst.msk [vmem:[%s1101 + $0xc9] sm:$0xff] %vm740, %v1031
      %1120 = vst.msk [vmem:[%s1101 + $0xd9] sm:$0xff] %vm740, %v1032
      %1121 = vst.msk [vmem:[%s1101 + $0xe1] sm:$0xff] %vm740, %v1033
      %1122 = vst.msk [vmem:[%s1101 + $0xf1] sm:$0xff] %vm740, %v1034
      %1123 = vst.msk [vmem:[%s1101 + $0xf9] sm:$0xff] %vm740, %v1035
      %1124 = vst.msk [vmem:[%s1101 + $0x109] sm:$0xff] %vm740, %v1036
      %1125 = vst.msk [vmem:[%s1101 + $0x111] sm:$0xff] %vm740, %v1037
      %1126 = vst.msk [vmem:[%s1101 + $0x121] sm:$0xff] %vm740, %v1038
      %1127 = vst.msk [vmem:[%s1101 + $0x129] sm:$0xff] %vm740, %v1039
      %1128 = vst.msk [vmem:[%s1101 + $0x139] sm:$0xff] %vm740, %v1040
      %1129 = vst.msk [vmem:[%s1101 + $0x141] sm:$0xff] %vm740, %v1041
      %1130 = vst.msk [vmem:[%s1101 + $0x151] sm:$0xff] %vm740, %v1042
      %1131 = vst.msk [vmem:[%s1101 + $0x159] sm:$0xff] %vm740, %v1043
      %1132 = vst.msk [vmem:[%s1101 + $0x169] sm:$0xff] %vm740, %v1044
      %1133 = vst.msk [vmem:[%s1101 + $0x171] sm:$0xff] %vm740, %v1045
      %v1134 = vld [vmem:[#allocation2] sm:$0xff]
      %v1135 = vld [vmem:[#allocation2 + $0x8] sm:$0xff]
      %v1136 = vld [vmem:[#allocation2 + $0x18] sm:$0xff]
      %v1137 = vld [vmem:[#allocation2 + $0x20] sm:$0xff]
      %v1138 = vld [vmem:[#allocation2 + $0x30] sm:$0xff]
      %v1139 = vld [vmem:[#allocation2 + $0x38] sm:$0xff]
      %v1140 = vld [vmem:[#allocation2 + $0x48] sm:$0xff]
      %v1141 = vld [vmem:[#allocation2 + $0x50] sm:$0xff]
      %v1142 = vld [vmem:[#allocation2 + $0x60] sm:$0xff]
      %v1143 = vld [vmem:[#allocation2 + $0x68] sm:$0xff]
      %v1144 = vld [vmem:[#allocation2 + $0x78] sm:$0xff]
      %v1145 = vld [vmem:[#allocation2 + $0x80] sm:$0xff]
      %v1146 = vld [vmem:[#allocation2 + $0x90] sm:$0xff]
      %v1147 = vld [vmem:[#allocation2 + $0x98] sm:$0xff]
      %v1148 = vld [vmem:[#allocation2 + $0xa8] sm:$0xff]
      %v1149 = vld [vmem:[#allocation2 + $0xb0] sm:$0xff]
      %v1150 = vld [vmem:[#allocation2 + $0xc0] sm:$0xff]
      %v1151 = vld [vmem:[#allocation2 + $0xc8] sm:$0xff]
      %v1152 = vld [vmem:[#allocation2 + $0xd8] sm:$0xff]
      %v1153 = vld [vmem:[#allocation2 + $0xe0] sm:$0xff]
      %v1154 = vld [vmem:[#allocation2 + $0xf0] sm:$0xff]
      %v1155 = vld [vmem:[#allocation2 + $0xf8] sm:$0xff]
      %v1156 = vld [vmem:[#allocation2 + $0x108] sm:$0xff]
      %v1157 = vld [vmem:[#allocation2 + $0x110] sm:$0xff]
      %v1158 = vld [vmem:[#allocation2 + $0x120] sm:$0xff]
      %v1159 = vld [vmem:[#allocation2 + $0x128] sm:$0xff]
      %v1160 = vld [vmem:[#allocation2 + $0x138] sm:$0xff]
      %v1161 = vld [vmem:[#allocation2 + $0x140] sm:$0xff]
      %v1162 = vld [vmem:[#allocation2 + $0x150] sm:$0xff]
      %v1163 = vld [vmem:[#allocation2 + $0x158] sm:$0xff]
      %v1164 = vld [vmem:[#allocation2 + $0x168] sm:$0xff]
      %v1165 = vld [vmem:[#allocation2 + $0x170] sm:$0xff]
      %v1166 = vpack.c.bf16 %v1135, %v1134
      %v1167 = vpack.c.bf16 %v1137, %v1136
      %v1168 = vpack.c.bf16 %v1139, %v1138
      %v1169 = vpack.c.bf16 %v1141, %v1140
      %v1170 = vpack.c.bf16 %v1143, %v1142
      %v1171 = vpack.c.bf16 %v1145, %v1144
      %v1172 = vpack.c.bf16 %v1147, %v1146
      %v1173 = vpack.c.bf16 %v1149, %v1148
      %v1174 = vpack.c.bf16 %v1151, %v1150
      %v1175 = vpack.c.bf16 %v1153, %v1152
      %v1176 = vpack.c.bf16 %v1155, %v1154
      %v1177 = vpack.c.bf16 %v1157, %v1156
      %v1178 = vpack.c.bf16 %v1159, %v1158
      %v1179 = vpack.c.bf16 %v1161, %v1160
      %v1180 = vpack.c.bf16 %v1163, %v1162
      %v1181 = vpack.c.bf16 %v1165, %v1164
      %v1182 = vld [vmem:[%s5] sm:$0xf]
      %v1183 = vld [vmem:[%s5 + $0x4] sm:$0xf]
      %v1184 = vld [vmem:[%s5 + $0x8] sm:$0xf]
      %v1185 = vld [vmem:[%s5 + $0xc] sm:$0xf]
      %v1186 = vld [vmem:[#allocation2 + $0x1] sm:$0xff]
      %v1187 = vld [vmem:[#allocation2 + $0x9] sm:$0xff]
      %v1188 = vld [vmem:[#allocation2 + $0x19] sm:$0xff]
      %v1189 = vld [vmem:[#allocation2 + $0x21] sm:$0xff]
      %v1190 = vld [vmem:[#allocation2 + $0x31] sm:$0xff]
      %v1191 = vld [vmem:[#allocation2 + $0x39] sm:$0xff]
      %v1192 = vld [vmem:[#allocation2 + $0x49] sm:$0xff]
      %v1193 = vld [vmem:[#allocation2 + $0x51] sm:$0xff]
      %v1194 = vld [vmem:[#allocation2 + $0x61] sm:$0xff]
      %v1195 = vld [vmem:[#allocation2 + $0x69] sm:$0xff]
      %v1196 = vld [vmem:[#allocation2 + $0x79] sm:$0xff]
      %v1197 = vld [vmem:[#allocation2 + $0x81] sm:$0xff]
      %v1198 = vld [vmem:[#allocation2 + $0x91] sm:$0xff]
      %v1199 = vld [vmem:[#allocation2 + $0x99] sm:$0xff]
      %v1200 = vld [vmem:[#allocation2 + $0xa9] sm:$0xff]
      %v1201 = vld [vmem:[#allocation2 + $0xb1] sm:$0xff]
      %v1202 = vld [vmem:[#allocation2 + $0xc1] sm:$0xff]
      %v1203 = vld [vmem:[#allocation2 + $0xc9] sm:$0xff]
      %v1204 = vld [vmem:[#allocation2 + $0xd9] sm:$0xff]
      %v1205 = vld [vmem:[#allocation2 + $0xe1] sm:$0xff]
      %v1206 = vld [vmem:[#allocation2 + $0xf1] sm:$0xff]
      %v1207 = vld [vmem:[#allocation2 + $0xf9] sm:$0xff]
      %v1208 = vld [vmem:[#allocation2 + $0x109] sm:$0xff]
      %v1209 = vld [vmem:[#allocation2 + $0x111] sm:$0xff]
      %v1210 = vld [vmem:[#allocation2 + $0x121] sm:$0xff]
      %v1211 = vld [vmem:[#allocation2 + $0x129] sm:$0xff]
      %v1212 = vld [vmem:[#allocation2 + $0x139] sm:$0xff]
      %v1213 = vld [vmem:[#allocation2 + $0x141] sm:$0xff]
      %v1214 = vld [vmem:[#allocation2 + $0x151] sm:$0xff]
      %v1215 = vld [vmem:[#allocation2 + $0x159] sm:$0xff]
      %v1216 = vld [vmem:[#allocation2 + $0x169] sm:$0xff]
      %v1217 = vld [vmem:[#allocation2 + $0x171] sm:$0xff]
      %v1218 = vpack.c.bf16 %v1187, %v1186
      %v1219 = vpack.c.bf16 %v1189, %v1188
      %v1220 = vpack.c.bf16 %v1191, %v1190
      %v1221 = vpack.c.bf16 %v1193, %v1192
      %v1222 = vpack.c.bf16 %v1195, %v1194
      %v1223 = vpack.c.bf16 %v1197, %v1196
      %v1224 = vpack.c.bf16 %v1199, %v1198
      %v1225 = vpack.c.bf16 %v1201, %v1200
      %v1226 = vpack.c.bf16 %v1203, %v1202
      %v1227 = vpack.c.bf16 %v1205, %v1204
      %v1228 = vpack.c.bf16 %v1207, %v1206
      %v1229 = vpack.c.bf16 %v1209, %v1208
      %v1230 = vpack.c.bf16 %v1211, %v1210
      %v1231 = vpack.c.bf16 %v1213, %v1212
      %v1232 = vpack.c.bf16 %v1215, %v1214
      %v1233 = vpack.c.bf16 %v1217, %v1216
      %s1234 = scalar_lea.vmem %s5, 16
      %v1235 = vld [vmem:[%s1234] sm:$0xf]
      %v1236 = vld [vmem:[%s1234 + $0x4] sm:$0xf]
      %v1237 = vld [vmem:[%s1234 + $0x8] sm:$0xf]
      %v1238 = vld [vmem:[%s1234 + $0xc] sm:$0xf]
      %v1243 = vunpack.c.l.b16 %v1235
      %v1244 = vunpack.c.l.b16 %v1236
      %v1245 = vunpack.c.l.b16 %v1237
      %v1246 = vunpack.c.l.b16 %v1238
      %v1247 = vpack.c.b16 %v1244, %v1243
      %v1248 = vpack.c.b16 %v1246, %v1245
      %v1252 = vsel %vm740, %v1218, 0
      %v1255 = vsel %vm740, %v1219, 0
      %v1258 = vsel %vm740, %v1220, 0
      %v1261 = vsel %vm740, %v1221, 0
      %v1264 = vsel %vm740, %v1222, 0
      %v1267 = vsel %vm740, %v1223, 0
      %v1270 = vsel %vm740, %v1224, 0
      %v1273 = vsel %vm740, %v1225, 0
      %v1276 = vsel %vm740, %v1226, 0
      %v1279 = vsel %vm740, %v1227, 0
      %v1282 = vsel %vm740, %v1228, 0
      %v1285 = vsel %vm740, %v1229, 0
      %v1288 = vsel %vm740, %v1230, 0
      %v1291 = vsel %vm740, %v1231, 0
      %v1294 = vsel %vm740, %v1232, 0
      %v1297 = vsel %vm740, %v1233, 0
      %1299 = vmatprep.subr.bf16.mxu0 0
      %1300 = vmatpush1.bf16.msra.mxu0 %v1247
      %1301 = vmatprep.subr.bf16.mxu0 0
      %1302 = vmatpush1.bf16.msra.mxu0 %v1248
      %1303 = vmatprep.subr.bf16.mxu0 0
      %1304 = vmatpush1.bf16.msra.mxu0 0
      %1305 = vmatprep.subr.bf16.mxu0 0
      %1306 = vmatpush1.bf16.msra.mxu0 0
      %1307 = vmatprep.subr.bf16.mxu0 0
      %1308 = vmatpush1.bf16.msra.mxu0 0
      %1309 = vmatprep.subr.bf16.mxu0 0
      %1310 = vmatpush1.bf16.msra.mxu0 0
      %1311 = vmatprep.subr.bf16.mxu0 0
      %1312 = vmatpush1.bf16.msra.mxu0 0
      %1313 = vmatprep.subr.bf16.mxu0 0
      %1314 = vmatpush1.bf16.msra.mxu0 0
      %1315 = vmatprep.subr.bf16.mxu0 0
      %1316 = vmatpush1.bf16.msra.mxu0 0
      %1317 = vmatprep.subr.bf16.mxu0 0
      %1318 = vmatpush1.bf16.msra.mxu0 0
      %1319 = vmatprep.subr.bf16.mxu0 0
      %1320 = vmatpush1.bf16.msra.mxu0 0
      %1321 = vmatprep.subr.bf16.mxu0 0
      %1322 = vmatpush1.bf16.msra.mxu0 0
      %1323 = vmatprep.subr.bf16.mxu0 0
      %1324 = vmatpush1.bf16.msra.mxu0 0
      %1325 = vmatprep.subr.bf16.mxu0 0
      %1326 = vmatpush1.bf16.msra.mxu0 0
      %1327 = vmatprep.subr.bf16.mxu0 0
      %1328 = vmatpush1.bf16.msra.mxu0 0
      %1329 = vmatprep.subr.bf16.mxu0 0
      %1330 = vmatpush1.bf16.msra.mxu0 0
      %1331 = vmatprep.mubr.bf16.mxu0 0
      %1332 = vmatmul.mubr.bf16.gmra.mrb[0].mxu0 %v1252
      %v1333 = vpop.f32.mrb[0].mxu0
      %v1334 = vadd.f32 0.0, %v1333
      %v1335 = vpop.f32.mrb[0].mxu0
      %v1336 = vpop.f32.mrb[0].mxu0
      %v1337 = vadd.f32 0.0, %v1336
      %v1338 = vpop.f32.mrb[0].mxu0
      %1339 = vmatprep.mubr.bf16.mxu0 0
      %1340 = vmatmul.mubr.bf16.gmra.mrb[0].mxu0 %v1255
      %v1341 = vpop.f32.mrb[0].mxu0
      %v1342 = vadd.f32 0.0, %v1341
      %v1343 = vpop.f32.mrb[0].mxu0
      %v1344 = vpop.f32.mrb[0].mxu0
      %v1345 = vadd.f32 0.0, %v1344
      %v1346 = vpop.f32.mrb[0].mxu0
      %1347 = vmatprep.mubr.bf16.mxu0 0
      %1348 = vmatmul.mubr.bf16.gmra.mrb[0].mxu0 %v1258
      %v1349 = vpop.f32.mrb[0].mxu0
      %v1350 = vadd.f32 0.0, %v1349
      %v1351 = vpop.f32.mrb[0].mxu0
      %v1352 = vpop.f32.mrb[0].mxu0
      %v1353 = vadd.f32 0.0, %v1352
      %v1354 = vpop.f32.mrb[0].mxu0
      %1355 = vmatprep.mubr.bf16.mxu0 0
      %1356 = vmatmul.mubr.bf16.gmra.mrb[0].mxu0 %v1261
      %v1357 = vpop.f32.mrb[0].mxu0
      %v1358 = vadd.f32 0.0, %v1357
      %v1359 = vpop.f32.mrb[0].mxu0
      %v1360 = vpop.f32.mrb[0].mxu0
      %v1361 = vadd.f32 0.0, %v1360
      %v1362 = vpop.f32.mrb[0].mxu0
      %1363 = vmatprep.mubr.bf16.mxu0 0
      %1364 = vmatmul.mubr.bf16.gmra.mrb[0].mxu0 %v1264
      %v1365 = vpop.f32.mrb[0].mxu0
      %v1366 = vadd.f32 0.0, %v1365
      %v1367 = vpop.f32.mrb[0].mxu0
      %v1368 = vpop.f32.mrb[0].mxu0
      %v1369 = vadd.f32 0.0, %v1368
      %v1370 = vpop.f32.mrb[0].mxu0
      %1371 = vmatprep.mubr.bf16.mxu0 0
      %1372 = vmatmul.mubr.bf16.gmra.mrb[0].mxu0 %v1267
      %v1373 = vpop.f32.mrb[0].mxu0
      %v1374 = vadd.f32 0.0, %v1373
      %v1375 = vpop.f32.mrb[0].mxu0
      %v1376 = vpop.f32.mrb[0].mxu0
      %v1377 = vadd.f32 0.0, %v1376
      %v1378 = vpop.f32.mrb[0].mxu0
      %1379 = vmatprep.mubr.bf16.mxu0 0
      %1380 = vmatmul.mubr.bf16.gmra.mrb[0].mxu0 %v1270
      %v1381 = vpop.f32.mrb[0].mxu0
      %v1382 = vadd.f32 0.0, %v1381
      %v1383 = vpop.f32.mrb[0].mxu0
      %v1384 = vpop.f32.mrb[0].mxu0
      %v1385 = vadd.f32 0.0, %v1384
      %v1386 = vpop.f32.mrb[0].mxu0
      %1387 = vmatprep.mubr.bf16.mxu0 0
      %1388 = vmatmul.mubr.bf16.gmra.mrb[0].mxu0 %v1273
      %v1389 = vpop.f32.mrb[0].mxu0
      %v1390 = vadd.f32 0.0, %v1389
      %v1391 = vpop.f32.mrb[0].mxu0
      %v1392 = vpop.f32.mrb[0].mxu0
      %v1393 = vadd.f32 0.0, %v1392
      %v1394 = vpop.f32.mrb[0].mxu0
      %1395 = vmatprep.mubr.bf16.mxu0 0
      %1396 = vmatmul.mubr.bf16.gmra.mrb[0].mxu0 %v1276
      %v1397 = vpop.f32.mrb[0].mxu0
      %v1398 = vadd.f32 0.0, %v1397
      %v1399 = vpop.f32.mrb[0].mxu0
      %v1400 = vpop.f32.mrb[0].mxu0
      %v1401 = vadd.f32 0.0, %v1400
      %v1402 = vpop.f32.mrb[0].mxu0
      %1403 = vmatprep.mubr.bf16.mxu0 0
      %1404 = vmatmul.mubr.bf16.gmra.mrb[0].mxu0 %v1279
      %v1405 = vpop.f32.mrb[0].mxu0
      %v1406 = vadd.f32 0.0, %v1405
      %v1407 = vpop.f32.mrb[0].mxu0
      %v1408 = vpop.f32.mrb[0].mxu0
      %v1409 = vadd.f32 0.0, %v1408
      %v1410 = vpop.f32.mrb[0].mxu0
      %1411 = vmatprep.mubr.bf16.mxu0 0
      %1412 = vmatmul.mubr.bf16.gmra.mrb[0].mxu0 %v1282
      %v1413 = vpop.f32.mrb[0].mxu0
      %v1414 = vadd.f32 0.0, %v1413
      %v1415 = vpop.f32.mrb[0].mxu0
      %v1416 = vpop.f32.mrb[0].mxu0
      %v1417 = vadd.f32 0.0, %v1416
      %v1418 = vpop.f32.mrb[0].mxu0
      %1419 = vmatprep.mubr.bf16.mxu0 0
      %1420 = vmatmul.mubr.bf16.gmra.mrb[0].mxu0 %v1285
      %v1421 = vpop.f32.mrb[0].mxu0
      %v1422 = vadd.f32 0.0, %v1421
      %v1423 = vpop.f32.mrb[0].mxu0
      %v1424 = vpop.f32.mrb[0].mxu0
      %v1425 = vadd.f32 0.0, %v1424
      %v1426 = vpop.f32.mrb[0].mxu0
      %1427 = vmatprep.mubr.bf16.mxu0 0
      %1428 = vmatmul.mubr.bf16.gmra.mrb[0].mxu0 %v1288
      %v1429 = vpop.f32.mrb[0].mxu0
      %v1430 = vadd.f32 0.0, %v1429
      %v1431 = vpop.f32.mrb[0].mxu0
      %v1432 = vpop.f32.mrb[0].mxu0
      %v1433 = vadd.f32 0.0, %v1432
      %v1434 = vpop.f32.mrb[0].mxu0
      %1435 = vmatprep.mubr.bf16.mxu0 0
      %1436 = vmatmul.mubr.bf16.gmra.mrb[0].mxu0 %v1291
      %v1437 = vpop.f32.mrb[0].mxu0
      %v1438 = vadd.f32 0.0, %v1437
      %v1439 = vpop.f32.mrb[0].mxu0
      %v1440 = vpop.f32.mrb[0].mxu0
      %v1441 = vadd.f32 0.0, %v1440
      %v1442 = vpop.f32.mrb[0].mxu0
      %1443 = vmatprep.mubr.bf16.mxu0 0
      %1444 = vmatmul.mubr.bf16.gmra.mrb[0].mxu0 %v1294
      %v1445 = vpop.f32.mrb[0].mxu0
      %v1446 = vadd.f32 0.0, %v1445
      %v1447 = vpop.f32.mrb[0].mxu0
      %v1448 = vpop.f32.mrb[0].mxu0
      %v1449 = vadd.f32 0.0, %v1448
      %v1450 = vpop.f32.mrb[0].mxu0
      %1451 = vmatprep.mubr.bf16.mxu0 0
      %1452 = vmatmul.mubr.bf16.gmra.mrb[0].mxu0 %v1297
      %v1453 = vpop.f32.mrb[0].mxu0
      %v1454 = vadd.f32 0.0, %v1453
      %v1455 = vpop.f32.mrb[0].mxu0
      %v1456 = vpop.f32.mrb[0].mxu0
      %v1457 = vadd.f32 0.0, %v1456
      %v1458 = vpop.f32.mrb[0].mxu0
      %1459 = vdwg.mxu0
      %v1464 = vunpack.c.l.b16 %v1182
      %v1465 = vunpack.c.l.b16 %v1183
      %v1466 = vunpack.c.l.b16 %v1184
      %v1467 = vunpack.c.l.b16 %v1185
      %v1468 = vpack.c.b16 %v1465, %v1464
      %v1469 = vpack.c.b16 %v1467, %v1466
      %v1473 = vsel %vm740, %v1166, 0
      %v1476 = vsel %vm740, %v1167, 0
      %v1479 = vsel %vm740, %v1168, 0
      %v1482 = vsel %vm740, %v1169, 0
      %v1485 = vsel %vm740, %v1170, 0
      %v1488 = vsel %vm740, %v1171, 0
      %v1491 = vsel %vm740, %v1172, 0
      %v1494 = vsel %vm740, %v1173, 0
      %v1497 = vsel %vm740, %v1174, 0
      %v1500 = vsel %vm740, %v1175, 0
      %v1503 = vsel %vm740, %v1176, 0
      %v1506 = vsel %vm740, %v1177, 0
      %v1509 = vsel %vm740, %v1178, 0
      %v1512 = vsel %vm740, %v1179, 0
      %v1515 = vsel %vm740, %v1180, 0
      %v1518 = vsel %vm740, %v1181, 0
      %1520 = vmatprep.subr.bf16.mxu0 0
      %1521 = vmatpush1.bf16.msra.mxu0 %v1468
      %1522 = vmatprep.subr.bf16.mxu0 0
      %1523 = vmatpush1.bf16.msra.mxu0 %v1469
      %1524 = vmatprep.subr.bf16.mxu0 0
      %1525 = vmatpush1.bf16.msra.mxu0 0
      %1526 = vmatprep.subr.bf16.mxu0 0
      %1527 = vmatpush1.bf16.msra.mxu0 0
      %1528 = vmatprep.subr.bf16.mxu0 0
      %1529 = vmatpush1.bf16.msra.mxu0 0
      %1530 = vmatprep.subr.bf16.mxu0 0
      %1531 = vmatpush1.bf16.msra.mxu0 0
      %1532 = vmatprep.subr.bf16.mxu0 0
      %1533 = vmatpush1.bf16.msra.mxu0 0
      %1534 = vmatprep.subr.bf16.mxu0 0
      %1535 = vmatpush1.bf16.msra.mxu0 0
      %1536 = vmatprep.subr.bf16.mxu0 0
      %1537 = vmatpush1.bf16.msra.mxu0 0
      %1538 = vmatprep.subr.bf16.mxu0 0
      %1539 = vmatpush1.bf16.msra.mxu0 0
      %1540 = vmatprep.subr.bf16.mxu0 0
      %1541 = vmatpush1.bf16.msra.mxu0 0
      %1542 = vmatprep.subr.bf16.mxu0 0
      %1543 = vmatpush1.bf16.msra.mxu0 0
      %1544 = vmatprep.subr.bf16.mxu0 0
      %1545 = vmatpush1.bf16.msra.mxu0 0
      %1546 = vmatprep.subr.bf16.mxu0 0
      %1547 = vmatpush1.bf16.msra.mxu0 0
      %1548 = vmatprep.subr.bf16.mxu0 0
      %1549 = vmatpush1.bf16.msra.mxu0 0
      %1550 = vmatprep.subr.bf16.mxu0 0
      %1551 = vmatpush1.bf16.msra.mxu0 0
      %1552 = vmatprep.mubr.bf16.mxu0 0
      %1553 = vmatmul.mubr.bf16.gmra.mrb[0].mxu0 %v1473
      %v1554 = vpop.f32.mrb[0].mxu0
      %v1555 = vadd.f32 %v1334, %v1554
      %v1556 = vpop.f32.mrb[0].mxu0
      %v1557 = vpop.f32.mrb[0].mxu0
      %v1558 = vadd.f32 %v1337, %v1557
      %v1559 = vpop.f32.mrb[0].mxu0
      %1560 = vmatprep.mubr.bf16.mxu0 0
      %1561 = vmatmul.mubr.bf16.gmra.mrb[0].mxu0 %v1476
      %v1562 = vpop.f32.mrb[0].mxu0
      %v1563 = vadd.f32 %v1342, %v1562
      %v1564 = vpop.f32.mrb[0].mxu0
      %v1565 = vpop.f32.mrb[0].mxu0
      %v1566 = vadd.f32 %v1345, %v1565
      %v1567 = vpop.f32.mrb[0].mxu0
      %1568 = vmatprep.mubr.bf16.mxu0 0
      %1569 = vmatmul.mubr.bf16.gmra.mrb[0].mxu0 %v1479
      %v1570 = vpop.f32.mrb[0].mxu0
      %v1571 = vadd.f32 %v1350, %v1570
      %v1572 = vpop.f32.mrb[0].mxu0
      %v1573 = vpop.f32.mrb[0].mxu0
      %v1574 = vadd.f32 %v1353, %v1573
      %v1575 = vpop.f32.mrb[0].mxu0
      %1576 = vmatprep.mubr.bf16.mxu0 0
      %1577 = vmatmul.mubr.bf16.gmra.mrb[0].mxu0 %v1482
      %v1578 = vpop.f32.mrb[0].mxu0
      %v1579 = vadd.f32 %v1358, %v1578
      %v1580 = vpop.f32.mrb[0].mxu0
      %v1581 = vpop.f32.mrb[0].mxu0
      %v1582 = vadd.f32 %v1361, %v1581
      %v1583 = vpop.f32.mrb[0].mxu0
      %1584 = vmatprep.mubr.bf16.mxu0 0
      %1585 = vmatmul.mubr.bf16.gmra.mrb[0].mxu0 %v1485
      %v1586 = vpop.f32.mrb[0].mxu0
      %v1587 = vadd.f32 %v1366, %v1586
      %v1588 = vpop.f32.mrb[0].mxu0
      %v1589 = vpop.f32.mrb[0].mxu0
      %v1590 = vadd.f32 %v1369, %v1589
      %v1591 = vpop.f32.mrb[0].mxu0
      %1592 = vmatprep.mubr.bf16.mxu0 0
      %1593 = vmatmul.mubr.bf16.gmra.mrb[0].mxu0 %v1488
      %v1594 = vpop.f32.mrb[0].mxu0
      %v1595 = vadd.f32 %v1374, %v1594
      %v1596 = vpop.f32.mrb[0].mxu0
      %v1597 = vpop.f32.mrb[0].mxu0
      %v1598 = vadd.f32 %v1377, %v1597
      %v1599 = vpop.f32.mrb[0].mxu0
      %1600 = vmatprep.mubr.bf16.mxu0 0
      %1601 = vmatmul.mubr.bf16.gmra.mrb[0].mxu0 %v1491
      %v1602 = vpop.f32.mrb[0].mxu0
      %v1603 = vadd.f32 %v1382, %v1602
      %v1604 = vpop.f32.mrb[0].mxu0
      %v1605 = vpop.f32.mrb[0].mxu0
      %v1606 = vadd.f32 %v1385, %v1605
      %v1607 = vpop.f32.mrb[0].mxu0
      %1608 = vmatprep.mubr.bf16.mxu0 0
      %1609 = vmatmul.mubr.bf16.gmra.mrb[0].mxu0 %v1494
      %v1610 = vpop.f32.mrb[0].mxu0
      %v1611 = vadd.f32 %v1390, %v1610
      %v1612 = vpop.f32.mrb[0].mxu0
      %v1613 = vpop.f32.mrb[0].mxu0
      %v1614 = vadd.f32 %v1393, %v1613
      %v1615 = vpop.f32.mrb[0].mxu0
      %1616 = vmatprep.mubr.bf16.mxu0 0
      %1617 = vmatmul.mubr.bf16.gmra.mrb[0].mxu0 %v1497
      %v1618 = vpop.f32.mrb[0].mxu0
      %v1619 = vadd.f32 %v1398, %v1618
      %v1620 = vpop.f32.mrb[0].mxu0
      %v1621 = vpop.f32.mrb[0].mxu0
      %v1622 = vadd.f32 %v1401, %v1621
      %v1623 = vpop.f32.mrb[0].mxu0
      %1624 = vmatprep.mubr.bf16.mxu0 0
      %1625 = vmatmul.mubr.bf16.gmra.mrb[0].mxu0 %v1500
      %v1626 = vpop.f32.mrb[0].mxu0
      %v1627 = vadd.f32 %v1406, %v1626
      %v1628 = vpop.f32.mrb[0].mxu0
      %v1629 = vpop.f32.mrb[0].mxu0
      %v1630 = vadd.f32 %v1409, %v1629
      %v1631 = vpop.f32.mrb[0].mxu0
      %1632 = vmatprep.mubr.bf16.mxu0 0
      %1633 = vmatmul.mubr.bf16.gmra.mrb[0].mxu0 %v1503
      %v1634 = vpop.f32.mrb[0].mxu0
      %v1635 = vadd.f32 %v1414, %v1634
      %v1636 = vpop.f32.mrb[0].mxu0
      %v1637 = vpop.f32.mrb[0].mxu0
      %v1638 = vadd.f32 %v1417, %v1637
      %v1639 = vpop.f32.mrb[0].mxu0
      %1640 = vmatprep.mubr.bf16.mxu0 0
      %1641 = vmatmul.mubr.bf16.gmra.mrb[0].mxu0 %v1506
      %v1642 = vpop.f32.mrb[0].mxu0
      %v1643 = vadd.f32 %v1422, %v1642
      %v1644 = vpop.f32.mrb[0].mxu0
      %v1645 = vpop.f32.mrb[0].mxu0
      %v1646 = vadd.f32 %v1425, %v1645
      %v1647 = vpop.f32.mrb[0].mxu0
      %1648 = vmatprep.mubr.bf16.mxu0 0
      %1649 = vmatmul.mubr.bf16.gmra.mrb[0].mxu0 %v1509
      %v1650 = vpop.f32.mrb[0].mxu0
      %v1651 = vadd.f32 %v1430, %v1650
      %v1652 = vpop.f32.mrb[0].mxu0
      %v1653 = vpop.f32.mrb[0].mxu0
      %v1654 = vadd.f32 %v1433, %v1653
      %v1655 = vpop.f32.mrb[0].mxu0
      %1656 = vmatprep.mubr.bf16.mxu0 0
      %1657 = vmatmul.mubr.bf16.gmra.mrb[0].mxu0 %v1512
      %v1658 = vpop.f32.mrb[0].mxu0
      %v1659 = vadd.f32 %v1438, %v1658
      %v1660 = vpop.f32.mrb[0].mxu0
      %v1661 = vpop.f32.mrb[0].mxu0
      %v1662 = vadd.f32 %v1441, %v1661
      %v1663 = vpop.f32.mrb[0].mxu0
      %1664 = vmatprep.mubr.bf16.mxu0 0
      %1665 = vmatmul.mubr.bf16.gmra.mrb[0].mxu0 %v1515
      %v1666 = vpop.f32.mrb[0].mxu0
      %v1667 = vadd.f32 %v1446, %v1666
      %v1668 = vpop.f32.mrb[0].mxu0
      %v1669 = vpop.f32.mrb[0].mxu0
      %v1670 = vadd.f32 %v1449, %v1669
      %v1671 = vpop.f32.mrb[0].mxu0
      %1672 = vmatprep.mubr.bf16.mxu0 0
      %1673 = vmatmul.mubr.bf16.gmra.mrb[0].mxu0 %v1518
      %v1674 = vpop.f32.mrb[0].mxu0
      %v1675 = vadd.f32 %v1454, %v1674
      %v1676 = vpop.f32.mrb[0].mxu0
      %v1677 = vpop.f32.mrb[0].mxu0
      %v1678 = vadd.f32 %v1457, %v1677
      %v1679 = vpop.f32.mrb[0].mxu0
      %1680 = vdwg.mxu0
      %v1681 = vld [vmem:[#allocation2 + $0x2] sm:$0xff]
      %v1682 = vld [vmem:[#allocation2 + $0xa] sm:$0xff]
      %v1683 = vld [vmem:[#allocation2 + $0x1a] sm:$0xff]
      %v1684 = vld [vmem:[#allocation2 + $0x22] sm:$0xff]
      %v1685 = vld [vmem:[#allocation2 + $0x32] sm:$0xff]
      %v1686 = vld [vmem:[#allocation2 + $0x3a] sm:$0xff]
      %v1687 = vld [vmem:[#allocation2 + $0x4a] sm:$0xff]
      %v1688 = vld [vmem:[#allocation2 + $0x52] sm:$0xff]
      %v1689 = vld [vmem:[#allocation2 + $0x62] sm:$0xff]
      %v1690 = vld [vmem:[#allocation2 + $0x6a] sm:$0xff]
      %v1691 = vld [vmem:[#allocation2 + $0x7a] sm:$0xff]
      %v1692 = vld [vmem:[#allocation2 + $0x82] sm:$0xff]
      %v1693 = vld [vmem:[#allocation2 + $0x92] sm:$0xff]
      %v1694 = vld [vmem:[#allocation2 + $0x9a] sm:$0xff]
      %v1695 = vld [vmem:[#allocation2 + $0xaa] sm:$0xff]
      %v1696 = vld [vmem:[#allocation2 + $0xb2] sm:$0xff]
      %v1697 = vld [vmem:[#allocation2 + $0xc2] sm:$0xff]
      %v1698 = vld [vmem:[#allocation2 + $0xca] sm:$0xff]
      %v1699 = vld [vmem:[#allocation2 + $0xda] sm:$0xff]
      %v1700 = vld [vmem:[#allocation2 + $0xe2] sm:$0xff]
      %v1701 = vld [vmem:[#allocation2 + $0xf2] sm:$0xff]
      %v1702 = vld [vmem:[#allocation2 + $0xfa] sm:$0xff]
      %v1703 = vld [vmem:[#allocation2 + $0x10a] sm:$0xff]
      %v1704 = vld [vmem:[#allocation2 + $0x112] sm:$0xff]
      %v1705 = vld [vmem:[#allocation2 + $0x122] sm:$0xff]
      %v1706 = vld [vmem:[#allocation2 + $0x12a] sm:$0xff]
      %v1707 = vld [vmem:[#allocation2 + $0x13a] sm:$0xff]
      %v1708 = vld [vmem:[#allocation2 + $0x142] sm:$0xff]
      %v1709 = vld [vmem:[#allocation2 + $0x152] sm:$0xff]
      %v1710 = vld [vmem:[#allocation2 + $0x15a] sm:$0xff]
      %v1711 = vld [vmem:[#allocation2 + $0x16a] sm:$0xff]
      %v1712 = vld [vmem:[#allocation2 + $0x172] sm:$0xff]
      %v1713 = vpack.c.bf16 %v1682, %v1681
      %v1714 = vpack.c.bf16 %v1684, %v1683
      %v1715 = vpack.c.bf16 %v1686, %v1685
      %v1716 = vpack.c.bf16 %v1688, %v1687
      %v1717 = vpack.c.bf16 %v1690, %v1689
      %v1718 = vpack.c.bf16 %v1692, %v1691
      %v1719 = vpack.c.bf16 %v1694, %v1693
      %v1720 = vpack.c.bf16 %v1696, %v1695
      %v1721 = vpack.c.bf16 %v1698, %v1697
      %v1722 = vpack.c.bf16 %v1700, %v1699
      %v1723 = vpack.c.bf16 %v1702, %v1701
      %v1724 = vpack.c.bf16 %v1704, %v1703
      %v1725 = vpack.c.bf16 %v1706, %v1705
      %v1726 = vpack.c.bf16 %v1708, %v1707
      %v1727 = vpack.c.bf16 %v1710, %v1709
      %v1728 = vpack.c.bf16 %v1712, %v1711
      %s1729 = scalar_lea.vmem %s5, 32
      %v1730 = vld [vmem:[%s1729] sm:$0xf]
      %v1731 = vld [vmem:[%s1729 + $0x4] sm:$0xf]
      %v1732 = vld [vmem:[%s1729 + $0x8] sm:$0xf]
      %v1733 = vld [vmem:[%s1729 + $0xc] sm:$0xf]
      %v1738 = vunpack.c.l.b16 %v1730
      %v1739 = vunpack.c.l.b16 %v1731
      %v1740 = vunpack.c.l.b16 %v1732
      %v1741 = vunpack.c.l.b16 %v1733
      %v1742 = vpack.c.b16 %v1739, %v1738
      %v1743 = vpack.c.b16 %v1741, %v1740
      %v1747 = vsel %vm740, %v1713, 0
      %v1750 = vsel %vm740, %v1714, 0
      %v1753 = vsel %vm740, %v1715, 0
      %v1756 = vsel %vm740, %v1716, 0
      %v1759 = vsel %vm740, %v1717, 0
      %v1762 = vsel %vm740, %v1718, 0
      %v1765 = vsel %vm740, %v1719, 0
      %v1768 = vsel %vm740, %v1720, 0
      %v1771 = vsel %vm740, %v1721, 0
      %v1774 = vsel %vm740, %v1722, 0
      %v1777 = vsel %vm740, %v1723, 0
      %v1780 = vsel %vm740, %v1724, 0
      %v1783 = vsel %vm740, %v1725, 0
      %v1786 = vsel %vm740, %v1726, 0
      %v1789 = vsel %vm740, %v1727, 0
      %v1792 = vsel %vm740, %v1728, 0
      %1794 = vmatprep.subr.bf16.mxu0 0
      %1795 = vmatpush1.bf16.msra.mxu0 %v1742
      %1796 = vmatprep.subr.bf16.mxu0 0
      %1797 = vmatpush1.bf16.msra.mxu0 %v1743
      %1798 = vmatprep.subr.bf16.mxu0 0
      %1799 = vmatpush1.bf16.msra.mxu0 0
      %1800 = vmatprep.subr.bf16.mxu0 0
      %1801 = vmatpush1.bf16.msra.mxu0 0
      %1802 = vmatprep.subr.bf16.mxu0 0
      %1803 = vmatpush1.bf16.msra.mxu0 0
      %1804 = vmatprep.subr.bf16.mxu0 0
      %1805 = vmatpush1.bf16.msra.mxu0 0
      %1806 = vmatprep.subr.bf16.mxu0 0
      %1807 = vmatpush1.bf16.msra.mxu0 0
      %1808 = vmatprep.subr.bf16.mxu0 0
      %1809 = vmatpush1.bf16.msra.mxu0 0
      %1810 = vmatprep.subr.bf16.mxu0 0
      %1811 = vmatpush1.bf16.msra.mxu0 0
      %1812 = vmatprep.subr.bf16.mxu0 0
      %1813 = vmatpush1.bf16.msra.mxu0 0
      %1814 = vmatprep.subr.bf16.mxu0 0
      %1815 = vmatpush1.bf16.msra.mxu0 0
      %1816 = vmatprep.subr.bf16.mxu0 0
      %1817 = vmatpush1.bf16.msra.mxu0 0
      %1818 = vmatprep.subr.bf16.mxu0 0
      %1819 = vmatpush1.bf16.msra.mxu0 0
      %1820 = vmatprep.subr.bf16.mxu0 0
      %1821 = vmatpush1.bf16.msra.mxu0 0
      %1822 = vmatprep.subr.bf16.mxu0 0
      %1823 = vmatpush1.bf16.msra.mxu0 0
      %1824 = vmatprep.subr.bf16.mxu0 0
      %1825 = vmatpush1.bf16.msra.mxu0 0
      %1826 = vmatprep.mubr.bf16.mxu0 0
      %1827 = vmatmul.mubr.bf16.gmra.mrb[0].mxu0 %v1747
      %v1828 = vpop.f32.mrb[0].mxu0
      %v1829 = vadd.f32 0.0, %v1828
      %v1830 = vpop.f32.mrb[0].mxu0
      %v1831 = vpop.f32.mrb[0].mxu0
      %v1832 = vadd.f32 0.0, %v1831
      %v1833 = vpop.f32.mrb[0].mxu0
      %1834 = vmatprep.mubr.bf16.mxu0 0
      %1835 = vmatmul.mubr.bf16.gmra.mrb[0].mxu0 %v1750
      %v1836 = vpop.f32.mrb[0].mxu0
      %v1837 = vadd.f32 0.0, %v1836
      %v1838 = vpop.f32.mrb[0].mxu0
      %v1839 = vpop.f32.mrb[0].mxu0
      %v1840 = vadd.f32 0.0, %v1839
      %v1841 = vpop.f32.mrb[0].mxu0
      %1842 = vmatprep.mubr.bf16.mxu0 0
      %1843 = vmatmul.mubr.bf16.gmra.mrb[0].mxu0 %v1753
      %v1844 = vpop.f32.mrb[0].mxu0
      %v1845 = vadd.f32 0.0, %v1844
      %v1846 = vpop.f32.mrb[0].mxu0
      %v1847 = vpop.f32.mrb[0].mxu0
      %v1848 = vadd.f32 0.0, %v1847
      %v1849 = vpop.f32.mrb[0].mxu0
      %1850 = vmatprep.mubr.bf16.mxu0 0
      %1851 = vmatmul.mubr.bf16.gmra.mrb[0].mxu0 %v1756
      %v1852 = vpop.f32.mrb[0].mxu0
      %v1853 = vadd.f32 0.0, %v1852
      %v1854 = vpop.f32.mrb[0].mxu0
      %v1855 = vpop.f32.mrb[0].mxu0
      %v1856 = vadd.f32 0.0, %v1855
      %v1857 = vpop.f32.mrb[0].mxu0
      %1858 = vmatprep.mubr.bf16.mxu0 0
      %1859 = vmatmul.mubr.bf16.gmra.mrb[0].mxu0 %v1759
      %v1860 = vpop.f32.mrb[0].mxu0
      %v1861 = vadd.f32 0.0, %v1860
      %v1862 = vpop.f32.mrb[0].mxu0
      %v1863 = vpop.f32.mrb[0].mxu0
      %v1864 = vadd.f32 0.0, %v1863
      %v1865 = vpop.f32.mrb[0].mxu0
      %1866 = vmatprep.mubr.bf16.mxu0 0
      %1867 = vmatmul.mubr.bf16.gmra.mrb[0].mxu0 %v1762
      %v1868 = vpop.f32.mrb[0].mxu0
      %v1869 = vadd.f32 0.0, %v1868
      %v1870 = vpop.f32.mrb[0].mxu0
      %v1871 = vpop.f32.mrb[0].mxu0
      %v1872 = vadd.f32 0.0, %v1871
      %v1873 = vpop.f32.mrb[0].mxu0
      %1874 = vmatprep.mubr.bf16.mxu0 0
      %1875 = vmatmul.mubr.bf16.gmra.mrb[0].mxu0 %v1765
      %v1876 = vpop.f32.mrb[0].mxu0
      %v1877 = vadd.f32 0.0, %v1876
      %v1878 = vpop.f32.mrb[0].mxu0
      %v1879 = vpop.f32.mrb[0].mxu0
      %v1880 = vadd.f32 0.0, %v1879
      %v1881 = vpop.f32.mrb[0].mxu0
      %1882 = vmatprep.mubr.bf16.mxu0 0
      %1883 = vmatmul.mubr.bf16.gmra.mrb[0].mxu0 %v1768
      %v1884 = vpop.f32.mrb[0].mxu0
      %v1885 = vadd.f32 0.0, %v1884
      %v1886 = vpop.f32.mrb[0].mxu0
      %v1887 = vpop.f32.mrb[0].mxu0
      %v1888 = vadd.f32 0.0, %v1887
      %v1889 = vpop.f32.mrb[0].mxu0
      %1890 = vmatprep.mubr.bf16.mxu0 0
      %1891 = vmatmul.mubr.bf16.gmra.mrb[0].mxu0 %v1771
      %v1892 = vpop.f32.mrb[0].mxu0
      %v1893 = vadd.f32 0.0, %v1892
      %v1894 = vpop.f32.mrb[0].mxu0
      %v1895 = vpop.f32.mrb[0].mxu0
      %v1896 = vadd.f32 0.0, %v1895
      %v1897 = vpop.f32.mrb[0].mxu0
      %1898 = vmatprep.mubr.bf16.mxu0 0
      %1899 = vmatmul.mubr.bf16.gmra.mrb[0].mxu0 %v1774
      %v1900 = vpop.f32.mrb[0].mxu0
      %v1901 = vadd.f32 0.0, %v1900
      %v1902 = vpop.f32.mrb[0].mxu0
      %v1903 = vpop.f32.mrb[0].mxu0
      %v1904 = vadd.f32 0.0, %v1903
      %v1905 = vpop.f32.mrb[0].mxu0
      %1906 = vmatprep.mubr.bf16.mxu0 0
      %1907 = vmatmul.mubr.bf16.gmra.mrb[0].mxu0 %v1777
      %v1908 = vpop.f32.mrb[0].mxu0
      %v1909 = vadd.f32 0.0, %v1908
      %v1910 = vpop.f32.mrb[0].mxu0
      %v1911 = vpop.f32.mrb[0].mxu0
      %v1912 = vadd.f32 0.0, %v1911
      %v1913 = vpop.f32.mrb[0].mxu0
      %1914 = vmatprep.mubr.bf16.mxu0 0
      %1915 = vmatmul.mubr.bf16.gmra.mrb[0].mxu0 %v1780
      %v1916 = vpop.f32.mrb[0].mxu0
      %v1917 = vadd.f32 0.0, %v1916
      %v1918 = vpop.f32.mrb[0].mxu0
      %v1919 = vpop.f32.mrb[0].mxu0
      %v1920 = vadd.f32 0.0, %v1919
      %v1921 = vpop.f32.mrb[0].mxu0
      %1922 = vmatprep.mubr.bf16.mxu0 0
      %1923 = vmatmul.mubr.bf16.gmra.mrb[0].mxu0 %v1783
      %v1924 = vpop.f32.mrb[0].mxu0
      %v1925 = vadd.f32 0.0, %v1924
      %v1926 = vpop.f32.mrb[0].mxu0
      %v1927 = vpop.f32.mrb[0].mxu0
      %v1928 = vadd.f32 0.0, %v1927
      %v1929 = vpop.f32.mrb[0].mxu0
      %1930 = vmatprep.mubr.bf16.mxu0 0
      %1931 = vmatmul.mubr.bf16.gmra.mrb[0].mxu0 %v1786
      %v1932 = vpop.f32.mrb[0].mxu0
      %v1933 = vadd.f32 0.0, %v1932
      %v1934 = vpop.f32.mrb[0].mxu0
      %v1935 = vpop.f32.mrb[0].mxu0
      %v1936 = vadd.f32 0.0, %v1935
      %v1937 = vpop.f32.mrb[0].mxu0
      %1938 = vmatprep.mubr.bf16.mxu0 0
      %1939 = vmatmul.mubr.bf16.gmra.mrb[0].mxu0 %v1789
      %v1940 = vpop.f32.mrb[0].mxu0
      %v1941 = vadd.f32 0.0, %v1940
      %v1942 = vpop.f32.mrb[0].mxu0
      %v1943 = vpop.f32.mrb[0].mxu0
      %v1944 = vadd.f32 0.0, %v1943
      %v1945 = vpop.f32.mrb[0].mxu0
      %1946 = vmatprep.mubr.bf16.mxu0 0
      %1947 = vmatmul.mubr.bf16.gmra.mrb[0].mxu0 %v1792
      %v1948 = vpop.f32.mrb[0].mxu0
      %v1949 = vadd.f32 0.0, %v1948
      %v1950 = vpop.f32.mrb[0].mxu0
      %v1951 = vpop.f32.mrb[0].mxu0
      %v1952 = vadd.f32 0.0, %v1951
      %v1953 = vpop.f32.mrb[0].mxu0
      %1954 = vdwg.mxu0
      %v1955 = vadd.f32 %v1555, %v1829
      %v1956 = vadd.f32 %v1558, %v1832
      %v1957 = vadd.f32 %v1563, %v1837
      %v1958 = vadd.f32 %v1566, %v1840
      %v1959 = vadd.f32 %v1571, %v1845
      %v1960 = vadd.f32 %v1574, %v1848
      %v1961 = vadd.f32 %v1579, %v1853
      %v1962 = vadd.f32 %v1582, %v1856
      %v1963 = vadd.f32 %v1587, %v1861
      %v1964 = vadd.f32 %v1590, %v1864
      %v1965 = vadd.f32 %v1595, %v1869
      %v1966 = vadd.f32 %v1598, %v1872
      %v1967 = vadd.f32 %v1603, %v1877
      %v1968 = vadd.f32 %v1606, %v1880
      %v1969 = vadd.f32 %v1611, %v1885
      %v1970 = vadd.f32 %v1614, %v1888
      %v1971 = vadd.f32 %v1619, %v1893
      %v1972 = vadd.f32 %v1622, %v1896
      %v1973 = vadd.f32 %v1627, %v1901
      %v1974 = vadd.f32 %v1630, %v1904
      %v1975 = vadd.f32 %v1635, %v1909
      %v1976 = vadd.f32 %v1638, %v1912
      %v1977 = vadd.f32 %v1643, %v1917
      %v1978 = vadd.f32 %v1646, %v1920
      %v1979 = vadd.f32 %v1651, %v1925
      %v1980 = vadd.f32 %v1654, %v1928
      %v1981 = vadd.f32 %v1659, %v1933
      %v1982 = vadd.f32 %v1662, %v1936
      %v1983 = vadd.f32 %v1667, %v1941
      %v1984 = vadd.f32 %v1670, %v1944
      %v1985 = vadd.f32 %v1675, %v1949
      %v1986 = vadd.f32 %v1678, %v1952
      %v1987 = vld [vmem:[%s1101] sm:$0xff]
      %v1988 = vld [vmem:[%s1101 + $0x8] sm:$0xff]
      %v1989 = vld [vmem:[%s1101 + $0x18] sm:$0xff]
      %v1990 = vld [vmem:[%s1101 + $0x20] sm:$0xff]
      %v1991 = vld [vmem:[%s1101 + $0x30] sm:$0xff]
      %v1992 = vld [vmem:[%s1101 + $0x38] sm:$0xff]
      %v1993 = vld [vmem:[%s1101 + $0x48] sm:$0xff]
      %v1994 = vld [vmem:[%s1101 + $0x50] sm:$0xff]
      %v1995 = vld [vmem:[%s1101 + $0x60] sm:$0xff]
      %v1996 = vld [vmem:[%s1101 + $0x68] sm:$0xff]
      %v1997 = vld [vmem:[%s1101 + $0x78] sm:$0xff]
      %v1998 = vld [vmem:[%s1101 + $0x80] sm:$0xff]
      %v1999 = vld [vmem:[%s1101 + $0x90] sm:$0xff]
      %v2000 = vld [vmem:[%s1101 + $0x98] sm:$0xff]
      %v2001 = vld [vmem:[%s1101 + $0xa8] sm:$0xff]
      %v2002 = vld [vmem:[%s1101 + $0xb0] sm:$0xff]
      %v2003 = vld [vmem:[%s1101 + $0xc0] sm:$0xff]
      %v2004 = vld [vmem:[%s1101 + $0xc8] sm:$0xff]
      %v2005 = vld [vmem:[%s1101 + $0xd8] sm:$0xff]
      %v2006 = vld [vmem:[%s1101 + $0xe0] sm:$0xff]
      %v2007 = vld [vmem:[%s1101 + $0xf0] sm:$0xff]
      %v2008 = vld [vmem:[%s1101 + $0xf8] sm:$0xff]
      %v2009 = vld [vmem:[%s1101 + $0x108] sm:$0xff]
      %v2010 = vld [vmem:[%s1101 + $0x110] sm:$0xff]
      %v2011 = vld [vmem:[%s1101 + $0x120] sm:$0xff]
      %v2012 = vld [vmem:[%s1101 + $0x128] sm:$0xff]
      %v2013 = vld [vmem:[%s1101 + $0x138] sm:$0xff]
      %v2014 = vld [vmem:[%s1101 + $0x140] sm:$0xff]
      %v2015 = vld [vmem:[%s1101 + $0x150] sm:$0xff]
      %v2016 = vld [vmem:[%s1101 + $0x158] sm:$0xff]
      %v2017 = vld [vmem:[%s1101 + $0x168] sm:$0xff]
      %v2018 = vld [vmem:[%s1101 + $0x170] sm:$0xff]
      %v2019 = vpack.c.bf16 %v1988, %v1987
      %v2020 = vpack.c.bf16 %v1990, %v1989
      %v2021 = vpack.c.bf16 %v1992, %v1991
      %v2022 = vpack.c.bf16 %v1994, %v1993
      %v2023 = vpack.c.bf16 %v1996, %v1995
      %v2024 = vpack.c.bf16 %v1998, %v1997
      %v2025 = vpack.c.bf16 %v2000, %v1999
      %v2026 = vpack.c.bf16 %v2002, %v2001
      %v2027 = vpack.c.bf16 %v2004, %v2003
      %v2028 = vpack.c.bf16 %v2006, %v2005
      %v2029 = vpack.c.bf16 %v2008, %v2007
      %v2030 = vpack.c.bf16 %v2010, %v2009
      %v2031 = vpack.c.bf16 %v2012, %v2011
      %v2032 = vpack.c.bf16 %v2014, %v2013
      %v2033 = vpack.c.bf16 %v2016, %v2015
      %v2034 = vpack.c.bf16 %v2018, %v2017
      %s2035 = scalar_lea.vmem %s5, 48
      %v2036 = vld [vmem:[%s2035] sm:$0xf]
      %v2037 = vld [vmem:[%s2035 + $0x4] sm:$0xf]
      %v2038 = vld [vmem:[%s2035 + $0x8] sm:$0xf]
      %v2039 = vld [vmem:[%s2035 + $0xc] sm:$0xf]
      %v2044 = vunpack.c.l.b16 %v2036
      %v2045 = vunpack.c.l.b16 %v2037
      %v2046 = vunpack.c.l.b16 %v2038
      %v2047 = vunpack.c.l.b16 %v2039
      %v2048 = vpack.c.b16 %v2045, %v2044
      %v2049 = vpack.c.b16 %v2047, %v2046
      %v2053 = vsel %vm740, %v2019, 0
      %v2056 = vsel %vm740, %v2020, 0
      %v2059 = vsel %vm740, %v2021, 0
      %v2062 = vsel %vm740, %v2022, 0
      %v2065 = vsel %vm740, %v2023, 0
      %v2068 = vsel %vm740, %v2024, 0
      %v2071 = vsel %vm740, %v2025, 0
      %v2074 = vsel %vm740, %v2026, 0
      %v2077 = vsel %vm740, %v2027, 0
      %v2080 = vsel %vm740, %v2028, 0
      %v2083 = vsel %vm740, %v2029, 0
      %v2086 = vsel %vm740, %v2030, 0
      %v2089 = vsel %vm740, %v2031, 0
      %v2092 = vsel %vm740, %v2032, 0
      %v2095 = vsel %vm740, %v2033, 0
      %v2098 = vsel %vm740, %v2034, 0
      %2100 = vmatprep.subr.bf16.mxu0 0
      %2101 = vmatpush1.bf16.msra.mxu0 %v2048
      %2102 = vmatprep.subr.bf16.mxu0 0
      %2103 = vmatpush1.bf16.msra.mxu0 %v2049
      %2104 = vmatprep.subr.bf16.mxu0 0
      %2105 = vmatpush1.bf16.msra.mxu0 0
      %2106 = vmatprep.subr.bf16.mxu0 0
      %2107 = vmatpush1.bf16.msra.mxu0 0
      %2108 = vmatprep.subr.bf16.mxu0 0
      %2109 = vmatpush1.bf16.msra.mxu0 0
      %2110 = vmatprep.subr.bf16.mxu0 0
      %2111 = vmatpush1.bf16.msra.mxu0 0
      %2112 = vmatprep.subr.bf16.mxu0 0
      %2113 = vmatpush1.bf16.msra.mxu0 0
      %2114 = vmatprep.subr.bf16.mxu0 0
      %2115 = vmatpush1.bf16.msra.mxu0 0
      %2116 = vmatprep.subr.bf16.mxu0 0
      %2117 = vmatpush1.bf16.msra.mxu0 0
      %2118 = vmatprep.subr.bf16.mxu0 0
      %2119 = vmatpush1.bf16.msra.mxu0 0
      %2120 = vmatprep.subr.bf16.mxu0 0
      %2121 = vmatpush1.bf16.msra.mxu0 0
      %2122 = vmatprep.subr.bf16.mxu0 0
      %2123 = vmatpush1.bf16.msra.mxu0 0
      %2124 = vmatprep.subr.bf16.mxu0 0
      %2125 = vmatpush1.bf16.msra.mxu0 0
      %2126 = vmatprep.subr.bf16.mxu0 0
      %2127 = vmatpush1.bf16.msra.mxu0 0
      %2128 = vmatprep.subr.bf16.mxu0 0
      %2129 = vmatpush1.bf16.msra.mxu0 0
      %2130 = vmatprep.subr.bf16.mxu0 0
      %2131 = vmatpush1.bf16.msra.mxu0 0
      %2132 = vmatprep.mubr.bf16.mxu0 0
      %2133 = vmatmul.mubr.bf16.gmra.mrb[0].mxu0 %v2053
      %v2134 = vpop.f32.mrb[0].mxu0
      %v2135 = vadd.f32 0.0, %v2134
      %v2136 = vpop.f32.mrb[0].mxu0
      %v2137 = vpop.f32.mrb[0].mxu0
      %v2138 = vadd.f32 0.0, %v2137
      %v2139 = vpop.f32.mrb[0].mxu0
      %2140 = vmatprep.mubr.bf16.mxu0 0
      %2141 = vmatmul.mubr.bf16.gmra.mrb[0].mxu0 %v2056
      %v2142 = vpop.f32.mrb[0].mxu0
      %v2143 = vadd.f32 0.0, %v2142
      %v2144 = vpop.f32.mrb[0].mxu0
      %v2145 = vpop.f32.mrb[0].mxu0
      %v2146 = vadd.f32 0.0, %v2145
      %v2147 = vpop.f32.mrb[0].mxu0
      %2148 = vmatprep.mubr.bf16.mxu0 0
      %2149 = vmatmul.mubr.bf16.gmra.mrb[0].mxu0 %v2059
      %v2150 = vpop.f32.mrb[0].mxu0
      %v2151 = vadd.f32 0.0, %v2150
      %v2152 = vpop.f32.mrb[0].mxu0
      %v2153 = vpop.f32.mrb[0].mxu0
      %v2154 = vadd.f32 0.0, %v2153
      %v2155 = vpop.f32.mrb[0].mxu0
      %2156 = vmatprep.mubr.bf16.mxu0 0
      %2157 = vmatmul.mubr.bf16.gmra.mrb[0].mxu0 %v2062
      %v2158 = vpop.f32.mrb[0].mxu0
      %v2159 = vadd.f32 0.0, %v2158
      %v2160 = vpop.f32.mrb[0].mxu0
      %v2161 = vpop.f32.mrb[0].mxu0
      %v2162 = vadd.f32 0.0, %v2161
      %v2163 = vpop.f32.mrb[0].mxu0
      %2164 = vmatprep.mubr.bf16.mxu0 0
      %2165 = vmatmul.mubr.bf16.gmra.mrb[0].mxu0 %v2065
      %v2166 = vpop.f32.mrb[0].mxu0
      %v2167 = vadd.f32 0.0, %v2166
      %v2168 = vpop.f32.mrb[0].mxu0
      %v2169 = vpop.f32.mrb[0].mxu0
      %v2170 = vadd.f32 0.0, %v2169
      %v2171 = vpop.f32.mrb[0].mxu0
      %2172 = vmatprep.mubr.bf16.mxu0 0
      %2173 = vmatmul.mubr.bf16.gmra.mrb[0].mxu0 %v2068
      %v2174 = vpop.f32.mrb[0].mxu0
      %v2175 = vadd.f32 0.0, %v2174
      %v2176 = vpop.f32.mrb[0].mxu0
      %v2177 = vpop.f32.mrb[0].mxu0
      %v2178 = vadd.f32 0.0, %v2177
      %v2179 = vpop.f32.mrb[0].mxu0
      %2180 = vmatprep.mubr.bf16.mxu0 0
      %2181 = vmatmul.mubr.bf16.gmra.mrb[0].mxu0 %v2071
      %v2182 = vpop.f32.mrb[0].mxu0
      %v2183 = vadd.f32 0.0, %v2182
      %v2184 = vpop.f32.mrb[0].mxu0
      %v2185 = vpop.f32.mrb[0].mxu0
      %v2186 = vadd.f32 0.0, %v2185
      %v2187 = vpop.f32.mrb[0].mxu0
      %2188 = vmatprep.mubr.bf16.mxu0 0
      %2189 = vmatmul.mubr.bf16.gmra.mrb[0].mxu0 %v2074
      %v2190 = vpop.f32.mrb[0].mxu0
      %v2191 = vadd.f32 0.0, %v2190
      %v2192 = vpop.f32.mrb[0].mxu0
      %v2193 = vpop.f32.mrb[0].mxu0
      %v2194 = vadd.f32 0.0, %v2193
      %v2195 = vpop.f32.mrb[0].mxu0
      %2196 = vmatprep.mubr.bf16.mxu0 0
      %2197 = vmatmul.mubr.bf16.gmra.mrb[0].mxu0 %v2077
      %v2198 = vpop.f32.mrb[0].mxu0
      %v2199 = vadd.f32 0.0, %v2198
      %v2200 = vpop.f32.mrb[0].mxu0
      %v2201 = vpop.f32.mrb[0].mxu0
      %v2202 = vadd.f32 0.0, %v2201
      %v2203 = vpop.f32.mrb[0].mxu0
      %2204 = vmatprep.mubr.bf16.mxu0 0
      %2205 = vmatmul.mubr.bf16.gmra.mrb[0].mxu0 %v2080
      %v2206 = vpop.f32.mrb[0].mxu0
      %v2207 = vadd.f32 0.0, %v2206
      %v2208 = vpop.f32.mrb[0].mxu0
      %v2209 = vpop.f32.mrb[0].mxu0
      %v2210 = vadd.f32 0.0, %v2209
      %v2211 = vpop.f32.mrb[0].mxu0
      %2212 = vmatprep.mubr.bf16.mxu0 0
      %2213 = vmatmul.mubr.bf16.gmra.mrb[0].mxu0 %v2083
      %v2214 = vpop.f32.mrb[0].mxu0
      %v2215 = vadd.f32 0.0, %v2214
      %v2216 = vpop.f32.mrb[0].mxu0
      %v2217 = vpop.f32.mrb[0].mxu0
      %v2218 = vadd.f32 0.0, %v2217
      %v2219 = vpop.f32.mrb[0].mxu0
      %2220 = vmatprep.mubr.bf16.mxu0 0
      %2221 = vmatmul.mubr.bf16.gmra.mrb[0].mxu0 %v2086
      %v2222 = vpop.f32.mrb[0].mxu0
      %v2223 = vadd.f32 0.0, %v2222
      %v2224 = vpop.f32.mrb[0].mxu0
      %v2225 = vpop.f32.mrb[0].mxu0
      %v2226 = vadd.f32 0.0, %v2225
      %v2227 = vpop.f32.mrb[0].mxu0
      %2228 = vmatprep.mubr.bf16.mxu0 0
      %2229 = vmatmul.mubr.bf16.gmra.mrb[0].mxu0 %v2089
      %v2230 = vpop.f32.mrb[0].mxu0
      %v2231 = vadd.f32 0.0, %v2230
      %v2232 = vpop.f32.mrb[0].mxu0
      %v2233 = vpop.f32.mrb[0].mxu0
      %v2234 = vadd.f32 0.0, %v2233
      %v2235 = vpop.f32.mrb[0].mxu0
      %2236 = vmatprep.mubr.bf16.mxu0 0
      %2237 = vmatmul.mubr.bf16.gmra.mrb[0].mxu0 %v2092
      %v2238 = vpop.f32.mrb[0].mxu0
      %v2239 = vadd.f32 0.0, %v2238
      %v2240 = vpop.f32.mrb[0].mxu0
      %v2241 = vpop.f32.mrb[0].mxu0
      %v2242 = vadd.f32 0.0, %v2241
      %v2243 = vpop.f32.mrb[0].mxu0
      %2244 = vmatprep.mubr.bf16.mxu0 0
      %2245 = vmatmul.mubr.bf16.gmra.mrb[0].mxu0 %v2095
      %v2246 = vpop.f32.mrb[0].mxu0
      %v2247 = vadd.f32 0.0, %v2246
      %v2248 = vpop.f32.mrb[0].mxu0
      %v2249 = vpop.f32.mrb[0].mxu0
      %v2250 = vadd.f32 0.0, %v2249
      %v2251 = vpop.f32.mrb[0].mxu0
      %2252 = vmatprep.mubr.bf16.mxu0 0
      %2253 = vmatmul.mubr.bf16.gmra.mrb[0].mxu0 %v2098
      %v2254 = vpop.f32.mrb[0].mxu0
      %v2255 = vadd.f32 0.0, %v2254
      %v2256 = vpop.f32.mrb[0].mxu0
      %v2257 = vpop.f32.mrb[0].mxu0
      %v2258 = vadd.f32 0.0, %v2257
      %v2259 = vpop.f32.mrb[0].mxu0
      %2260 = vdwg.mxu0
      %v2261 = vadd.f32 %v1955, %v2135
      %v2262 = vadd.f32 %v1956, %v2138
      %v2263 = vadd.f32 %v1957, %v2143
      %v2264 = vadd.f32 %v1958, %v2146
      %v2265 = vadd.f32 %v1959, %v2151
      %v2266 = vadd.f32 %v1960, %v2154
      %v2267 = vadd.f32 %v1961, %v2159
      %v2268 = vadd.f32 %v1962, %v2162
      %v2269 = vadd.f32 %v1963, %v2167
      %v2270 = vadd.f32 %v1964, %v2170
      %v2271 = vadd.f32 %v1965, %v2175
      %v2272 = vadd.f32 %v1966, %v2178
      %v2273 = vadd.f32 %v1967, %v2183
      %v2274 = vadd.f32 %v1968, %v2186
      %v2275 = vadd.f32 %v1969, %v2191
      %v2276 = vadd.f32 %v1970, %v2194
      %v2277 = vadd.f32 %v1971, %v2199
      %v2278 = vadd.f32 %v1972, %v2202
      %v2279 = vadd.f32 %v1973, %v2207
      %v2280 = vadd.f32 %v1974, %v2210
      %v2281 = vadd.f32 %v1975, %v2215
      %v2282 = vadd.f32 %v1976, %v2218
      %v2283 = vadd.f32 %v1977, %v2223
      %v2284 = vadd.f32 %v1978, %v2226
      %v2285 = vadd.f32 %v1979, %v2231
      %v2286 = vadd.f32 %v1980, %v2234
      %v2287 = vadd.f32 %v1981, %v2239
      %v2288 = vadd.f32 %v1982, %v2242
      %v2289 = vadd.f32 %v1983, %v2247
      %v2290 = vadd.f32 %v1984, %v2250
      %v2291 = vadd.f32 %v1985, %v2255
      %v2292 = vadd.f32 %v1986, %v2258
      %v2293 = vld [vmem:[%s1101 + $0x1] sm:$0xff]
      %v2294 = vld [vmem:[%s1101 + $0x9] sm:$0xff]
      %v2295 = vld [vmem:[%s1101 + $0x19] sm:$0xff]
      %v2296 = vld [vmem:[%s1101 + $0x21] sm:$0xff]
      %v2297 = vld [vmem:[%s1101 + $0x31] sm:$0xff]
      %v2298 = vld [vmem:[%s1101 + $0x39] sm:$0xff]
      %v2299 = vld [vmem:[%s1101 + $0x49] sm:$0xff]
      %v2300 = vld [vmem:[%s1101 + $0x51] sm:$0xff]
      %v2301 = vld [vmem:[%s1101 + $0x61] sm:$0xff]
      %v2302 = vld [vmem:[%s1101 + $0x69] sm:$0xff]
      %v2303 = vld [vmem:[%s1101 + $0x79] sm:$0xff]
      %v2304 = vld [vmem:[%s1101 + $0x81] sm:$0xff]
      %v2305 = vld [vmem:[%s1101 + $0x91] sm:$0xff]
      %v2306 = vld [vmem:[%s1101 + $0x99] sm:$0xff]
      %v2307 = vld [vmem:[%s1101 + $0xa9] sm:$0xff]
      %v2308 = vld [vmem:[%s1101 + $0xb1] sm:$0xff]
      %v2309 = vld [vmem:[%s1101 + $0xc1] sm:$0xff]
      %v2310 = vld [vmem:[%s1101 + $0xc9] sm:$0xff]
      %v2311 = vld [vmem:[%s1101 + $0xd9] sm:$0xff]
      %v2312 = vld [vmem:[%s1101 + $0xe1] sm:$0xff]
      %v2313 = vld [vmem:[%s1101 + $0xf1] sm:$0xff]
      %v2314 = vld [vmem:[%s1101 + $0xf9] sm:$0xff]
      %v2315 = vld [vmem:[%s1101 + $0x109] sm:$0xff]
      %v2316 = vld [vmem:[%s1101 + $0x111] sm:$0xff]
      %v2317 = vld [vmem:[%s1101 + $0x121] sm:$0xff]
      %v2318 = vld [vmem:[%s1101 + $0x129] sm:$0xff]
      %v2319 = vld [vmem:[%s1101 + $0x139] sm:$0xff]
      %v2320 = vld [vmem:[%s1101 + $0x141] sm:$0xff]
      %v2321 = vld [vmem:[%s1101 + $0x151] sm:$0xff]
      %v2322 = vld [vmem:[%s1101 + $0x159] sm:$0xff]
      %v2323 = vld [vmem:[%s1101 + $0x169] sm:$0xff]
      %v2324 = vld [vmem:[%s1101 + $0x171] sm:$0xff]
      %v2325 = vpack.c.bf16 %v2294, %v2293
      %v2326 = vpack.c.bf16 %v2296, %v2295
      %v2327 = vpack.c.bf16 %v2298, %v2297
      %v2328 = vpack.c.bf16 %v2300, %v2299
      %v2329 = vpack.c.bf16 %v2302, %v2301
      %v2330 = vpack.c.bf16 %v2304, %v2303
      %v2331 = vpack.c.bf16 %v2306, %v2305
      %v2332 = vpack.c.bf16 %v2308, %v2307
      %v2333 = vpack.c.bf16 %v2310, %v2309
      %v2334 = vpack.c.bf16 %v2312, %v2311
      %v2335 = vpack.c.bf16 %v2314, %v2313
      %v2336 = vpack.c.bf16 %v2316, %v2315
      %v2337 = vpack.c.bf16 %v2318, %v2317
      %v2338 = vpack.c.bf16 %v2320, %v2319
      %v2339 = vpack.c.bf16 %v2322, %v2321
      %v2340 = vpack.c.bf16 %v2324, %v2323
      %s2341 = scalar_lea.vmem %s5, 64
      %v2342 = vld [vmem:[%s2341] sm:$0xf]
      %v2343 = vld [vmem:[%s2341 + $0x4] sm:$0xf]
      %v2344 = vld [vmem:[%s2341 + $0x8] sm:$0xf]
      %v2345 = vld [vmem:[%s2341 + $0xc] sm:$0xf]
      %v2350 = vunpack.c.l.b16 %v2342
      %v2351 = vunpack.c.l.b16 %v2343
      %v2352 = vunpack.c.l.b16 %v2344
      %v2353 = vunpack.c.l.b16 %v2345
      %v2354 = vpack.c.b16 %v2351, %v2350
      %v2355 = vpack.c.b16 %v2353, %v2352
      %v2359 = vsel %vm740, %v2325, 0
      %v2362 = vsel %vm740, %v2326, 0
      %v2365 = vsel %vm740, %v2327, 0
      %v2368 = vsel %vm740, %v2328, 0
      %v2371 = vsel %vm740, %v2329, 0
      %v2374 = vsel %vm740, %v2330, 0
      %v2377 = vsel %vm740, %v2331, 0
      %v2380 = vsel %vm740, %v2332, 0
      %v2383 = vsel %vm740, %v2333, 0
      %v2386 = vsel %vm740, %v2334, 0
      %v2389 = vsel %vm740, %v2335, 0
      %v2392 = vsel %vm740, %v2336, 0
      %v2395 = vsel %vm740, %v2337, 0
      %v2398 = vsel %vm740, %v2338, 0
      %v2401 = vsel %vm740, %v2339, 0
      %v2404 = vsel %vm740, %v2340, 0
      %2406 = vmatprep.subr.bf16.mxu0 0
      %2407 = vmatpush1.bf16.msra.mxu0 %v2354
      %2408 = vmatprep.subr.bf16.mxu0 0
      %2409 = vmatpush1.bf16.msra.mxu0 %v2355
      %2410 = vmatprep.subr.bf16.mxu0 0
      %2411 = vmatpush1.bf16.msra.mxu0 0
      %2412 = vmatprep.subr.bf16.mxu0 0
      %2413 = vmatpush1.bf16.msra.mxu0 0
      %2414 = vmatprep.subr.bf16.mxu0 0
      %2415 = vmatpush1.bf16.msra.mxu0 0
      %2416 = vmatprep.subr.bf16.mxu0 0
      %2417 = vmatpush1.bf16.msra.mxu0 0
      %2418 = vmatprep.subr.bf16.mxu0 0
      %2419 = vmatpush1.bf16.msra.mxu0 0
      %2420 = vmatprep.subr.bf16.mxu0 0
      %2421 = vmatpush1.bf16.msra.mxu0 0
      %2422 = vmatprep.subr.bf16.mxu0 0
      %2423 = vmatpush1.bf16.msra.mxu0 0
      %2424 = vmatprep.subr.bf16.mxu0 0
      %2425 = vmatpush1.bf16.msra.mxu0 0
      %2426 = vmatprep.subr.bf16.mxu0 0
      %2427 = vmatpush1.bf16.msra.mxu0 0
      %2428 = vmatprep.subr.bf16.mxu0 0
      %2429 = vmatpush1.bf16.msra.mxu0 0
      %2430 = vmatprep.subr.bf16.mxu0 0
      %2431 = vmatpush1.bf16.msra.mxu0 0
      %2432 = vmatprep.subr.bf16.mxu0 0
      %2433 = vmatpush1.bf16.msra.mxu0 0
      %2434 = vmatprep.subr.bf16.mxu0 0
      %2435 = vmatpush1.bf16.msra.mxu0 0
      %2436 = vmatprep.subr.bf16.mxu0 0
      %2437 = vmatpush1.bf16.msra.mxu0 0
      %2438 = vmatprep.mubr.bf16.mxu0 0
      %2439 = vmatmul.mubr.bf16.gmra.mrb[0].mxu0 %v2359
      %v2440 = vpop.f32.mrb[0].mxu0
      %v2441 = vadd.f32 0.0, %v2440
      %v2442 = vpop.f32.mrb[0].mxu0
      %v2443 = vpop.f32.mrb[0].mxu0
      %v2444 = vadd.f32 0.0, %v2443
      %v2445 = vpop.f32.mrb[0].mxu0
      %2446 = vmatprep.mubr.bf16.mxu0 0
      %2447 = vmatmul.mubr.bf16.gmra.mrb[0].mxu0 %v2362
      %v2448 = vpop.f32.mrb[0].mxu0
      %v2449 = vadd.f32 0.0, %v2448
      %v2450 = vpop.f32.mrb[0].mxu0
      %v2451 = vpop.f32.mrb[0].mxu0
      %v2452 = vadd.f32 0.0, %v2451
      %v2453 = vpop.f32.mrb[0].mxu0
      %2454 = vmatprep.mubr.bf16.mxu0 0
      %2455 = vmatmul.mubr.bf16.gmra.mrb[0].mxu0 %v2365
      %v2456 = vpop.f32.mrb[0].mxu0
      %v2457 = vadd.f32 0.0, %v2456
      %v2458 = vpop.f32.mrb[0].mxu0
      %v2459 = vpop.f32.mrb[0].mxu0
      %v2460 = vadd.f32 0.0, %v2459
      %v2461 = vpop.f32.mrb[0].mxu0
      %2462 = vmatprep.mubr.bf16.mxu0 0
      %2463 = vmatmul.mubr.bf16.gmra.mrb[0].mxu0 %v2368
      %v2464 = vpop.f32.mrb[0].mxu0
      %v2465 = vadd.f32 0.0, %v2464
      %v2466 = vpop.f32.mrb[0].mxu0
      %v2467 = vpop.f32.mrb[0].mxu0
      %v2468 = vadd.f32 0.0, %v2467
      %v2469 = vpop.f32.mrb[0].mxu0
      %2470 = vmatprep.mubr.bf16.mxu0 0
      %2471 = vmatmul.mubr.bf16.gmra.mrb[0].mxu0 %v2371
      %v2472 = vpop.f32.mrb[0].mxu0
      %v2473 = vadd.f32 0.0, %v2472
      %v2474 = vpop.f32.mrb[0].mxu0
      %v2475 = vpop.f32.mrb[0].mxu0
      %v2476 = vadd.f32 0.0, %v2475
      %v2477 = vpop.f32.mrb[0].mxu0
      %2478 = vmatprep.mubr.bf16.mxu0 0
      %2479 = vmatmul.mubr.bf16.gmra.mrb[0].mxu0 %v2374
      %v2480 = vpop.f32.mrb[0].mxu0
      %v2481 = vadd.f32 0.0, %v2480
      %v2482 = vpop.f32.mrb[0].mxu0
      %v2483 = vpop.f32.mrb[0].mxu0
      %v2484 = vadd.f32 0.0, %v2483
      %v2485 = vpop.f32.mrb[0].mxu0
      %2486 = vmatprep.mubr.bf16.mxu0 0
      %2487 = vmatmul.mubr.bf16.gmra.mrb[0].mxu0 %v2377
      %v2488 = vpop.f32.mrb[0].mxu0
      %v2489 = vadd.f32 0.0, %v2488
      %v2490 = vpop.f32.mrb[0].mxu0
      %v2491 = vpop.f32.mrb[0].mxu0
      %v2492 = vadd.f32 0.0, %v2491
      %v2493 = vpop.f32.mrb[0].mxu0
      %2494 = vmatprep.mubr.bf16.mxu0 0
      %2495 = vmatmul.mubr.bf16.gmra.mrb[0].mxu0 %v2380
      %v2496 = vpop.f32.mrb[0].mxu0
      %v2497 = vadd.f32 0.0, %v2496
      %v2498 = vpop.f32.mrb[0].mxu0
      %v2499 = vpop.f32.mrb[0].mxu0
      %v2500 = vadd.f32 0.0, %v2499
      %v2501 = vpop.f32.mrb[0].mxu0
      %2502 = vmatprep.mubr.bf16.mxu0 0
      %2503 = vmatmul.mubr.bf16.gmra.mrb[0].mxu0 %v2383
      %v2504 = vpop.f32.mrb[0].mxu0
      %v2505 = vadd.f32 0.0, %v2504
      %v2506 = vpop.f32.mrb[0].mxu0
      %v2507 = vpop.f32.mrb[0].mxu0
      %v2508 = vadd.f32 0.0, %v2507
      %v2509 = vpop.f32.mrb[0].mxu0
      %2510 = vmatprep.mubr.bf16.mxu0 0
      %2511 = vmatmul.mubr.bf16.gmra.mrb[0].mxu0 %v2386
      %v2512 = vpop.f32.mrb[0].mxu0
      %v2513 = vadd.f32 0.0, %v2512
      %v2514 = vpop.f32.mrb[0].mxu0
      %v2515 = vpop.f32.mrb[0].mxu0
      %v2516 = vadd.f32 0.0, %v2515
      %v2517 = vpop.f32.mrb[0].mxu0
      %2518 = vmatprep.mubr.bf16.mxu0 0
      %2519 = vmatmul.mubr.bf16.gmra.mrb[0].mxu0 %v2389
      %v2520 = vpop.f32.mrb[0].mxu0
      %v2521 = vadd.f32 0.0, %v2520
      %v2522 = vpop.f32.mrb[0].mxu0
      %v2523 = vpop.f32.mrb[0].mxu0
      %v2524 = vadd.f32 0.0, %v2523
      %v2525 = vpop.f32.mrb[0].mxu0
      %2526 = vmatprep.mubr.bf16.mxu0 0
      %2527 = vmatmul.mubr.bf16.gmra.mrb[0].mxu0 %v2392
      %v2528 = vpop.f32.mrb[0].mxu0
      %v2529 = vadd.f32 0.0, %v2528
      %v2530 = vpop.f32.mrb[0].mxu0
      %v2531 = vpop.f32.mrb[0].mxu0
      %v2532 = vadd.f32 0.0, %v2531
      %v2533 = vpop.f32.mrb[0].mxu0
      %2534 = vmatprep.mubr.bf16.mxu0 0
      %2535 = vmatmul.mubr.bf16.gmra.mrb[0].mxu0 %v2395
      %v2536 = vpop.f32.mrb[0].mxu0
      %v2537 = vadd.f32 0.0, %v2536
      %v2538 = vpop.f32.mrb[0].mxu0
      %v2539 = vpop.f32.mrb[0].mxu0
      %v2540 = vadd.f32 0.0, %v2539
      %v2541 = vpop.f32.mrb[0].mxu0
      %2542 = vmatprep.mubr.bf16.mxu0 0
      %2543 = vmatmul.mubr.bf16.gmra.mrb[0].mxu0 %v2398
      %v2544 = vpop.f32.mrb[0].mxu0
      %v2545 = vadd.f32 0.0, %v2544
      %v2546 = vpop.f32.mrb[0].mxu0
      %v2547 = vpop.f32.mrb[0].mxu0
      %v2548 = vadd.f32 0.0, %v2547
      %v2549 = vpop.f32.mrb[0].mxu0
      %2550 = vmatprep.mubr.bf16.mxu0 0
      %2551 = vmatmul.mubr.bf16.gmra.mrb[0].mxu0 %v2401
      %v2552 = vpop.f32.mrb[0].mxu0
      %v2553 = vadd.f32 0.0, %v2552
      %v2554 = vpop.f32.mrb[0].mxu0
      %v2555 = vpop.f32.mrb[0].mxu0
      %v2556 = vadd.f32 0.0, %v2555
      %v2557 = vpop.f32.mrb[0].mxu0
      %2558 = vmatprep.mubr.bf16.mxu0 0
      %2559 = vmatmul.mubr.bf16.gmra.mrb[0].mxu0 %v2404
      %v2560 = vpop.f32.mrb[0].mxu0
      %v2561 = vadd.f32 0.0, %v2560
      %v2562 = vpop.f32.mrb[0].mxu0
      %v2563 = vpop.f32.mrb[0].mxu0
      %v2564 = vadd.f32 0.0, %v2563
      %v2565 = vpop.f32.mrb[0].mxu0
      %2566 = vdwg.mxu0
      %v2567 = vadd.f32 %v2261, %v2441
      %v2568 = vadd.f32 %v2262, %v2444
      %v2569 = vadd.f32 %v2263, %v2449
      %v2570 = vadd.f32 %v2264, %v2452
      %v2571 = vadd.f32 %v2265, %v2457
      %v2572 = vadd.f32 %v2266, %v2460
      %v2573 = vadd.f32 %v2267, %v2465
      %v2574 = vadd.f32 %v2268, %v2468
      %v2575 = vadd.f32 %v2269, %v2473
      %v2576 = vadd.f32 %v2270, %v2476
      %v2577 = vadd.f32 %v2271, %v2481
      %v2578 = vadd.f32 %v2272, %v2484
      %v2579 = vadd.f32 %v2273, %v2489
      %v2580 = vadd.f32 %v2274, %v2492
      %v2581 = vadd.f32 %v2275, %v2497
      %v2582 = vadd.f32 %v2276, %v2500
      %v2583 = vadd.f32 %v2277, %v2505
      %v2584 = vadd.f32 %v2278, %v2508
      %v2585 = vadd.f32 %v2279, %v2513
      %v2586 = vadd.f32 %v2280, %v2516
      %v2587 = vadd.f32 %v2281, %v2521
      %v2588 = vadd.f32 %v2282, %v2524
      %v2589 = vadd.f32 %v2283, %v2529
      %v2590 = vadd.f32 %v2284, %v2532
      %v2591 = vadd.f32 %v2285, %v2537
      %v2592 = vadd.f32 %v2286, %v2540
      %v2593 = vadd.f32 %v2287, %v2545
      %v2594 = vadd.f32 %v2288, %v2548
      %v2595 = vadd.f32 %v2289, %v2553
      %v2596 = vadd.f32 %v2290, %v2556
      %v2597 = vadd.f32 %v2291, %v2561
      %v2598 = vadd.f32 %v2292, %v2564
      %v2599 = vld [vmem:[%s1101 + $0x2] sm:$0xff]
      %v2600 = vld [vmem:[%s1101 + $0xa] sm:$0xff]
      %v2601 = vld [vmem:[%s1101 + $0x1a] sm:$0xff]
      %v2602 = vld [vmem:[%s1101 + $0x22] sm:$0xff]
      %v2603 = vld [vmem:[%s1101 + $0x32] sm:$0xff]
      %v2604 = vld [vmem:[%s1101 + $0x3a] sm:$0xff]
      %v2605 = vld [vmem:[%s1101 + $0x4a] sm:$0xff]
      %v2606 = vld [vmem:[%s1101 + $0x52] sm:$0xff]
      %v2607 = vld [vmem:[%s1101 + $0x62] sm:$0xff]
      %v2608 = vld [vmem:[%s1101 + $0x6a] sm:$0xff]
      %v2609 = vld [vmem:[%s1101 + $0x7a] sm:$0xff]
      %v2610 = vld [vmem:[%s1101 + $0x82] sm:$0xff]
      %v2611 = vld [vmem:[%s1101 + $0x92] sm:$0xff]
      %v2612 = vld [vmem:[%s1101 + $0x9a] sm:$0xff]
      %v2613 = vld [vmem:[%s1101 + $0xaa] sm:$0xff]
      %v2614 = vld [vmem:[%s1101 + $0xb2] sm:$0xff]
      %v2615 = vld [vmem:[%s1101 + $0xc2] sm:$0xff]
      %v2616 = vld [vmem:[%s1101 + $0xca] sm:$0xff]
      %v2617 = vld [vmem:[%s1101 + $0xda] sm:$0xff]
      %v2618 = vld [vmem:[%s1101 + $0xe2] sm:$0xff]
      %v2619 = vld [vmem:[%s1101 + $0xf2] sm:$0xff]
      %v2620 = vld [vmem:[%s1101 + $0xfa] sm:$0xff]
      %v2621 = vld [vmem:[%s1101 + $0x10a] sm:$0xff]
      %v2622 = vld [vmem:[%s1101 + $0x112] sm:$0xff]
      %v2623 = vld [vmem:[%s1101 + $0x122] sm:$0xff]
      %v2624 = vld [vmem:[%s1101 + $0x12a] sm:$0xff]
      %v2625 = vld [vmem:[%s1101 + $0x13a] sm:$0xff]
      %v2626 = vld [vmem:[%s1101 + $0x142] sm:$0xff]
      %v2627 = vld [vmem:[%s1101 + $0x152] sm:$0xff]
      %v2628 = vld [vmem:[%s1101 + $0x15a] sm:$0xff]
      %v2629 = vld [vmem:[%s1101 + $0x16a] sm:$0xff]
      %v2630 = vld [vmem:[%s1101 + $0x172] sm:$0xff]
      %v2631 = vpack.c.bf16 %v2600, %v2599
      %v2632 = vpack.c.bf16 %v2602, %v2601
      %v2633 = vpack.c.bf16 %v2604, %v2603
      %v2634 = vpack.c.bf16 %v2606, %v2605
      %v2635 = vpack.c.bf16 %v2608, %v2607
      %v2636 = vpack.c.bf16 %v2610, %v2609
      %v2637 = vpack.c.bf16 %v2612, %v2611
      %v2638 = vpack.c.bf16 %v2614, %v2613
      %v2639 = vpack.c.bf16 %v2616, %v2615
      %v2640 = vpack.c.bf16 %v2618, %v2617
      %v2641 = vpack.c.bf16 %v2620, %v2619
      %v2642 = vpack.c.bf16 %v2622, %v2621
      %v2643 = vpack.c.bf16 %v2624, %v2623
      %v2644 = vpack.c.bf16 %v2626, %v2625
      %v2645 = vpack.c.bf16 %v2628, %v2627
      %v2646 = vpack.c.bf16 %v2630, %v2629
      %s2647 = scalar_lea.vmem %s5, 80
      %v2648 = vld [vmem:[%s2647] sm:$0xf]
      %v2649 = vld [vmem:[%s2647 + $0x4] sm:$0xf]
      %v2650 = vld [vmem:[%s2647 + $0x8] sm:$0xf]
      %v2651 = vld [vmem:[%s2647 + $0xc] sm:$0xf]
      %v2656 = vunpack.c.l.b16 %v2648
      %v2657 = vunpack.c.l.b16 %v2649
      %v2658 = vunpack.c.l.b16 %v2650
      %v2659 = vunpack.c.l.b16 %v2651
      %v2660 = vpack.c.b16 %v2657, %v2656
      %v2661 = vpack.c.b16 %v2659, %v2658
      %v2665 = vsel %vm740, %v2631, 0
      %v2668 = vsel %vm740, %v2632, 0
      %v2671 = vsel %vm740, %v2633, 0
      %v2674 = vsel %vm740, %v2634, 0
      %v2677 = vsel %vm740, %v2635, 0
      %v2680 = vsel %vm740, %v2636, 0
      %v2683 = vsel %vm740, %v2637, 0
      %v2686 = vsel %vm740, %v2638, 0
      %v2689 = vsel %vm740, %v2639, 0
      %v2692 = vsel %vm740, %v2640, 0
      %v2695 = vsel %vm740, %v2641, 0
      %v2698 = vsel %vm740, %v2642, 0
      %v2701 = vsel %vm740, %v2643, 0
      %v2704 = vsel %vm740, %v2644, 0
      %v2707 = vsel %vm740, %v2645, 0
      %v2710 = vsel %vm740, %v2646, 0
      %2712 = vmatprep.subr.bf16.mxu0 0
      %2713 = vmatpush1.bf16.msra.mxu0 %v2660
      %2714 = vmatprep.subr.bf16.mxu0 0
      %2715 = vmatpush1.bf16.msra.mxu0 %v2661
      %2716 = vmatprep.subr.bf16.mxu0 0
      %2717 = vmatpush1.bf16.msra.mxu0 0
      %2718 = vmatprep.subr.bf16.mxu0 0
      %2719 = vmatpush1.bf16.msra.mxu0 0
      %2720 = vmatprep.subr.bf16.mxu0 0
      %2721 = vmatpush1.bf16.msra.mxu0 0
      %2722 = vmatprep.subr.bf16.mxu0 0
      %2723 = vmatpush1.bf16.msra.mxu0 0
      %2724 = vmatprep.subr.bf16.mxu0 0
      %2725 = vmatpush1.bf16.msra.mxu0 0
      %2726 = vmatprep.subr.bf16.mxu0 0
      %2727 = vmatpush1.bf16.msra.mxu0 0
      %2728 = vmatprep.subr.bf16.mxu0 0
      %2729 = vmatpush1.bf16.msra.mxu0 0
      %2730 = vmatprep.subr.bf16.mxu0 0
      %2731 = vmatpush1.bf16.msra.mxu0 0
      %2732 = vmatprep.subr.bf16.mxu0 0
      %2733 = vmatpush1.bf16.msra.mxu0 0
      %2734 = vmatprep.subr.bf16.mxu0 0
      %2735 = vmatpush1.bf16.msra.mxu0 0
      %2736 = vmatprep.subr.bf16.mxu0 0
      %2737 = vmatpush1.bf16.msra.mxu0 0
      %2738 = vmatprep.subr.bf16.mxu0 0
      %2739 = vmatpush1.bf16.msra.mxu0 0
      %2740 = vmatprep.subr.bf16.mxu0 0
      %2741 = vmatpush1.bf16.msra.mxu0 0
      %2742 = vmatprep.subr.bf16.mxu0 0
      %2743 = vmatpush1.bf16.msra.mxu0 0
      %2744 = vmatprep.mubr.bf16.mxu0 0
      %2745 = vmatmul.mubr.bf16.gmra.mrb[0].mxu0 %v2665
      %v2746 = vpop.f32.mrb[0].mxu0
      %v2747 = vadd.f32 0.0, %v2746
      %v2748 = vpop.f32.mrb[0].mxu0
      %v2749 = vpop.f32.mrb[0].mxu0
      %v2750 = vadd.f32 0.0, %v2749
      %v2751 = vpop.f32.mrb[0].mxu0
      %2752 = vmatprep.mubr.bf16.mxu0 0
      %2753 = vmatmul.mubr.bf16.gmra.mrb[0].mxu0 %v2668
      %v2754 = vpop.f32.mrb[0].mxu0
      %v2755 = vadd.f32 0.0, %v2754
      %v2756 = vpop.f32.mrb[0].mxu0
      %v2757 = vpop.f32.mrb[0].mxu0
      %v2758 = vadd.f32 0.0, %v2757
      %v2759 = vpop.f32.mrb[0].mxu0
      %2760 = vmatprep.mubr.bf16.mxu0 0
      %2761 = vmatmul.mubr.bf16.gmra.mrb[0].mxu0 %v2671
      %v2762 = vpop.f32.mrb[0].mxu0
      %v2763 = vadd.f32 0.0, %v2762
      %v2764 = vpop.f32.mrb[0].mxu0
      %v2765 = vpop.f32.mrb[0].mxu0
      %v2766 = vadd.f32 0.0, %v2765
      %v2767 = vpop.f32.mrb[0].mxu0
      %2768 = vmatprep.mubr.bf16.mxu0 0
      %2769 = vmatmul.mubr.bf16.gmra.mrb[0].mxu0 %v2674
      %v2770 = vpop.f32.mrb[0].mxu0
      %v2771 = vadd.f32 0.0, %v2770
      %v2772 = vpop.f32.mrb[0].mxu0
      %v2773 = vpop.f32.mrb[0].mxu0
      %v2774 = vadd.f32 0.0, %v2773
      %v2775 = vpop.f32.mrb[0].mxu0
      %2776 = vmatprep.mubr.bf16.mxu0 0
      %2777 = vmatmul.mubr.bf16.gmra.mrb[0].mxu0 %v2677
      %v2778 = vpop.f32.mrb[0].mxu0
      %v2779 = vadd.f32 0.0, %v2778
      %v2780 = vpop.f32.mrb[0].mxu0
      %v2781 = vpop.f32.mrb[0].mxu0
      %v2782 = vadd.f32 0.0, %v2781
      %v2783 = vpop.f32.mrb[0].mxu0
      %2784 = vmatprep.mubr.bf16.mxu0 0
      %2785 = vmatmul.mubr.bf16.gmra.mrb[0].mxu0 %v2680
      %v2786 = vpop.f32.mrb[0].mxu0
      %v2787 = vadd.f32 0.0, %v2786
      %v2788 = vpop.f32.mrb[0].mxu0
      %v2789 = vpop.f32.mrb[0].mxu0
      %v2790 = vadd.f32 0.0, %v2789
      %v2791 = vpop.f32.mrb[0].mxu0
      %2792 = vmatprep.mubr.bf16.mxu0 0
      %2793 = vmatmul.mubr.bf16.gmra.mrb[0].mxu0 %v2683
      %v2794 = vpop.f32.mrb[0].mxu0
      %v2795 = vadd.f32 0.0, %v2794
      %v2796 = vpop.f32.mrb[0].mxu0
      %v2797 = vpop.f32.mrb[0].mxu0
      %v2798 = vadd.f32 0.0, %v2797
      %v2799 = vpop.f32.mrb[0].mxu0
      %2800 = vmatprep.mubr.bf16.mxu0 0
      %2801 = vmatmul.mubr.bf16.gmra.mrb[0].mxu0 %v2686
      %v2802 = vpop.f32.mrb[0].mxu0
      %v2803 = vadd.f32 0.0, %v2802
      %v2804 = vpop.f32.mrb[0].mxu0
      %v2805 = vpop.f32.mrb[0].mxu0
      %v2806 = vadd.f32 0.0, %v2805
      %v2807 = vpop.f32.mrb[0].mxu0
      %2808 = vmatprep.mubr.bf16.mxu0 0
      %2809 = vmatmul.mubr.bf16.gmra.mrb[0].mxu0 %v2689
      %v2810 = vpop.f32.mrb[0].mxu0
      %v2811 = vadd.f32 0.0, %v2810
      %v2812 = vpop.f32.mrb[0].mxu0
      %v2813 = vpop.f32.mrb[0].mxu0
      %v2814 = vadd.f32 0.0, %v2813
      %v2815 = vpop.f32.mrb[0].mxu0
      %2816 = vmatprep.mubr.bf16.mxu0 0
      %2817 = vmatmul.mubr.bf16.gmra.mrb[0].mxu0 %v2692
      %v2818 = vpop.f32.mrb[0].mxu0
      %v2819 = vadd.f32 0.0, %v2818
      %v2820 = vpop.f32.mrb[0].mxu0
      %v2821 = vpop.f32.mrb[0].mxu0
      %v2822 = vadd.f32 0.0, %v2821
      %v2823 = vpop.f32.mrb[0].mxu0
      %2824 = vmatprep.mubr.bf16.mxu0 0
      %2825 = vmatmul.mubr.bf16.gmra.mrb[0].mxu0 %v2695
      %v2826 = vpop.f32.mrb[0].mxu0
      %v2827 = vadd.f32 0.0, %v2826
      %v2828 = vpop.f32.mrb[0].mxu0
      %v2829 = vpop.f32.mrb[0].mxu0
      %v2830 = vadd.f32 0.0, %v2829
      %v2831 = vpop.f32.mrb[0].mxu0
      %2832 = vmatprep.mubr.bf16.mxu0 0
      %2833 = vmatmul.mubr.bf16.gmra.mrb[0].mxu0 %v2698
      %v2834 = vpop.f32.mrb[0].mxu0
      %v2835 = vadd.f32 0.0, %v2834
      %v2836 = vpop.f32.mrb[0].mxu0
      %v2837 = vpop.f32.mrb[0].mxu0
      %v2838 = vadd.f32 0.0, %v2837
      %v2839 = vpop.f32.mrb[0].mxu0
      %2840 = vmatprep.mubr.bf16.mxu0 0
      %2841 = vmatmul.mubr.bf16.gmra.mrb[0].mxu0 %v2701
      %v2842 = vpop.f32.mrb[0].mxu0
      %v2843 = vadd.f32 0.0, %v2842
      %v2844 = vpop.f32.mrb[0].mxu0
      %v2845 = vpop.f32.mrb[0].mxu0
      %v2846 = vadd.f32 0.0, %v2845
      %v2847 = vpop.f32.mrb[0].mxu0
      %2848 = vmatprep.mubr.bf16.mxu0 0
      %2849 = vmatmul.mubr.bf16.gmra.mrb[0].mxu0 %v2704
      %v2850 = vpop.f32.mrb[0].mxu0
      %v2851 = vadd.f32 0.0, %v2850
      %v2852 = vpop.f32.mrb[0].mxu0
      %v2853 = vpop.f32.mrb[0].mxu0
      %v2854 = vadd.f32 0.0, %v2853
      %v2855 = vpop.f32.mrb[0].mxu0
      %2856 = vmatprep.mubr.bf16.mxu0 0
      %2857 = vmatmul.mubr.bf16.gmra.mrb[0].mxu0 %v2707
      %v2858 = vpop.f32.mrb[0].mxu0
      %v2859 = vadd.f32 0.0, %v2858
      %v2860 = vpop.f32.mrb[0].mxu0
      %v2861 = vpop.f32.mrb[0].mxu0
      %v2862 = vadd.f32 0.0, %v2861
      %v2863 = vpop.f32.mrb[0].mxu0
      %2864 = vmatprep.mubr.bf16.mxu0 0
      %2865 = vmatmul.mubr.bf16.gmra.mrb[0].mxu0 %v2710
      %v2866 = vpop.f32.mrb[0].mxu0
      %v2867 = vadd.f32 0.0, %v2866
      %v2868 = vpop.f32.mrb[0].mxu0
      %v2869 = vpop.f32.mrb[0].mxu0
      %v2870 = vadd.f32 0.0, %v2869
      %v2871 = vpop.f32.mrb[0].mxu0
      %2872 = vdwg.mxu0
      %v2873 = vadd.f32 %v2567, %v2747
      %v2874 = vadd.f32 %v2568, %v2750
      %v2875 = vadd.f32 %v2569, %v2755
      %v2876 = vadd.f32 %v2570, %v2758
      %v2877 = vadd.f32 %v2571, %v2763
      %v2878 = vadd.f32 %v2572, %v2766
      %v2879 = vadd.f32 %v2573, %v2771
      %v2880 = vadd.f32 %v2574, %v2774
      %v2881 = vadd.f32 %v2575, %v2779
      %v2882 = vadd.f32 %v2576, %v2782
      %v2883 = vadd.f32 %v2577, %v2787
      %v2884 = vadd.f32 %v2578, %v2790
      %v2885 = vadd.f32 %v2579, %v2795
      %v2886 = vadd.f32 %v2580, %v2798
      %v2887 = vadd.f32 %v2581, %v2803
      %v2888 = vadd.f32 %v2582, %v2806
      %v2889 = vadd.f32 %v2583, %v2811
      %v2890 = vadd.f32 %v2584, %v2814
      %v2891 = vadd.f32 %v2585, %v2819
      %v2892 = vadd.f32 %v2586, %v2822
      %v2893 = vadd.f32 %v2587, %v2827
      %v2894 = vadd.f32 %v2588, %v2830
      %v2895 = vadd.f32 %v2589, %v2835
      %v2896 = vadd.f32 %v2590, %v2838
      %v2897 = vadd.f32 %v2591, %v2843
      %v2898 = vadd.f32 %v2592, %v2846
      %v2899 = vadd.f32 %v2593, %v2851
      %v2900 = vadd.f32 %v2594, %v2854
      %v2901 = vadd.f32 %v2595, %v2859
      %v2902 = vadd.f32 %v2596, %v2862
      %v2903 = vadd.f32 %v2597, %v2867
      %v2904 = vadd.f32 %v2598, %v2870
      %s2905 = scalar_lea.vmem [#allocation2], 48
      %v2906 = vld [vmem:[%s2905] sm:$0xff]
      %v2907 = vld [vmem:[%s2905 + $0x8] sm:$0xff]
      %v2908 = vld [vmem:[%s2905 + $0x18] sm:$0xff]
      %v2909 = vld [vmem:[%s2905 + $0x20] sm:$0xff]
      %v2910 = vld [vmem:[%s2905 + $0x30] sm:$0xff]
      %v2911 = vld [vmem:[%s2905 + $0x38] sm:$0xff]
      %v2912 = vld [vmem:[%s2905 + $0x48] sm:$0xff]
      %v2913 = vld [vmem:[%s2905 + $0x50] sm:$0xff]
      %v2914 = vld [vmem:[%s2905 + $0x60] sm:$0xff]
      %v2915 = vld [vmem:[%s2905 + $0x68] sm:$0xff]
      %v2916 = vld [vmem:[%s2905 + $0x78] sm:$0xff]
      %v2917 = vld [vmem:[%s2905 + $0x80] sm:$0xff]
      %v2918 = vld [vmem:[%s2905 + $0x90] sm:$0xff]
      %v2919 = vld [vmem:[%s2905 + $0x98] sm:$0xff]
      %v2920 = vld [vmem:[%s2905 + $0xa8] sm:$0xff]
      %v2921 = vld [vmem:[%s2905 + $0xb0] sm:$0xff]
      %v2922 = vld [vmem:[%s2905 + $0xc0] sm:$0xff]
      %v2923 = vld [vmem:[%s2905 + $0xc8] sm:$0xff]
      %v2924 = vld [vmem:[%s2905 + $0xd8] sm:$0xff]
      %v2925 = vld [vmem:[%s2905 + $0xe0] sm:$0xff]
      %v2926 = vld [vmem:[%s2905 + $0xf0] sm:$0xff]
      %v2927 = vld [vmem:[%s2905 + $0xf8] sm:$0xff]
      %v2928 = vld [vmem:[%s2905 + $0x108] sm:$0xff]
      %v2929 = vld [vmem:[%s2905 + $0x110] sm:$0xff]
      %v2930 = vld [vmem:[%s2905 + $0x120] sm:$0xff]
      %v2931 = vld [vmem:[%s2905 + $0x128] sm:$0xff]
      %v2932 = vld [vmem:[%s2905 + $0x138] sm:$0xff]
      %v2933 = vld [vmem:[%s2905 + $0x140] sm:$0xff]
      %v2934 = vld [vmem:[%s2905 + $0x150] sm:$0xff]
      %v2935 = vld [vmem:[%s2905 + $0x158] sm:$0xff]
      %v2936 = vld [vmem:[%s2905 + $0x168] sm:$0xff]
      %v2937 = vld [vmem:[%s2905 + $0x170] sm:$0xff]
      %v2938 = vpack.c.bf16 %v2907, %v2906
      %v2939 = vpack.c.bf16 %v2909, %v2908
      %v2940 = vpack.c.bf16 %v2911, %v2910
      %v2941 = vpack.c.bf16 %v2913, %v2912
      %v2942 = vpack.c.bf16 %v2915, %v2914
      %v2943 = vpack.c.bf16 %v2917, %v2916
      %v2944 = vpack.c.bf16 %v2919, %v2918
      %v2945 = vpack.c.bf16 %v2921, %v2920
      %v2946 = vpack.c.bf16 %v2923, %v2922
      %v2947 = vpack.c.bf16 %v2925, %v2924
      %v2948 = vpack.c.bf16 %v2927, %v2926
      %v2949 = vpack.c.bf16 %v2929, %v2928
      %v2950 = vpack.c.bf16 %v2931, %v2930
      %v2951 = vpack.c.bf16 %v2933, %v2932
      %v2952 = vpack.c.bf16 %v2935, %v2934
      %v2953 = vpack.c.bf16 %v2937, %v2936
      %s2954 = scalar_lea.vmem %s5, 96
      %v2955 = vld [vmem:[%s2954] sm:$0xf]
      %v2956 = vld [vmem:[%s2954 + $0x4] sm:$0xf]
      %v2957 = vld [vmem:[%s2954 + $0x8] sm:$0xf]
      %v2958 = vld [vmem:[%s2954 + $0xc] sm:$0xf]
      %v2963 = vunpack.c.l.b16 %v2955
      %v2964 = vunpack.c.l.b16 %v2956
      %v2965 = vunpack.c.l.b16 %v2957
      %v2966 = vunpack.c.l.b16 %v2958
      %v2967 = vpack.c.b16 %v2964, %v2963
      %v2968 = vpack.c.b16 %v2966, %v2965
      %v2972 = vsel %vm740, %v2938, 0
      %v2975 = vsel %vm740, %v2939, 0
      %v2978 = vsel %vm740, %v2940, 0
      %v2981 = vsel %vm740, %v2941, 0
      %v2984 = vsel %vm740, %v2942, 0
      %v2987 = vsel %vm740, %v2943, 0
      %v2990 = vsel %vm740, %v2944, 0
      %v2993 = vsel %vm740, %v2945, 0
      %v2996 = vsel %vm740, %v2946, 0
      %v2999 = vsel %vm740, %v2947, 0
      %v3002 = vsel %vm740, %v2948, 0
      %v3005 = vsel %vm740, %v2949, 0
      %v3008 = vsel %vm740, %v2950, 0
      %v3011 = vsel %vm740, %v2951, 0
      %v3014 = vsel %vm740, %v2952, 0
      %v3017 = vsel %vm740, %v2953, 0
      %3019 = vmatprep.subr.bf16.mxu0 0
      %3020 = vmatpush1.bf16.msra.mxu0 %v2967
      %3021 = vmatprep.subr.bf16.mxu0 0
      %3022 = vmatpush1.bf16.msra.mxu0 %v2968
      %3023 = vmatprep.subr.bf16.mxu0 0
      %3024 = vmatpush1.bf16.msra.mxu0 0
      %3025 = vmatprep.subr.bf16.mxu0 0
      %3026 = vmatpush1.bf16.msra.mxu0 0
      %3027 = vmatprep.subr.bf16.mxu0 0
      %3028 = vmatpush1.bf16.msra.mxu0 0
      %3029 = vmatprep.subr.bf16.mxu0 0
      %3030 = vmatpush1.bf16.msra.mxu0 0
      %3031 = vmatprep.subr.bf16.mxu0 0
      %3032 = vmatpush1.bf16.msra.mxu0 0
      %3033 = vmatprep.subr.bf16.mxu0 0
      %3034 = vmatpush1.bf16.msra.mxu0 0
      %3035 = vmatprep.subr.bf16.mxu0 0
      %3036 = vmatpush1.bf16.msra.mxu0 0
      %3037 = vmatprep.subr.bf16.mxu0 0
      %3038 = vmatpush1.bf16.msra.mxu0 0
      %3039 = vmatprep.subr.bf16.mxu0 0
      %3040 = vmatpush1.bf16.msra.mxu0 0
      %3041 = vmatprep.subr.bf16.mxu0 0
      %3042 = vmatpush1.bf16.msra.mxu0 0
      %3043 = vmatprep.subr.bf16.mxu0 0
      %3044 = vmatpush1.bf16.msra.mxu0 0
      %3045 = vmatprep.subr.bf16.mxu0 0
      %3046 = vmatpush1.bf16.msra.mxu0 0
      %3047 = vmatprep.subr.bf16.mxu0 0
      %3048 = vmatpush1.bf16.msra.mxu0 0
      %3049 = vmatprep.subr.bf16.mxu0 0
      %3050 = vmatpush1.bf16.msra.mxu0 0
      %3051 = vmatprep.mubr.bf16.mxu0 0
      %3052 = vmatmul.mubr.bf16.gmra.mrb[0].mxu0 %v2972
      %v3053 = vpop.f32.mrb[0].mxu0
      %v3054 = vadd.f32 0.0, %v3053
      %v3055 = vpop.f32.mrb[0].mxu0
      %v3056 = vpop.f32.mrb[0].mxu0
      %v3057 = vadd.f32 0.0, %v3056
      %v3058 = vpop.f32.mrb[0].mxu0
      %3059 = vmatprep.mubr.bf16.mxu0 0
      %3060 = vmatmul.mubr.bf16.gmra.mrb[0].mxu0 %v2975
      %v3061 = vpop.f32.mrb[0].mxu0
      %v3062 = vadd.f32 0.0, %v3061
      %v3063 = vpop.f32.mrb[0].mxu0
      %v3064 = vpop.f32.mrb[0].mxu0
      %v3065 = vadd.f32 0.0, %v3064
      %v3066 = vpop.f32.mrb[0].mxu0
      %3067 = vmatprep.mubr.bf16.mxu0 0
      %3068 = vmatmul.mubr.bf16.gmra.mrb[0].mxu0 %v2978
      %v3069 = vpop.f32.mrb[0].mxu0
      %v3070 = vadd.f32 0.0, %v3069
      %v3071 = vpop.f32.mrb[0].mxu0
      %v3072 = vpop.f32.mrb[0].mxu0
      %v3073 = vadd.f32 0.0, %v3072
      %v3074 = vpop.f32.mrb[0].mxu0
      %3075 = vmatprep.mubr.bf16.mxu0 0
      %3076 = vmatmul.mubr.bf16.gmra.mrb[0].mxu0 %v2981
      %v3077 = vpop.f32.mrb[0].mxu0
      %v3078 = vadd.f32 0.0, %v3077
      %v3079 = vpop.f32.mrb[0].mxu0
      %v3080 = vpop.f32.mrb[0].mxu0
      %v3081 = vadd.f32 0.0, %v3080
      %v3082 = vpop.f32.mrb[0].mxu0
      %3083 = vmatprep.mubr.bf16.mxu0 0
      %3084 = vmatmul.mubr.bf16.gmra.mrb[0].mxu0 %v2984
      %v3085 = vpop.f32.mrb[0].mxu0
      %v3086 = vadd.f32 0.0, %v3085
      %v3087 = vpop.f32.mrb[0].mxu0
      %v3088 = vpop.f32.mrb[0].mxu0
      %v3089 = vadd.f32 0.0, %v3088
      %v3090 = vpop.f32.mrb[0].mxu0
      %3091 = vmatprep.mubr.bf16.mxu0 0
      %3092 = vmatmul.mubr.bf16.gmra.mrb[0].mxu0 %v2987
      %v3093 = vpop.f32.mrb[0].mxu0
      %v3094 = vadd.f32 0.0, %v3093
      %v3095 = vpop.f32.mrb[0].mxu0
      %v3096 = vpop.f32.mrb[0].mxu0
      %v3097 = vadd.f32 0.0, %v3096
      %v3098 = vpop.f32.mrb[0].mxu0
      %3099 = vmatprep.mubr.bf16.mxu0 0
      %3100 = vmatmul.mubr.bf16.gmra.mrb[0].mxu0 %v2990
      %v3101 = vpop.f32.mrb[0].mxu0
      %v3102 = vadd.f32 0.0, %v3101
      %v3103 = vpop.f32.mrb[0].mxu0
      %v3104 = vpop.f32.mrb[0].mxu0
      %v3105 = vadd.f32 0.0, %v3104
      %v3106 = vpop.f32.mrb[0].mxu0
      %3107 = vmatprep.mubr.bf16.mxu0 0
      %3108 = vmatmul.mubr.bf16.gmra.mrb[0].mxu0 %v2993
      %v3109 = vpop.f32.mrb[0].mxu0
      %v3110 = vadd.f32 0.0, %v3109
      %v3111 = vpop.f32.mrb[0].mxu0
      %v3112 = vpop.f32.mrb[0].mxu0
      %v3113 = vadd.f32 0.0, %v3112
      %v3114 = vpop.f32.mrb[0].mxu0
      %3115 = vmatprep.mubr.bf16.mxu0 0
      %3116 = vmatmul.mubr.bf16.gmra.mrb[0].mxu0 %v2996
      %v3117 = vpop.f32.mrb[0].mxu0
      %v3118 = vadd.f32 0.0, %v3117
      %v3119 = vpop.f32.mrb[0].mxu0
      %v3120 = vpop.f32.mrb[0].mxu0
      %v3121 = vadd.f32 0.0, %v3120
      %v3122 = vpop.f32.mrb[0].mxu0
      %3123 = vmatprep.mubr.bf16.mxu0 0
      %3124 = vmatmul.mubr.bf16.gmra.mrb[0].mxu0 %v2999
      %v3125 = vpop.f32.mrb[0].mxu0
      %v3126 = vadd.f32 0.0, %v3125
      %v3127 = vpop.f32.mrb[0].mxu0
      %v3128 = vpop.f32.mrb[0].mxu0
      %v3129 = vadd.f32 0.0, %v3128
      %v3130 = vpop.f32.mrb[0].mxu0
      %3131 = vmatprep.mubr.bf16.mxu0 0
      %3132 = vmatmul.mubr.bf16.gmra.mrb[0].mxu0 %v3002
      %v3133 = vpop.f32.mrb[0].mxu0
      %v3134 = vadd.f32 0.0, %v3133
      %v3135 = vpop.f32.mrb[0].mxu0
      %v3136 = vpop.f32.mrb[0].mxu0
      %v3137 = vadd.f32 0.0, %v3136
      %v3138 = vpop.f32.mrb[0].mxu0
      %3139 = vmatprep.mubr.bf16.mxu0 0
      %3140 = vmatmul.mubr.bf16.gmra.mrb[0].mxu0 %v3005
      %v3141 = vpop.f32.mrb[0].mxu0
      %v3142 = vadd.f32 0.0, %v3141
      %v3143 = vpop.f32.mrb[0].mxu0
      %v3144 = vpop.f32.mrb[0].mxu0
      %v3145 = vadd.f32 0.0, %v3144
      %v3146 = vpop.f32.mrb[0].mxu0
      %3147 = vmatprep.mubr.bf16.mxu0 0
      %3148 = vmatmul.mubr.bf16.gmra.mrb[0].mxu0 %v3008
      %v3149 = vpop.f32.mrb[0].mxu0
      %v3150 = vadd.f32 0.0, %v3149
      %v3151 = vpop.f32.mrb[0].mxu0
      %v3152 = vpop.f32.mrb[0].mxu0
      %v3153 = vadd.f32 0.0, %v3152
      %v3154 = vpop.f32.mrb[0].mxu0
      %3155 = vmatprep.mubr.bf16.mxu0 0
      %3156 = vmatmul.mubr.bf16.gmra.mrb[0].mxu0 %v3011
      %v3157 = vpop.f32.mrb[0].mxu0
      %v3158 = vadd.f32 0.0, %v3157
      %v3159 = vpop.f32.mrb[0].mxu0
      %v3160 = vpop.f32.mrb[0].mxu0
      %v3161 = vadd.f32 0.0, %v3160
      %v3162 = vpop.f32.mrb[0].mxu0
      %3163 = vmatprep.mubr.bf16.mxu0 0
      %3164 = vmatmul.mubr.bf16.gmra.mrb[0].mxu0 %v3014
      %v3165 = vpop.f32.mrb[0].mxu0
      %v3166 = vadd.f32 0.0, %v3165
      %v3167 = vpop.f32.mrb[0].mxu0
      %v3168 = vpop.f32.mrb[0].mxu0
      %v3169 = vadd.f32 0.0, %v3168
      %v3170 = vpop.f32.mrb[0].mxu0
      %3171 = vmatprep.mubr.bf16.mxu0 0
      %3172 = vmatmul.mubr.bf16.gmra.mrb[0].mxu0 %v3017
      %v3173 = vpop.f32.mrb[0].mxu0
      %v3174 = vadd.f32 0.0, %v3173
      %v3175 = vpop.f32.mrb[0].mxu0
      %v3176 = vpop.f32.mrb[0].mxu0
      %v3177 = vadd.f32 0.0, %v3176
      %v3178 = vpop.f32.mrb[0].mxu0
      %3179 = vdwg.mxu0
      %v3180 = vadd.f32 %v2873, %v3054
      %v3181 = vadd.f32 %v2874, %v3057
      %v3182 = vadd.f32 %v2875, %v3062
      %v3183 = vadd.f32 %v2876, %v3065
      %v3184 = vadd.f32 %v2877, %v3070
      %v3185 = vadd.f32 %v2878, %v3073
      %v3186 = vadd.f32 %v2879, %v3078
      %v3187 = vadd.f32 %v2880, %v3081
      %v3188 = vadd.f32 %v2881, %v3086
      %v3189 = vadd.f32 %v2882, %v3089
      %v3190 = vadd.f32 %v2883, %v3094
      %v3191 = vadd.f32 %v2884, %v3097
      %v3192 = vadd.f32 %v2885, %v3102
      %v3193 = vadd.f32 %v2886, %v3105
      %v3194 = vadd.f32 %v2887, %v3110
      %v3195 = vadd.f32 %v2888, %v3113
      %v3196 = vadd.f32 %v2889, %v3118
      %v3197 = vadd.f32 %v2890, %v3121
      %v3198 = vadd.f32 %v2891, %v3126
      %v3199 = vadd.f32 %v2892, %v3129
      %v3200 = vadd.f32 %v2893, %v3134
      %v3201 = vadd.f32 %v2894, %v3137
      %v3202 = vadd.f32 %v2895, %v3142
      %v3203 = vadd.f32 %v2896, %v3145
      %v3204 = vadd.f32 %v2897, %v3150
      %v3205 = vadd.f32 %v2898, %v3153
      %v3206 = vadd.f32 %v2899, %v3158
      %v3207 = vadd.f32 %v2900, %v3161
      %v3208 = vadd.f32 %v2901, %v3166
      %v3209 = vadd.f32 %v2902, %v3169
      %v3210 = vadd.f32 %v2903, %v3174
      %v3211 = vadd.f32 %v2904, %v3177
      %v3212 = vld [vmem:[%s2905 + $0x1] sm:$0xff]
      %v3213 = vld [vmem:[%s2905 + $0x9] sm:$0xff]
      %v3214 = vld [vmem:[%s2905 + $0x19] sm:$0xff]
      %v3215 = vld [vmem:[%s2905 + $0x21] sm:$0xff]
      %v3216 = vld [vmem:[%s2905 + $0x31] sm:$0xff]
      %v3217 = vld [vmem:[%s2905 + $0x39] sm:$0xff]
      %v3218 = vld [vmem:[%s2905 + $0x49] sm:$0xff]
      %v3219 = vld [vmem:[%s2905 + $0x51] sm:$0xff]
      %v3220 = vld [vmem:[%s2905 + $0x61] sm:$0xff]
      %v3221 = vld [vmem:[%s2905 + $0x69] sm:$0xff]
      %v3222 = vld [vmem:[%s2905 + $0x79] sm:$0xff]
      %v3223 = vld [vmem:[%s2905 + $0x81] sm:$0xff]
      %v3224 = vld [vmem:[%s2905 + $0x91] sm:$0xff]
      %v3225 = vld [vmem:[%s2905 + $0x99] sm:$0xff]
      %v3226 = vld [vmem:[%s2905 + $0xa9] sm:$0xff]
      %v3227 = vld [vmem:[%s2905 + $0xb1] sm:$0xff]
      %v3228 = vld [vmem:[%s2905 + $0xc1] sm:$0xff]
      %v3229 = vld [vmem:[%s2905 + $0xc9] sm:$0xff]
      %v3230 = vld [vmem:[%s2905 + $0xd9] sm:$0xff]
      %v3231 = vld [vmem:[%s2905 + $0xe1] sm:$0xff]
      %v3232 = vld [vmem:[%s2905 + $0xf1] sm:$0xff]
      %v3233 = vld [vmem:[%s2905 + $0xf9] sm:$0xff]
      %v3234 = vld [vmem:[%s2905 + $0x109] sm:$0xff]
      %v3235 = vld [vmem:[%s2905 + $0x111] sm:$0xff]
      %v3236 = vld [vmem:[%s2905 + $0x121] sm:$0xff]
      %v3237 = vld [vmem:[%s2905 + $0x129] sm:$0xff]
      %v3238 = vld [vmem:[%s2905 + $0x139] sm:$0xff]
      %v3239 = vld [vmem:[%s2905 + $0x141] sm:$0xff]
      %v3240 = vld [vmem:[%s2905 + $0x151] sm:$0xff]
      %v3241 = vld [vmem:[%s2905 + $0x159] sm:$0xff]
      %v3242 = vld [vmem:[%s2905 + $0x169] sm:$0xff]
      %v3243 = vld [vmem:[%s2905 + $0x171] sm:$0xff]
      %v3244 = vpack.c.bf16 %v3213, %v3212
      %v3245 = vpack.c.bf16 %v3215, %v3214
      %v3246 = vpack.c.bf16 %v3217, %v3216
      %v3247 = vpack.c.bf16 %v3219, %v3218
      %v3248 = vpack.c.bf16 %v3221, %v3220
      %v3249 = vpack.c.bf16 %v3223, %v3222
      %v3250 = vpack.c.bf16 %v3225, %v3224
      %v3251 = vpack.c.bf16 %v3227, %v3226
      %v3252 = vpack.c.bf16 %v3229, %v3228
      %v3253 = vpack.c.bf16 %v3231, %v3230
      %v3254 = vpack.c.bf16 %v3233, %v3232
      %v3255 = vpack.c.bf16 %v3235, %v3234
      %v3256 = vpack.c.bf16 %v3237, %v3236
      %v3257 = vpack.c.bf16 %v3239, %v3238
      %v3258 = vpack.c.bf16 %v3241, %v3240
      %v3259 = vpack.c.bf16 %v3243, %v3242
      %s3260 = scalar_lea.vmem %s5, 112
      %v3261 = vld [vmem:[%s3260] sm:$0xf]
      %v3262 = vld [vmem:[%s3260 + $0x4] sm:$0xf]
      %v3263 = vld [vmem:[%s3260 + $0x8] sm:$0xf]
      %v3264 = vld [vmem:[%s3260 + $0xc] sm:$0xf]
      %v3269 = vunpack.c.l.b16 %v3261
      %v3270 = vunpack.c.l.b16 %v3262
      %v3271 = vunpack.c.l.b16 %v3263
      %v3272 = vunpack.c.l.b16 %v3264
      %v3273 = vpack.c.b16 %v3270, %v3269
      %v3274 = vpack.c.b16 %v3272, %v3271
      %v3278 = vsel %vm740, %v3244, 0
      %v3281 = vsel %vm740, %v3245, 0
      %v3284 = vsel %vm740, %v3246, 0
      %v3287 = vsel %vm740, %v3247, 0
      %v3290 = vsel %vm740, %v3248, 0
      %v3293 = vsel %vm740, %v3249, 0
      %v3296 = vsel %vm740, %v3250, 0
      %v3299 = vsel %vm740, %v3251, 0
      %v3302 = vsel %vm740, %v3252, 0
      %v3305 = vsel %vm740, %v3253, 0
      %v3308 = vsel %vm740, %v3254, 0
      %v3311 = vsel %vm740, %v3255, 0
      %v3314 = vsel %vm740, %v3256, 0
      %v3317 = vsel %vm740, %v3257, 0
      %v3320 = vsel %vm740, %v3258, 0
      %v3323 = vsel %vm740, %v3259, 0
      %3325 = vmatprep.subr.bf16.mxu0 0
      %3326 = vmatpush1.bf16.msra.mxu0 %v3273
      %3327 = vmatprep.subr.bf16.mxu0 0
      %3328 = vmatpush1.bf16.msra.mxu0 %v3274
      %3329 = vmatprep.subr.bf16.mxu0 0
      %3330 = vmatpush1.bf16.msra.mxu0 0
      %3331 = vmatprep.subr.bf16.mxu0 0
      %3332 = vmatpush1.bf16.msra.mxu0 0
      %3333 = vmatprep.subr.bf16.mxu0 0
      %3334 = vmatpush1.bf16.msra.mxu0 0
      %3335 = vmatprep.subr.bf16.mxu0 0
      %3336 = vmatpush1.bf16.msra.mxu0 0
      %3337 = vmatprep.subr.bf16.mxu0 0
      %3338 = vmatpush1.bf16.msra.mxu0 0
      %3339 = vmatprep.subr.bf16.mxu0 0
      %3340 = vmatpush1.bf16.msra.mxu0 0
      %3341 = vmatprep.subr.bf16.mxu0 0
      %3342 = vmatpush1.bf16.msra.mxu0 0
      %3343 = vmatprep.subr.bf16.mxu0 0
      %3344 = vmatpush1.bf16.msra.mxu0 0
      %3345 = vmatprep.subr.bf16.mxu0 0
      %3346 = vmatpush1.bf16.msra.mxu0 0
      %3347 = vmatprep.subr.bf16.mxu0 0
      %3348 = vmatpush1.bf16.msra.mxu0 0
      %3349 = vmatprep.subr.bf16.mxu0 0
      %3350 = vmatpush1.bf16.msra.mxu0 0
      %3351 = vmatprep.subr.bf16.mxu0 0
      %3352 = vmatpush1.bf16.msra.mxu0 0
      %3353 = vmatprep.subr.bf16.mxu0 0
      %3354 = vmatpush1.bf16.msra.mxu0 0
      %3355 = vmatprep.subr.bf16.mxu0 0
      %3356 = vmatpush1.bf16.msra.mxu0 0
      %3357 = vmatprep.mubr.bf16.mxu0 0
      %3358 = vmatmul.mubr.bf16.gmra.mrb[0].mxu0 %v3278
      %v3359 = vpop.f32.mrb[0].mxu0
      %v3360 = vadd.f32 0.0, %v3359
      %v3361 = vpop.f32.mrb[0].mxu0
      %v3362 = vpop.f32.mrb[0].mxu0
      %v3363 = vadd.f32 0.0, %v3362
      %v3364 = vpop.f32.mrb[0].mxu0
      %3365 = vmatprep.mubr.bf16.mxu0 0
      %3366 = vmatmul.mubr.bf16.gmra.mrb[0].mxu0 %v3281
      %v3367 = vpop.f32.mrb[0].mxu0
      %v3368 = vadd.f32 0.0, %v3367
      %v3369 = vpop.f32.mrb[0].mxu0
      %v3370 = vpop.f32.mrb[0].mxu0
      %v3371 = vadd.f32 0.0, %v3370
      %v3372 = vpop.f32.mrb[0].mxu0
      %3373 = vmatprep.mubr.bf16.mxu0 0
      %3374 = vmatmul.mubr.bf16.gmra.mrb[0].mxu0 %v3284
      %v3375 = vpop.f32.mrb[0].mxu0
      %v3376 = vadd.f32 0.0, %v3375
      %v3377 = vpop.f32.mrb[0].mxu0
      %v3378 = vpop.f32.mrb[0].mxu0
      %v3379 = vadd.f32 0.0, %v3378
      %v3380 = vpop.f32.mrb[0].mxu0
      %3381 = vmatprep.mubr.bf16.mxu0 0
      %3382 = vmatmul.mubr.bf16.gmra.mrb[0].mxu0 %v3287
      %v3383 = vpop.f32.mrb[0].mxu0
      %v3384 = vadd.f32 0.0, %v3383
      %v3385 = vpop.f32.mrb[0].mxu0
      %v3386 = vpop.f32.mrb[0].mxu0
      %v3387 = vadd.f32 0.0, %v3386
      %v3388 = vpop.f32.mrb[0].mxu0
      %3389 = vmatprep.mubr.bf16.mxu0 0
      %3390 = vmatmul.mubr.bf16.gmra.mrb[0].mxu0 %v3290
      %v3391 = vpop.f32.mrb[0].mxu0
      %v3392 = vadd.f32 0.0, %v3391
      %v3393 = vpop.f32.mrb[0].mxu0
      %v3394 = vpop.f32.mrb[0].mxu0
      %v3395 = vadd.f32 0.0, %v3394
      %v3396 = vpop.f32.mrb[0].mxu0
      %3397 = vmatprep.mubr.bf16.mxu0 0
      %3398 = vmatmul.mubr.bf16.gmra.mrb[0].mxu0 %v3293
      %v3399 = vpop.f32.mrb[0].mxu0
      %v3400 = vadd.f32 0.0, %v3399
      %v3401 = vpop.f32.mrb[0].mxu0
      %v3402 = vpop.f32.mrb[0].mxu0
      %v3403 = vadd.f32 0.0, %v3402
      %v3404 = vpop.f32.mrb[0].mxu0
      %3405 = vmatprep.mubr.bf16.mxu0 0
      %3406 = vmatmul.mubr.bf16.gmra.mrb[0].mxu0 %v3296
      %v3407 = vpop.f32.mrb[0].mxu0
      %v3408 = vadd.f32 0.0, %v3407
      %v3409 = vpop.f32.mrb[0].mxu0
      %v3410 = vpop.f32.mrb[0].mxu0
      %v3411 = vadd.f32 0.0, %v3410
      %v3412 = vpop.f32.mrb[0].mxu0
      %3413 = vmatprep.mubr.bf16.mxu0 0
      %3414 = vmatmul.mubr.bf16.gmra.mrb[0].mxu0 %v3299
      %v3415 = vpop.f32.mrb[0].mxu0
      %v3416 = vadd.f32 0.0, %v3415
      %v3417 = vpop.f32.mrb[0].mxu0
      %v3418 = vpop.f32.mrb[0].mxu0
      %v3419 = vadd.f32 0.0, %v3418
      %v3420 = vpop.f32.mrb[0].mxu0
      %3421 = vmatprep.mubr.bf16.mxu0 0
      %3422 = vmatmul.mubr.bf16.gmra.mrb[0].mxu0 %v3302
      %v3423 = vpop.f32.mrb[0].mxu0
      %v3424 = vadd.f32 0.0, %v3423
      %v3425 = vpop.f32.mrb[0].mxu0
      %v3426 = vpop.f32.mrb[0].mxu0
      %v3427 = vadd.f32 0.0, %v3426
      %v3428 = vpop.f32.mrb[0].mxu0
      %3429 = vmatprep.mubr.bf16.mxu0 0
      %3430 = vmatmul.mubr.bf16.gmra.mrb[0].mxu0 %v3305
      %v3431 = vpop.f32.mrb[0].mxu0
      %v3432 = vadd.f32 0.0, %v3431
      %v3433 = vpop.f32.mrb[0].mxu0
      %v3434 = vpop.f32.mrb[0].mxu0
      %v3435 = vadd.f32 0.0, %v3434
      %v3436 = vpop.f32.mrb[0].mxu0
      %3437 = vmatprep.mubr.bf16.mxu0 0
      %3438 = vmatmul.mubr.bf16.gmra.mrb[0].mxu0 %v3308
      %v3439 = vpop.f32.mrb[0].mxu0
      %v3440 = vadd.f32 0.0, %v3439
      %v3441 = vpop.f32.mrb[0].mxu0
      %v3442 = vpop.f32.mrb[0].mxu0
      %v3443 = vadd.f32 0.0, %v3442
      %v3444 = vpop.f32.mrb[0].mxu0
      %3445 = vmatprep.mubr.bf16.mxu0 0
      %3446 = vmatmul.mubr.bf16.gmra.mrb[0].mxu0 %v3311
      %v3447 = vpop.f32.mrb[0].mxu0
      %v3448 = vadd.f32 0.0, %v3447
      %v3449 = vpop.f32.mrb[0].mxu0
      %v3450 = vpop.f32.mrb[0].mxu0
      %v3451 = vadd.f32 0.0, %v3450
      %v3452 = vpop.f32.mrb[0].mxu0
      %3453 = vmatprep.mubr.bf16.mxu0 0
      %3454 = vmatmul.mubr.bf16.gmra.mrb[0].mxu0 %v3314
      %v3455 = vpop.f32.mrb[0].mxu0
      %v3456 = vadd.f32 0.0, %v3455
      %v3457 = vpop.f32.mrb[0].mxu0
      %v3458 = vpop.f32.mrb[0].mxu0
      %v3459 = vadd.f32 0.0, %v3458
      %v3460 = vpop.f32.mrb[0].mxu0
      %3461 = vmatprep.mubr.bf16.mxu0 0
      %3462 = vmatmul.mubr.bf16.gmra.mrb[0].mxu0 %v3317
      %v3463 = vpop.f32.mrb[0].mxu0
      %v3464 = vadd.f32 0.0, %v3463
      %v3465 = vpop.f32.mrb[0].mxu0
      %v3466 = vpop.f32.mrb[0].mxu0
      %v3467 = vadd.f32 0.0, %v3466
      %v3468 = vpop.f32.mrb[0].mxu0
      %3469 = vmatprep.mubr.bf16.mxu0 0
      %3470 = vmatmul.mubr.bf16.gmra.mrb[0].mxu0 %v3320
      %v3471 = vpop.f32.mrb[0].mxu0
      %v3472 = vadd.f32 0.0, %v3471
      %v3473 = vpop.f32.mrb[0].mxu0
      %v3474 = vpop.f32.mrb[0].mxu0
      %v3475 = vadd.f32 0.0, %v3474
      %v3476 = vpop.f32.mrb[0].mxu0
      %3477 = vmatprep.mubr.bf16.mxu0 0
      %3478 = vmatmul.mubr.bf16.gmra.mrb[0].mxu0 %v3323
      %v3479 = vpop.f32.mrb[0].mxu0
      %v3480 = vadd.f32 0.0, %v3479
      %v3481 = vpop.f32.mrb[0].mxu0
      %v3482 = vpop.f32.mrb[0].mxu0
      %v3483 = vadd.f32 0.0, %v3482
      %v3484 = vpop.f32.mrb[0].mxu0
      %3485 = vdwg.mxu0
      %v3486 = vadd.f32 %v3180, %v3360
      %v3487 = vadd.f32 %v3181, %v3363
      %v3488 = vadd.f32 %v3182, %v3368
      %v3489 = vadd.f32 %v3183, %v3371
      %v3490 = vadd.f32 %v3184, %v3376
      %v3491 = vadd.f32 %v3185, %v3379
      %v3492 = vadd.f32 %v3186, %v3384
      %v3493 = vadd.f32 %v3187, %v3387
      %v3494 = vadd.f32 %v3188, %v3392
      %v3495 = vadd.f32 %v3189, %v3395
      %v3496 = vadd.f32 %v3190, %v3400
      %v3497 = vadd.f32 %v3191, %v3403
      %v3498 = vadd.f32 %v3192, %v3408
      %v3499 = vadd.f32 %v3193, %v3411
      %v3500 = vadd.f32 %v3194, %v3416
      %v3501 = vadd.f32 %v3195, %v3419
      %v3502 = vadd.f32 %v3196, %v3424
      %v3503 = vadd.f32 %v3197, %v3427
      %v3504 = vadd.f32 %v3198, %v3432
      %v3505 = vadd.f32 %v3199, %v3435
      %v3506 = vadd.f32 %v3200, %v3440
      %v3507 = vadd.f32 %v3201, %v3443
      %v3508 = vadd.f32 %v3202, %v3448
      %v3509 = vadd.f32 %v3203, %v3451
      %v3510 = vadd.f32 %v3204, %v3456
      %v3511 = vadd.f32 %v3205, %v3459
      %v3512 = vadd.f32 %v3206, %v3464
      %v3513 = vadd.f32 %v3207, %v3467
      %v3514 = vadd.f32 %v3208, %v3472
      %v3515 = vadd.f32 %v3209, %v3475
      %v3516 = vadd.f32 %v3210, %v3480
      %v3517 = vadd.f32 %v3211, %v3483
      %v3518 = vld [vmem:[%s2905 + $0x2] sm:$0xff]
      %v3519 = vld [vmem:[%s2905 + $0xa] sm:$0xff]
      %v3520 = vld [vmem:[%s2905 + $0x1a] sm:$0xff]
      %v3521 = vld [vmem:[%s2905 + $0x22] sm:$0xff]
      %v3522 = vld [vmem:[%s2905 + $0x32] sm:$0xff]
      %v3523 = vld [vmem:[%s2905 + $0x3a] sm:$0xff]
      %v3524 = vld [vmem:[%s2905 + $0x4a] sm:$0xff]
      %v3525 = vld [vmem:[%s2905 + $0x52] sm:$0xff]
      %v3526 = vld [vmem:[%s2905 + $0x62] sm:$0xff]
      %v3527 = vld [vmem:[%s2905 + $0x6a] sm:$0xff]
      %v3528 = vld [vmem:[%s2905 + $0x7a] sm:$0xff]
      %v3529 = vld [vmem:[%s2905 + $0x82] sm:$0xff]
      %v3530 = vld [vmem:[%s2905 + $0x92] sm:$0xff]
      %v3531 = vld [vmem:[%s2905 + $0x9a] sm:$0xff]
      %v3532 = vld [vmem:[%s2905 + $0xaa] sm:$0xff]
      %v3533 = vld [vmem:[%s2905 + $0xb2] sm:$0xff]
      %v3534 = vld [vmem:[%s2905 + $0xc2] sm:$0xff]
      %v3535 = vld [vmem:[%s2905 + $0xca] sm:$0xff]
      %v3536 = vld [vmem:[%s2905 + $0xda] sm:$0xff]
      %v3537 = vld [vmem:[%s2905 + $0xe2] sm:$0xff]
      %v3538 = vld [vmem:[%s2905 + $0xf2] sm:$0xff]
      %v3539 = vld [vmem:[%s2905 + $0xfa] sm:$0xff]
      %v3540 = vld [vmem:[%s2905 + $0x10a] sm:$0xff]
      %v3541 = vld [vmem:[%s2905 + $0x112] sm:$0xff]
      %v3542 = vld [vmem:[%s2905 + $0x122] sm:$0xff]
      %v3543 = vld [vmem:[%s2905 + $0x12a] sm:$0xff]
      %v3544 = vld [vmem:[%s2905 + $0x13a] sm:$0xff]
      %v3545 = vld [vmem:[%s2905 + $0x142] sm:$0xff]
      %v3546 = vld [vmem:[%s2905 + $0x152] sm:$0xff]
      %v3547 = vld [vmem:[%s2905 + $0x15a] sm:$0xff]
      %v3548 = vld [vmem:[%s2905 + $0x16a] sm:$0xff]
      %v3549 = vld [vmem:[%s2905 + $0x172] sm:$0xff]
      %v3550 = vpack.c.bf16 %v3519, %v3518
      %v3551 = vpack.c.bf16 %v3521, %v3520
      %v3552 = vpack.c.bf16 %v3523, %v3522
      %v3553 = vpack.c.bf16 %v3525, %v3524
      %v3554 = vpack.c.bf16 %v3527, %v3526
      %v3555 = vpack.c.bf16 %v3529, %v3528
      %v3556 = vpack.c.bf16 %v3531, %v3530
      %v3557 = vpack.c.bf16 %v3533, %v3532
      %v3558 = vpack.c.bf16 %v3535, %v3534
      %v3559 = vpack.c.bf16 %v3537, %v3536
      %v3560 = vpack.c.bf16 %v3539, %v3538
      %v3561 = vpack.c.bf16 %v3541, %v3540
      %v3562 = vpack.c.bf16 %v3543, %v3542
      %v3563 = vpack.c.bf16 %v3545, %v3544
      %v3564 = vpack.c.bf16 %v3547, %v3546
      %v3565 = vpack.c.bf16 %v3549, %v3548
      %s3566 = scalar_lea.vmem %s5, 128
      %v3567 = vld [vmem:[%s3566] sm:$0xf]
      %v3568 = vld [vmem:[%s3566 + $0x4] sm:$0xf]
      %v3569 = vld [vmem:[%s3566 + $0x8] sm:$0xf]
      %v3570 = vld [vmem:[%s3566 + $0xc] sm:$0xf]
      %v3575 = vunpack.c.l.b16 %v3567
      %v3576 = vunpack.c.l.b16 %v3568
      %v3577 = vunpack.c.l.b16 %v3569
      %v3578 = vunpack.c.l.b16 %v3570
      %v3579 = vpack.c.b16 %v3576, %v3575
      %v3580 = vpack.c.b16 %v3578, %v3577
      %v3584 = vsel %vm740, %v3550, 0
      %v3587 = vsel %vm740, %v3551, 0
      %v3590 = vsel %vm740, %v3552, 0
      %v3593 = vsel %vm740, %v3553, 0
      %v3596 = vsel %vm740, %v3554, 0
      %v3599 = vsel %vm740, %v3555, 0
      %v3602 = vsel %vm740, %v3556, 0
      %v3605 = vsel %vm740, %v3557, 0
      %v3608 = vsel %vm740, %v3558, 0
      %v3611 = vsel %vm740, %v3559, 0
      %v3614 = vsel %vm740, %v3560, 0
      %v3617 = vsel %vm740, %v3561, 0
      %v3620 = vsel %vm740, %v3562, 0
      %v3623 = vsel %vm740, %v3563, 0
      %v3626 = vsel %vm740, %v3564, 0
      %v3629 = vsel %vm740, %v3565, 0
      %3631 = vmatprep.subr.bf16.mxu0 0
      %3632 = vmatpush1.bf16.msra.mxu0 %v3579
      %3633 = vmatprep.subr.bf16.mxu0 0
      %3634 = vmatpush1.bf16.msra.mxu0 %v3580
      %3635 = vmatprep.subr.bf16.mxu0 0
      %3636 = vmatpush1.bf16.msra.mxu0 0
      %3637 = vmatprep.subr.bf16.mxu0 0
      %3638 = vmatpush1.bf16.msra.mxu0 0
      %3639 = vmatprep.subr.bf16.mxu0 0
      %3640 = vmatpush1.bf16.msra.mxu0 0
      %3641 = vmatprep.subr.bf16.mxu0 0
      %3642 = vmatpush1.bf16.msra.mxu0 0
      %3643 = vmatprep.subr.bf16.mxu0 0
      %3644 = vmatpush1.bf16.msra.mxu0 0
      %3645 = vmatprep.subr.bf16.mxu0 0
      %3646 = vmatpush1.bf16.msra.mxu0 0
      %3647 = vmatprep.subr.bf16.mxu0 0
      %3648 = vmatpush1.bf16.msra.mxu0 0
      %3649 = vmatprep.subr.bf16.mxu0 0
      %3650 = vmatpush1.bf16.msra.mxu0 0
      %3651 = vmatprep.subr.bf16.mxu0 0
      %3652 = vmatpush1.bf16.msra.mxu0 0
      %3653 = vmatprep.subr.bf16.mxu0 0
      %3654 = vmatpush1.bf16.msra.mxu0 0
      %3655 = vmatprep.subr.bf16.mxu0 0
      %3656 = vmatpush1.bf16.msra.mxu0 0
      %3657 = vmatprep.subr.bf16.mxu0 0
      %3658 = vmatpush1.bf16.msra.mxu0 0
      %3659 = vmatprep.subr.bf16.mxu0 0
      %3660 = vmatpush1.bf16.msra.mxu0 0
      %3661 = vmatprep.subr.bf16.mxu0 0
      %3662 = vmatpush1.bf16.msra.mxu0 0
      %3663 = vmatprep.mubr.bf16.mxu0 0
      %3664 = vmatmul.mubr.bf16.gmra.mrb[0].mxu0 %v3584
      %v3665 = vpop.f32.mrb[0].mxu0
      %v3666 = vadd.f32 0.0, %v3665
      %v3667 = vpop.f32.mrb[0].mxu0
      %v3668 = vpop.f32.mrb[0].mxu0
      %v3669 = vadd.f32 0.0, %v3668
      %v3670 = vpop.f32.mrb[0].mxu0
      %3671 = vmatprep.mubr.bf16.mxu0 0
      %3672 = vmatmul.mubr.bf16.gmra.mrb[0].mxu0 %v3587
      %v3673 = vpop.f32.mrb[0].mxu0
      %v3674 = vadd.f32 0.0, %v3673
      %v3675 = vpop.f32.mrb[0].mxu0
      %v3676 = vpop.f32.mrb[0].mxu0
      %v3677 = vadd.f32 0.0, %v3676
      %v3678 = vpop.f32.mrb[0].mxu0
      %3679 = vmatprep.mubr.bf16.mxu0 0
      %3680 = vmatmul.mubr.bf16.gmra.mrb[0].mxu0 %v3590
      %v3681 = vpop.f32.mrb[0].mxu0
      %v3682 = vadd.f32 0.0, %v3681
      %v3683 = vpop.f32.mrb[0].mxu0
      %v3684 = vpop.f32.mrb[0].mxu0
      %v3685 = vadd.f32 0.0, %v3684
      %v3686 = vpop.f32.mrb[0].mxu0
      %3687 = vmatprep.mubr.bf16.mxu0 0
      %3688 = vmatmul.mubr.bf16.gmra.mrb[0].mxu0 %v3593
      %v3689 = vpop.f32.mrb[0].mxu0
      %v3690 = vadd.f32 0.0, %v3689
      %v3691 = vpop.f32.mrb[0].mxu0
      %v3692 = vpop.f32.mrb[0].mxu0
      %v3693 = vadd.f32 0.0, %v3692
      %v3694 = vpop.f32.mrb[0].mxu0
      %3695 = vmatprep.mubr.bf16.mxu0 0
      %3696 = vmatmul.mubr.bf16.gmra.mrb[0].mxu0 %v3596
      %v3697 = vpop.f32.mrb[0].mxu0
      %v3698 = vadd.f32 0.0, %v3697
      %v3699 = vpop.f32.mrb[0].mxu0
      %v3700 = vpop.f32.mrb[0].mxu0
      %v3701 = vadd.f32 0.0, %v3700
      %v3702 = vpop.f32.mrb[0].mxu0
      %3703 = vmatprep.mubr.bf16.mxu0 0
      %3704 = vmatmul.mubr.bf16.gmra.mrb[0].mxu0 %v3599
      %v3705 = vpop.f32.mrb[0].mxu0
      %v3706 = vadd.f32 0.0, %v3705
      %v3707 = vpop.f32.mrb[0].mxu0
      %v3708 = vpop.f32.mrb[0].mxu0
      %v3709 = vadd.f32 0.0, %v3708
      %v3710 = vpop.f32.mrb[0].mxu0
      %3711 = vmatprep.mubr.bf16.mxu0 0
      %3712 = vmatmul.mubr.bf16.gmra.mrb[0].mxu0 %v3602
      %v3713 = vpop.f32.mrb[0].mxu0
      %v3714 = vadd.f32 0.0, %v3713
      %v3715 = vpop.f32.mrb[0].mxu0
      %v3716 = vpop.f32.mrb[0].mxu0
      %v3717 = vadd.f32 0.0, %v3716
      %v3718 = vpop.f32.mrb[0].mxu0
      %3719 = vmatprep.mubr.bf16.mxu0 0
      %3720 = vmatmul.mubr.bf16.gmra.mrb[0].mxu0 %v3605
      %v3721 = vpop.f32.mrb[0].mxu0
      %v3722 = vadd.f32 0.0, %v3721
      %v3723 = vpop.f32.mrb[0].mxu0
      %v3724 = vpop.f32.mrb[0].mxu0
      %v3725 = vadd.f32 0.0, %v3724
      %v3726 = vpop.f32.mrb[0].mxu0
      %3727 = vmatprep.mubr.bf16.mxu0 0
      %3728 = vmatmul.mubr.bf16.gmra.mrb[0].mxu0 %v3608
      %v3729 = vpop.f32.mrb[0].mxu0
      %v3730 = vadd.f32 0.0, %v3729
      %v3731 = vpop.f32.mrb[0].mxu0
      %v3732 = vpop.f32.mrb[0].mxu0
      %v3733 = vadd.f32 0.0, %v3732
      %v3734 = vpop.f32.mrb[0].mxu0
      %3735 = vmatprep.mubr.bf16.mxu0 0
      %3736 = vmatmul.mubr.bf16.gmra.mrb[0].mxu0 %v3611
      %v3737 = vpop.f32.mrb[0].mxu0
      %v3738 = vadd.f32 0.0, %v3737
      %v3739 = vpop.f32.mrb[0].mxu0
      %v3740 = vpop.f32.mrb[0].mxu0
      %v3741 = vadd.f32 0.0, %v3740
      %v3742 = vpop.f32.mrb[0].mxu0
      %3743 = vmatprep.mubr.bf16.mxu0 0
      %3744 = vmatmul.mubr.bf16.gmra.mrb[0].mxu0 %v3614
      %v3745 = vpop.f32.mrb[0].mxu0
      %v3746 = vadd.f32 0.0, %v3745
      %v3747 = vpop.f32.mrb[0].mxu0
      %v3748 = vpop.f32.mrb[0].mxu0
      %v3749 = vadd.f32 0.0, %v3748
      %v3750 = vpop.f32.mrb[0].mxu0
      %3751 = vmatprep.mubr.bf16.mxu0 0
      %3752 = vmatmul.mubr.bf16.gmra.mrb[0].mxu0 %v3617
      %v3753 = vpop.f32.mrb[0].mxu0
      %v3754 = vadd.f32 0.0, %v3753
      %v3755 = vpop.f32.mrb[0].mxu0
      %v3756 = vpop.f32.mrb[0].mxu0
      %v3757 = vadd.f32 0.0, %v3756
      %v3758 = vpop.f32.mrb[0].mxu0
      %3759 = vmatprep.mubr.bf16.mxu0 0
      %3760 = vmatmul.mubr.bf16.gmra.mrb[0].mxu0 %v3620
      %v3761 = vpop.f32.mrb[0].mxu0
      %v3762 = vadd.f32 0.0, %v3761
      %v3763 = vpop.f32.mrb[0].mxu0
      %v3764 = vpop.f32.mrb[0].mxu0
      %v3765 = vadd.f32 0.0, %v3764
      %v3766 = vpop.f32.mrb[0].mxu0
      %3767 = vmatprep.mubr.bf16.mxu0 0
      %3768 = vmatmul.mubr.bf16.gmra.mrb[0].mxu0 %v3623
      %v3769 = vpop.f32.mrb[0].mxu0
      %v3770 = vadd.f32 0.0, %v3769
      %v3771 = vpop.f32.mrb[0].mxu0
      %v3772 = vpop.f32.mrb[0].mxu0
      %v3773 = vadd.f32 0.0, %v3772
      %v3774 = vpop.f32.mrb[0].mxu0
      %3775 = vmatprep.mubr.bf16.mxu0 0
      %3776 = vmatmul.mubr.bf16.gmra.mrb[0].mxu0 %v3626
      %v3777 = vpop.f32.mrb[0].mxu0
      %v3778 = vadd.f32 0.0, %v3777
      %v3779 = vpop.f32.mrb[0].mxu0
      %v3780 = vpop.f32.mrb[0].mxu0
      %v3781 = vadd.f32 0.0, %v3780
      %v3782 = vpop.f32.mrb[0].mxu0
      %3783 = vmatprep.mubr.bf16.mxu0 0
      %3784 = vmatmul.mubr.bf16.gmra.mrb[0].mxu0 %v3629
      %v3785 = vpop.f32.mrb[0].mxu0
      %v3786 = vadd.f32 0.0, %v3785
      %v3787 = vpop.f32.mrb[0].mxu0
      %v3788 = vpop.f32.mrb[0].mxu0
      %v3789 = vadd.f32 0.0, %v3788
      %v3790 = vpop.f32.mrb[0].mxu0
      %3791 = vdwg.mxu0
      %v3792 = vadd.f32 %v3486, %v3666
      %v3793 = vadd.f32 %v3487, %v3669
      %v3794 = vadd.f32 %v3488, %v3674
      %v3795 = vadd.f32 %v3489, %v3677
      %v3796 = vadd.f32 %v3490, %v3682
      %v3797 = vadd.f32 %v3491, %v3685
      %v3798 = vadd.f32 %v3492, %v3690
      %v3799 = vadd.f32 %v3493, %v3693
      %v3800 = vadd.f32 %v3494, %v3698
      %v3801 = vadd.f32 %v3495, %v3701
      %v3802 = vadd.f32 %v3496, %v3706
      %v3803 = vadd.f32 %v3497, %v3709
      %v3804 = vadd.f32 %v3498, %v3714
      %v3805 = vadd.f32 %v3499, %v3717
      %v3806 = vadd.f32 %v3500, %v3722
      %v3807 = vadd.f32 %v3501, %v3725
      %v3808 = vadd.f32 %v3502, %v3730
      %v3809 = vadd.f32 %v3503, %v3733
      %v3810 = vadd.f32 %v3504, %v3738
      %v3811 = vadd.f32 %v3505, %v3741
      %v3812 = vadd.f32 %v3506, %v3746
      %v3813 = vadd.f32 %v3507, %v3749
      %v3814 = vadd.f32 %v3508, %v3754
      %v3815 = vadd.f32 %v3509, %v3757
      %v3816 = vadd.f32 %v3510, %v3762
      %v3817 = vadd.f32 %v3511, %v3765
      %v3818 = vadd.f32 %v3512, %v3770
      %v3819 = vadd.f32 %v3513, %v3773
      %v3820 = vadd.f32 %v3514, %v3778
      %v3821 = vadd.f32 %v3515, %v3781
      %v3822 = vadd.f32 %v3516, %v3786
      %v3823 = vadd.f32 %v3517, %v3789
      %v3824 = vld [vmem:[%s6] sm:$0x1]
      %v3826 = vlaneseq
      %v3827 = vshrl.u32 %v3826, 7
      %v3828 = vsub.s32 0, %v3827
      %v3829 = vrot.slane %v3824, %v3828
      %v3831 = vadd.f32 %v3792, %v3829
      %v3832 = vadd.f32 %v3793, %v3829
      %v3833 = vadd.f32 %v3794, %v3829
      %v3834 = vadd.f32 %v3795, %v3829
      %v3835 = vadd.f32 %v3796, %v3829
      %v3836 = vadd.f32 %v3797, %v3829
      %v3837 = vadd.f32 %v3798, %v3829
      %v3838 = vadd.f32 %v3799, %v3829
      %v3839 = vadd.f32 %v3800, %v3829
      %v3840 = vadd.f32 %v3801, %v3829
      %v3841 = vadd.f32 %v3802, %v3829
      %v3842 = vadd.f32 %v3803, %v3829
      %v3843 = vadd.f32 %v3804, %v3829
      %v3844 = vadd.f32 %v3805, %v3829
      %v3845 = vadd.f32 %v3806, %v3829
      %v3846 = vadd.f32 %v3807, %v3829
      %v3847 = vadd.f32 %v3808, %v3829
      %v3848 = vadd.f32 %v3809, %v3829
      %v3849 = vadd.f32 %v3810, %v3829
      %v3850 = vadd.f32 %v3811, %v3829
      %v3851 = vadd.f32 %v3812, %v3829
      %v3852 = vadd.f32 %v3813, %v3829
      %v3853 = vadd.f32 %v3814, %v3829
      %v3854 = vadd.f32 %v3815, %v3829
      %v3855 = vadd.f32 %v3816, %v3829
      %v3856 = vadd.f32 %v3817, %v3829
      %v3857 = vadd.f32 %v3818, %v3829
      %v3858 = vadd.f32 %v3819, %v3829
      %v3859 = vadd.f32 %v3820, %v3829
      %v3860 = vadd.f32 %v3821, %v3829
      %v3861 = vadd.f32 %v3822, %v3829
      %v3862 = vadd.f32 %v3823, %v3829
      %vm3863 = vcmp.ge.f32.partialorder %v3831, 0.0
      %vm3864 = vcmp.ge.f32.partialorder %v3832, 0.0
      %vm3865 = vcmp.ge.f32.partialorder %v3833, 0.0
      %vm3866 = vcmp.ge.f32.partialorder %v3834, 0.0
      %vm3867 = vcmp.ge.f32.partialorder %v3835, 0.0
      %vm3868 = vcmp.ge.f32.partialorder %v3836, 0.0
      %vm3869 = vcmp.ge.f32.partialorder %v3837, 0.0
      %vm3870 = vcmp.ge.f32.partialorder %v3838, 0.0
      %vm3871 = vcmp.ge.f32.partialorder %v3839, 0.0
      %vm3872 = vcmp.ge.f32.partialorder %v3840, 0.0
      %vm3873 = vcmp.ge.f32.partialorder %v3841, 0.0
      %vm3874 = vcmp.ge.f32.partialorder %v3842, 0.0
      %vm3875 = vcmp.ge.f32.partialorder %v3843, 0.0
      %vm3876 = vcmp.ge.f32.partialorder %v3844, 0.0
      %vm3877 = vcmp.ge.f32.partialorder %v3845, 0.0
      %vm3878 = vcmp.ge.f32.partialorder %v3846, 0.0
      %vm3879 = vcmp.ge.f32.partialorder %v3847, 0.0
      %vm3880 = vcmp.ge.f32.partialorder %v3848, 0.0
      %vm3881 = vcmp.ge.f32.partialorder %v3849, 0.0
      %vm3882 = vcmp.ge.f32.partialorder %v3850, 0.0
      %vm3883 = vcmp.ge.f32.partialorder %v3851, 0.0
      %vm3884 = vcmp.ge.f32.partialorder %v3852, 0.0
      %vm3885 = vcmp.ge.f32.partialorder %v3853, 0.0
      %vm3886 = vcmp.ge.f32.partialorder %v3854, 0.0
      %vm3887 = vcmp.ge.f32.partialorder %v3855, 0.0
      %vm3888 = vcmp.ge.f32.partialorder %v3856, 0.0
      %vm3889 = vcmp.ge.f32.partialorder %v3857, 0.0
      %vm3890 = vcmp.ge.f32.partialorder %v3858, 0.0
      %vm3891 = vcmp.ge.f32.partialorder %v3859, 0.0
      %vm3892 = vcmp.ge.f32.partialorder %v3860, 0.0
      %vm3893 = vcmp.ge.f32.partialorder %v3861, 0.0
      %vm3894 = vcmp.ge.f32.partialorder %v3862, 0.0
      %v3895 = vmul.f32 %v3831, 0.1
      %v3896 = vmul.f32 %v3832, 0.1
      %v3897 = vmul.f32 %v3833, 0.1
      %v3898 = vmul.f32 %v3834, 0.1
      %v3899 = vmul.f32 %v3835, 0.1
      %v3900 = vmul.f32 %v3836, 0.1
      %v3901 = vmul.f32 %v3837, 0.1
      %v3902 = vmul.f32 %v3838, 0.1
      %v3903 = vmul.f32 %v3839, 0.1
      %v3904 = vmul.f32 %v3840, 0.1
      %v3905 = vmul.f32 %v3841, 0.1
      %v3906 = vmul.f32 %v3842, 0.1
      %v3907 = vmul.f32 %v3843, 0.1
      %v3908 = vmul.f32 %v3844, 0.1
      %v3909 = vmul.f32 %v3845, 0.1
      %v3910 = vmul.f32 %v3846, 0.1
      %v3911 = vmul.f32 %v3847, 0.1
      %v3912 = vmul.f32 %v3848, 0.1
      %v3913 = vmul.f32 %v3849, 0.1
      %v3914 = vmul.f32 %v3850, 0.1
      %v3915 = vmul.f32 %v3851, 0.1
      %v3916 = vmul.f32 %v3852, 0.1
      %v3917 = vmul.f32 %v3853, 0.1
      %v3918 = vmul.f32 %v3854, 0.1
      %v3919 = vmul.f32 %v3855, 0.1
      %v3920 = vmul.f32 %v3856, 0.1
      %v3921 = vmul.f32 %v3857, 0.1
      %v3922 = vmul.f32 %v3858, 0.1
      %v3923 = vmul.f32 %v3859, 0.1
      %v3924 = vmul.f32 %v3860, 0.1
      %v3925 = vmul.f32 %v3861, 0.1
      %v3926 = vmul.f32 %v3862, 0.1
      %v3927 = vsel %vm3863, %v3831, %v3895
      %v3928 = vsel %vm3864, %v3832, %v3896
      %v3929 = vsel %vm3865, %v3833, %v3897
      %v3930 = vsel %vm3866, %v3834, %v3898
      %v3931 = vsel %vm3867, %v3835, %v3899
      %v3932 = vsel %vm3868, %v3836, %v3900
      %v3933 = vsel %vm3869, %v3837, %v3901
      %v3934 = vsel %vm3870, %v3838, %v3902
      %v3935 = vsel %vm3871, %v3839, %v3903
      %v3936 = vsel %vm3872, %v3840, %v3904
      %v3937 = vsel %vm3873, %v3841, %v3905
      %v3938 = vsel %vm3874, %v3842, %v3906
      %v3939 = vsel %vm3875, %v3843, %v3907
      %v3940 = vsel %vm3876, %v3844, %v3908
      %v3941 = vsel %vm3877, %v3845, %v3909
      %v3942 = vsel %vm3878, %v3846, %v3910
      %v3943 = vsel %vm3879, %v3847, %v3911
      %v3944 = vsel %vm3880, %v3848, %v3912
      %v3945 = vsel %vm3881, %v3849, %v3913
      %v3946 = vsel %vm3882, %v3850, %v3914
      %v3947 = vsel %vm3883, %v3851, %v3915
      %v3948 = vsel %vm3884, %v3852, %v3916
      %v3949 = vsel %vm3885, %v3853, %v3917
      %v3950 = vsel %vm3886, %v3854, %v3918
      %v3951 = vsel %vm3887, %v3855, %v3919
      %v3952 = vsel %vm3888, %v3856, %v3920
      %v3953 = vsel %vm3889, %v3857, %v3921
      %v3954 = vsel %vm3890, %v3858, %v3922
      %v3955 = vsel %vm3891, %v3859, %v3923
      %v3956 = vsel %vm3892, %v3860, %v3924
      %v3957 = vsel %vm3893, %v3861, %v3925
      %v3958 = vsel %vm3894, %v3862, %v3926
      %v3959 = vld [vmem:[%s7] sm:$0x3]
      %v3960 = vld [vmem:[%s8] sm:$0x1]
      %v3962 = vlaneseq
      %v3963 = vshrl.u32 %v3962, 7
      %v3964 = vsub.s32 0, %v3963
      %v3965 = vrot.slane %v3960, %v3964
      %v3968 = vsel %vm440, %v3959, 0
      %3970 = vmatprep.subr.bf16.mxu0 0
      %3971 = vmatpush1.bf16.msra.mxu0 %v3968
      %3972 = vmatprep.subr.bf16.mxu0 0
      %3973 = vmatpush1.bf16.msra.mxu0 0
      %3974 = vmatprep.subr.bf16.mxu0 0
      %3975 = vmatpush1.bf16.msra.mxu0 0
      %3976 = vmatprep.subr.bf16.mxu0 0
      %3977 = vmatpush1.bf16.msra.mxu0 0
      %3978 = vmatprep.subr.bf16.mxu0 0
      %3979 = vmatpush1.bf16.msra.mxu0 0
      %3980 = vmatprep.subr.bf16.mxu0 0
      %3981 = vmatpush1.bf16.msra.mxu0 0
      %3982 = vmatprep.subr.bf16.mxu0 0
      %3983 = vmatpush1.bf16.msra.mxu0 0
      %3984 = vmatprep.subr.bf16.mxu0 0
      %3985 = vmatpush1.bf16.msra.mxu0 0
      %3986 = vmatprep.subr.bf16.mxu0 0
      %3987 = vmatpush1.bf16.msra.mxu0 0
      %3988 = vmatprep.subr.bf16.mxu0 0
      %3989 = vmatpush1.bf16.msra.mxu0 0
      %3990 = vmatprep.subr.bf16.mxu0 0
      %3991 = vmatpush1.bf16.msra.mxu0 0
      %3992 = vmatprep.subr.bf16.mxu0 0
      %3993 = vmatpush1.bf16.msra.mxu0 0
      %3994 = vmatprep.subr.bf16.mxu0 0
      %3995 = vmatpush1.bf16.msra.mxu0 0
      %3996 = vmatprep.subr.bf16.mxu0 0
      %3997 = vmatpush1.bf16.msra.mxu0 0
      %3998 = vmatprep.subr.bf16.mxu0 0
      %3999 = vmatpush1.bf16.msra.mxu0 0
      %4000 = vmatprep.subr.bf16.mxu0 0
      %4001 = vmatpush1.bf16.msra.mxu0 0
      %4002 = vmatprep.mubr.bf16.mxu0 0
      %4003 = vmatmul.mubr.bf16.gmra.mrb[0].mxu0 %v393
      %v4004 = vpop.f32.mrb[0].mxu0
      %v4005 = vadd.f32 %v3965, %v4004
      %v4006 = vpop.f32.mrb[0].mxu0
      %v4007 = vpop.f32.mrb[0].mxu0
      %v4008 = vadd.f32 %v3965, %v4007
      %v4009 = vpop.f32.mrb[0].mxu0
      %4010 = vmatprep.mubr.bf16.mxu0 0
      %4011 = vmatmul.mubr.bf16.gmra.mrb[0].mxu0 %v396
      %v4012 = vpop.f32.mrb[0].mxu0
      %v4013 = vadd.f32 %v3965, %v4012
      %v4014 = vpop.f32.mrb[0].mxu0
      %v4015 = vpop.f32.mrb[0].mxu0
      %v4016 = vadd.f32 %v3965, %v4015
      %v4017 = vpop.f32.mrb[0].mxu0
      %4018 = vmatprep.mubr.bf16.mxu0 0
      %4019 = vmatmul.mubr.bf16.gmra.mrb[0].mxu0 %v399
      %v4020 = vpop.f32.mrb[0].mxu0
      %v4021 = vadd.f32 %v3965, %v4020
      %v4022 = vpop.f32.mrb[0].mxu0
      %v4023 = vpop.f32.mrb[0].mxu0
      %v4024 = vadd.f32 %v3965, %v4023
      %v4025 = vpop.f32.mrb[0].mxu0
      %4026 = vmatprep.mubr.bf16.mxu0 0
      %4027 = vmatmul.mubr.bf16.gmra.mrb[0].mxu0 %v402
      %v4028 = vpop.f32.mrb[0].mxu0
      %v4029 = vadd.f32 %v3965, %v4028
      %v4030 = vpop.f32.mrb[0].mxu0
      %v4031 = vpop.f32.mrb[0].mxu0
      %v4032 = vadd.f32 %v3965, %v4031
      %v4033 = vpop.f32.mrb[0].mxu0
      %4034 = vmatprep.mubr.bf16.mxu0 0
      %4035 = vmatmul.mubr.bf16.gmra.mrb[0].mxu0 %v405
      %v4036 = vpop.f32.mrb[0].mxu0
      %v4037 = vadd.f32 %v3965, %v4036
      %v4038 = vpop.f32.mrb[0].mxu0
      %v4039 = vpop.f32.mrb[0].mxu0
      %v4040 = vadd.f32 %v3965, %v4039
      %v4041 = vpop.f32.mrb[0].mxu0
      %4042 = vmatprep.mubr.bf16.mxu0 0
      %4043 = vmatmul.mubr.bf16.gmra.mrb[0].mxu0 %v408
      %v4044 = vpop.f32.mrb[0].mxu0
      %v4045 = vadd.f32 %v3965, %v4044
      %v4046 = vpop.f32.mrb[0].mxu0
      %v4047 = vpop.f32.mrb[0].mxu0
      %v4048 = vadd.f32 %v3965, %v4047
      %v4049 = vpop.f32.mrb[0].mxu0
      %4050 = vmatprep.mubr.bf16.mxu0 0
      %4051 = vmatmul.mubr.bf16.gmra.mrb[0].mxu0 %v411
      %v4052 = vpop.f32.mrb[0].mxu0
      %v4053 = vadd.f32 %v3965, %v4052
      %v4054 = vpop.f32.mrb[0].mxu0
      %v4055 = vpop.f32.mrb[0].mxu0
      %v4056 = vadd.f32 %v3965, %v4055
      %v4057 = vpop.f32.mrb[0].mxu0
      %4058 = vmatprep.mubr.bf16.mxu0 0
      %4059 = vmatmul.mubr.bf16.gmra.mrb[0].mxu0 %v414
      %v4060 = vpop.f32.mrb[0].mxu0
      %v4061 = vadd.f32 %v3965, %v4060
      %v4062 = vpop.f32.mrb[0].mxu0
      %v4063 = vpop.f32.mrb[0].mxu0
      %v4064 = vadd.f32 %v3965, %v4063
      %v4065 = vpop.f32.mrb[0].mxu0
      %4066 = vmatprep.mubr.bf16.mxu0 0
      %4067 = vmatmul.mubr.bf16.gmra.mrb[0].mxu0 %v417
      %v4068 = vpop.f32.mrb[0].mxu0
      %v4069 = vadd.f32 %v3965, %v4068
      %v4070 = vpop.f32.mrb[0].mxu0
      %v4071 = vpop.f32.mrb[0].mxu0
      %v4072 = vadd.f32 %v3965, %v4071
      %v4073 = vpop.f32.mrb[0].mxu0
      %4074 = vmatprep.mubr.bf16.mxu0 0
      %4075 = vmatmul.mubr.bf16.gmra.mrb[0].mxu0 %v420
      %v4076 = vpop.f32.mrb[0].mxu0
      %v4077 = vadd.f32 %v3965, %v4076
      %v4078 = vpop.f32.mrb[0].mxu0
      %v4079 = vpop.f32.mrb[0].mxu0
      %v4080 = vadd.f32 %v3965, %v4079
      %v4081 = vpop.f32.mrb[0].mxu0
      %4082 = vmatprep.mubr.bf16.mxu0 0
      %4083 = vmatmul.mubr.bf16.gmra.mrb[0].mxu0 %v423
      %v4084 = vpop.f32.mrb[0].mxu0
      %v4085 = vadd.f32 %v3965, %v4084
      %v4086 = vpop.f32.mrb[0].mxu0
      %v4087 = vpop.f32.mrb[0].mxu0
      %v4088 = vadd.f32 %v3965, %v4087
      %v4089 = vpop.f32.mrb[0].mxu0
      %4090 = vmatprep.mubr.bf16.mxu0 0
      %4091 = vmatmul.mubr.bf16.gmra.mrb[0].mxu0 %v426
      %v4092 = vpop.f32.mrb[0].mxu0
      %v4093 = vadd.f32 %v3965, %v4092
      %v4094 = vpop.f32.mrb[0].mxu0
      %v4095 = vpop.f32.mrb[0].mxu0
      %v4096 = vadd.f32 %v3965, %v4095
      %v4097 = vpop.f32.mrb[0].mxu0
      %4098 = vmatprep.mubr.bf16.mxu0 0
      %4099 = vmatmul.mubr.bf16.gmra.mrb[0].mxu0 %v429
      %v4100 = vpop.f32.mrb[0].mxu0
      %v4101 = vadd.f32 %v3965, %v4100
      %v4102 = vpop.f32.mrb[0].mxu0
      %v4103 = vpop.f32.mrb[0].mxu0
      %v4104 = vadd.f32 %v3965, %v4103
      %v4105 = vpop.f32.mrb[0].mxu0
      %4106 = vmatprep.mubr.bf16.mxu0 0
      %4107 = vmatmul.mubr.bf16.gmra.mrb[0].mxu0 %v432
      %v4108 = vpop.f32.mrb[0].mxu0
      %v4109 = vadd.f32 %v3965, %v4108
      %v4110 = vpop.f32.mrb[0].mxu0
      %v4111 = vpop.f32.mrb[0].mxu0
      %v4112 = vadd.f32 %v3965, %v4111
      %v4113 = vpop.f32.mrb[0].mxu0
      %4114 = vmatprep.mubr.bf16.mxu0 0
      %4115 = vmatmul.mubr.bf16.gmra.mrb[0].mxu0 %v435
      %v4116 = vpop.f32.mrb[0].mxu0
      %v4117 = vadd.f32 %v3965, %v4116
      %v4118 = vpop.f32.mrb[0].mxu0
      %v4119 = vpop.f32.mrb[0].mxu0
      %v4120 = vadd.f32 %v3965, %v4119
      %v4121 = vpop.f32.mrb[0].mxu0
      %4122 = vmatprep.mubr.bf16.mxu0 0
      %4123 = vmatmul.mubr.bf16.gmra.mrb[0].mxu0 %v438
      %v4124 = vpop.f32.mrb[0].mxu0
      %v4125 = vadd.f32 %v3965, %v4124
      %v4126 = vpop.f32.mrb[0].mxu0
      %v4127 = vpop.f32.mrb[0].mxu0
      %v4128 = vadd.f32 %v3965, %v4127
      %v4129 = vpop.f32.mrb[0].mxu0
      %4130 = vdwg.mxu0
      %v4131 = vadd.f32 %v4005, %v3927
      %v4132 = vadd.f32 %v4008, %v3928
      %v4133 = vadd.f32 %v4013, %v3929
      %v4134 = vadd.f32 %v4016, %v3930
      %v4135 = vadd.f32 %v4021, %v3931
      %v4136 = vadd.f32 %v4024, %v3932
      %v4137 = vadd.f32 %v4029, %v3933
      %v4138 = vadd.f32 %v4032, %v3934
      %v4139 = vadd.f32 %v4037, %v3935
      %v4140 = vadd.f32 %v4040, %v3936
      %v4141 = vadd.f32 %v4045, %v3937
      %v4142 = vadd.f32 %v4048, %v3938
      %v4143 = vadd.f32 %v4053, %v3939
      %v4144 = vadd.f32 %v4056, %v3940
      %v4145 = vadd.f32 %v4061, %v3941
      %v4146 = vadd.f32 %v4064, %v3942
      %v4147 = vadd.f32 %v4069, %v3943
      %v4148 = vadd.f32 %v4072, %v3944
      %v4149 = vadd.f32 %v4077, %v3945
      %v4150 = vadd.f32 %v4080, %v3946
      %v4151 = vadd.f32 %v4085, %v3947
      %v4152 = vadd.f32 %v4088, %v3948
      %v4153 = vadd.f32 %v4093, %v3949
      %v4154 = vadd.f32 %v4096, %v3950
      %v4155 = vadd.f32 %v4101, %v3951
      %v4156 = vadd.f32 %v4104, %v3952
      %v4157 = vadd.f32 %v4109, %v3953
      %v4158 = vadd.f32 %v4112, %v3954
      %v4159 = vadd.f32 %v4117, %v3955
      %v4160 = vadd.f32 %v4120, %v3956
      %v4161 = vadd.f32 %v4125, %v3957
      %v4162 = vadd.f32 %v4128, %v3958
      %vm4163 = vcmask 523264
      %4164 = vst.msk [vmem:[%s332] sm:$0xff] %vm4163, %v4131
      %4165 = vst.msk [vmem:[%s332 + $0x8] sm:$0xff] %vm4163, %v4132
      %4166 = vst.msk [vmem:[%s332 + $0x10] sm:$0xff] %vm4163, %v4133
      %4167 = vst.msk [vmem:[%s332 + $0x18] sm:$0xff] %vm4163, %v4134
      %4168 = vst.msk [vmem:[%s332 + $0x20] sm:$0xff] %vm4163, %v4135
      %4169 = vst.msk [vmem:[%s332 + $0x28] sm:$0xff] %vm4163, %v4136
      %4170 = vst.msk [vmem:[%s332 + $0x30] sm:$0xff] %vm4163, %v4137
      %4171 = vst.msk [vmem:[%s332 + $0x38] sm:$0xff] %vm4163, %v4138
      %4172 = vst.msk [vmem:[%s332 + $0x40] sm:$0xff] %vm4163, %v4139
      %4173 = vst.msk [vmem:[%s332 + $0x48] sm:$0xff] %vm4163, %v4140
      %4174 = vst.msk [vmem:[%s332 + $0x50] sm:$0xff] %vm4163, %v4141
      %4175 = vst.msk [vmem:[%s332 + $0x58] sm:$0xff] %vm4163, %v4142
      %4176 = vst.msk [vmem:[%s332 + $0x60] sm:$0xff] %vm4163, %v4143
      %4177 = vst.msk [vmem:[%s332 + $0x68] sm:$0xff] %vm4163, %v4144
      %4178 = vst.msk [vmem:[%s332 + $0x70] sm:$0xff] %vm4163, %v4145
      %4179 = vst.msk [vmem:[%s332 + $0x78] sm:$0xff] %vm4163, %v4146
      %4180 = vst.msk [vmem:[%s332 + $0x80] sm:$0xff] %vm4163, %v4147
      %4181 = vst.msk [vmem:[%s332 + $0x88] sm:$0xff] %vm4163, %v4148
      %4182 = vst.msk [vmem:[%s332 + $0x90] sm:$0xff] %vm4163, %v4149
      %4183 = vst.msk [vmem:[%s332 + $0x98] sm:$0xff] %vm4163, %v4150
      %4184 = vst.msk [vmem:[%s332 + $0xa0] sm:$0xff] %vm4163, %v4151
      %4185 = vst.msk [vmem:[%s332 + $0xa8] sm:$0xff] %vm4163, %v4152
      %4186 = vst.msk [vmem:[%s332 + $0xb0] sm:$0xff] %vm4163, %v4153
      %4187 = vst.msk [vmem:[%s332 + $0xb8] sm:$0xff] %vm4163, %v4154
      %4188 = vst.msk [vmem:[%s332 + $0xc0] sm:$0xff] %vm4163, %v4155
      %4189 = vst.msk [vmem:[%s332 + $0xc8] sm:$0xff] %vm4163, %v4156
      %4190 = vst.msk [vmem:[%s332 + $0xd0] sm:$0xff] %vm4163, %v4157
      %4191 = vst.msk [vmem:[%s332 + $0xd8] sm:$0xff] %vm4163, %v4158
      %4192 = vst.msk [vmem:[%s332 + $0xe0] sm:$0xff] %vm4163, %v4159
      %4193 = vst.msk [vmem:[%s332 + $0xe8] sm:$0xff] %vm4163, %v4160
      %4194 = vst.msk [vmem:[%s332 + $0xf0] sm:$0xff] %vm4163, %v4161
      %4195 = vst.msk [vmem:[%s332 + $0xf8] sm:$0xff] %vm4163, %v4162
      %p4196 = scmp.lt.s32.totalorder %s20, 1
      %s4197 = scalar_select %p4196, %s20, 1
      %s4198 = smul.addr %s4197, 32
      %s4199 = smul.addr %s4198, 8
      %s4200 = scalar_lea.vmem %s9, %s4199
      // Predicated region
      $region57: #{down_forward.2} parent=55 // pred_check
        %p4201 = pneg %p232
      $region58: #{down_forward.2} parent=55 // pred_check_branch
        %4203 = sbr.rel (%p4201) target = $region60
      $region59: #{down_forward.2} parent=55 // pred_region
        _
      $region60: #{down_forward.2} parent=55 // pred_fallthru
        _
    $region56: #{down_forward.2} parent=5 // pred_fallthru
      _
    %p4204 = scmp.le.s32.totalorder 2, %s15
    // Predicated region
    $region61: #{down_forward.2} parent=5 // pred_check
      %p4205 = pneg %p4204
    $region62: #{down_forward.2} parent=5 // pred_check_branch
      %4207 = sbr.rel (%p4205) target = $region64
    $region63: #{down_forward.2} parent=5 // pred_region
      %s4208 = ssub.s32 %s15, 2
      // Predicated region
      $region65: #{down_forward.2} parent=63 // pred_check
        %p4209 = pneg %p238
      $region66: #{down_forward.2} parent=63 // pred_check_branch
        %4211 = sbr.rel (%p4209) target = $region68
      $region67: #{down_forward.2} parent=63 // pred_region
        %p4212 = scmp.lt.s32.totalorder %s21, 1
        %s4213 = scalar_select %p4212, %s21, 1
        %s4214 = smul.addr %s4213, 32
        %s4215 = smul.addr %s4214, 8
        %s4216 = scalar_lea.vmem %s9, %s4215
      $region68: #{down_forward.2} parent=63 // pred_fallthru
        _
    $region64: #{down_forward.2} parent=5 // pred_fallthru
      _
  $region6: #{down_forward.2} parent=0 // loop_footer
    %s19 = sadd.s32 1, %s15
  $region7: #{down_forward.2} parent=0 // loop_footer_branch
    %14 = sbr.rel target = $region3
  $region8: #{down_forward.2} parent=0 // loop_exit
    _

</llo_original>
